<compile_context>
chip_gen: v7x
topology: tpu7x:2x2x1
jax: 0.10.0
libtpu: 0.0.40
codegen_flags: <defaults>
</compile_context>

<pallas_src>
import jax
import jax.numpy as jnp
from jax.experimental import pallas as pl
from jax.experimental.pallas import tpu as pltpu

ROWS = 32  # per-image row stride: 28 image rows + 4 zero-pad rows.  Multiple of
           # the (8,128)/(16,128) sublane tiling, so stacking images along the
           # sublane (M) dim never needs an unaligned relayout.


def _shift_up(x, dh):
    """rows[r] <- x[r + dh]; the dh rows that fall off the end become zeros.

    Those tail rows only ever land in the per-image padding region (garbage
    rows >= 26 of the last image in the block), which valid outputs never read.
    """
    if dh == 0:
        return x
    pad = jnp.zeros((dh, x.shape[1]), x.dtype)
    return jnp.concatenate([x[dh:], pad], axis=0)


def _make_kernel(nb):
    m = nb * ROWS  # stacked M for the conv / pooling matmuls

    def kernel(x_ref, n1_ref, b1_ref, n2_ref, b2_ref, bcol_ref,
               w1r_ref, lb1_ref, w2_ref, lb2_ref, o_ref, tsum_ref):
        f32 = jnp.float32
        cdt = n1_ref.dtype  # bf16 MXU operand dtype

        # ---- conv1 (1 -> 8, 3x3, VALID) + ReLU, images stacked in M ---------
        # h1[b*32+i, c*26+j] for i in 0..25 (rows >= 26 per image are garbage).
        x = x_ref[...]                                            # (m, 28) bf16
        acc1 = jnp.zeros((m, 208), f32)
        for dh in range(3):
            acc1 += jnp.dot(_shift_up(x, dh), n1_ref[dh],
                            preferred_element_type=f32)
        h1 = jnp.maximum(acc1 + b1_ref[...], 0.0).astype(cdt)     # (m, 208)

        # ---- conv2 (8 -> 16, 3x3, VALID) + ReLU ------------------------------
        # h2[b*32+i, f*24+j] for i in 0..23.
        acc2 = jnp.zeros((m, 384), f32)
        for dh in range(3):
            acc2 += jnp.dot(_shift_up(h1, dh), n2_ref[dh],
                            preferred_element_type=f32)
        h2 = jnp.maximum(acc2 + b2_ref[...], 0.0).astype(cdt)     # (m, 384)

        # ---- adaptive avg-pool 24x24 -> 8x8 (exact 3x3 bins) -----------------
        # Column pool: one stacked-M MXU matmul against a 0/1 bin matrix (f32 acc).
        t = jnp.dot(h2, bcol_ref[...], preferred_element_type=f32)  # (m, 128)
        # Row pool: VPU adds of row-shifted copies; the valid 3-row sums for
        # output row io of image b land at row b*32 + 3*io.
        tsum_ref[...] = t + _shift_up(t, 1) + _shift_up(t, 2)

        # TODO(synk): dropout(p=0.5) eval-mode identity (no random masking).

        # ---- linear1 (1024 -> 512) + ReLU, images stacked in M ---------------
        # torch flatten order (f, io, jo) was folded into w1r on the host, so the
        # contraction is 8 matmuls of (NB,128)@(128,512); the (NB,128) operand is
        # a strided row gather (one pooled row per image) from the scratch.
        accf = jnp.zeros((nb, 512), f32)
        for io in range(8):
            rows = tsum_ref[pl.ds(3 * io, nb, stride=ROWS), :]       # (nb, 128) f32
            pooled = ((1.0 / 9.0) * rows).astype(cdt)                # 1/9 in f32
            accf += jnp.dot(pooled, w1r_ref[io], preferred_element_type=f32)
        f1 = jnp.maximum(accf + lb1_ref[...], 0.0).astype(cdt)       # (nb, 512)

        # ---- linear2 (512 -> 10), lane-padded to 128 for unmasked stores -----
        out = jnp.dot(f1, w2_ref[...], preferred_element_type=f32) + lb2_ref[...]
        o_ref[...] = out.astype(o_ref.dtype)                          # (nb, 128)

    return kernel


# ---------------------------------------------------------------------------
# Host-side weight preprocessing (done once; pure layout plumbing).
# ---------------------------------------------------------------------------
def prepare_params(params, compute_dtype=jnp.bfloat16):
    f32 = jnp.float32
    w1 = params["w1"].astype(f32)                  # (8, 1, 3, 3)   torch OIHW
    w2 = params["w2"].astype(f32)                  # (16, 8, 3, 3)

    # conv1 banded matrices: n1[dh, w, c*26 + j] = w1[c,0,dh,w-j] for 0<=w-j<=2
    d = jnp.arange(28)[:, None] - jnp.arange(26)[None, :]            # (28, 26)
    valid = (d >= 0) & (d <= 2)
    taps = w1[:, 0, :, :][:, :, jnp.clip(d, 0, 2)]                   # (8,3,28,26)
    taps = jnp.where(valid[None, None], taps, 0.0)
    n1 = taps.transpose(1, 2, 0, 3).reshape(3, 28, 8 * 26)           # (3, 28, 208)

    # conv2 banded matrices: n2[dh, c*26 + w, f*24 + j] = w2[f,c,dh,w-j]
    d = jnp.arange(26)[:, None] - jnp.arange(24)[None, :]            # (26, 24)
    valid = (d >= 0) & (d <= 2)
    taps = w2[:, :, :, jnp.clip(d, 0, 2)]                            # (16,8,3,26,24)
    taps = jnp.where(valid[None, None, None], taps, 0.0)
    n2 = taps.transpose(2, 1, 3, 0, 4).reshape(3, 8 * 26, 16 * 24)   # (3, 208, 384)

    # column-pool bin matrix: exact 0/1 (the 1/9 scale is applied in f32 in-kernel)
    bcol_blk = (jnp.arange(24)[:, None] // 3
                == jnp.arange(8)[None, :]).astype(f32)               # (24, 8)
    bcol = jnp.kron(jnp.eye(16, dtype=f32), bcol_blk)                # (384, 128)

    # linear1: torch y = x_flat @ lw1.T + lb1 with x_flat index f*64 + io*8 + jo.
    # Rearranged to w1r[io, f*8 + jo, o]  =>  no in-kernel flatten/reshape.
    lw1 = params["lw1"].astype(f32)                                  # (512, 1024)
    w1r = lw1.T.reshape(16, 8, 8, 512).transpose(1, 0, 2, 3).reshape(8, 128, 512)

    # linear2, lane-padded to 128 output lanes (unmasked stores; host slices :10)
    lw2 = params["lw2"].astype(f32)                                  # (10, 512)
    w2p = jnp.zeros((512, 128), f32).at[:, :10].set(lw2.T)
    lb2p = jnp.zeros((1, 128), f32).at[0, :10].set(params["lb2"].astype(f32))

    cdt = compute_dtype
    return {
        "n1": n1.astype(cdt),
        "b1": jnp.repeat(params["b1"].astype(f32), 26)[None, :],     # (1, 208)
        "n2": n2.astype(cdt),
        "b2": jnp.repeat(params["b2"].astype(f32), 24)[None, :],     # (1, 384)
        "bcol": bcol.astype(cdt),
        "w1r": w1r.astype(cdt),
        "lb1": params["lb1"].astype(f32)[None, :],                   # (1, 512)
        "w2": w2p.astype(cdt),                                       # (512, 128)
        "lb2": lb2p,                                                 # (1, 128)
    }


# ---------------------------------------------------------------------------
# Wrapper: one fused pallas_call, NB images per grid step.
# ---------------------------------------------------------------------------
def mnist_convnet_forward(x, prep, nb=8):
    """x: (B, 1, 28, 28) float32 NCHW -> logits (B, 10) float32.

    nb = images per grid step (multiple of 8).  For real batches raise nb to
    32-256 to fill the 128/256-row MXU; keep >= 2 grid steps for v7x megacore.
    """
    assert nb % 8 == 0 and nb >= 8, nb
    B = x.shape[0]
    assert x.shape[1:] == (1, 28, 28), x.shape

    bp = ((B + nb - 1) // nb) * nb
    x2 = x.reshape(B, 28, 28)
    if bp != B:
        x2 = jnp.concatenate([x2, jnp.zeros((bp - B, 28, 28), x2.dtype)], axis=0)
    # Pad each image to ROWS=32 rows, pre-cast to bf16 (halves input DMA) and
    # stack all image rows along the sublane dim: (bp*32, 28).
    xp = jnp.pad(x2, ((0, 0), (0, ROWS - 28), (0, 0))).astype(jnp.bfloat16)
    xp = xp.reshape(bp * ROWS, 28)

    steps = bp // nb
    m = nb * ROWS

    per_step_macs = (3 * m * 28 * 208 + 3 * m * 208 * 384 + m * 384 * 128
                     + 8 * nb * 128 * 512 + nb * 512 * 128)
    weight_bytes = sum(int(v.size) * v.dtype.itemsize for v in prep.values())
    cost = pl.CostEstimate(
        flops=2 * steps * per_step_macs,
        transcendentals=0,
        bytes_accessed=weight_bytes + int(xp.size) * 2 + bp * 128 * 4)

    out = pl.pallas_call(
        _make_kernel(nb),
        out_shape=jax.ShapeDtypeStruct((bp, 128), jnp.float32),
        grid=(steps,),
        in_specs=[
            pl.BlockSpec((m, 28), lambda s: (s, 0)),            # x (nb images/step)
            # weights / biases: constant index maps -> fetched once, VMEM resident
            pl.BlockSpec((3, 28, 208), lambda s: (0, 0, 0)),    # n1
            pl.BlockSpec((1, 208), lambda s: (0, 0)),           # b1
            pl.BlockSpec((3, 208, 384), lambda s: (0, 0, 0)),   # n2
            pl.BlockSpec((1, 384), lambda s: (0, 0)),           # b2
            pl.BlockSpec((384, 128), lambda s: (0, 0)),         # bcol
            pl.BlockSpec((8, 128, 512), lambda s: (0, 0, 0)),   # w1r
            pl.BlockSpec((1, 512), lambda s: (0, 0)),           # lb1
            pl.BlockSpec((512, 128), lambda s: (0, 0)),         # w2 (lane padded)
            pl.BlockSpec((1, 128), lambda s: (0, 0)),           # lb2 (lane padded)
        ],
        out_specs=pl.BlockSpec((nb, 128), lambda s: (s, 0)),
        scratch_shapes=[pltpu.VMEM((m, 128), jnp.float32)],     # row-pool staging
        compiler_params=pltpu.CompilerParams(
            dimension_semantics=("parallel",)),
        cost_estimate=cost,
    )(xp, prep["n1"], prep["b1"], prep["n2"], prep["b2"], prep["bcol"],
      prep["w1r"], prep["lb1"], prep["w2"], prep["lb2"])

    return out[:B, :10]


# ---------------------------------------------------------------------------
# Pure-JAX reference with original PyTorch semantics (f32, highest precision).
# ---------------------------------------------------------------------------
def reference_forward(x, params):
    hp = jax.lax.Precision.HIGHEST
    f32 = jnp.float32
    h = jax.lax.conv_general_dilated(
        x.astype(f32), params["w1"].astype(f32), (1, 1), "VALID",
        dimension_numbers=("NCHW", "OIHW", "NCHW"), precision=hp)
    h = jax.nn.relu(h + params["b1"][None, :, None, None])
    h = jax.lax.conv_general_dilated(
        h, params["w2"].astype(f32), (1, 1), "VALID",
        dimension_numbers=("NCHW", "OIHW", "NCHW"), precision=hp)
    h = jax.nn.relu(h + params["b2"][None, :, None, None])
    B = h.shape[0]
    h = h.reshape(B, 16, 8, 3, 8, 3).mean(axis=(3, 5))   # AdaptiveAvgPool2d((8,8))
    h = h.reshape(B, 16 * 8 * 8)                         # .view(-1, 1024)
    # dropout(p=0.5): identity in eval mode
    h = jax.nn.relu(jnp.dot(h, params["lw1"].T, precision=hp) + params["lb1"])
    return jnp.dot(h, params["lw2"].T, precision=hp) + params["lb2"]


def init_params(key):
    ks = jax.random.split(key, 8)
    s, f32 = 0.05, jnp.float32
    return {  # PyTorch layouts: Conv2d OIHW, Linear (out_features, in_features)
        "w1": s * jax.random.normal(ks[0], (8, 1, 3, 3), f32),
        "b1": s * jax.random.normal(ks[1], (8,), f32),
        "w2": s * jax.random.normal(ks[2], (16, 8, 3, 3), f32),
        "b2": s * jax.random.normal(ks[3], (16,), f32),
        "lw1": s * jax.random.normal(ks[4], (512, 1024), f32),
        "lb1": s * jax.random.normal(ks[5], (512,), f32),
        "lw2": s * jax.random.normal(ks[6], (10, 512), f32),
        "lb2": s * jax.random.normal(ks[7], (10,), f32),
    }


if __name__ == "__main__":
    key = jax.random.PRNGKey(0)
    kx, kp = jax.random.split(key)

    # MNIST-shaped input: 28x28 -> conv -> 26x26 -> conv -> 24x24 -> pool 8x8,
    # giving the 16*8*8 = 1024 features the Linear layer expects.
    B = 16
    x = jax.random.normal(kx, (B, 1, 28, 28), jnp.float32)
    params = init_params(kp)

    prep = prepare_params(params, compute_dtype=jnp.bfloat16)
    logits = jax.block_until_ready(mnist_convnet_forward(x, prep, nb=8))
    assert logits.shape == (B, 10), logits.shape

    ref = jax.block_until_ready(reference_forward(x, params))
    max_diff = jnp.max(jnp.abs(logits - ref))
    assert jnp.allclose(logits, ref, atol=2e-2, rtol=2e-2), (
        f"Pallas forward mismatch vs reference (max abs diff = {max_diff})")

    print("KERNEL_OK")
</pallas_src>

<mosaic_0001>
module attributes {stable_mosaic.version = 11 : i64} {
  func.func @kernel(%arg0: i32, %arg1: memref<256x28xbf16, #tpu.memory_space<vmem>>, %arg2: memref<3x28x208xbf16, #tpu.memory_space<vmem>>, %arg3: memref<1x208xf32, #tpu.memory_space<vmem>>, %arg4: memref<3x208x384xbf16, #tpu.memory_space<vmem>>, %arg5: memref<1x384xf32, #tpu.memory_space<vmem>>, %arg6: memref<384x128xbf16, #tpu.memory_space<vmem>>, %arg7: memref<8x128x512xbf16, #tpu.memory_space<vmem>>, %arg8: memref<1x512xf32, #tpu.memory_space<vmem>>, %arg9: memref<512x128xbf16, #tpu.memory_space<vmem>>, %arg10: memref<1x128xf32, #tpu.memory_space<vmem>>, %arg11: memref<8x128xf32, #tpu.memory_space<vmem>>, %arg12: memref<256x128xf32, #tpu.memory_space<vmem>>) attributes {dimension_semantics = [#tpu.dimension_semantics<parallel>], iteration_bounds = array<i64: 2>, scalar_prefetch = 0 : i64, scratch_operands = 1 : i64, tpu.core_type = #tpu.core_type<tc>, window_params = [{transform_indices = @transform_0, window_bounds = array<i64: 256, 28>}, {pipeline_mode = #tpu.pipeline_mode<synchronous>, transform_indices = @transform_1, window_bounds = array<i64: 3, 28, 208>}, {pipeline_mode = #tpu.pipeline_mode<synchronous>, transform_indices = @transform_2, window_bounds = array<i64: 1, 208>}, {pipeline_mode = #tpu.pipeline_mode<synchronous>, transform_indices = @transform_3, window_bounds = array<i64: 3, 208, 384>}, {pipeline_mode = #tpu.pipeline_mode<synchronous>, transform_indices = @transform_4, window_bounds = array<i64: 1, 384>}, {pipeline_mode = #tpu.pipeline_mode<synchronous>, transform_indices = @transform_5, window_bounds = array<i64: 384, 128>}, {pipeline_mode = #tpu.pipeline_mode<synchronous>, transform_indices = @transform_6, window_bounds = array<i64: 8, 128, 512>}, {pipeline_mode = #tpu.pipeline_mode<synchronous>, transform_indices = @transform_7, window_bounds = array<i64: 1, 512>}, {pipeline_mode = #tpu.pipeline_mode<synchronous>, transform_indices = @transform_8, window_bounds = array<i64: 512, 128>}, {pipeline_mode = #tpu.pipeline_mode<synchronous>, transform_indices = @transform_9, window_bounds = array<i64: 1, 128>}, {transform_indices = @transform_10, window_bounds = array<i64: 8, 128>}]} {
    %c0 = arith.constant 0 : index
    %c0_0 = arith.constant 0 : index
    %0 = vector.load %arg1[%c0, %c0_0] : memref<256x28xbf16, #tpu.memory_space<vmem>>, vector<256x28xbf16>
    %cst = arith.constant 0.000000e+00 : f32
    %1 = vector.broadcast %cst : f32 to vector<256x208xf32>
    %c0_1 = arith.constant 0 : index
    %c0_2 = arith.constant 0 : index
    %c0_3 = arith.constant 0 : index
    %2 = vector.load %arg2[%c0_1, %c0_2, %c0_3] : memref<3x28x208xbf16, #tpu.memory_space<vmem>>, vector<1x28x208xbf16>
    %3 = vector.shape_cast %2 : vector<1x28x208xbf16> to vector<28x208xbf16>
    %cst_4 = arith.constant dense<0.000000e+00> : vector<256x208xf32>
    %4 = tpu.matmul %0, %3, %cst_4 {dimension_numbers = #tpu.dot_dimension_numbers<[1], [0], [0], [1], [0, 0, 1, 1], [], []>} : vector<256x28xbf16>, vector<28x208xbf16>, vector<256x208xf32> -> vector<256x208xf32>
    %5 = arith.addf %1, %4 : vector<256x208xf32>
    %cst_5 = arith.constant 0.000000e+00 : bf16
    %6 = vector.broadcast %cst_5 : bf16 to vector<1x28xbf16>
    %7 = vector.extract_strided_slice %0 {offsets = [1, 0], sizes = [255, 28], strides = [1, 1]} : vector<256x28xbf16> to vector<255x28xbf16>
    %8 = tpu.concatenate %7, %6 in 0 : vector<255x28xbf16>, vector<1x28xbf16> -> vector<256x28xbf16>
    %c1 = arith.constant 1 : index
    %c0_6 = arith.constant 0 : index
    %c0_7 = arith.constant 0 : index
    %9 = vector.load %arg2[%c1, %c0_6, %c0_7] : memref<3x28x208xbf16, #tpu.memory_space<vmem>>, vector<1x28x208xbf16>
    %10 = vector.shape_cast %9 : vector<1x28x208xbf16> to vector<28x208xbf16>
    %cst_8 = arith.constant dense<0.000000e+00> : vector<256x208xf32>
    %11 = tpu.matmul %8, %10, %cst_8 {dimension_numbers = #tpu.dot_dimension_numbers<[1], [0], [0], [1], [0, 0, 1, 1], [], []>} : vector<256x28xbf16>, vector<28x208xbf16>, vector<256x208xf32> -> vector<256x208xf32>
    %12 = arith.addf %5, %11 : vector<256x208xf32>
    %cst_9 = arith.constant 0.000000e+00 : bf16
    %13 = vector.broadcast %cst_9 : bf16 to vector<2x28xbf16>
    %14 = vector.extract_strided_slice %0 {offsets = [2, 0], sizes = [254, 28], strides = [1, 1]} : vector<256x28xbf16> to vector<254x28xbf16>
    %15 = tpu.concatenate %14, %13 in 0 : vector<254x28xbf16>, vector<2x28xbf16> -> vector<256x28xbf16>
    %c2 = arith.constant 2 : index
    %c0_10 = arith.constant 0 : index
    %c0_11 = arith.constant 0 : index
    %16 = vector.load %arg2[%c2, %c0_10, %c0_11] : memref<3x28x208xbf16, #tpu.memory_space<vmem>>, vector<1x28x208xbf16>
    %17 = vector.shape_cast %16 : vector<1x28x208xbf16> to vector<28x208xbf16>
    %cst_12 = arith.constant dense<0.000000e+00> : vector<256x208xf32>
    %18 = tpu.matmul %15, %17, %cst_12 {dimension_numbers = #tpu.dot_dimension_numbers<[1], [0], [0], [1], [0, 0, 1, 1], [], []>} : vector<256x28xbf16>, vector<28x208xbf16>, vector<256x208xf32> -> vector<256x208xf32>
    %19 = arith.addf %12, %18 : vector<256x208xf32>
    %c0_13 = arith.constant 0 : index
    %c0_14 = arith.constant 0 : index
    %20 = vector.load %arg3[%c0_13, %c0_14] : memref<1x208xf32, #tpu.memory_space<vmem>>, vector<1x208xf32>
    %21 = vector.broadcast %20 : vector<1x208xf32> to vector<256x208xf32>
    %22 = arith.addf %19, %21 : vector<256x208xf32>
    %cst_15 = arith.constant 0.000000e+00 : f32
    %23 = vector.broadcast %cst_15 : f32 to vector<256x208xf32>
    %24 = arith.maximumf %22, %23 : vector<256x208xf32>
    %25 = arith.truncf %24 : vector<256x208xf32> to vector<256x208xbf16>
    %cst_16 = arith.constant 0.000000e+00 : f32
    %26 = vector.broadcast %cst_16 : f32 to vector<256x384xf32>
    %c0_17 = arith.constant 0 : index
    %c0_18 = arith.constant 0 : index
    %c0_19 = arith.constant 0 : index
    %27 = vector.load %arg4[%c0_17, %c0_18, %c0_19] : memref<3x208x384xbf16, #tpu.memory_space<vmem>>, vector<1x208x384xbf16>
    %28 = vector.shape_cast %27 : vector<1x208x384xbf16> to vector<208x384xbf16>
    %cst_20 = arith.constant dense<0.000000e+00> : vector<256x384xf32>
    %29 = tpu.matmul %25, %28, %cst_20 {dimension_numbers = #tpu.dot_dimension_numbers<[1], [0], [0], [1], [0, 0, 1, 1], [], []>} : vector<256x208xbf16>, vector<208x384xbf16>, vector<256x384xf32> -> vector<256x384xf32>
    %30 = arith.addf %26, %29 : vector<256x384xf32>
    %cst_21 = arith.constant 0.000000e+00 : bf16
    %31 = vector.broadcast %cst_21 : bf16 to vector<1x208xbf16>
    %32 = vector.extract_strided_slice %25 {offsets = [1, 0], sizes = [255, 208], strides = [1, 1]} : vector<256x208xbf16> to vector<255x208xbf16>
    %33 = tpu.concatenate %32, %31 in 0 : vector<255x208xbf16>, vector<1x208xbf16> -> vector<256x208xbf16>
    %c1_22 = arith.constant 1 : index
    %c0_23 = arith.constant 0 : index
    %c0_24 = arith.constant 0 : index
    %34 = vector.load %arg4[%c1_22, %c0_23, %c0_24] : memref<3x208x384xbf16, #tpu.memory_space<vmem>>, vector<1x208x384xbf16>
    %35 = vector.shape_cast %34 : vector<1x208x384xbf16> to vector<208x384xbf16>
    %cst_25 = arith.constant dense<0.000000e+00> : vector<256x384xf32>
    %36 = tpu.matmul %33, %35, %cst_25 {dimension_numbers = #tpu.dot_dimension_numbers<[1], [0], [0], [1], [0, 0, 1, 1], [], []>} : vector<256x208xbf16>, vector<208x384xbf16>, vector<256x384xf32> -> vector<256x384xf32>
    %37 = arith.addf %30, %36 : vector<256x384xf32>
    %cst_26 = arith.constant 0.000000e+00 : bf16
    %38 = vector.broadcast %cst_26 : bf16 to vector<2x208xbf16>
    %39 = vector.extract_strided_slice %25 {offsets = [2, 0], sizes = [254, 208], strides = [1, 1]} : vector<256x208xbf16> to vector<254x208xbf16>
    %40 = tpu.concatenate %39, %38 in 0 : vector<254x208xbf16>, vector<2x208xbf16> -> vector<256x208xbf16>
    %c2_27 = arith.constant 2 : index
    %c0_28 = arith.constant 0 : index
    %c0_29 = arith.constant 0 : index
    %41 = vector.load %arg4[%c2_27, %c0_28, %c0_29] : memref<3x208x384xbf16, #tpu.memory_space<vmem>>, vector<1x208x384xbf16>
    %42 = vector.shape_cast %41 : vector<1x208x384xbf16> to vector<208x384xbf16>
    %cst_30 = arith.constant dense<0.000000e+00> : vector<256x384xf32>
    %43 = tpu.matmul %40, %42, %cst_30 {dimension_numbers = #tpu.dot_dimension_numbers<[1], [0], [0], [1], [0, 0, 1, 1], [], []>} : vector<256x208xbf16>, vector<208x384xbf16>, vector<256x384xf32> -> vector<256x384xf32>
    %44 = arith.addf %37, %43 : vector<256x384xf32>
    %c0_31 = arith.constant 0 : index
    %c0_32 = arith.constant 0 : index
    %45 = vector.load %arg5[%c0_31, %c0_32] : memref<1x384xf32, #tpu.memory_space<vmem>>, vector<1x384xf32>
    %46 = vector.broadcast %45 : vector<1x384xf32> to vector<256x384xf32>
    %47 = arith.addf %44, %46 : vector<256x384xf32>
    %cst_33 = arith.constant 0.000000e+00 : f32
    %48 = vector.broadcast %cst_33 : f32 to vector<256x384xf32>
    %49 = arith.maximumf %47, %48 : vector<256x384xf32>
    %50 = arith.truncf %49 : vector<256x384xf32> to vector<256x384xbf16>
    %c0_34 = arith.constant 0 : index
    %c0_35 = arith.constant 0 : index
    %51 = vector.load %arg6[%c0_34, %c0_35] : memref<384x128xbf16, #tpu.memory_space<vmem>>, vector<384x128xbf16>
    %cst_36 = arith.constant dense<0.000000e+00> : vector<256x128xf32>
    %52 = tpu.matmul %50, %51, %cst_36 {dimension_numbers = #tpu.dot_dimension_numbers<[1], [0], [0], [1], [0, 0, 1, 1], [], []>} : vector<256x384xbf16>, vector<384x128xbf16>, vector<256x128xf32> -> vector<256x128xf32>
    %cst_37 = arith.constant 0.000000e+00 : f32
    %53 = vector.broadcast %cst_37 : f32 to vector<1x128xf32>
    %54 = vector.extract_strided_slice %52 {offsets = [1, 0], sizes = [255, 128], strides = [1, 1]} : vector<256x128xf32> to vector<255x128xf32>
    %55 = tpu.concatenate %54, %53 in 0 : vector<255x128xf32>, vector<1x128xf32> -> vector<256x128xf32>
    %56 = arith.addf %52, %55 : vector<256x128xf32>
    %cst_38 = arith.constant 0.000000e+00 : f32
    %57 = vector.broadcast %cst_38 : f32 to vector<2x128xf32>
    %58 = vector.extract_strided_slice %52 {offsets = [2, 0], sizes = [254, 128], strides = [1, 1]} : vector<256x128xf32> to vector<254x128xf32>
    %59 = tpu.concatenate %58, %57 in 0 : vector<254x128xf32>, vector<2x128xf32> -> vector<256x128xf32>
    %60 = arith.addf %56, %59 : vector<256x128xf32>
    %c0_39 = arith.constant 0 : index
    %c0_40 = arith.constant 0 : index
    %61 = vector.load %arg12[%c0_39, %c0_40] : memref<256x128xf32, #tpu.memory_space<vmem>>, vector<256x128xf32>
    tpu.vector_store %arg12[%c0_39, %c0_40], %60 {strides = array<i32>} : memref<256x128xf32, #tpu.memory_space<vmem>>, vector<256x128xf32>,
    %cst_41 = arith.constant 0.000000e+00 : f32
    %62 = vector.broadcast %cst_41 : f32 to vector<8x512xf32>
    %c0_42 = arith.constant 0 : index
    %c0_43 = arith.constant 0 : index
    %63 = tpu.strided_load %arg12[%c0_42, %c0_43] {strides = array<i32: 32, 1>} : memref<256x128xf32, #tpu.memory_space<vmem>>, vector<8x128xf32>
    %cst_44 = arith.constant 0.111111112 : f32
    %64 = vector.broadcast %cst_44 : f32 to vector<8x128xf32>
    %65 = arith.mulf %64, %63 : vector<8x128xf32>
    %66 = arith.truncf %65 : vector<8x128xf32> to vector<8x128xbf16>
    %c0_45 = arith.constant 0 : index
    %c0_46 = arith.constant 0 : index
    %c0_47 = arith.constant 0 : index
    %67 = vector.load %arg7[%c0_45, %c0_46, %c0_47] : memref<8x128x512xbf16, #tpu.memory_space<vmem>>, vector<1x128x512xbf16>
    %68 = vector.shape_cast %67 : vector<1x128x512xbf16> to vector<128x512xbf16>
    %cst_48 = arith.constant dense<0.000000e+00> : vector<8x512xf32>
    %69 = tpu.matmul %66, %68, %cst_48 {dimension_numbers = #tpu.dot_dimension_numbers<[1], [0], [0], [1], [0, 0, 1, 1], [], []>} : vector<8x128xbf16>, vector<128x512xbf16>, vector<8x512xf32> -> vector<8x512xf32>
    %70 = arith.addf %62, %69 : vector<8x512xf32>
    %c3 = arith.constant 3 : index
    %c0_49 = arith.constant 0 : index
    %71 = tpu.strided_load %arg12[%c3, %c0_49] {strides = array<i32: 32, 1>} : memref<256x128xf32, #tpu.memory_space<vmem>>, vector<8x128xf32>
    %cst_50 = arith.constant 0.111111112 : f32
    %72 = vector.broadcast %cst_50 : f32 to vector<8x128xf32>
    %73 = arith.mulf %72, %71 : vector<8x128xf32>
    %74 = arith.truncf %73 : vector<8x128xf32> to vector<8x128xbf16>
    %c1_51 = arith.constant 1 : index
    %c0_52 = arith.constant 0 : index
    %c0_53 = arith.constant 0 : index
    %75 = vector.load %arg7[%c1_51, %c0_52, %c0_53] : memref<8x128x512xbf16, #tpu.memory_space<vmem>>, vector<1x128x512xbf16>
    %76 = vector.shape_cast %75 : vector<1x128x512xbf16> to vector<128x512xbf16>
    %cst_54 = arith.constant dense<0.000000e+00> : vector<8x512xf32>
    %77 = tpu.matmul %74, %76, %cst_54 {dimension_numbers = #tpu.dot_dimension_numbers<[1], [0], [0], [1], [0, 0, 1, 1], [], []>} : vector<8x128xbf16>, vector<128x512xbf16>, vector<8x512xf32> -> vector<8x512xf32>
    %78 = arith.addf %70, %77 : vector<8x512xf32>
    %c6 = arith.constant 6 : index
    %c0_55 = arith.constant 0 : index
    %79 = tpu.strided_load %arg12[%c6, %c0_55] {strides = array<i32: 32, 1>} : memref<256x128xf32, #tpu.memory_space<vmem>>, vector<8x128xf32>
    %cst_56 = arith.constant 0.111111112 : f32
    %80 = vector.broadcast %cst_56 : f32 to vector<8x128xf32>
    %81 = arith.mulf %80, %79 : vector<8x128xf32>
    %82 = arith.truncf %81 : vector<8x128xf32> to vector<8x128xbf16>
    %c2_57 = arith.constant 2 : index
    %c0_58 = arith.constant 0 : index
    %c0_59 = arith.constant 0 : index
    %83 = vector.load %arg7[%c2_57, %c0_58, %c0_59] : memref<8x128x512xbf16, #tpu.memory_space<vmem>>, vector<1x128x512xbf16>
    %84 = vector.shape_cast %83 : vector<1x128x512xbf16> to vector<128x512xbf16>
    %cst_60 = arith.constant dense<0.000000e+00> : vector<8x512xf32>
    %85 = tpu.matmul %82, %84, %cst_60 {dimension_numbers = #tpu.dot_dimension_numbers<[1], [0], [0], [1], [0, 0, 1, 1], [], []>} : vector<8x128xbf16>, vector<128x512xbf16>, vector<8x512xf32> -> vector<8x512xf32>
    %86 = arith.addf %78, %85 : vector<8x512xf32>
    %c9 = arith.constant 9 : index
    %c0_61 = arith.constant 0 : index
    %87 = tpu.strided_load %arg12[%c9, %c0_61] {strides = array<i32: 32, 1>} : memref<256x128xf32, #tpu.memory_space<vmem>>, vector<8x128xf32>
    %cst_62 = arith.constant 0.111111112 : f32
    %88 = vector.broadcast %cst_62 : f32 to vector<8x128xf32>
    %89 = arith.mulf %88, %87 : vector<8x128xf32>
    %90 = arith.truncf %89 : vector<8x128xf32> to vector<8x128xbf16>
    %c3_63 = arith.constant 3 : index
    %c0_64 = arith.constant 0 : index
    %c0_65 = arith.constant 0 : index
    %91 = vector.load %arg7[%c3_63, %c0_64, %c0_65] : memref<8x128x512xbf16, #tpu.memory_space<vmem>>, vector<1x128x512xbf16>
    %92 = vector.shape_cast %91 : vector<1x128x512xbf16> to vector<128x512xbf16>
    %cst_66 = arith.constant dense<0.000000e+00> : vector<8x512xf32>
    %93 = tpu.matmul %90, %92, %cst_66 {dimension_numbers = #tpu.dot_dimension_numbers<[1], [0], [0], [1], [0, 0, 1, 1], [], []>} : vector<8x128xbf16>, vector<128x512xbf16>, vector<8x512xf32> -> vector<8x512xf32>
    %94 = arith.addf %86, %93 : vector<8x512xf32>
    %c12 = arith.constant 12 : index
    %c0_67 = arith.constant 0 : index
    %95 = tpu.strided_load %arg12[%c12, %c0_67] {strides = array<i32: 32, 1>} : memref<256x128xf32, #tpu.memory_space<vmem>>, vector<8x128xf32>
    %cst_68 = arith.constant 0.111111112 : f32
    %96 = vector.broadcast %cst_68 : f32 to vector<8x128xf32>
    %97 = arith.mulf %96, %95 : vector<8x128xf32>
    %98 = arith.truncf %97 : vector<8x128xf32> to vector<8x128xbf16>
    %c4 = arith.constant 4 : index
    %c0_69 = arith.constant 0 : index
    %c0_70 = arith.constant 0 : index
    %99 = vector.load %arg7[%c4, %c0_69, %c0_70] : memref<8x128x512xbf16, #tpu.memory_space<vmem>>, vector<1x128x512xbf16>
    %100 = vector.shape_cast %99 : vector<1x128x512xbf16> to vector<128x512xbf16>
    %cst_71 = arith.constant dense<0.000000e+00> : vector<8x512xf32>
    %101 = tpu.matmul %98, %100, %cst_71 {dimension_numbers = #tpu.dot_dimension_numbers<[1], [0], [0], [1], [0, 0, 1, 1], [], []>} : vector<8x128xbf16>, vector<128x512xbf16>, vector<8x512xf32> -> vector<8x512xf32>
    %102 = arith.addf %94, %101 : vector<8x512xf32>
    %c15 = arith.constant 15 : index
    %c0_72 = arith.constant 0 : index
    %103 = tpu.strided_load %arg12[%c15, %c0_72] {strides = array<i32: 32, 1>} : memref<256x128xf32, #tpu.memory_space<vmem>>, vector<8x128xf32>
    %cst_73 = arith.constant 0.111111112 : f32
    %104 = vector.broadcast %cst_73 : f32 to vector<8x128xf32>
    %105 = arith.mulf %104, %103 : vector<8x128xf32>
    %106 = arith.truncf %105 : vector<8x128xf32> to vector<8x128xbf16>
    %c5 = arith.constant 5 : index
    %c0_74 = arith.constant 0 : index
    %c0_75 = arith.constant 0 : index
    %107 = vector.load %arg7[%c5, %c0_74, %c0_75] : memref<8x128x512xbf16, #tpu.memory_space<vmem>>, vector<1x128x512xbf16>
    %108 = vector.shape_cast %107 : vector<1x128x512xbf16> to vector<128x512xbf16>
    %cst_76 = arith.constant dense<0.000000e+00> : vector<8x512xf32>
    %109 = tpu.matmul %106, %108, %cst_76 {dimension_numbers = #tpu.dot_dimension_numbers<[1], [0], [0], [1], [0, 0, 1, 1], [], []>} : vector<8x128xbf16>, vector<128x512xbf16>, vector<8x512xf32> -> vector<8x512xf32>
    %110 = arith.addf %102, %109 : vector<8x512xf32>
    %c18 = arith.constant 18 : index
    %c0_77 = arith.constant 0 : index
    %111 = tpu.strided_load %arg12[%c18, %c0_77] {strides = array<i32: 32, 1>} : memref<256x128xf32, #tpu.memory_space<vmem>>, vector<8x128xf32>
    %cst_78 = arith.constant 0.111111112 : f32
    %112 = vector.broadcast %cst_78 : f32 to vector<8x128xf32>
    %113 = arith.mulf %112, %111 : vector<8x128xf32>
    %114 = arith.truncf %113 : vector<8x128xf32> to vector<8x128xbf16>
    %c6_79 = arith.constant 6 : index
    %c0_80 = arith.constant 0 : index
    %c0_81 = arith.constant 0 : index
    %115 = vector.load %arg7[%c6_79, %c0_80, %c0_81] : memref<8x128x512xbf16, #tpu.memory_space<vmem>>, vector<1x128x512xbf16>
    %116 = vector.shape_cast %115 : vector<1x128x512xbf16> to vector<128x512xbf16>
    %cst_82 = arith.constant dense<0.000000e+00> : vector<8x512xf32>
    %117 = tpu.matmul %114, %116, %cst_82 {dimension_numbers = #tpu.dot_dimension_numbers<[1], [0], [0], [1], [0, 0, 1, 1], [], []>} : vector<8x128xbf16>, vector<128x512xbf16>, vector<8x512xf32> -> vector<8x512xf32>
    %118 = arith.addf %110, %117 : vector<8x512xf32>
    %c21 = arith.constant 21 : index
    %c0_83 = arith.constant 0 : index
    %119 = tpu.strided_load %arg12[%c21, %c0_83] {strides = array<i32: 32, 1>} : memref<256x128xf32, #tpu.memory_space<vmem>>, vector<8x128xf32>
    %cst_84 = arith.constant 0.111111112 : f32
    %120 = vector.broadcast %cst_84 : f32 to vector<8x128xf32>
    %121 = arith.mulf %120, %119 : vector<8x128xf32>
    %122 = arith.truncf %121 : vector<8x128xf32> to vector<8x128xbf16>
    %c7 = arith.constant 7 : index
    %c0_85 = arith.constant 0 : index
    %c0_86 = arith.constant 0 : index
    %123 = vector.load %arg7[%c7, %c0_85, %c0_86] : memref<8x128x512xbf16, #tpu.memory_space<vmem>>, vector<1x128x512xbf16>
    %124 = vector.shape_cast %123 : vector<1x128x512xbf16> to vector<128x512xbf16>
    %cst_87 = arith.constant dense<0.000000e+00> : vector<8x512xf32>
    %125 = tpu.matmul %122, %124, %cst_87 {dimension_numbers = #tpu.dot_dimension_numbers<[1], [0], [0], [1], [0, 0, 1, 1], [], []>} : vector<8x128xbf16>, vector<128x512xbf16>, vector<8x512xf32> -> vector<8x512xf32>
    %126 = arith.addf %118, %125 : vector<8x512xf32>
    %c0_88 = arith.constant 0 : index
    %c0_89 = arith.constant 0 : index
    %127 = vector.load %arg8[%c0_88, %c0_89] : memref<1x512xf32, #tpu.memory_space<vmem>>, vector<1x512xf32>
    %128 = vector.broadcast %127 : vector<1x512xf32> to vector<8x512xf32>
    %129 = arith.addf %126, %128 : vector<8x512xf32>
    %cst_90 = arith.constant 0.000000e+00 : f32
    %130 = vector.broadcast %cst_90 : f32 to vector<8x512xf32>
    %131 = arith.maximumf %129, %130 : vector<8x512xf32>
    %132 = arith.truncf %131 : vector<8x512xf32> to vector<8x512xbf16>
    %c0_91 = arith.constant 0 : index
    %c0_92 = arith.constant 0 : index
    %133 = vector.load %arg9[%c0_91, %c0_92] : memref<512x128xbf16, #tpu.memory_space<vmem>>, vector<512x128xbf16>
    %cst_93 = arith.constant dense<0.000000e+00> : vector<8x128xf32>
    %134 = tpu.matmul %132, %133, %cst_93 {dimension_numbers = #tpu.dot_dimension_numbers<[1], [0], [0], [1], [0, 0, 1, 1], [], []>} : vector<8x512xbf16>, vector<512x128xbf16>, vector<8x128xf32> -> vector<8x128xf32>
    %c0_94 = arith.constant 0 : index
    %c0_95 = arith.constant 0 : index
    %135 = vector.load %arg10[%c0_94, %c0_95] : memref<1x128xf32, #tpu.memory_space<vmem>>, vector<1x128xf32>
    %136 = vector.broadcast %135 : vector<1x128xf32> to vector<8x128xf32>
    %137 = arith.addf %134, %136 : vector<8x128xf32>
    %c0_96 = arith.constant 0 : index
    %c0_97 = arith.constant 0 : index
    %138 = vector.load %arg11[%c0_96, %c0_97] : memref<8x128xf32, #tpu.memory_space<vmem>>, vector<8x128xf32>
    tpu.vector_store %arg11[%c0_96, %c0_97], %137 {strides = array<i32>} : memref<8x128xf32, #tpu.memory_space<vmem>>, vector<8x128xf32>,
    return
  }
  func.func @transform_0(%arg0: i32) -> (i32, i32) {
    %c0_i32 = arith.constant 0 : i32
    %c0_i32_0 = arith.constant 0 : i32
    return %arg0, %c0_i32 : i32, i32
  }
  func.func @transform_1(%arg0: i32) -> (i32, i32, i32) {
    %c0_i32 = arith.constant 0 : i32
    %c0_i32_0 = arith.constant 0 : i32
    %c0_i32_1 = arith.constant 0 : i32
    %c0_i32_2 = arith.constant 0 : i32
    return %c0_i32, %c0_i32_0, %c0_i32_1 : i32, i32, i32
  }
  func.func @transform_2(%arg0: i32) -> (i32, i32) {
    %c0_i32 = arith.constant 0 : i32
    %c0_i32_0 = arith.constant 0 : i32
    %c0_i32_1 = arith.constant 0 : i32
    return %c0_i32, %c0_i32_0 : i32, i32
  }
  func.func @transform_3(%arg0: i32) -> (i32, i32, i32) {
    %c0_i32 = arith.constant 0 : i32
    %c0_i32_0 = arith.constant 0 : i32
    %c0_i32_1 = arith.constant 0 : i32
    %c0_i32_2 = arith.constant 0 : i32
    return %c0_i32, %c0_i32_0, %c0_i32_1 : i32, i32, i32
  }
  func.func @transform_4(%arg0: i32) -> (i32, i32) {
    %c0_i32 = arith.constant 0 : i32
    %c0_i32_0 = arith.constant 0 : i32
    %c0_i32_1 = arith.constant 0 : i32
    return %c0_i32, %c0_i32_0 : i32, i32
  }
  func.func @transform_5(%arg0: i32) -> (i32, i32) {
    %c0_i32 = arith.constant 0 : i32
    %c0_i32_0 = arith.constant 0 : i32
    %c0_i32_1 = arith.constant 0 : i32
    return %c0_i32, %c0_i32_0 : i32, i32
  }
  func.func @transform_6(%arg0: i32) -> (i32, i32, i32) {
    %c0_i32 = arith.constant 0 : i32
    %c0_i32_0 = arith.constant 0 : i32
    %c0_i32_1 = arith.constant 0 : i32
    %c0_i32_2 = arith.constant 0 : i32
    return %c0_i32, %c0_i32_0, %c0_i32_1 : i32, i32, i32
  }
  func.func @transform_7(%arg0: i32) -> (i32, i32) {
    %c0_i32 = arith.constant 0 : i32
    %c0_i32_0 = arith.constant 0 : i32
    %c0_i32_1 = arith.constant 0 : i32
    return %c0_i32, %c0_i32_0 : i32, i32
  }
  func.func @transform_8(%arg0: i32) -> (i32, i32) {
    %c0_i32 = arith.constant 0 : i32
    %c0_i32_0 = arith.constant 0 : i32
    %c0_i32_1 = arith.constant 0 : i32
    return %c0_i32, %c0_i32_0 : i32, i32
  }
  func.func @transform_9(%arg0: i32) -> (i32, i32) {
    %c0_i32 = arith.constant 0 : i32
    %c0_i32_0 = arith.constant 0 : i32
    %c0_i32_1 = arith.constant 0 : i32
    return %c0_i32, %c0_i32_0 : i32, i32
  }
  func.func @transform_10(%arg0: i32) -> (i32, i32) {
    %c0_i32 = arith.constant 0 : i32
    %c0_i32_0 = arith.constant 0 : i32
    return %arg0, %c0_i32 : i32, i32
  }
}

</mosaic_0001>

<llo_original>
// kernel: tpu_custom_call.1
$region0: #{tpu_custom_call.1}
  #allocation0 [shape = 'u32[]', space=smem, size = 0x4, offset = 0x4, fixed_abs, tag = 'smem constant byte address 0x4 - core index']
  #allocation1 [shape = 'u32[144,128]{1,0:T(1,128)}', space=vmem, size = 0x12000, scoped, tag = 'internal scratch']
  #allocation2 [shape = 'f32[256,128]{1,0:T(8,128)}', space=vmem, size = 0x20000, scoped, tag = 'scratch operand']
  %s0 = inlined_call_operand.vmem [shape: bf16[512,28], index: 0, kind: input, shape index: {}]
  %s1 = inlined_call_operand.hbm [shape: bf16[3,28,208], index: 1, kind: input, shape index: {}]
  %s2 = inlined_call_operand.vmem [shape: f32[1,208], index: 2, kind: input, shape index: {}]
  %s3 = inlined_call_operand.hbm [shape: bf16[3,208,384], index: 3, kind: input, shape index: {}]
  %s4 = inlined_call_operand.vmem [shape: f32[1,384], index: 4, kind: input, shape index: {}]
  %s5 = inlined_call_operand.hbm [shape: bf16[384,128], index: 5, kind: input, shape index: {}]
  %s6 = inlined_call_operand.hbm [shape: bf16[8,128,512], index: 6, kind: input, shape index: {}]
  %s7 = inlined_call_operand.vmem [shape: f32[1,512], index: 7, kind: input, shape index: {}]
  %s8 = inlined_call_operand.vmem [shape: bf16[512,128], index: 8, kind: input, shape index: {}]
  %s9 = inlined_call_operand.vmem [shape: f32[1,128], index: 9, kind: input, shape index: {}]
  %s10 = inlined_call_operand.hbm [shape: f32[16,128], index: 10, kind: output, shape index: {}]
  %s11 = sld [smem:[#allocation0]]
  $region89: #{tpu_custom_call.1} parent=0
    _
  %s13 = ssub.s32 1, %s11
  %s14 = scalar_select 0, %s13, %s11
  $region1: #{tpu_custom_call.1} parent=0
    #allocation3 [shape = 'u8[49152]{0}', space=vmem, size = 0xc000, scoped, tag = 'input window, operand 1, single buffered']
    #allocation4 [shape = 's32[2]{0}', space=sflag, size = 0x8, scoped, tag = 'scoped memory for tpu_custom_call.1']
    #allocation5 [shape = 's32[2]{0}', space=sflag, size = 0x8, scoped, tag = 'scoped memory for tpu_custom_call.1']
    #allocation6 [shape = 'u8[479232]{0}', space=vmem, size = 0x75000, scoped, tag = 'input window, operand 3, single buffered']
    #allocation7 [shape = 's32[1]{0}', space=sflag, size = 0x4, scoped, tag = 'scoped memory for tpu_custom_call.1']
    #allocation8 [shape = 'u8[98304]{0}', space=vmem, size = 0x18000, scoped, tag = 'input window, operand 5, single buffered']
    #allocation9 [shape = 'u8[1048576]{0}', space=vmem, size = 0x100000, scoped, tag = 'input window, operand 6, single buffered']
    #allocation10 [shape = 's32[1]{0}', space=sflag, size = 0x4, scoped, tag = 'scoped memory for tpu_custom_call.1']
    #allocation11 [shape = 'u8[8192]{0}', space=vmem, size = 0x2000, scoped, tag = 'output window, operand 0']
    %15 = vsyncpa [#allocation4], 0
    %16 = vsyncpa [#allocation7], 0
    %17 = vsyncpa [#allocation10], 0
    %18 = vsyncpa [#allocation5], 0
    %s19 = scalar_lea.sflag [#allocation5], 1
    %20 = vsyncpa %s19, 0
    loop: start=0, step=1, limit=4
    $region2: #{tpu_custom_call.1} parent=1 // loop_pre_header
      _
    $region3: #{tpu_custom_call.1} parent=1 // loop_header
      %s22 = sphi 0, %s26
      %p23 = scmp.ge.s32.totalorder %s22, 4
      %s32 = sphi 0, %s34
      %s35 = sphi 0, %s32
      %s36 = sphi 0, %s35
      %s52 = sphi 0, %s36
      %s56 = sphi 0, %s56
      %s58 = sphi 0, %s56
      %s59 = sphi 0, %s58
      %s73 = sphi 0, %s59
      %s77 = sphi 0, %s77
      %s79 = sphi 0, %s77
      %s80 = sphi 0, %s79
      %s94 = sphi 0, %s80
      %s98 = sphi 0, %s98
      %s100 = sphi 0, %s98
      %s101 = sphi 0, %s100
      %s115 = sphi 0, %s101
      %s119 = sphi 0, %s119
      %s121 = sphi 0, %s119
      %s122 = sphi 0, %s121
      %s136 = sphi 0, %s122
      %s140 = sphi 0, %s140
      %s142 = sphi 0, %s140
      %s143 = sphi 0, %s142
      %s157 = sphi 0, %s143
      %s161 = sphi 0, %s161
      %s163 = sphi 0, %s161
      %s164 = sphi 0, %s163
      %s178 = sphi 0, %s164
      %s182 = sphi 0, %s182
      %s184 = sphi 0, %s182
      %s185 = sphi 0, %s184
      %s199 = sphi 0, %s185
      %s203 = sphi 0, %s203
      %s205 = sphi 0, %s203
      %s206 = sphi 0, %s205
      %s220 = sphi 0, %s206
      %s224 = sphi 0, %s224
      %s226 = sphi 0, %s224
      %s227 = sphi 0, %s226
      %s241 = sphi 0, %s227
      %s247 = sphi 0, %s249
      %s250 = sphi 0, %s247
      %s251 = sphi 0, %s250
      %s267 = sphi 0, %s251
    $region4: #{tpu_custom_call.1} parent=1 // loop_header_branch
      %25 = sbr.rel (%p23) target = $region8
    $region5: #{tpu_custom_call.1} parent=1 // loop_body
      %s27 = ssub.s32 %s22, 1
      %s28 = ssub.s32 %s22, 2
      %s29 = sadd.s32 %s22, 1
      %s30 = ssub.s32 %s22, %s29
      %p31 = scmp.eq.s32.totalorder %s30, 0
      %s33 = sadd.s32 %s32, 1
      %s34 = scalar_select %p31, %s32, %s33
      %p37 = pneg %p31
      %p38 = scmp.eq.s32.totalorder %s22, 1
      %p39 = por %p37, %p38
      %p40 = scmp.ne.s32.totalorder %s32, %s35
      %p41 = scmp.eq.s32.totalorder %s22, 0
      %p42 = por %p40, %p41
      %p43 = scmp.ne.s32.totalorder %s32, %s35
      %p44 = scmp.eq.s32.totalorder %s27, 1
      %p45 = por %p43, %p44
      %p46 = scmp.ne.s32.totalorder %s35, %s36
      %p47 = scmp.eq.s32.totalorder %s27, 0
      %p48 = por %p46, %p47
      %p49 = scmp.ne.s32.totalorder %s35, %s36
      %p50 = scmp.eq.s32.totalorder %s28, 1
      %p51 = por %p49, %p50
      %p53 = scmp.ne.s32.totalorder %s36, %s52
      %p54 = scmp.eq.s32.totalorder %s28, 0
      %p55 = por %p53, %p54
      %s57 = sadd.s32 %s56, 1
      %p60 = scmp.eq.s32.totalorder %s22, 1
      %p61 = scmp.ne.s32.totalorder %s56, %s58
      %p62 = scmp.eq.s32.totalorder %s22, 0
      %p63 = por %p61, %p62
      %p64 = scmp.ne.s32.totalorder %s56, %s58
      %p65 = scmp.eq.s32.totalorder %s27, 1
      %p66 = por %p64, %p65
      %p67 = scmp.ne.s32.totalorder %s58, %s59
      %p68 = scmp.eq.s32.totalorder %s27, 0
      %p69 = por %p67, %p68
      %p70 = scmp.ne.s32.totalorder %s58, %s59
      %p71 = scmp.eq.s32.totalorder %s28, 1
      %p72 = por %p70, %p71
      %p74 = scmp.ne.s32.totalorder %s59, %s73
      %p75 = scmp.eq.s32.totalorder %s28, 0
      %p76 = por %p74, %p75
      %s78 = sadd.s32 %s77, 1
      %p81 = scmp.eq.s32.totalorder %s22, 1
      %p82 = scmp.ne.s32.totalorder %s77, %s79
      %p83 = scmp.eq.s32.totalorder %s22, 0
      %p84 = por %p82, %p83
      %p85 = scmp.ne.s32.totalorder %s77, %s79
      %p86 = scmp.eq.s32.totalorder %s27, 1
      %p87 = por %p85, %p86
      %p88 = scmp.ne.s32.totalorder %s79, %s80
      %p89 = scmp.eq.s32.totalorder %s27, 0
      %p90 = por %p88, %p89
      %p91 = scmp.ne.s32.totalorder %s79, %s80
      %p92 = scmp.eq.s32.totalorder %s28, 1
      %p93 = por %p91, %p92
      %p95 = scmp.ne.s32.totalorder %s80, %s94
      %p96 = scmp.eq.s32.totalorder %s28, 0
      %p97 = por %p95, %p96
      %s99 = sadd.s32 %s98, 1
      %p102 = scmp.eq.s32.totalorder %s22, 1
      %p103 = scmp.ne.s32.totalorder %s98, %s100
      %p104 = scmp.eq.s32.totalorder %s22, 0
      %p105 = por %p103, %p104
      %p106 = scmp.ne.s32.totalorder %s98, %s100
      %p107 = scmp.eq.s32.totalorder %s27, 1
      %p108 = por %p106, %p107
      %p109 = scmp.ne.s32.totalorder %s100, %s101
      %p110 = scmp.eq.s32.totalorder %s27, 0
      %p111 = por %p109, %p110
      %p112 = scmp.ne.s32.totalorder %s100, %s101
      %p113 = scmp.eq.s32.totalorder %s28, 1
      %p114 = por %p112, %p113
      %p116 = scmp.ne.s32.totalorder %s101, %s115
      %p117 = scmp.eq.s32.totalorder %s28, 0
      %p118 = por %p116, %p117
      %s120 = sadd.s32 %s119, 1
      %p123 = scmp.eq.s32.totalorder %s22, 1
      %p124 = scmp.ne.s32.totalorder %s119, %s121
      %p125 = scmp.eq.s32.totalorder %s22, 0
      %p126 = por %p124, %p125
      %p127 = scmp.ne.s32.totalorder %s119, %s121
      %p128 = scmp.eq.s32.totalorder %s27, 1
      %p129 = por %p127, %p128
      %p130 = scmp.ne.s32.totalorder %s121, %s122
      %p131 = scmp.eq.s32.totalorder %s27, 0
      %p132 = por %p130, %p131
      %p133 = scmp.ne.s32.totalorder %s121, %s122
      %p134 = scmp.eq.s32.totalorder %s28, 1
      %p135 = por %p133, %p134
      %p137 = scmp.ne.s32.totalorder %s122, %s136
      %p138 = scmp.eq.s32.totalorder %s28, 0
      %p139 = por %p137, %p138
      %s141 = sadd.s32 %s140, 1
      %p144 = scmp.eq.s32.totalorder %s22, 1
      %p145 = scmp.ne.s32.totalorder %s140, %s142
      %p146 = scmp.eq.s32.totalorder %s22, 0
      %p147 = por %p145, %p146
      %p148 = scmp.ne.s32.totalorder %s140, %s142
      %p149 = scmp.eq.s32.totalorder %s27, 1
      %p150 = por %p148, %p149
      %p151 = scmp.ne.s32.totalorder %s142, %s143
      %p152 = scmp.eq.s32.totalorder %s27, 0
      %p153 = por %p151, %p152
      %p154 = scmp.ne.s32.totalorder %s142, %s143
      %p155 = scmp.eq.s32.totalorder %s28, 1
      %p156 = por %p154, %p155
      %p158 = scmp.ne.s32.totalorder %s143, %s157
      %p159 = scmp.eq.s32.totalorder %s28, 0
      %p160 = por %p158, %p159
      %s162 = sadd.s32 %s161, 1
      %p165 = scmp.eq.s32.totalorder %s22, 1
      %p166 = scmp.ne.s32.totalorder %s161, %s163
      %p167 = scmp.eq.s32.totalorder %s22, 0
      %p168 = por %p166, %p167
      %p169 = scmp.ne.s32.totalorder %s161, %s163
      %p170 = scmp.eq.s32.totalorder %s27, 1
      %p171 = por %p169, %p170
      %p172 = scmp.ne.s32.totalorder %s163, %s164
      %p173 = scmp.eq.s32.totalorder %s27, 0
      %p174 = por %p172, %p173
      %p175 = scmp.ne.s32.totalorder %s163, %s164
      %p176 = scmp.eq.s32.totalorder %s28, 1
      %p177 = por %p175, %p176
      %p179 = scmp.ne.s32.totalorder %s164, %s178
      %p180 = scmp.eq.s32.totalorder %s28, 0
      %p181 = por %p179, %p180
      %s183 = sadd.s32 %s182, 1
      %p186 = scmp.eq.s32.totalorder %s22, 1
      %p187 = scmp.ne.s32.totalorder %s182, %s184
      %p188 = scmp.eq.s32.totalorder %s22, 0
      %p189 = por %p187, %p188
      %p190 = scmp.ne.s32.totalorder %s182, %s184
      %p191 = scmp.eq.s32.totalorder %s27, 1
      %p192 = por %p190, %p191
      %p193 = scmp.ne.s32.totalorder %s184, %s185
      %p194 = scmp.eq.s32.totalorder %s27, 0
      %p195 = por %p193, %p194
      %p196 = scmp.ne.s32.totalorder %s184, %s185
      %p197 = scmp.eq.s32.totalorder %s28, 1
      %p198 = por %p196, %p197
      %p200 = scmp.ne.s32.totalorder %s185, %s199
      %p201 = scmp.eq.s32.totalorder %s28, 0
      %p202 = por %p200, %p201
      %s204 = sadd.s32 %s203, 1
      %p207 = scmp.eq.s32.totalorder %s22, 1
      %p208 = scmp.ne.s32.totalorder %s203, %s205
      %p209 = scmp.eq.s32.totalorder %s22, 0
      %p210 = por %p208, %p209
      %p211 = scmp.ne.s32.totalorder %s203, %s205
      %p212 = scmp.eq.s32.totalorder %s27, 1
      %p213 = por %p211, %p212
      %p214 = scmp.ne.s32.totalorder %s205, %s206
      %p215 = scmp.eq.s32.totalorder %s27, 0
      %p216 = por %p214, %p215
      %p217 = scmp.ne.s32.totalorder %s205, %s206
      %p218 = scmp.eq.s32.totalorder %s28, 1
      %p219 = por %p217, %p218
      %p221 = scmp.ne.s32.totalorder %s206, %s220
      %p222 = scmp.eq.s32.totalorder %s28, 0
      %p223 = por %p221, %p222
      %s225 = sadd.s32 %s224, 1
      %p228 = scmp.eq.s32.totalorder %s22, 1
      %p229 = scmp.ne.s32.totalorder %s224, %s226
      %p230 = scmp.eq.s32.totalorder %s22, 0
      %p231 = por %p229, %p230
      %p232 = scmp.ne.s32.totalorder %s224, %s226
      %p233 = scmp.eq.s32.totalorder %s27, 1
      %p234 = por %p232, %p233
      %p235 = scmp.ne.s32.totalorder %s226, %s227
      %p236 = scmp.eq.s32.totalorder %s27, 0
      %p237 = por %p235, %p236
      %p238 = scmp.ne.s32.totalorder %s226, %s227
      %p239 = scmp.eq.s32.totalorder %s28, 1
      %p240 = por %p238, %p239
      %p242 = scmp.ne.s32.totalorder %s227, %s241
      %p243 = scmp.eq.s32.totalorder %s28, 0
      %p244 = por %p242, %p243
      %s245 = ssub.s32 %s22, %s29
      %p246 = scmp.eq.s32.totalorder %s245, 0
      %s248 = sadd.s32 %s247, 1
      %s249 = scalar_select %p246, %s247, %s248
      %p252 = pneg %p246
      %p253 = scmp.eq.s32.totalorder %s22, 1
      %p254 = por %p252, %p253
      %p255 = scmp.ne.s32.totalorder %s247, %s250
      %p256 = scmp.eq.s32.totalorder %s22, 0
      %p257 = por %p255, %p256
      %p258 = scmp.ne.s32.totalorder %s247, %s250
      %p259 = scmp.eq.s32.totalorder %s27, 1
      %p260 = por %p258, %p259
      %p261 = scmp.ne.s32.totalorder %s250, %s251
      %p262 = scmp.eq.s32.totalorder %s27, 0
      %p263 = por %p261, %p262
      %p264 = scmp.ne.s32.totalorder %s250, %s251
      %p265 = scmp.eq.s32.totalorder %s28, 1
      %p266 = por %p264, %p265
      %p268 = scmp.ne.s32.totalorder %s251, %s267
      %p269 = scmp.eq.s32.totalorder %s28, 0
      %p270 = por %p268, %p269
      %p271 = scmp.le.s32.totalorder 1, %s22
      %p272 = scmp.lt.s32.totalorder %s22, 3
      %p273 = pnand %p271, %p272
      %p274 = pneg %p273
      // Predicated region
      $region9: #{tpu_custom_call.1} parent=5 // pred_check
        _
      $region10: #{tpu_custom_call.1} parent=5 // pred_check_branch
        %276 = sbr.rel (%p273) target = $region12
      $region11: #{tpu_custom_call.1} parent=5 // pred_region
        %s277 = ssub.s32 %s22, 1
        // Predicated region
        $region13: #{tpu_custom_call.1} parent=11 // pred_check
          %p278 = pneg %p69
        $region14: #{tpu_custom_call.1} parent=11 // pred_check_branch
          %280 = sbr.rel (%p278) target = $region16
        $region15: #{tpu_custom_call.1} parent=11 // pred_region
          %s282 = ssub.s32 1536, 1536
          %283 = vsyncadd [#allocation4], %s282
          %s284 = sshll.u32 [#allocation3], 4
          %s285 = int_to_ptr.vmem [resolvable:$true] %s284
          %290 = dma.hbm_to_vmem [thread:$0]  %s1, 1536, %s285, [#allocation4], 128, 128, 8
        $region16: #{tpu_custom_call.1} parent=11 // pred_fallthru
          _
        // Predicated region
        $region17: #{tpu_custom_call.1} parent=11 // pred_check
          %p291 = pneg %p90
        $region18: #{tpu_custom_call.1} parent=11 // pred_check_branch
          %293 = sbr.rel (%p291) target = $region20
        $region19: #{tpu_custom_call.1} parent=11 // pred_region
          _
        $region20: #{tpu_custom_call.1} parent=11 // pred_fallthru
          _
        // Predicated region
        $region21: #{tpu_custom_call.1} parent=11 // pred_check
          %p294 = pneg %p111
        $region22: #{tpu_custom_call.1} parent=11 // pred_check_branch
          %296 = sbr.rel (%p294) target = $region24
        $region23: #{tpu_custom_call.1} parent=11 // pred_region
          %s298 = ssub.s32 14976, 14976
          %299 = vsyncadd [#allocation7], %s298
          %s300 = sshll.u32 [#allocation6], 4
          %s301 = int_to_ptr.vmem [resolvable:$true] %s300
          %306 = dma.hbm_to_vmem [thread:$0]  %s3, 14976, %s301, [#allocation7], 192, 192, 12
        $region24: #{tpu_custom_call.1} parent=11 // pred_fallthru
          _
        // Predicated region
        $region25: #{tpu_custom_call.1} parent=11 // pred_check
          %p307 = pneg %p132
        $region26: #{tpu_custom_call.1} parent=11 // pred_check_branch
          %309 = sbr.rel (%p307) target = $region28
        $region27: #{tpu_custom_call.1} parent=11 // pred_region
          _
        $region28: #{tpu_custom_call.1} parent=11 // pred_fallthru
          _
        // Predicated region
        $region29: #{tpu_custom_call.1} parent=11 // pred_check
          %p310 = pneg %p153
        $region30: #{tpu_custom_call.1} parent=11 // pred_check_branch
          %312 = sbr.rel (%p310) target = $region32
        $region31: #{tpu_custom_call.1} parent=11 // pred_region
          %s314 = ssub.s32 3072, 3072
          %315 = vsyncadd [#allocation7], %s314
          %s316 = sshll.u32 [#allocation8], 4
          %s317 = int_to_ptr.vmem [resolvable:$true] %s316
          %322 = dma.hbm_to_vmem [thread:$0]  %s5, 3072, %s317, [#allocation7], 64, 64, 4
        $region32: #{tpu_custom_call.1} parent=11 // pred_fallthru
          _
        // Predicated region
        $region33: #{tpu_custom_call.1} parent=11 // pred_check
          %p323 = pneg %p174
        $region34: #{tpu_custom_call.1} parent=11 // pred_check_branch
          %325 = sbr.rel (%p323) target = $region36
        $region35: #{tpu_custom_call.1} parent=11 // pred_region
          %s327 = ssub.s32 32768, 32768
          %328 = vsyncadd [#allocation10], %s327
          %s329 = sshll.u32 [#allocation9], 4
          %s330 = int_to_ptr.vmem [resolvable:$true] %s329
          %335 = dma.hbm_to_vmem [thread:$0]  %s6, 32768, %s330, [#allocation10], 256, 256, 16
        $region36: #{tpu_custom_call.1} parent=11 // pred_fallthru
          _
        // Predicated region
        $region37: #{tpu_custom_call.1} parent=11 // pred_check
          %p336 = pneg %p195
        $region38: #{tpu_custom_call.1} parent=11 // pred_check_branch
          %338 = sbr.rel (%p336) target = $region40
        $region39: #{tpu_custom_call.1} parent=11 // pred_region
          _
        $region40: #{tpu_custom_call.1} parent=11 // pred_fallthru
          _
        // Predicated region
        $region41: #{tpu_custom_call.1} parent=11 // pred_check
          %p339 = pneg %p216
        $region42: #{tpu_custom_call.1} parent=11 // pred_check_branch
          %341 = sbr.rel (%p339) target = $region44
        $region43: #{tpu_custom_call.1} parent=11 // pred_region
          _
        $region44: #{tpu_custom_call.1} parent=11 // pred_fallthru
          _
        // Predicated region
        $region45: #{tpu_custom_call.1} parent=11 // pred_check
          %p342 = pneg %p237
        $region46: #{tpu_custom_call.1} parent=11 // pred_check_branch
          %344 = sbr.rel (%p342) target = $region48
        $region47: #{tpu_custom_call.1} parent=11 // pred_region
          _
        $region48: #{tpu_custom_call.1} parent=11 // pred_fallthru
          _
      $region12: #{tpu_custom_call.1} parent=5 // pred_fallthru
        _
      %p345 = scmp.lt.s32.totalorder %s22, 2
      // Predicated region
      $region49: #{tpu_custom_call.1} parent=5 // pred_check
        %p346 = pneg %p345
      $region50: #{tpu_custom_call.1} parent=5 // pred_check_branch
        %348 = sbr.rel (%p346) target = $region52
      $region51: #{tpu_custom_call.1} parent=5 // pred_region
        // Predicated region
        $region53: #{tpu_custom_call.1} parent=51 // pred_check
          %p349 = pneg %p42
        $region54: #{tpu_custom_call.1} parent=51 // pred_check_branch
          %351 = sbr.rel (%p349) target = $region56
        $region55: #{tpu_custom_call.1} parent=51 // pred_region
          %s352 = smul.u32 32, %s22
          %p353 = scmp.lt.s32.totalorder %s352, 63
          %s354 = scalar_select %p353, %s352, 63
          %s355 = smul.addr %s354, 4
          %s356 = scalar_lea.vmem %s0, %s355
          %s357 = smul.u32 32, %s22
        $region56: #{tpu_custom_call.1} parent=51 // pred_fallthru
          _
      $region52: #{tpu_custom_call.1} parent=5 // pred_fallthru
        _
      %p358 = scmp.le.s32.totalorder 1, %s22
      %p359 = scmp.lt.s32.totalorder %s22, 3
      %p360 = pnand %p358, %p359
      %p361 = pneg %p360
      // Predicated region
      $region57: #{tpu_custom_call.1} parent=5 // pred_check
        _
      $region58: #{tpu_custom_call.1} parent=5 // pred_check_branch
        %363 = sbr.rel (%p360) target = $region60
      $region59: #{tpu_custom_call.1} parent=5 // pred_region
        %s364 = ssub.s32 %s22, 1
        // Predicated region
        $region61: #{tpu_custom_call.1} parent=59 // pred_check
          %p365 = pneg %p69
        $region62: #{tpu_custom_call.1} parent=59 // pred_check_branch
          %367 = sbr.rel (%p365) target = $region64
        $region63: #{tpu_custom_call.1} parent=59 // pred_region
          %368 = dma.done [#allocation4], 1536
        $region64: #{tpu_custom_call.1} parent=59 // pred_fallthru
          _
        // Predicated region
        $region65: #{tpu_custom_call.1} parent=59 // pred_check
          %p369 = pneg %p111
        $region66: #{tpu_custom_call.1} parent=59 // pred_check_branch
          %371 = sbr.rel (%p369) target = $region68
        $region67: #{tpu_custom_call.1} parent=59 // pred_region
          %372 = dma.done [#allocation7], 14976
        $region68: #{tpu_custom_call.1} parent=59 // pred_fallthru
          _
        // Predicated region
        $region69: #{tpu_custom_call.1} parent=59 // pred_check
          %p373 = pneg %p153
        $region70: #{tpu_custom_call.1} parent=59 // pred_check_branch
          %375 = sbr.rel (%p373) target = $region72
        $region71: #{tpu_custom_call.1} parent=59 // pred_region
          %376 = dma.done [#allocation7], 3072
        $region72: #{tpu_custom_call.1} parent=59 // pred_fallthru
          _
        // Predicated region
        $region73: #{tpu_custom_call.1} parent=59 // pred_check
          %p377 = pneg %p174
        $region74: #{tpu_custom_call.1} parent=59 // pred_check_branch
          %379 = sbr.rel (%p377) target = $region76
        $region75: #{tpu_custom_call.1} parent=59 // pred_region
          %380 = dma.done [#allocation10], 32768
        $region76: #{tpu_custom_call.1} parent=59 // pred_fallthru
          _
        %s381 = smul.u32 32, %s27
        %p382 = scmp.lt.s32.totalorder %s381, 63
        %s383 = scalar_select %p382, %s381, 63
        %s384 = smul.addr %s383, 4
        %s385 = scalar_lea.vmem %s0, %s384
        %p386 = pneg %p48
        %p387 = pneg %p45
        %p388 = pneg %p69
        %p389 = pneg %p66
        %p390 = pneg %p90
        %p391 = pneg %p87
        %p392 = pneg %p111
        %p393 = pneg %p108
        %p394 = pneg %p132
        %p395 = pneg %p129
        %p396 = pneg %p153
        %p397 = pneg %p150
        %p398 = pneg %p174
        %p399 = pneg %p171
        %p400 = pneg %p195
        %p401 = pneg %p192
        %p402 = pneg %p216
        %p403 = pneg %p213
        %p404 = pneg %p237
        %p405 = pneg %p234
        %p406 = pneg %p263
        %p407 = pneg %p260
        %s408 = sand.u32 %s250, 1
        %s409 = scalar_lea.sflag [#allocation5], %s408
        %s410 = sand.u32 %s250, 1
        %s411 = smul.addr %s410, 8
        %s412 = scalar_lea.vmem [#allocation11], %s411
        %s413 = smul.u32 32, %s27
        %p414 = scmp.lt.s32.totalorder %s413, 63
        %s415 = scalar_select %p414, %s413, 63
        %s416 = smul.addr %s415, 4
        %s417 = scalar_lea.vmem %s0, %s416
        %s418 = smul.u32 32, %s27
        %v420 = vld [vmem:[%s417] sm:$0xf]
        %v421 = vld [vmem:[%s417 + $0x4] sm:$0xf]
        %v422 = vld [vmem:[%s417 + $0x8] sm:$0xf]
        %v423 = vld [vmem:[%s417 + $0xc] sm:$0xf]
        %v424 = vld [vmem:[%s417 + $0x10] sm:$0xf]
        %v425 = vld [vmem:[%s417 + $0x14] sm:$0xf]
        %v426 = vld [vmem:[%s417 + $0x18] sm:$0xf]
        %v427 = vld [vmem:[%s417 + $0x1c] sm:$0xf]
        %v428 = vld [vmem:[%s417 + $0x20] sm:$0xf]
        %v429 = vld [vmem:[%s417 + $0x24] sm:$0xf]
        %v430 = vld [vmem:[%s417 + $0x28] sm:$0xf]
        %v431 = vld [vmem:[%s417 + $0x2c] sm:$0xf]
        %v432 = vld [vmem:[%s417 + $0x30] sm:$0xf]
        %v433 = vld [vmem:[%s417 + $0x34] sm:$0xf]
        %v434 = vld [vmem:[%s417 + $0x38] sm:$0xf]
        %v435 = vld [vmem:[%s417 + $0x3c] sm:$0xf]
        %v436 = vld [vmem:[%s417 + $0x40] sm:$0xf]
        %v437 = vld [vmem:[%s417 + $0x44] sm:$0xf]
        %v438 = vld [vmem:[%s417 + $0x48] sm:$0xf]
        %v439 = vld [vmem:[%s417 + $0x4c] sm:$0xf]
        %v440 = vld [vmem:[%s417 + $0x50] sm:$0xf]
        %v441 = vld [vmem:[%s417 + $0x54] sm:$0xf]
        %v442 = vld [vmem:[%s417 + $0x58] sm:$0xf]
        %v443 = vld [vmem:[%s417 + $0x5c] sm:$0xf]
        %v444 = vld [vmem:[%s417 + $0x60] sm:$0xf]
        %v445 = vld [vmem:[%s417 + $0x64] sm:$0xf]
        %v446 = vld [vmem:[%s417 + $0x68] sm:$0xf]
        %v447 = vld [vmem:[%s417 + $0x6c] sm:$0xf]
        %v448 = vld [vmem:[%s417 + $0x70] sm:$0xf]
        %v449 = vld [vmem:[%s417 + $0x74] sm:$0xf]
        %v450 = vld [vmem:[%s417 + $0x78] sm:$0xf]
        %v451 = vld [vmem:[%s417 + $0x7c] sm:$0xf]
        %v452 = vld [vmem:[#allocation3] sm:$0xff]
        %v453 = vld [vmem:[#allocation3 + $0x8] sm:$0xff]
        %v454 = vld [vmem:[#allocation3 + $0x10] sm:$0xff]
        %v455 = vld [vmem:[#allocation3 + $0x18] sm:$0x33]
        %v488 = vunpack.c.l.b16 %v420
        %v489 = vunpack.c.l.b16 %v421
        %v490 = vunpack.c.l.b16 %v422
        %v491 = vunpack.c.l.b16 %v423
        %v492 = vunpack.c.l.b16 %v424
        %v493 = vunpack.c.l.b16 %v425
        %v494 = vunpack.c.l.b16 %v426
        %v495 = vunpack.c.l.b16 %v427
        %v496 = vunpack.c.l.b16 %v428
        %v497 = vunpack.c.l.b16 %v429
        %v498 = vunpack.c.l.b16 %v430
        %v499 = vunpack.c.l.b16 %v431
        %v500 = vunpack.c.l.b16 %v432
        %v501 = vunpack.c.l.b16 %v433
        %v502 = vunpack.c.l.b16 %v434
        %v503 = vunpack.c.l.b16 %v435
        %v504 = vunpack.c.l.b16 %v436
        %v505 = vunpack.c.l.b16 %v437
        %v506 = vunpack.c.l.b16 %v438
        %v507 = vunpack.c.l.b16 %v439
        %v508 = vunpack.c.l.b16 %v440
        %v509 = vunpack.c.l.b16 %v441
        %v510 = vunpack.c.l.b16 %v442
        %v511 = vunpack.c.l.b16 %v443
        %v512 = vunpack.c.l.b16 %v444
        %v513 = vunpack.c.l.b16 %v445
        %v514 = vunpack.c.l.b16 %v446
        %v515 = vunpack.c.l.b16 %v447
        %v516 = vunpack.c.l.b16 %v448
        %v517 = vunpack.c.l.b16 %v449
        %v518 = vunpack.c.l.b16 %v450
        %v519 = vunpack.c.l.b16 %v451
        %v520 = vpack.c.b16 %v489, %v488
        %v521 = vpack.c.b16 %v491, %v490
        %v522 = vpack.c.b16 %v493, %v492
        %v523 = vpack.c.b16 %v495, %v494
        %v524 = vpack.c.b16 %v497, %v496
        %v525 = vpack.c.b16 %v499, %v498
        %v526 = vpack.c.b16 %v501, %v500
        %v527 = vpack.c.b16 %v503, %v502
        %v528 = vpack.c.b16 %v505, %v504
        %v529 = vpack.c.b16 %v507, %v506
        %v530 = vpack.c.b16 %v509, %v508
        %v531 = vpack.c.b16 %v511, %v510
        %v532 = vpack.c.b16 %v513, %v512
        %v533 = vpack.c.b16 %v515, %v514
        %v534 = vpack.c.b16 %v517, %v516
        %v535 = vpack.c.b16 %v519, %v518
        %vm536 = vsmask.f32 7424
        %v538 = vshrl.u32 %v520, 16
        %v540 = vshll.u32 %v520, 16
        %v542 = vrot.slane %v540, 1
        %v543 = vor.u32 %v538, %v542
        %v545 = vshll.u32 %v521, 16
        %v547 = vrot.slane %v545, 1
        %v548 = vsel %vm536, %v543, %v547
        %v549 = vshrl.u32 %v521, 16
        %v551 = vor.u32 %v549, %v547
        %v553 = vshll.u32 %v522, 16
        %v555 = vrot.slane %v553, 1
        %v556 = vsel %vm536, %v551, %v555
        %v557 = vshrl.u32 %v522, 16
        %v559 = vor.u32 %v557, %v555
        %v561 = vshll.u32 %v523, 16
        %v563 = vrot.slane %v561, 1
        %v564 = vsel %vm536, %v559, %v563
        %v565 = vshrl.u32 %v523, 16
        %v567 = vor.u32 %v565, %v563
        %v569 = vshll.u32 %v524, 16
        %v571 = vrot.slane %v569, 1
        %v572 = vsel %vm536, %v567, %v571
        %v573 = vshrl.u32 %v524, 16
        %v575 = vor.u32 %v573, %v571
        %v577 = vshll.u32 %v525, 16
        %v579 = vrot.slane %v577, 1
        %v580 = vsel %vm536, %v575, %v579
        %v581 = vshrl.u32 %v525, 16
        %v583 = vor.u32 %v581, %v579
        %v585 = vshll.u32 %v526, 16
        %v587 = vrot.slane %v585, 1
        %v588 = vsel %vm536, %v583, %v587
        %v589 = vshrl.u32 %v526, 16
        %v591 = vor.u32 %v589, %v587
        %v593 = vshll.u32 %v527, 16
        %v595 = vrot.slane %v593, 1
        %v596 = vsel %vm536, %v591, %v595
        %v597 = vshrl.u32 %v527, 16
        %v599 = vor.u32 %v597, %v595
        %v601 = vshll.u32 %v528, 16
        %v603 = vrot.slane %v601, 1
        %v604 = vsel %vm536, %v599, %v603
        %v605 = vshrl.u32 %v528, 16
        %v607 = vor.u32 %v605, %v603
        %v609 = vshll.u32 %v529, 16
        %v611 = vrot.slane %v609, 1
        %v612 = vsel %vm536, %v607, %v611
        %v613 = vshrl.u32 %v529, 16
        %v615 = vor.u32 %v613, %v611
        %v617 = vshll.u32 %v530, 16
        %v619 = vrot.slane %v617, 1
        %v620 = vsel %vm536, %v615, %v619
        %v621 = vshrl.u32 %v530, 16
        %v623 = vor.u32 %v621, %v619
        %v625 = vshll.u32 %v531, 16
        %v627 = vrot.slane %v625, 1
        %v628 = vsel %vm536, %v623, %v627
        %v629 = vshrl.u32 %v531, 16
        %v631 = vor.u32 %v629, %v627
        %v633 = vshll.u32 %v532, 16
        %v635 = vrot.slane %v633, 1
        %v636 = vsel %vm536, %v631, %v635
        %v637 = vshrl.u32 %v532, 16
        %v639 = vor.u32 %v637, %v635
        %v641 = vshll.u32 %v533, 16
        %v643 = vrot.slane %v641, 1
        %v644 = vsel %vm536, %v639, %v643
        %v645 = vshrl.u32 %v533, 16
        %v647 = vor.u32 %v645, %v643
        %v649 = vshll.u32 %v534, 16
        %v651 = vrot.slane %v649, 1
        %v652 = vsel %vm536, %v647, %v651
        %v653 = vshrl.u32 %v534, 16
        %v655 = vor.u32 %v653, %v651
        %v657 = vshll.u32 %v535, 16
        %v659 = vrot.slane %v657, 1
        %v660 = vsel %vm536, %v655, %v659
        %v661 = vshrl.u32 %v535, 16
        %v663 = vor.u32 %v661, %v659
        %vm665 = vcmask 1047552
        %vm666 = vmand %vm665, %vm536
        %v667 = vsel %vm666, %v663, 0
        %s668 = scalar_lea.vmem [#allocation3], 32
        %v669 = vld [vmem:[%s668] sm:$0xff]
        %v670 = vld [vmem:[%s668 + $0x8] sm:$0xff]
        %v671 = vld [vmem:[%s668 + $0x10] sm:$0xff]
        %v672 = vld [vmem:[%s668 + $0x18] sm:$0x33]
        %v677 = vunpack.c.l.b16 %v669
        %v678 = vunpack.c.h.b16 %v669
        %v679 = vunpack.c.l.b16 %v670
        %v680 = vunpack.c.h.b16 %v670
        %v681 = vunpack.c.l.b16 %v671
        %v682 = vunpack.c.h.b16 %v671
        %v683 = vunpack.c.l.b16 %v672
        %v684 = vunpack.c.h.b16 %v672
        %v685 = vpack.c.b16 %v679, %v677
        %v686 = vpack.c.b16 %v680, %v678
        %v687 = vpack.c.b16 %v683, %v681
        %v688 = vpack.c.b16 %v684, %v682
        %vm691 = vcmask 228352
        %v693 = vsel %vm691, %v548, 0
        %v696 = vsel %vm691, %v556, 0
        %v699 = vsel %vm691, %v564, 0
        %v702 = vsel %vm691, %v572, 0
        %v705 = vsel %vm691, %v580, 0
        %v708 = vsel %vm691, %v588, 0
        %v711 = vsel %vm691, %v596, 0
        %v714 = vsel %vm691, %v604, 0
        %v717 = vsel %vm691, %v612, 0
        %v720 = vsel %vm691, %v620, 0
        %v723 = vsel %vm691, %v628, 0
        %v726 = vsel %vm691, %v636, 0
        %v729 = vsel %vm691, %v644, 0
        %v732 = vsel %vm691, %v652, 0
        %v735 = vsel %vm691, %v660, 0
        %v738 = vsel %vm691, %v667, 0
        %vm740 = vcmask 1045504
        %v742 = vsel %vm740, %v687, 0
        %v745 = vsel %vm740, %v688, 0
        %747 = vmatprep.subr.bf16.mxu0 %v686
        %748 = vmatpush1.bf16.msra.mxu0 %v685
        %749 = vmatprep.subr.bf16.mxu0 %v745
        %750 = vmatpush1.bf16.msra.mxu0 %v742
        %751 = vmatprep.subr.bf16.mxu0 0
        %752 = vmatpush1.bf16.msra.mxu0 0
        %753 = vmatprep.subr.bf16.mxu0 0
        %754 = vmatpush1.bf16.msra.mxu0 0
        %755 = vmatprep.subr.bf16.mxu0 0
        %756 = vmatpush1.bf16.msra.mxu0 0
        %757 = vmatprep.subr.bf16.mxu0 0
        %758 = vmatpush1.bf16.msra.mxu0 0
        %759 = vmatprep.subr.bf16.mxu0 0
        %760 = vmatpush1.bf16.msra.mxu0 0
        %761 = vmatprep.subr.bf16.mxu0 0
        %762 = vmatpush1.bf16.msra.mxu0 0
        %763 = vmatprep.subr.bf16.mxu0 0
        %764 = vmatpush1.bf16.msra.mxu0 0
        %765 = vmatprep.subr.bf16.mxu0 0
        %766 = vmatpush1.bf16.msra.mxu0 0
        %767 = vmatprep.subr.bf16.mxu0 0
        %768 = vmatpush1.bf16.msra.mxu0 0
        %769 = vmatprep.subr.bf16.mxu0 0
        %770 = vmatpush1.bf16.msra.mxu0 0
        %771 = vmatprep.subr.bf16.mxu0 0
        %772 = vmatpush1.bf16.msra.mxu0 0
        %773 = vmatprep.subr.bf16.mxu0 0
        %774 = vmatpush1.bf16.msra.mxu0 0
        %775 = vmatprep.subr.bf16.mxu0 0
        %776 = vmatpush1.bf16.msra.mxu0 0
        %777 = vmatprep.subr.bf16.mxu0 0
        %778 = vmatpush1.bf16.msra.mxu0 0
        %779 = vmatprep.mubr.bf16.mxu0 0
        %780 = vmatmul.mubr.bf16.gmra.mrb[0].mxu0 %v693
        %v781 = vpop.f32.mrb[0].mxu0
        %v782 = vadd.f32 0.0, %v781
        %v783 = vpop.f32.mrb[0].mxu0
        %v784 = vadd.f32 0.0, %v783
        %v785 = vpop.f32.mrb[0].mxu0
        %v786 = vadd.f32 0.0, %v785
        %v787 = vpop.f32.mrb[0].mxu0
        %v788 = vadd.f32 0.0, %v787
        %789 = vmatprep.mubr.bf16.mxu0 0
        %790 = vmatmul.mubr.bf16.gmra.mrb[0].mxu0 %v696
        %v791 = vpop.f32.mrb[0].mxu0
        %v792 = vadd.f32 0.0, %v791
        %v793 = vpop.f32.mrb[0].mxu0
        %v794 = vadd.f32 0.0, %v793
        %v795 = vpop.f32.mrb[0].mxu0
        %v796 = vadd.f32 0.0, %v795
        %v797 = vpop.f32.mrb[0].mxu0
        %v798 = vadd.f32 0.0, %v797
        %799 = vmatprep.mubr.bf16.mxu0 0
        %800 = vmatmul.mubr.bf16.gmra.mrb[0].mxu0 %v699
        %v801 = vpop.f32.mrb[0].mxu0
        %v802 = vadd.f32 0.0, %v801
        %v803 = vpop.f32.mrb[0].mxu0
        %v804 = vadd.f32 0.0, %v803
        %v805 = vpop.f32.mrb[0].mxu0
        %v806 = vadd.f32 0.0, %v805
        %v807 = vpop.f32.mrb[0].mxu0
        %v808 = vadd.f32 0.0, %v807
        %809 = vmatprep.mubr.bf16.mxu0 0
        %810 = vmatmul.mubr.bf16.gmra.mrb[0].mxu0 %v702
        %v811 = vpop.f32.mrb[0].mxu0
        %v812 = vadd.f32 0.0, %v811
        %v813 = vpop.f32.mrb[0].mxu0
        %v814 = vadd.f32 0.0, %v813
        %v815 = vpop.f32.mrb[0].mxu0
        %v816 = vadd.f32 0.0, %v815
        %v817 = vpop.f32.mrb[0].mxu0
        %v818 = vadd.f32 0.0, %v817
        %819 = vmatprep.mubr.bf16.mxu0 0
        %820 = vmatmul.mubr.bf16.gmra.mrb[0].mxu0 %v705
        %v821 = vpop.f32.mrb[0].mxu0
        %v822 = vadd.f32 0.0, %v821
        %v823 = vpop.f32.mrb[0].mxu0
        %v824 = vadd.f32 0.0, %v823
        %v825 = vpop.f32.mrb[0].mxu0
        %v826 = vadd.f32 0.0, %v825
        %v827 = vpop.f32.mrb[0].mxu0
        %v828 = vadd.f32 0.0, %v827
        %829 = vmatprep.mubr.bf16.mxu0 0
        %830 = vmatmul.mubr.bf16.gmra.mrb[0].mxu0 %v708
        %v831 = vpop.f32.mrb[0].mxu0
        %v832 = vadd.f32 0.0, %v831
        %v833 = vpop.f32.mrb[0].mxu0
        %v834 = vadd.f32 0.0, %v833
        %v835 = vpop.f32.mrb[0].mxu0
        %v836 = vadd.f32 0.0, %v835
        %v837 = vpop.f32.mrb[0].mxu0
        %v838 = vadd.f32 0.0, %v837
        %839 = vmatprep.mubr.bf16.mxu0 0
        %840 = vmatmul.mubr.bf16.gmra.mrb[0].mxu0 %v711
        %v841 = vpop.f32.mrb[0].mxu0
        %v842 = vadd.f32 0.0, %v841
        %v843 = vpop.f32.mrb[0].mxu0
        %v844 = vadd.f32 0.0, %v843
        %v845 = vpop.f32.mrb[0].mxu0
        %v846 = vadd.f32 0.0, %v845
        %v847 = vpop.f32.mrb[0].mxu0
        %v848 = vadd.f32 0.0, %v847
        %849 = vmatprep.mubr.bf16.mxu0 0
        %850 = vmatmul.mubr.bf16.gmra.mrb[0].mxu0 %v714
        %v851 = vpop.f32.mrb[0].mxu0
        %v852 = vadd.f32 0.0, %v851
        %v853 = vpop.f32.mrb[0].mxu0
        %v854 = vadd.f32 0.0, %v853
        %v855 = vpop.f32.mrb[0].mxu0
        %v856 = vadd.f32 0.0, %v855
        %v857 = vpop.f32.mrb[0].mxu0
        %v858 = vadd.f32 0.0, %v857
        %859 = vmatprep.mubr.bf16.mxu0 0
        %860 = vmatmul.mubr.bf16.gmra.mrb[0].mxu0 %v717
        %v861 = vpop.f32.mrb[0].mxu0
        %v862 = vadd.f32 0.0, %v861
        %v863 = vpop.f32.mrb[0].mxu0
        %v864 = vadd.f32 0.0, %v863
        %v865 = vpop.f32.mrb[0].mxu0
        %v866 = vadd.f32 0.0, %v865
        %v867 = vpop.f32.mrb[0].mxu0
        %v868 = vadd.f32 0.0, %v867
        %869 = vmatprep.mubr.bf16.mxu0 0
        %870 = vmatmul.mubr.bf16.gmra.mrb[0].mxu0 %v720
        %v871 = vpop.f32.mrb[0].mxu0
        %v872 = vadd.f32 0.0, %v871
        %v873 = vpop.f32.mrb[0].mxu0
        %v874 = vadd.f32 0.0, %v873
        %v875 = vpop.f32.mrb[0].mxu0
        %v876 = vadd.f32 0.0, %v875
        %v877 = vpop.f32.mrb[0].mxu0
        %v878 = vadd.f32 0.0, %v877
        %879 = vmatprep.mubr.bf16.mxu0 0
        %880 = vmatmul.mubr.bf16.gmra.mrb[0].mxu0 %v723
        %v881 = vpop.f32.mrb[0].mxu0
        %v882 = vadd.f32 0.0, %v881
        %v883 = vpop.f32.mrb[0].mxu0
        %v884 = vadd.f32 0.0, %v883
        %v885 = vpop.f32.mrb[0].mxu0
        %v886 = vadd.f32 0.0, %v885
        %v887 = vpop.f32.mrb[0].mxu0
        %v888 = vadd.f32 0.0, %v887
        %889 = vmatprep.mubr.bf16.mxu0 0
        %890 = vmatmul.mubr.bf16.gmra.mrb[0].mxu0 %v726
        %v891 = vpop.f32.mrb[0].mxu0
        %v892 = vadd.f32 0.0, %v891
        %v893 = vpop.f32.mrb[0].mxu0
        %v894 = vadd.f32 0.0, %v893
        %v895 = vpop.f32.mrb[0].mxu0
        %v896 = vadd.f32 0.0, %v895
        %v897 = vpop.f32.mrb[0].mxu0
        %v898 = vadd.f32 0.0, %v897
        %899 = vmatprep.mubr.bf16.mxu0 0
        %900 = vmatmul.mubr.bf16.gmra.mrb[0].mxu0 %v729
        %v901 = vpop.f32.mrb[0].mxu0
        %v902 = vadd.f32 0.0, %v901
        %v903 = vpop.f32.mrb[0].mxu0
        %v904 = vadd.f32 0.0, %v903
        %v905 = vpop.f32.mrb[0].mxu0
        %v906 = vadd.f32 0.0, %v905
        %v907 = vpop.f32.mrb[0].mxu0
        %v908 = vadd.f32 0.0, %v907
        %909 = vmatprep.mubr.bf16.mxu0 0
        %910 = vmatmul.mubr.bf16.gmra.mrb[0].mxu0 %v732
        %v911 = vpop.f32.mrb[0].mxu0
        %v912 = vadd.f32 0.0, %v911
        %v913 = vpop.f32.mrb[0].mxu0
        %v914 = vadd.f32 0.0, %v913
        %v915 = vpop.f32.mrb[0].mxu0
        %v916 = vadd.f32 0.0, %v915
        %v917 = vpop.f32.mrb[0].mxu0
        %v918 = vadd.f32 0.0, %v917
        %919 = vmatprep.mubr.bf16.mxu0 0
        %920 = vmatmul.mubr.bf16.gmra.mrb[0].mxu0 %v735
        %v921 = vpop.f32.mrb[0].mxu0
        %v922 = vadd.f32 0.0, %v921
        %v923 = vpop.f32.mrb[0].mxu0
        %v924 = vadd.f32 0.0, %v923
        %v925 = vpop.f32.mrb[0].mxu0
        %v926 = vadd.f32 0.0, %v925
        %v927 = vpop.f32.mrb[0].mxu0
        %v928 = vadd.f32 0.0, %v927
        %929 = vmatprep.mubr.bf16.mxu0 0
        %930 = vmatmul.mubr.bf16.gmra.mrb[0].mxu0 %v738
        %v931 = vpop.f32.mrb[0].mxu0
        %v932 = vadd.f32 0.0, %v931
        %v933 = vpop.f32.mrb[0].mxu0
        %v934 = vadd.f32 0.0, %v933
        %v935 = vpop.f32.mrb[0].mxu0
        %v936 = vadd.f32 0.0, %v935
        %v937 = vpop.f32.mrb[0].mxu0
        %v938 = vadd.f32 0.0, %v937
        %939 = vdwg.mxu0
        %v944 = vunpack.c.l.b16 %v452
        %v945 = vunpack.c.h.b16 %v452
        %v946 = vunpack.c.l.b16 %v453
        %v947 = vunpack.c.h.b16 %v453
        %v948 = vunpack.c.l.b16 %v454
        %v949 = vunpack.c.h.b16 %v454
        %v950 = vunpack.c.l.b16 %v455
        %v951 = vunpack.c.h.b16 %v455
        %v952 = vpack.c.b16 %v946, %v944
        %v953 = vpack.c.b16 %v947, %v945
        %v954 = vpack.c.b16 %v950, %v948
        %v955 = vpack.c.b16 %v951, %v949
        %v958 = vsel %vm691, %v520, 0
        %v960 = vsel %vm691, %v521, 0
        %v962 = vsel %vm691, %v522, 0
        %v964 = vsel %vm691, %v523, 0
        %v966 = vsel %vm691, %v524, 0
        %v968 = vsel %vm691, %v525, 0
        %v970 = vsel %vm691, %v526, 0
        %v972 = vsel %vm691, %v527, 0
        %v974 = vsel %vm691, %v528, 0
        %v976 = vsel %vm691, %v529, 0
        %v978 = vsel %vm691, %v530, 0
        %v980 = vsel %vm691, %v531, 0
        %v982 = vsel %vm691, %v532, 0
        %v984 = vsel %vm691, %v533, 0
        %v986 = vsel %vm691, %v534, 0
        %v988 = vsel %vm691, %v535, 0
        %v991 = vsel %vm740, %v954, 0
        %v994 = vsel %vm740, %v955, 0
        %996 = vmatprep.subr.bf16.mxu0 %v953
        %997 = vmatpush1.bf16.msra.mxu0 %v952
        %998 = vmatprep.subr.bf16.mxu0 %v994
        %999 = vmatpush1.bf16.msra.mxu0 %v991
        %1000 = vmatprep.subr.bf16.mxu0 0
        %1001 = vmatpush1.bf16.msra.mxu0 0
        %1002 = vmatprep.subr.bf16.mxu0 0
        %1003 = vmatpush1.bf16.msra.mxu0 0
        %1004 = vmatprep.subr.bf16.mxu0 0
        %1005 = vmatpush1.bf16.msra.mxu0 0
        %1006 = vmatprep.subr.bf16.mxu0 0
        %1007 = vmatpush1.bf16.msra.mxu0 0
        %1008 = vmatprep.subr.bf16.mxu0 0
        %1009 = vmatpush1.bf16.msra.mxu0 0
        %1010 = vmatprep.subr.bf16.mxu0 0
        %1011 = vmatpush1.bf16.msra.mxu0 0
        %1012 = vmatprep.subr.bf16.mxu0 0
        %1013 = vmatpush1.bf16.msra.mxu0 0
        %1014 = vmatprep.subr.bf16.mxu0 0
        %1015 = vmatpush1.bf16.msra.mxu0 0
        %1016 = vmatprep.subr.bf16.mxu0 0
        %1017 = vmatpush1.bf16.msra.mxu0 0
        %1018 = vmatprep.subr.bf16.mxu0 0
        %1019 = vmatpush1.bf16.msra.mxu0 0
        %1020 = vmatprep.subr.bf16.mxu0 0
        %1021 = vmatpush1.bf16.msra.mxu0 0
        %1022 = vmatprep.subr.bf16.mxu0 0
        %1023 = vmatpush1.bf16.msra.mxu0 0
        %1024 = vmatprep.subr.bf16.mxu0 0
        %1025 = vmatpush1.bf16.msra.mxu0 0
        %1026 = vmatprep.subr.bf16.mxu0 0
        %1027 = vmatpush1.bf16.msra.mxu0 0
        %1028 = vmatprep.mubr.bf16.mxu0 0
        %1029 = vmatmul.mubr.bf16.gmra.mrb[0].mxu0 %v958
        %v1030 = vpop.f32.mrb[0].mxu0
        %v1031 = vadd.f32 %v782, %v1030
        %v1032 = vpop.f32.mrb[0].mxu0
        %v1033 = vadd.f32 %v784, %v1032
        %v1034 = vpop.f32.mrb[0].mxu0
        %v1035 = vadd.f32 %v786, %v1034
        %v1036 = vpop.f32.mrb[0].mxu0
        %v1037 = vadd.f32 %v788, %v1036
        %1038 = vmatprep.mubr.bf16.mxu0 0
        %1039 = vmatmul.mubr.bf16.gmra.mrb[0].mxu0 %v960
        %v1040 = vpop.f32.mrb[0].mxu0
        %v1041 = vadd.f32 %v792, %v1040
        %v1042 = vpop.f32.mrb[0].mxu0
        %v1043 = vadd.f32 %v794, %v1042
        %v1044 = vpop.f32.mrb[0].mxu0
        %v1045 = vadd.f32 %v796, %v1044
        %v1046 = vpop.f32.mrb[0].mxu0
        %v1047 = vadd.f32 %v798, %v1046
        %1048 = vmatprep.mubr.bf16.mxu0 0
        %1049 = vmatmul.mubr.bf16.gmra.mrb[0].mxu0 %v962
        %v1050 = vpop.f32.mrb[0].mxu0
        %v1051 = vadd.f32 %v802, %v1050
        %v1052 = vpop.f32.mrb[0].mxu0
        %v1053 = vadd.f32 %v804, %v1052
        %v1054 = vpop.f32.mrb[0].mxu0
        %v1055 = vadd.f32 %v806, %v1054
        %v1056 = vpop.f32.mrb[0].mxu0
        %v1057 = vadd.f32 %v808, %v1056
        %1058 = vmatprep.mubr.bf16.mxu0 0
        %1059 = vmatmul.mubr.bf16.gmra.mrb[0].mxu0 %v964
        %v1060 = vpop.f32.mrb[0].mxu0
        %v1061 = vadd.f32 %v812, %v1060
        %v1062 = vpop.f32.mrb[0].mxu0
        %v1063 = vadd.f32 %v814, %v1062
        %v1064 = vpop.f32.mrb[0].mxu0
        %v1065 = vadd.f32 %v816, %v1064
        %v1066 = vpop.f32.mrb[0].mxu0
        %v1067 = vadd.f32 %v818, %v1066
        %1068 = vmatprep.mubr.bf16.mxu0 0
        %1069 = vmatmul.mubr.bf16.gmra.mrb[0].mxu0 %v966
        %v1070 = vpop.f32.mrb[0].mxu0
        %v1071 = vadd.f32 %v822, %v1070
        %v1072 = vpop.f32.mrb[0].mxu0
        %v1073 = vadd.f32 %v824, %v1072
        %v1074 = vpop.f32.mrb[0].mxu0
        %v1075 = vadd.f32 %v826, %v1074
        %v1076 = vpop.f32.mrb[0].mxu0
        %v1077 = vadd.f32 %v828, %v1076
        %1078 = vmatprep.mubr.bf16.mxu0 0
        %1079 = vmatmul.mubr.bf16.gmra.mrb[0].mxu0 %v968
        %v1080 = vpop.f32.mrb[0].mxu0
        %v1081 = vadd.f32 %v832, %v1080
        %v1082 = vpop.f32.mrb[0].mxu0
        %v1083 = vadd.f32 %v834, %v1082
        %v1084 = vpop.f32.mrb[0].mxu0
        %v1085 = vadd.f32 %v836, %v1084
        %v1086 = vpop.f32.mrb[0].mxu0
        %v1087 = vadd.f32 %v838, %v1086
        %1088 = vmatprep.mubr.bf16.mxu0 0
        %1089 = vmatmul.mubr.bf16.gmra.mrb[0].mxu0 %v970
        %v1090 = vpop.f32.mrb[0].mxu0
        %v1091 = vadd.f32 %v842, %v1090
        %v1092 = vpop.f32.mrb[0].mxu0
        %v1093 = vadd.f32 %v844, %v1092
        %v1094 = vpop.f32.mrb[0].mxu0
        %v1095 = vadd.f32 %v846, %v1094
        %v1096 = vpop.f32.mrb[0].mxu0
        %v1097 = vadd.f32 %v848, %v1096
        %1098 = vmatprep.mubr.bf16.mxu0 0
        %1099 = vmatmul.mubr.bf16.gmra.mrb[0].mxu0 %v972
        %v1100 = vpop.f32.mrb[0].mxu0
        %v1101 = vadd.f32 %v852, %v1100
        %v1102 = vpop.f32.mrb[0].mxu0
        %v1103 = vadd.f32 %v854, %v1102
        %v1104 = vpop.f32.mrb[0].mxu0
        %v1105 = vadd.f32 %v856, %v1104
        %v1106 = vpop.f32.mrb[0].mxu0
        %v1107 = vadd.f32 %v858, %v1106
        %1108 = vmatprep.mubr.bf16.mxu0 0
        %1109 = vmatmul.mubr.bf16.gmra.mrb[0].mxu0 %v974
        %v1110 = vpop.f32.mrb[0].mxu0
        %v1111 = vadd.f32 %v862, %v1110
        %v1112 = vpop.f32.mrb[0].mxu0
        %v1113 = vadd.f32 %v864, %v1112
        %v1114 = vpop.f32.mrb[0].mxu0
        %v1115 = vadd.f32 %v866, %v1114
        %v1116 = vpop.f32.mrb[0].mxu0
        %v1117 = vadd.f32 %v868, %v1116
        %1118 = vmatprep.mubr.bf16.mxu0 0
        %1119 = vmatmul.mubr.bf16.gmra.mrb[0].mxu0 %v976
        %v1120 = vpop.f32.mrb[0].mxu0
        %v1121 = vadd.f32 %v872, %v1120
        %v1122 = vpop.f32.mrb[0].mxu0
        %v1123 = vadd.f32 %v874, %v1122
        %v1124 = vpop.f32.mrb[0].mxu0
        %v1125 = vadd.f32 %v876, %v1124
        %v1126 = vpop.f32.mrb[0].mxu0
        %v1127 = vadd.f32 %v878, %v1126
        %1128 = vmatprep.mubr.bf16.mxu0 0
        %1129 = vmatmul.mubr.bf16.gmra.mrb[0].mxu0 %v978
        %v1130 = vpop.f32.mrb[0].mxu0
        %v1131 = vadd.f32 %v882, %v1130
        %v1132 = vpop.f32.mrb[0].mxu0
        %v1133 = vadd.f32 %v884, %v1132
        %v1134 = vpop.f32.mrb[0].mxu0
        %v1135 = vadd.f32 %v886, %v1134
        %v1136 = vpop.f32.mrb[0].mxu0
        %v1137 = vadd.f32 %v888, %v1136
        %1138 = vmatprep.mubr.bf16.mxu0 0
        %1139 = vmatmul.mubr.bf16.gmra.mrb[0].mxu0 %v980
        %v1140 = vpop.f32.mrb[0].mxu0
        %v1141 = vadd.f32 %v892, %v1140
        %v1142 = vpop.f32.mrb[0].mxu0
        %v1143 = vadd.f32 %v894, %v1142
        %v1144 = vpop.f32.mrb[0].mxu0
        %v1145 = vadd.f32 %v896, %v1144
        %v1146 = vpop.f32.mrb[0].mxu0
        %v1147 = vadd.f32 %v898, %v1146
        %1148 = vmatprep.mubr.bf16.mxu0 0
        %1149 = vmatmul.mubr.bf16.gmra.mrb[0].mxu0 %v982
        %v1150 = vpop.f32.mrb[0].mxu0
        %v1151 = vadd.f32 %v902, %v1150
        %v1152 = vpop.f32.mrb[0].mxu0
        %v1153 = vadd.f32 %v904, %v1152
        %v1154 = vpop.f32.mrb[0].mxu0
        %v1155 = vadd.f32 %v906, %v1154
        %v1156 = vpop.f32.mrb[0].mxu0
        %v1157 = vadd.f32 %v908, %v1156
        %1158 = vmatprep.mubr.bf16.mxu0 0
        %1159 = vmatmul.mubr.bf16.gmra.mrb[0].mxu0 %v984
        %v1160 = vpop.f32.mrb[0].mxu0
        %v1161 = vadd.f32 %v912, %v1160
        %v1162 = vpop.f32.mrb[0].mxu0
        %v1163 = vadd.f32 %v914, %v1162
        %v1164 = vpop.f32.mrb[0].mxu0
        %v1165 = vadd.f32 %v916, %v1164
        %v1166 = vpop.f32.mrb[0].mxu0
        %v1167 = vadd.f32 %v918, %v1166
        %1168 = vmatprep.mubr.bf16.mxu0 0
        %1169 = vmatmul.mubr.bf16.gmra.mrb[0].mxu0 %v986
        %v1170 = vpop.f32.mrb[0].mxu0
        %v1171 = vadd.f32 %v922, %v1170
        %v1172 = vpop.f32.mrb[0].mxu0
        %v1173 = vadd.f32 %v924, %v1172
        %v1174 = vpop.f32.mrb[0].mxu0
        %v1175 = vadd.f32 %v926, %v1174
        %v1176 = vpop.f32.mrb[0].mxu0
        %v1177 = vadd.f32 %v928, %v1176
        %1178 = vmatprep.mubr.bf16.mxu0 0
        %1179 = vmatmul.mubr.bf16.gmra.mrb[0].mxu0 %v988
        %v1180 = vpop.f32.mrb[0].mxu0
        %v1181 = vadd.f32 %v932, %v1180
        %v1182 = vpop.f32.mrb[0].mxu0
        %v1183 = vadd.f32 %v934, %v1182
        %v1184 = vpop.f32.mrb[0].mxu0
        %v1185 = vadd.f32 %v936, %v1184
        %v1186 = vpop.f32.mrb[0].mxu0
        %v1187 = vadd.f32 %v938, %v1186
        %1188 = vdwg.mxu0
        %vm1189 = vcmask 1046528
        %v1190 = vrot.slane %v520, 1
        %v1191 = vrot.slane %v521, 1
        %v1192 = vsel %vm1189, %v1190, %v1191
        %v1193 = vrot.slane %v522, 1
        %v1194 = vsel %vm1189, %v1191, %v1193
        %v1195 = vrot.slane %v523, 1
        %v1196 = vsel %vm1189, %v1193, %v1195
        %v1197 = vrot.slane %v524, 1
        %v1198 = vsel %vm1189, %v1195, %v1197
        %v1199 = vrot.slane %v525, 1
        %v1200 = vsel %vm1189, %v1197, %v1199
        %v1201 = vrot.slane %v526, 1
        %v1202 = vsel %vm1189, %v1199, %v1201
        %v1203 = vrot.slane %v527, 1
        %v1204 = vsel %vm1189, %v1201, %v1203
        %v1205 = vrot.slane %v528, 1
        %v1206 = vsel %vm1189, %v1203, %v1205
        %v1207 = vrot.slane %v529, 1
        %v1208 = vsel %vm1189, %v1205, %v1207
        %v1209 = vrot.slane %v530, 1
        %v1210 = vsel %vm1189, %v1207, %v1209
        %v1211 = vrot.slane %v531, 1
        %v1212 = vsel %vm1189, %v1209, %v1211
        %v1213 = vrot.slane %v532, 1
        %v1214 = vsel %vm1189, %v1211, %v1213
        %v1215 = vrot.slane %v533, 1
        %v1216 = vsel %vm1189, %v1213, %v1215
        %v1217 = vrot.slane %v534, 1
        %v1218 = vsel %vm1189, %v1215, %v1217
        %v1219 = vrot.slane %v535, 1
        %v1220 = vsel %vm1189, %v1217, %v1219
        %vm1221 = vcmask 1046528
        %v1224 = vsel %vm1221, %v1219, 0
        %s1225 = scalar_lea.vmem [#allocation3], 64
        %v1226 = vld [vmem:[%s1225] sm:$0xff]
        %v1227 = vld [vmem:[%s1225 + $0x8] sm:$0xff]
        %v1228 = vld [vmem:[%s1225 + $0x10] sm:$0xff]
        %v1229 = vld [vmem:[%s1225 + $0x18] sm:$0x33]
        %v1234 = vunpack.c.l.b16 %v1226
        %v1235 = vunpack.c.h.b16 %v1226
        %v1236 = vunpack.c.l.b16 %v1227
        %v1237 = vunpack.c.h.b16 %v1227
        %v1238 = vunpack.c.l.b16 %v1228
        %v1239 = vunpack.c.h.b16 %v1228
        %v1240 = vunpack.c.l.b16 %v1229
        %v1241 = vunpack.c.h.b16 %v1229
        %v1242 = vpack.c.b16 %v1236, %v1234
        %v1243 = vpack.c.b16 %v1237, %v1235
        %v1244 = vpack.c.b16 %v1240, %v1238
        %v1245 = vpack.c.b16 %v1241, %v1239
        %v1249 = vsel %vm691, %v1192, 0
        %v1252 = vsel %vm691, %v1194, 0
        %v1255 = vsel %vm691, %v1196, 0
        %v1258 = vsel %vm691, %v1198, 0
        %v1261 = vsel %vm691, %v1200, 0
        %v1264 = vsel %vm691, %v1202, 0
        %v1267 = vsel %vm691, %v1204, 0
        %v1270 = vsel %vm691, %v1206, 0
        %v1273 = vsel %vm691, %v1208, 0
        %v1276 = vsel %vm691, %v1210, 0
        %v1279 = vsel %vm691, %v1212, 0
        %v1282 = vsel %vm691, %v1214, 0
        %v1285 = vsel %vm691, %v1216, 0
        %v1288 = vsel %vm691, %v1218, 0
        %v1291 = vsel %vm691, %v1220, 0
        %v1293 = vsel %vm691, %v1224, 0
        %v1296 = vsel %vm740, %v1244, 0
        %v1299 = vsel %vm740, %v1245, 0
        %1301 = vmatprep.subr.bf16.mxu0 %v1243
        %1302 = vmatpush1.bf16.msra.mxu0 %v1242
        %1303 = vmatprep.subr.bf16.mxu0 %v1299
        %1304 = vmatpush1.bf16.msra.mxu0 %v1296
        %1305 = vmatprep.subr.bf16.mxu0 0
        %1306 = vmatpush1.bf16.msra.mxu0 0
        %1307 = vmatprep.subr.bf16.mxu0 0
        %1308 = vmatpush1.bf16.msra.mxu0 0
        %1309 = vmatprep.subr.bf16.mxu0 0
        %1310 = vmatpush1.bf16.msra.mxu0 0
        %1311 = vmatprep.subr.bf16.mxu0 0
        %1312 = vmatpush1.bf16.msra.mxu0 0
        %1313 = vmatprep.subr.bf16.mxu0 0
        %1314 = vmatpush1.bf16.msra.mxu0 0
        %1315 = vmatprep.subr.bf16.mxu0 0
        %1316 = vmatpush1.bf16.msra.mxu0 0
        %1317 = vmatprep.subr.bf16.mxu0 0
        %1318 = vmatpush1.bf16.msra.mxu0 0
        %1319 = vmatprep.subr.bf16.mxu0 0
        %1320 = vmatpush1.bf16.msra.mxu0 0
        %1321 = vmatprep.subr.bf16.mxu0 0
        %1322 = vmatpush1.bf16.msra.mxu0 0
        %1323 = vmatprep.subr.bf16.mxu0 0
        %1324 = vmatpush1.bf16.msra.mxu0 0
        %1325 = vmatprep.subr.bf16.mxu0 0
        %1326 = vmatpush1.bf16.msra.mxu0 0
        %1327 = vmatprep.subr.bf16.mxu0 0
        %1328 = vmatpush1.bf16.msra.mxu0 0
        %1329 = vmatprep.subr.bf16.mxu0 0
        %1330 = vmatpush1.bf16.msra.mxu0 0
        %1331 = vmatprep.subr.bf16.mxu0 0
        %1332 = vmatpush1.bf16.msra.mxu0 0
        %1333 = vmatprep.mubr.bf16.mxu0 0
        %1334 = vmatmul.mubr.bf16.gmra.mrb[0].mxu0 %v1249
        %v1335 = vpop.f32.mrb[0].mxu0
        %v1336 = vadd.f32 0.0, %v1335
        %v1337 = vpop.f32.mrb[0].mxu0
        %v1338 = vadd.f32 0.0, %v1337
        %v1339 = vpop.f32.mrb[0].mxu0
        %v1340 = vadd.f32 0.0, %v1339
        %v1341 = vpop.f32.mrb[0].mxu0
        %v1342 = vadd.f32 0.0, %v1341
        %1343 = vmatprep.mubr.bf16.mxu0 0
        %1344 = vmatmul.mubr.bf16.gmra.mrb[0].mxu0 %v1252
        %v1345 = vpop.f32.mrb[0].mxu0
        %v1346 = vadd.f32 0.0, %v1345
        %v1347 = vpop.f32.mrb[0].mxu0
        %v1348 = vadd.f32 0.0, %v1347
        %v1349 = vpop.f32.mrb[0].mxu0
        %v1350 = vadd.f32 0.0, %v1349
        %v1351 = vpop.f32.mrb[0].mxu0
        %v1352 = vadd.f32 0.0, %v1351
        %1353 = vmatprep.mubr.bf16.mxu0 0
        %1354 = vmatmul.mubr.bf16.gmra.mrb[0].mxu0 %v1255
        %v1355 = vpop.f32.mrb[0].mxu0
        %v1356 = vadd.f32 0.0, %v1355
        %v1357 = vpop.f32.mrb[0].mxu0
        %v1358 = vadd.f32 0.0, %v1357
        %v1359 = vpop.f32.mrb[0].mxu0
        %v1360 = vadd.f32 0.0, %v1359
        %v1361 = vpop.f32.mrb[0].mxu0
        %v1362 = vadd.f32 0.0, %v1361
        %1363 = vmatprep.mubr.bf16.mxu0 0
        %1364 = vmatmul.mubr.bf16.gmra.mrb[0].mxu0 %v1258
        %v1365 = vpop.f32.mrb[0].mxu0
        %v1366 = vadd.f32 0.0, %v1365
        %v1367 = vpop.f32.mrb[0].mxu0
        %v1368 = vadd.f32 0.0, %v1367
        %v1369 = vpop.f32.mrb[0].mxu0
        %v1370 = vadd.f32 0.0, %v1369
        %v1371 = vpop.f32.mrb[0].mxu0
        %v1372 = vadd.f32 0.0, %v1371
        %1373 = vmatprep.mubr.bf16.mxu0 0
        %1374 = vmatmul.mubr.bf16.gmra.mrb[0].mxu0 %v1261
        %v1375 = vpop.f32.mrb[0].mxu0
        %v1376 = vadd.f32 0.0, %v1375
        %v1377 = vpop.f32.mrb[0].mxu0
        %v1378 = vadd.f32 0.0, %v1377
        %v1379 = vpop.f32.mrb[0].mxu0
        %v1380 = vadd.f32 0.0, %v1379
        %v1381 = vpop.f32.mrb[0].mxu0
        %v1382 = vadd.f32 0.0, %v1381
        %1383 = vmatprep.mubr.bf16.mxu0 0
        %1384 = vmatmul.mubr.bf16.gmra.mrb[0].mxu0 %v1264
        %v1385 = vpop.f32.mrb[0].mxu0
        %v1386 = vadd.f32 0.0, %v1385
        %v1387 = vpop.f32.mrb[0].mxu0
        %v1388 = vadd.f32 0.0, %v1387
        %v1389 = vpop.f32.mrb[0].mxu0
        %v1390 = vadd.f32 0.0, %v1389
        %v1391 = vpop.f32.mrb[0].mxu0
        %v1392 = vadd.f32 0.0, %v1391
        %1393 = vmatprep.mubr.bf16.mxu0 0
        %1394 = vmatmul.mubr.bf16.gmra.mrb[0].mxu0 %v1267
        %v1395 = vpop.f32.mrb[0].mxu0
        %v1396 = vadd.f32 0.0, %v1395
        %v1397 = vpop.f32.mrb[0].mxu0
        %v1398 = vadd.f32 0.0, %v1397
        %v1399 = vpop.f32.mrb[0].mxu0
        %v1400 = vadd.f32 0.0, %v1399
        %v1401 = vpop.f32.mrb[0].mxu0
        %v1402 = vadd.f32 0.0, %v1401
        %1403 = vmatprep.mubr.bf16.mxu0 0
        %1404 = vmatmul.mubr.bf16.gmra.mrb[0].mxu0 %v1270
        %v1405 = vpop.f32.mrb[0].mxu0
        %v1406 = vadd.f32 0.0, %v1405
        %v1407 = vpop.f32.mrb[0].mxu0
        %v1408 = vadd.f32 0.0, %v1407
        %v1409 = vpop.f32.mrb[0].mxu0
        %v1410 = vadd.f32 0.0, %v1409
        %v1411 = vpop.f32.mrb[0].mxu0
        %v1412 = vadd.f32 0.0, %v1411
        %1413 = vmatprep.mubr.bf16.mxu0 0
        %1414 = vmatmul.mubr.bf16.gmra.mrb[0].mxu0 %v1273
        %v1415 = vpop.f32.mrb[0].mxu0
        %v1416 = vadd.f32 0.0, %v1415
        %v1417 = vpop.f32.mrb[0].mxu0
        %v1418 = vadd.f32 0.0, %v1417
        %v1419 = vpop.f32.mrb[0].mxu0
        %v1420 = vadd.f32 0.0, %v1419
        %v1421 = vpop.f32.mrb[0].mxu0
        %v1422 = vadd.f32 0.0, %v1421
        %1423 = vmatprep.mubr.bf16.mxu0 0
        %1424 = vmatmul.mubr.bf16.gmra.mrb[0].mxu0 %v1276
        %v1425 = vpop.f32.mrb[0].mxu0
        %v1426 = vadd.f32 0.0, %v1425
        %v1427 = vpop.f32.mrb[0].mxu0
        %v1428 = vadd.f32 0.0, %v1427
        %v1429 = vpop.f32.mrb[0].mxu0
        %v1430 = vadd.f32 0.0, %v1429
        %v1431 = vpop.f32.mrb[0].mxu0
        %v1432 = vadd.f32 0.0, %v1431
        %1433 = vmatprep.mubr.bf16.mxu0 0
        %1434 = vmatmul.mubr.bf16.gmra.mrb[0].mxu0 %v1279
        %v1435 = vpop.f32.mrb[0].mxu0
        %v1436 = vadd.f32 0.0, %v1435
        %v1437 = vpop.f32.mrb[0].mxu0
        %v1438 = vadd.f32 0.0, %v1437
        %v1439 = vpop.f32.mrb[0].mxu0
        %v1440 = vadd.f32 0.0, %v1439
        %v1441 = vpop.f32.mrb[0].mxu0
        %v1442 = vadd.f32 0.0, %v1441
        %1443 = vmatprep.mubr.bf16.mxu0 0
        %1444 = vmatmul.mubr.bf16.gmra.mrb[0].mxu0 %v1282
        %v1445 = vpop.f32.mrb[0].mxu0
        %v1446 = vadd.f32 0.0, %v1445
        %v1447 = vpop.f32.mrb[0].mxu0
        %v1448 = vadd.f32 0.0, %v1447
        %v1449 = vpop.f32.mrb[0].mxu0
        %v1450 = vadd.f32 0.0, %v1449
        %v1451 = vpop.f32.mrb[0].mxu0
        %v1452 = vadd.f32 0.0, %v1451
        %1453 = vmatprep.mubr.bf16.mxu0 0
        %1454 = vmatmul.mubr.bf16.gmra.mrb[0].mxu0 %v1285
        %v1455 = vpop.f32.mrb[0].mxu0
        %v1456 = vadd.f32 0.0, %v1455
        %v1457 = vpop.f32.mrb[0].mxu0
        %v1458 = vadd.f32 0.0, %v1457
        %v1459 = vpop.f32.mrb[0].mxu0
        %v1460 = vadd.f32 0.0, %v1459
        %v1461 = vpop.f32.mrb[0].mxu0
        %v1462 = vadd.f32 0.0, %v1461
        %1463 = vmatprep.mubr.bf16.mxu0 0
        %1464 = vmatmul.mubr.bf16.gmra.mrb[0].mxu0 %v1288
        %v1465 = vpop.f32.mrb[0].mxu0
        %v1466 = vadd.f32 0.0, %v1465
        %v1467 = vpop.f32.mrb[0].mxu0
        %v1468 = vadd.f32 0.0, %v1467
        %v1469 = vpop.f32.mrb[0].mxu0
        %v1470 = vadd.f32 0.0, %v1469
        %v1471 = vpop.f32.mrb[0].mxu0
        %v1472 = vadd.f32 0.0, %v1471
        %1473 = vmatprep.mubr.bf16.mxu0 0
        %1474 = vmatmul.mubr.bf16.gmra.mrb[0].mxu0 %v1291
        %v1475 = vpop.f32.mrb[0].mxu0
        %v1476 = vadd.f32 0.0, %v1475
        %v1477 = vpop.f32.mrb[0].mxu0
        %v1478 = vadd.f32 0.0, %v1477
        %v1479 = vpop.f32.mrb[0].mxu0
        %v1480 = vadd.f32 0.0, %v1479
        %v1481 = vpop.f32.mrb[0].mxu0
        %v1482 = vadd.f32 0.0, %v1481
        %1483 = vmatprep.mubr.bf16.mxu0 0
        %1484 = vmatmul.mubr.bf16.gmra.mrb[0].mxu0 %v1293
        %v1485 = vpop.f32.mrb[0].mxu0
        %v1486 = vadd.f32 0.0, %v1485
        %v1487 = vpop.f32.mrb[0].mxu0
        %v1488 = vadd.f32 0.0, %v1487
        %v1489 = vpop.f32.mrb[0].mxu0
        %v1490 = vadd.f32 0.0, %v1489
        %v1491 = vpop.f32.mrb[0].mxu0
        %v1492 = vadd.f32 0.0, %v1491
        %1493 = vdwg.mxu0
        %v1494 = vadd.f32 %v1031, %v1336
        %v1495 = vadd.f32 %v1033, %v1338
        %v1496 = vadd.f32 %v1035, %v1340
        %v1497 = vadd.f32 %v1037, %v1342
        %v1498 = vadd.f32 %v1041, %v1346
        %v1499 = vadd.f32 %v1043, %v1348
        %v1500 = vadd.f32 %v1045, %v1350
        %v1501 = vadd.f32 %v1047, %v1352
        %v1502 = vadd.f32 %v1051, %v1356
        %v1503 = vadd.f32 %v1053, %v1358
        %v1504 = vadd.f32 %v1055, %v1360
        %v1505 = vadd.f32 %v1057, %v1362
        %v1506 = vadd.f32 %v1061, %v1366
        %v1507 = vadd.f32 %v1063, %v1368
        %v1508 = vadd.f32 %v1065, %v1370
        %v1509 = vadd.f32 %v1067, %v1372
        %v1510 = vadd.f32 %v1071, %v1376
        %v1511 = vadd.f32 %v1073, %v1378
        %v1512 = vadd.f32 %v1075, %v1380
        %v1513 = vadd.f32 %v1077, %v1382
        %v1514 = vadd.f32 %v1081, %v1386
        %v1515 = vadd.f32 %v1083, %v1388
        %v1516 = vadd.f32 %v1085, %v1390
        %v1517 = vadd.f32 %v1087, %v1392
        %v1518 = vadd.f32 %v1091, %v1396
        %v1519 = vadd.f32 %v1093, %v1398
        %v1520 = vadd.f32 %v1095, %v1400
        %v1521 = vadd.f32 %v1097, %v1402
        %v1522 = vadd.f32 %v1101, %v1406
        %v1523 = vadd.f32 %v1103, %v1408
        %v1524 = vadd.f32 %v1105, %v1410
        %v1525 = vadd.f32 %v1107, %v1412
        %v1526 = vadd.f32 %v1111, %v1416
        %v1527 = vadd.f32 %v1113, %v1418
        %v1528 = vadd.f32 %v1115, %v1420
        %v1529 = vadd.f32 %v1117, %v1422
        %v1530 = vadd.f32 %v1121, %v1426
        %v1531 = vadd.f32 %v1123, %v1428
        %v1532 = vadd.f32 %v1125, %v1430
        %v1533 = vadd.f32 %v1127, %v1432
        %v1534 = vadd.f32 %v1131, %v1436
        %v1535 = vadd.f32 %v1133, %v1438
        %v1536 = vadd.f32 %v1135, %v1440
        %v1537 = vadd.f32 %v1137, %v1442
        %v1538 = vadd.f32 %v1141, %v1446
        %v1539 = vadd.f32 %v1143, %v1448
        %v1540 = vadd.f32 %v1145, %v1450
        %v1541 = vadd.f32 %v1147, %v1452
        %v1542 = vadd.f32 %v1151, %v1456
        %v1543 = vadd.f32 %v1153, %v1458
        %v1544 = vadd.f32 %v1155, %v1460
        %v1545 = vadd.f32 %v1157, %v1462
        %v1546 = vadd.f32 %v1161, %v1466
        %v1547 = vadd.f32 %v1163, %v1468
        %v1548 = vadd.f32 %v1165, %v1470
        %v1549 = vadd.f32 %v1167, %v1472
        %v1550 = vadd.f32 %v1171, %v1476
        %v1551 = vadd.f32 %v1173, %v1478
        %v1552 = vadd.f32 %v1175, %v1480
        %v1553 = vadd.f32 %v1177, %v1482
        %v1554 = vadd.f32 %v1181, %v1486
        %v1555 = vadd.f32 %v1183, %v1488
        %v1556 = vadd.f32 %v1185, %v1490
        %v1557 = vadd.f32 %v1187, %v1492
        %v1558 = vld [vmem:[%s2] sm:$0x3]
        %v1560 = vlaneseq
        %v1561 = vshrl.u32 %v1560, 7
        %v1562 = vsub.s32 0, %v1561
        %v1563 = vrot.slane %v1558, %v1562
        %v1564 = vlaneseq
        %v1565 = vshrl.u32 %v1564, 7
        %v1566 = vsub.s32 1, %v1565
        %v1567 = vrot.slane %v1558, %v1566
        %v1570 = vadd.f32 %v1494, %v1563
        %v1571 = vadd.f32 %v1495, %v1567
        %v1572 = vadd.f32 %v1496, %v1563
        %v1573 = vadd.f32 %v1497, %v1567
        %v1574 = vadd.f32 %v1498, %v1563
        %v1575 = vadd.f32 %v1499, %v1567
        %v1576 = vadd.f32 %v1500, %v1563
        %v1577 = vadd.f32 %v1501, %v1567
        %v1578 = vadd.f32 %v1502, %v1563
        %v1579 = vadd.f32 %v1503, %v1567
        %v1580 = vadd.f32 %v1504, %v1563
        %v1581 = vadd.f32 %v1505, %v1567
        %v1582 = vadd.f32 %v1506, %v1563
        %v1583 = vadd.f32 %v1507, %v1567
        %v1584 = vadd.f32 %v1508, %v1563
        %v1585 = vadd.f32 %v1509, %v1567
        %v1586 = vadd.f32 %v1510, %v1563
        %v1587 = vadd.f32 %v1511, %v1567
        %v1588 = vadd.f32 %v1512, %v1563
        %v1589 = vadd.f32 %v1513, %v1567
        %v1590 = vadd.f32 %v1514, %v1563
        %v1591 = vadd.f32 %v1515, %v1567
        %v1592 = vadd.f32 %v1516, %v1563
        %v1593 = vadd.f32 %v1517, %v1567
        %v1594 = vadd.f32 %v1518, %v1563
        %v1595 = vadd.f32 %v1519, %v1567
        %v1596 = vadd.f32 %v1520, %v1563
        %v1597 = vadd.f32 %v1521, %v1567
        %v1598 = vadd.f32 %v1522, %v1563
        %v1599 = vadd.f32 %v1523, %v1567
        %v1600 = vadd.f32 %v1524, %v1563
        %v1601 = vadd.f32 %v1525, %v1567
        %v1602 = vadd.f32 %v1526, %v1563
        %v1603 = vadd.f32 %v1527, %v1567
        %v1604 = vadd.f32 %v1528, %v1563
        %v1605 = vadd.f32 %v1529, %v1567
        %v1606 = vadd.f32 %v1530, %v1563
        %v1607 = vadd.f32 %v1531, %v1567
        %v1608 = vadd.f32 %v1532, %v1563
        %v1609 = vadd.f32 %v1533, %v1567
        %v1610 = vadd.f32 %v1534, %v1563
        %v1611 = vadd.f32 %v1535, %v1567
        %v1612 = vadd.f32 %v1536, %v1563
        %v1613 = vadd.f32 %v1537, %v1567
        %v1614 = vadd.f32 %v1538, %v1563
        %v1615 = vadd.f32 %v1539, %v1567
        %v1616 = vadd.f32 %v1540, %v1563
        %v1617 = vadd.f32 %v1541, %v1567
        %v1618 = vadd.f32 %v1542, %v1563
        %v1619 = vadd.f32 %v1543, %v1567
        %v1620 = vadd.f32 %v1544, %v1563
        %v1621 = vadd.f32 %v1545, %v1567
        %v1622 = vadd.f32 %v1546, %v1563
        %v1623 = vadd.f32 %v1547, %v1567
        %v1624 = vadd.f32 %v1548, %v1563
        %v1625 = vadd.f32 %v1549, %v1567
        %v1626 = vadd.f32 %v1550, %v1563
        %v1627 = vadd.f32 %v1551, %v1567
        %v1628 = vadd.f32 %v1552, %v1563
        %v1629 = vadd.f32 %v1553, %v1567
        %v1630 = vadd.f32 %v1554, %v1563
        %v1631 = vadd.f32 %v1555, %v1567
        %v1632 = vadd.f32 %v1556, %v1563
        %v1633 = vadd.f32 %v1557, %v1567
        %v1634 = vmax.f32 %v1570, 0.0
        %v1635 = vmax.f32 %v1571, 0.0
        %v1636 = vmax.f32 %v1572, 0.0
        %v1637 = vmax.f32 %v1573, 0.0
        %v1638 = vmax.f32 %v1574, 0.0
        %v1639 = vmax.f32 %v1575, 0.0
        %v1640 = vmax.f32 %v1576, 0.0
        %v1641 = vmax.f32 %v1577, 0.0
        %v1642 = vmax.f32 %v1578, 0.0
        %v1643 = vmax.f32 %v1579, 0.0
        %v1644 = vmax.f32 %v1580, 0.0
        %v1645 = vmax.f32 %v1581, 0.0
        %v1646 = vmax.f32 %v1582, 0.0
        %v1647 = vmax.f32 %v1583, 0.0
        %v1648 = vmax.f32 %v1584, 0.0
        %v1649 = vmax.f32 %v1585, 0.0
        %v1650 = vmax.f32 %v1586, 0.0
        %v1651 = vmax.f32 %v1587, 0.0
        %v1652 = vmax.f32 %v1588, 0.0
        %v1653 = vmax.f32 %v1589, 0.0
        %v1654 = vmax.f32 %v1590, 0.0
        %v1655 = vmax.f32 %v1591, 0.0
        %v1656 = vmax.f32 %v1592, 0.0
        %v1657 = vmax.f32 %v1593, 0.0
        %v1658 = vmax.f32 %v1594, 0.0
        %v1659 = vmax.f32 %v1595, 0.0
        %v1660 = vmax.f32 %v1596, 0.0
        %v1661 = vmax.f32 %v1597, 0.0
        %v1662 = vmax.f32 %v1598, 0.0
        %v1663 = vmax.f32 %v1599, 0.0
        %v1664 = vmax.f32 %v1600, 0.0
        %v1665 = vmax.f32 %v1601, 0.0
        %v1666 = vmax.f32 %v1602, 0.0
        %v1667 = vmax.f32 %v1603, 0.0
        %v1668 = vmax.f32 %v1604, 0.0
        %v1669 = vmax.f32 %v1605, 0.0
        %v1670 = vmax.f32 %v1606, 0.0
        %v1671 = vmax.f32 %v1607, 0.0
        %v1672 = vmax.f32 %v1608, 0.0
        %v1673 = vmax.f32 %v1609, 0.0
        %v1674 = vmax.f32 %v1610, 0.0
        %v1675 = vmax.f32 %v1611, 0.0
        %v1676 = vmax.f32 %v1612, 0.0
        %v1677 = vmax.f32 %v1613, 0.0
        %v1678 = vmax.f32 %v1614, 0.0
        %v1679 = vmax.f32 %v1615, 0.0
        %v1680 = vmax.f32 %v1616, 0.0
        %v1681 = vmax.f32 %v1617, 0.0
        %v1682 = vmax.f32 %v1618, 0.0
        %v1683 = vmax.f32 %v1619, 0.0
        %v1684 = vmax.f32 %v1620, 0.0
        %v1685 = vmax.f32 %v1621, 0.0
        %v1686 = vmax.f32 %v1622, 0.0
        %v1687 = vmax.f32 %v1623, 0.0
        %v1688 = vmax.f32 %v1624, 0.0
        %v1689 = vmax.f32 %v1625, 0.0
        %v1690 = vmax.f32 %v1626, 0.0
        %v1691 = vmax.f32 %v1627, 0.0
        %v1692 = vmax.f32 %v1628, 0.0
        %v1693 = vmax.f32 %v1629, 0.0
        %v1694 = vmax.f32 %v1630, 0.0
        %v1695 = vmax.f32 %v1631, 0.0
        %v1696 = vmax.f32 %v1632, 0.0
        %v1697 = vmax.f32 %v1633, 0.0
        %v1698 = vpack.c.bf16 %v1636, %v1634
        %v1699 = vpack.c.bf16 %v1637, %v1635
        %v1700 = vpack.c.bf16 %v1640, %v1638
        %v1701 = vpack.c.bf16 %v1641, %v1639
        %v1702 = vpack.c.bf16 %v1644, %v1642
        %v1703 = vpack.c.bf16 %v1645, %v1643
        %v1704 = vpack.c.bf16 %v1648, %v1646
        %v1705 = vpack.c.bf16 %v1649, %v1647
        %v1706 = vpack.c.bf16 %v1652, %v1650
        %v1707 = vpack.c.bf16 %v1653, %v1651
        %v1708 = vpack.c.bf16 %v1656, %v1654
        %v1709 = vpack.c.bf16 %v1657, %v1655
        %v1710 = vpack.c.bf16 %v1660, %v1658
        %v1711 = vpack.c.bf16 %v1661, %v1659
        %v1712 = vpack.c.bf16 %v1664, %v1662
        %v1713 = vpack.c.bf16 %v1665, %v1663
        %v1714 = vpack.c.bf16 %v1668, %v1666
        %v1715 = vpack.c.bf16 %v1669, %v1667
        %v1716 = vpack.c.bf16 %v1672, %v1670
        %v1717 = vpack.c.bf16 %v1673, %v1671
        %v1718 = vpack.c.bf16 %v1676, %v1674
        %v1719 = vpack.c.bf16 %v1677, %v1675
        %v1720 = vpack.c.bf16 %v1680, %v1678
        %v1721 = vpack.c.bf16 %v1681, %v1679
        %v1722 = vpack.c.bf16 %v1684, %v1682
        %v1723 = vpack.c.bf16 %v1685, %v1683
        %v1724 = vpack.c.bf16 %v1688, %v1686
        %v1725 = vpack.c.bf16 %v1689, %v1687
        %v1726 = vpack.c.bf16 %v1692, %v1690
        %v1727 = vpack.c.bf16 %v1693, %v1691
        %v1728 = vpack.c.bf16 %v1696, %v1694
        %v1729 = vpack.c.bf16 %v1697, %v1695
        %v1730 = vld [vmem:[#allocation6] sm:$0xff]
        %v1731 = vld [vmem:[#allocation6 + $0x8] sm:$0xf]
        %v1732 = vld [vmem:[#allocation6 + $0xc] sm:$0xff]
        %v1733 = vld [vmem:[#allocation6 + $0x14] sm:$0xf]
        %v1734 = vld [vmem:[#allocation6 + $0x18] sm:$0xff]
        %v1735 = vld [vmem:[#allocation6 + $0x20] sm:$0xf]
        %v1736 = vld [vmem:[#allocation6 + $0x24] sm:$0xff]
        %v1737 = vld [vmem:[#allocation6 + $0x2c] sm:$0xf]
        %v1738 = vld [vmem:[#allocation6 + $0x30] sm:$0xff]
        %v1739 = vld [vmem:[#allocation6 + $0x38] sm:$0xf]
        %v1740 = vld [vmem:[#allocation6 + $0x3c] sm:$0xff]
        %v1741 = vld [vmem:[#allocation6 + $0x44] sm:$0xf]
        %v1742 = vld [vmem:[#allocation6 + $0x48] sm:$0xff]
        %v1743 = vld [vmem:[#allocation6 + $0x50] sm:$0xf]
        %v1744 = vld [vmem:[#allocation6 + $0x54] sm:$0xff]
        %v1745 = vld [vmem:[#allocation6 + $0x5c] sm:$0xf]
        %v1746 = vld [vmem:[#allocation6 + $0x60] sm:$0xff]
        %v1747 = vld [vmem:[#allocation6 + $0x68] sm:$0xf]
        %v1748 = vld [vmem:[#allocation6 + $0x6c] sm:$0xff]
        %v1749 = vld [vmem:[#allocation6 + $0x74] sm:$0xf]
        %v1750 = vld [vmem:[#allocation6 + $0x78] sm:$0xff]
        %v1751 = vld [vmem:[#allocation6 + $0x80] sm:$0xf]
        %v1752 = vld [vmem:[#allocation6 + $0x84] sm:$0xff]
        %v1753 = vld [vmem:[#allocation6 + $0x8c] sm:$0xf]
        %v1754 = vld [vmem:[#allocation6 + $0x90] sm:$0xff]
        %v1755 = vld [vmem:[#allocation6 + $0x98] sm:$0xf]
        %v1756 = vld [vmem:[#allocation6 + $0x9c] sm:$0xff]
        %v1757 = vld [vmem:[#allocation6 + $0xa4] sm:$0xf]
        %v1758 = vld [vmem:[#allocation6 + $0xa8] sm:$0xff]
        %v1759 = vld [vmem:[#allocation6 + $0xb0] sm:$0xf]
        %v1760 = vld [vmem:[#allocation6 + $0xb4] sm:$0xff]
        %v1761 = vld [vmem:[#allocation6 + $0xbc] sm:$0xf]
        %v1762 = vld [vmem:[#allocation6 + $0xc0] sm:$0xff]
        %v1763 = vld [vmem:[#allocation6 + $0xc8] sm:$0xf]
        %v1764 = vld [vmem:[#allocation6 + $0xcc] sm:$0xff]
        %v1765 = vld [vmem:[#allocation6 + $0xd4] sm:$0xf]
        %v1766 = vld [vmem:[#allocation6 + $0xd8] sm:$0xff]
        %v1767 = vld [vmem:[#allocation6 + $0xe0] sm:$0xf]
        %v1768 = vld [vmem:[#allocation6 + $0xe4] sm:$0xff]
        %v1769 = vld [vmem:[#allocation6 + $0xec] sm:$0xf]
        %v1770 = vld [vmem:[#allocation6 + $0xf0] sm:$0xff]
        %v1771 = vld [vmem:[#allocation6 + $0xf8] sm:$0xf]
        %v1772 = vld [vmem:[#allocation6 + $0xfc] sm:$0xff]
        %v1773 = vld [vmem:[#allocation6 + $0x104] sm:$0xf]
        %v1774 = vld [vmem:[#allocation6 + $0x108] sm:$0xff]
        %v1775 = vld [vmem:[#allocation6 + $0x110] sm:$0xf]
        %v1776 = vld [vmem:[#allocation6 + $0x114] sm:$0xff]
        %v1777 = vld [vmem:[#allocation6 + $0x11c] sm:$0xf]
        %v1778 = vld [vmem:[#allocation6 + $0x120] sm:$0xff]
        %v1779 = vld [vmem:[#allocation6 + $0x128] sm:$0xf]
        %v1780 = vld [vmem:[#allocation6 + $0x12c] sm:$0xff]
        %v1781 = vld [vmem:[#allocation6 + $0x134] sm:$0xf]
        %v1783 = vshrl.u32 %v1698, 16
        %v1785 = vshll.u32 %v1698, 16
        %v1787 = vrot.slane %v1785, 1
        %v1788 = vor.u32 %v1783, %v1787
        %v1790 = vshll.u32 %v1700, 16
        %v1792 = vrot.slane %v1790, 1
        %v1793 = vsel %vm536, %v1788, %v1792
        %v1795 = vshrl.u32 %v1699, 16
        %v1797 = vshll.u32 %v1699, 16
        %v1799 = vrot.slane %v1797, 1
        %v1800 = vor.u32 %v1795, %v1799
        %v1802 = vshll.u32 %v1701, 16
        %v1804 = vrot.slane %v1802, 1
        %v1805 = vsel %vm536, %v1800, %v1804
        %v1806 = vshrl.u32 %v1700, 16
        %v1808 = vor.u32 %v1806, %v1792
        %v1810 = vshll.u32 %v1702, 16
        %v1812 = vrot.slane %v1810, 1
        %v1813 = vsel %vm536, %v1808, %v1812
        %v1814 = vshrl.u32 %v1701, 16
        %v1816 = vor.u32 %v1814, %v1804
        %v1818 = vshll.u32 %v1703, 16
        %v1820 = vrot.slane %v1818, 1
        %v1821 = vsel %vm536, %v1816, %v1820
        %v1822 = vshrl.u32 %v1702, 16
        %v1824 = vor.u32 %v1822, %v1812
        %v1826 = vshll.u32 %v1704, 16
        %v1828 = vrot.slane %v1826, 1
        %v1829 = vsel %vm536, %v1824, %v1828
        %v1830 = vshrl.u32 %v1703, 16
        %v1832 = vor.u32 %v1830, %v1820
        %v1834 = vshll.u32 %v1705, 16
        %v1836 = vrot.slane %v1834, 1
        %v1837 = vsel %vm536, %v1832, %v1836
        %v1838 = vshrl.u32 %v1704, 16
        %v1840 = vor.u32 %v1838, %v1828
        %v1842 = vshll.u32 %v1706, 16
        %v1844 = vrot.slane %v1842, 1
        %v1845 = vsel %vm536, %v1840, %v1844
        %v1846 = vshrl.u32 %v1705, 16
        %v1848 = vor.u32 %v1846, %v1836
        %v1850 = vshll.u32 %v1707, 16
        %v1852 = vrot.slane %v1850, 1
        %v1853 = vsel %vm536, %v1848, %v1852
        %v1854 = vshrl.u32 %v1706, 16
        %v1856 = vor.u32 %v1854, %v1844
        %v1858 = vshll.u32 %v1708, 16
        %v1860 = vrot.slane %v1858, 1
        %v1861 = vsel %vm536, %v1856, %v1860
        %v1862 = vshrl.u32 %v1707, 16
        %v1864 = vor.u32 %v1862, %v1852
        %v1866 = vshll.u32 %v1709, 16
        %v1868 = vrot.slane %v1866, 1
        %v1869 = vsel %vm536, %v1864, %v1868
        %v1870 = vshrl.u32 %v1708, 16
        %v1872 = vor.u32 %v1870, %v1860
        %v1874 = vshll.u32 %v1710, 16
        %v1876 = vrot.slane %v1874, 1
        %v1877 = vsel %vm536, %v1872, %v1876
        %v1878 = vshrl.u32 %v1709, 16
        %v1880 = vor.u32 %v1878, %v1868
        %v1882 = vshll.u32 %v1711, 16
        %v1884 = vrot.slane %v1882, 1
        %v1885 = vsel %vm536, %v1880, %v1884
        %v1886 = vshrl.u32 %v1710, 16
        %v1888 = vor.u32 %v1886, %v1876
        %v1890 = vshll.u32 %v1712, 16
        %v1892 = vrot.slane %v1890, 1
        %v1893 = vsel %vm536, %v1888, %v1892
        %v1894 = vshrl.u32 %v1711, 16
        %v1896 = vor.u32 %v1894, %v1884
        %v1898 = vshll.u32 %v1713, 16
        %v1900 = vrot.slane %v1898, 1
        %v1901 = vsel %vm536, %v1896, %v1900
        %v1902 = vshrl.u32 %v1712, 16
        %v1904 = vor.u32 %v1902, %v1892
        %v1906 = vshll.u32 %v1714, 16
        %v1908 = vrot.slane %v1906, 1
        %v1909 = vsel %vm536, %v1904, %v1908
        %v1910 = vshrl.u32 %v1713, 16
        %v1912 = vor.u32 %v1910, %v1900
        %v1914 = vshll.u32 %v1715, 16
        %v1916 = vrot.slane %v1914, 1
        %v1917 = vsel %vm536, %v1912, %v1916
        %v1918 = vshrl.u32 %v1714, 16
        %v1920 = vor.u32 %v1918, %v1908
        %v1922 = vshll.u32 %v1716, 16
        %v1924 = vrot.slane %v1922, 1
        %v1925 = vsel %vm536, %v1920, %v1924
        %v1926 = vshrl.u32 %v1715, 16
        %v1928 = vor.u32 %v1926, %v1916
        %v1930 = vshll.u32 %v1717, 16
        %v1932 = vrot.slane %v1930, 1
        %v1933 = vsel %vm536, %v1928, %v1932
        %v1934 = vshrl.u32 %v1716, 16
        %v1936 = vor.u32 %v1934, %v1924
        %v1938 = vshll.u32 %v1718, 16
        %v1940 = vrot.slane %v1938, 1
        %v1941 = vsel %vm536, %v1936, %v1940
        %v1942 = vshrl.u32 %v1717, 16
        %v1944 = vor.u32 %v1942, %v1932
        %v1946 = vshll.u32 %v1719, 16
        %v1948 = vrot.slane %v1946, 1
        %v1949 = vsel %vm536, %v1944, %v1948
        %v1950 = vshrl.u32 %v1718, 16
        %v1952 = vor.u32 %v1950, %v1940
        %v1954 = vshll.u32 %v1720, 16
        %v1956 = vrot.slane %v1954, 1
        %v1957 = vsel %vm536, %v1952, %v1956
        %v1958 = vshrl.u32 %v1719, 16
        %v1960 = vor.u32 %v1958, %v1948
        %v1962 = vshll.u32 %v1721, 16
        %v1964 = vrot.slane %v1962, 1
        %v1965 = vsel %vm536, %v1960, %v1964
        %v1966 = vshrl.u32 %v1720, 16
        %v1968 = vor.u32 %v1966, %v1956
        %v1970 = vshll.u32 %v1722, 16
        %v1972 = vrot.slane %v1970, 1
        %v1973 = vsel %vm536, %v1968, %v1972
        %v1974 = vshrl.u32 %v1721, 16
        %v1976 = vor.u32 %v1974, %v1964
        %v1978 = vshll.u32 %v1723, 16
        %v1980 = vrot.slane %v1978, 1
        %v1981 = vsel %vm536, %v1976, %v1980
        %v1982 = vshrl.u32 %v1722, 16
        %v1984 = vor.u32 %v1982, %v1972
        %v1986 = vshll.u32 %v1724, 16
        %v1988 = vrot.slane %v1986, 1
        %v1989 = vsel %vm536, %v1984, %v1988
        %v1990 = vshrl.u32 %v1723, 16
        %v1992 = vor.u32 %v1990, %v1980
        %v1994 = vshll.u32 %v1725, 16
        %v1996 = vrot.slane %v1994, 1
        %v1997 = vsel %vm536, %v1992, %v1996
        %v1998 = vshrl.u32 %v1724, 16
        %v2000 = vor.u32 %v1998, %v1988
        %v2002 = vshll.u32 %v1726, 16
        %v2004 = vrot.slane %v2002, 1
        %v2005 = vsel %vm536, %v2000, %v2004
        %v2006 = vshrl.u32 %v1725, 16
        %v2008 = vor.u32 %v2006, %v1996
        %v2010 = vshll.u32 %v1727, 16
        %v2012 = vrot.slane %v2010, 1
        %v2013 = vsel %vm536, %v2008, %v2012
        %v2014 = vshrl.u32 %v1726, 16
        %v2016 = vor.u32 %v2014, %v2004
        %v2018 = vshll.u32 %v1728, 16
        %v2020 = vrot.slane %v2018, 1
        %v2021 = vsel %vm536, %v2016, %v2020
        %v2022 = vshrl.u32 %v1727, 16
        %v2024 = vor.u32 %v2022, %v2012
        %v2026 = vshll.u32 %v1729, 16
        %v2028 = vrot.slane %v2026, 1
        %v2029 = vsel %vm536, %v2024, %v2028
        %v2030 = vshrl.u32 %v1728, 16
        %v2032 = vor.u32 %v2030, %v2020
        %v2033 = vshrl.u32 %v1729, 16
        %v2035 = vor.u32 %v2033, %v2028
        %v2053 = vsel %vm666, %v2032, 0
        %v2054 = vsel %vm666, %v2035, 0
        %s2055 = scalar_lea.vmem [#allocation6], 312
        %v2056 = vld [vmem:[%s2055] sm:$0xff]
        %v2057 = vld [vmem:[%s2055 + $0x8] sm:$0xf]
        %v2058 = vld [vmem:[%s2055 + $0xc] sm:$0xff]
        %v2059 = vld [vmem:[%s2055 + $0x14] sm:$0xf]
        %v2060 = vld [vmem:[%s2055 + $0x18] sm:$0xff]
        %v2061 = vld [vmem:[%s2055 + $0x20] sm:$0xf]
        %v2062 = vld [vmem:[%s2055 + $0x24] sm:$0xff]
        %v2063 = vld [vmem:[%s2055 + $0x2c] sm:$0xf]
        %v2064 = vld [vmem:[%s2055 + $0x30] sm:$0xff]
        %v2065 = vld [vmem:[%s2055 + $0x38] sm:$0xf]
        %v2066 = vld [vmem:[%s2055 + $0x3c] sm:$0xff]
        %v2067 = vld [vmem:[%s2055 + $0x44] sm:$0xf]
        %v2068 = vld [vmem:[%s2055 + $0x48] sm:$0xff]
        %v2069 = vld [vmem:[%s2055 + $0x50] sm:$0xf]
        %v2070 = vld [vmem:[%s2055 + $0x54] sm:$0xff]
        %v2071 = vld [vmem:[%s2055 + $0x5c] sm:$0xf]
        %v2072 = vld [vmem:[%s2055 + $0x60] sm:$0xff]
        %v2073 = vld [vmem:[%s2055 + $0x68] sm:$0xf]
        %v2074 = vld [vmem:[%s2055 + $0x6c] sm:$0xff]
        %v2075 = vld [vmem:[%s2055 + $0x74] sm:$0xf]
        %v2076 = vld [vmem:[%s2055 + $0x78] sm:$0xff]
        %v2077 = vld [vmem:[%s2055 + $0x80] sm:$0xf]
        %v2078 = vld [vmem:[%s2055 + $0x84] sm:$0xff]
        %v2079 = vld [vmem:[%s2055 + $0x8c] sm:$0xf]
        %v2080 = vld [vmem:[%s2055 + $0x90] sm:$0xff]
        %v2081 = vld [vmem:[%s2055 + $0x98] sm:$0xf]
        %v2082 = vld [vmem:[%s2055 + $0x9c] sm:$0xff]
        %v2083 = vld [vmem:[%s2055 + $0xa4] sm:$0xf]
        %v2084 = vld [vmem:[%s2055 + $0xa8] sm:$0xff]
        %v2085 = vld [vmem:[%s2055 + $0xb0] sm:$0xf]
        %v2086 = vld [vmem:[%s2055 + $0xb4] sm:$0xff]
        %v2087 = vld [vmem:[%s2055 + $0xbc] sm:$0xf]
        %v2088 = vld [vmem:[%s2055 + $0xc0] sm:$0xff]
        %v2089 = vld [vmem:[%s2055 + $0xc8] sm:$0xf]
        %v2090 = vld [vmem:[%s2055 + $0xcc] sm:$0xff]
        %v2091 = vld [vmem:[%s2055 + $0xd4] sm:$0xf]
        %v2092 = vld [vmem:[%s2055 + $0xd8] sm:$0xff]
        %v2093 = vld [vmem:[%s2055 + $0xe0] sm:$0xf]
        %v2094 = vld [vmem:[%s2055 + $0xe4] sm:$0xff]
        %v2095 = vld [vmem:[%s2055 + $0xec] sm:$0xf]
        %v2096 = vld [vmem:[%s2055 + $0xf0] sm:$0xff]
        %v2097 = vld [vmem:[%s2055 + $0xf8] sm:$0xf]
        %v2098 = vld [vmem:[%s2055 + $0xfc] sm:$0xff]
        %v2099 = vld [vmem:[%s2055 + $0x104] sm:$0xf]
        %v2100 = vld [vmem:[%s2055 + $0x108] sm:$0xff]
        %v2101 = vld [vmem:[%s2055 + $0x110] sm:$0xf]
        %v2102 = vld [vmem:[%s2055 + $0x114] sm:$0xff]
        %v2103 = vld [vmem:[%s2055 + $0x11c] sm:$0xf]
        %v2104 = vld [vmem:[%s2055 + $0x120] sm:$0xff]
        %v2105 = vld [vmem:[%s2055 + $0x128] sm:$0xf]
        %v2106 = vld [vmem:[%s2055 + $0x12c] sm:$0xff]
        %v2107 = vld [vmem:[%s2055 + $0x134] sm:$0xf]
        %v2160 = vunpack.c.l.b16 %v2056
        %v2161 = vunpack.c.h.b16 %v2056
        %v2162 = vunpack.c.l.b16 %v2057
        %v2163 = vunpack.c.l.b16 %v2058
        %v2164 = vunpack.c.h.b16 %v2058
        %v2165 = vunpack.c.l.b16 %v2059
        %v2166 = vunpack.c.l.b16 %v2060
        %v2167 = vunpack.c.h.b16 %v2060
        %v2168 = vunpack.c.l.b16 %v2061
        %v2169 = vunpack.c.l.b16 %v2062
        %v2170 = vunpack.c.h.b16 %v2062
        %v2171 = vunpack.c.l.b16 %v2063
        %v2172 = vunpack.c.l.b16 %v2064
        %v2173 = vunpack.c.h.b16 %v2064
        %v2174 = vunpack.c.l.b16 %v2065
        %v2175 = vunpack.c.l.b16 %v2066
        %v2176 = vunpack.c.h.b16 %v2066
        %v2177 = vunpack.c.l.b16 %v2067
        %v2178 = vunpack.c.l.b16 %v2068
        %v2179 = vunpack.c.h.b16 %v2068
        %v2180 = vunpack.c.l.b16 %v2069
        %v2181 = vunpack.c.l.b16 %v2070
        %v2182 = vunpack.c.h.b16 %v2070
        %v2183 = vunpack.c.l.b16 %v2071
        %v2184 = vunpack.c.l.b16 %v2072
        %v2185 = vunpack.c.h.b16 %v2072
        %v2186 = vunpack.c.l.b16 %v2073
        %v2187 = vunpack.c.l.b16 %v2074
        %v2188 = vunpack.c.h.b16 %v2074
        %v2189 = vunpack.c.l.b16 %v2075
        %v2190 = vunpack.c.l.b16 %v2076
        %v2191 = vunpack.c.h.b16 %v2076
        %v2192 = vunpack.c.l.b16 %v2077
        %v2193 = vunpack.c.l.b16 %v2078
        %v2194 = vunpack.c.h.b16 %v2078
        %v2195 = vunpack.c.l.b16 %v2079
        %v2196 = vunpack.c.l.b16 %v2080
        %v2197 = vunpack.c.h.b16 %v2080
        %v2198 = vunpack.c.l.b16 %v2081
        %v2199 = vunpack.c.l.b16 %v2082
        %v2200 = vunpack.c.h.b16 %v2082
        %v2201 = vunpack.c.l.b16 %v2083
        %v2202 = vunpack.c.l.b16 %v2084
        %v2203 = vunpack.c.h.b16 %v2084
        %v2204 = vunpack.c.l.b16 %v2085
        %v2205 = vunpack.c.l.b16 %v2086
        %v2206 = vunpack.c.h.b16 %v2086
        %v2207 = vunpack.c.l.b16 %v2087
        %v2208 = vunpack.c.l.b16 %v2088
        %v2209 = vunpack.c.h.b16 %v2088
        %v2210 = vunpack.c.l.b16 %v2089
        %v2211 = vunpack.c.l.b16 %v2090
        %v2212 = vunpack.c.h.b16 %v2090
        %v2213 = vunpack.c.l.b16 %v2091
        %v2214 = vunpack.c.l.b16 %v2092
        %v2215 = vunpack.c.h.b16 %v2092
        %v2216 = vunpack.c.l.b16 %v2093
        %v2217 = vunpack.c.l.b16 %v2094
        %v2218 = vunpack.c.h.b16 %v2094
        %v2219 = vunpack.c.l.b16 %v2095
        %v2220 = vunpack.c.l.b16 %v2096
        %v2221 = vunpack.c.h.b16 %v2096
        %v2222 = vunpack.c.l.b16 %v2097
        %v2223 = vunpack.c.l.b16 %v2098
        %v2224 = vunpack.c.h.b16 %v2098
        %v2225 = vunpack.c.l.b16 %v2099
        %v2226 = vunpack.c.l.b16 %v2100
        %v2227 = vunpack.c.h.b16 %v2100
        %v2228 = vunpack.c.l.b16 %v2101
        %v2229 = vunpack.c.l.b16 %v2102
        %v2230 = vunpack.c.h.b16 %v2102
        %v2231 = vunpack.c.l.b16 %v2103
        %v2232 = vunpack.c.l.b16 %v2104
        %v2233 = vunpack.c.h.b16 %v2104
        %v2234 = vunpack.c.l.b16 %v2105
        %v2235 = vunpack.c.l.b16 %v2106
        %v2236 = vunpack.c.h.b16 %v2106
        %v2237 = vunpack.c.l.b16 %v2107
        %v2238 = vpack.c.b16 %v2163, %v2160
        %v2239 = vpack.c.b16 %v2164, %v2161
        %v2240 = vpack.c.b16 %v2165, %v2162
        %v2241 = vpack.c.b16 %v2169, %v2166
        %v2242 = vpack.c.b16 %v2170, %v2167
        %v2243 = vpack.c.b16 %v2171, %v2168
        %v2244 = vpack.c.b16 %v2175, %v2172
        %v2245 = vpack.c.b16 %v2176, %v2173
        %v2246 = vpack.c.b16 %v2177, %v2174
        %v2247 = vpack.c.b16 %v2181, %v2178
        %v2248 = vpack.c.b16 %v2182, %v2179
        %v2249 = vpack.c.b16 %v2183, %v2180
        %v2250 = vpack.c.b16 %v2187, %v2184
        %v2251 = vpack.c.b16 %v2188, %v2185
        %v2252 = vpack.c.b16 %v2189, %v2186
        %v2253 = vpack.c.b16 %v2193, %v2190
        %v2254 = vpack.c.b16 %v2194, %v2191
        %v2255 = vpack.c.b16 %v2195, %v2192
        %v2256 = vpack.c.b16 %v2199, %v2196
        %v2257 = vpack.c.b16 %v2200, %v2197
        %v2258 = vpack.c.b16 %v2201, %v2198
        %v2259 = vpack.c.b16 %v2205, %v2202
        %v2260 = vpack.c.b16 %v2206, %v2203
        %v2261 = vpack.c.b16 %v2207, %v2204
        %v2262 = vpack.c.b16 %v2211, %v2208
        %v2263 = vpack.c.b16 %v2212, %v2209
        %v2264 = vpack.c.b16 %v2213, %v2210
        %v2265 = vpack.c.b16 %v2217, %v2214
        %v2266 = vpack.c.b16 %v2218, %v2215
        %v2267 = vpack.c.b16 %v2219, %v2216
        %v2268 = vpack.c.b16 %v2223, %v2220
        %v2269 = vpack.c.b16 %v2224, %v2221
        %v2270 = vpack.c.b16 %v2225, %v2222
        %v2271 = vpack.c.b16 %v2229, %v2226
        %v2272 = vpack.c.b16 %v2230, %v2227
        %v2273 = vpack.c.b16 %v2231, %v2228
        %v2274 = vpack.c.b16 %v2235, %v2232
        %v2275 = vpack.c.b16 %v2236, %v2233
        %v2276 = vpack.c.b16 %v2237, %v2234
        %vm2316 = vcmask 654336
        %v2318 = vsel %vm2316, %v1805, 0
        %v2321 = vsel %vm2316, %v1821, 0
        %v2324 = vsel %vm2316, %v1837, 0
        %v2327 = vsel %vm2316, %v1853, 0
        %v2330 = vsel %vm2316, %v1869, 0
        %v2333 = vsel %vm2316, %v1885, 0
        %v2336 = vsel %vm2316, %v1901, 0
        %v2339 = vsel %vm2316, %v1917, 0
        %v2342 = vsel %vm2316, %v1933, 0
        %v2345 = vsel %vm2316, %v1949, 0
        %v2348 = vsel %vm2316, %v1965, 0
        %v2351 = vsel %vm2316, %v1981, 0
        %v2354 = vsel %vm2316, %v1997, 0
        %v2357 = vsel %vm2316, %v2013, 0
        %v2360 = vsel %vm2316, %v2029, 0
        %v2363 = vsel %vm2316, %v2054, 0
        %2365 = vmatprep.subr.bf16.mxu0 %v2239
        %2366 = vmatpush1.bf16.msra.mxu0 %v2238
        %2367 = vmatprep.subr.bf16.mxu0 %v2242
        %2368 = vmatpush1.bf16.msra.mxu0 %v2241
        %2369 = vmatprep.subr.bf16.mxu0 %v2245
        %2370 = vmatpush1.bf16.msra.mxu0 %v2244
        %2371 = vmatprep.subr.bf16.mxu0 %v2248
        %2372 = vmatpush1.bf16.msra.mxu0 %v2247
        %2373 = vmatprep.subr.bf16.mxu0 %v2251
        %2374 = vmatpush1.bf16.msra.mxu0 %v2250
        %2375 = vmatprep.subr.bf16.mxu0 %v2254
        %2376 = vmatpush1.bf16.msra.mxu0 %v2253
        %2377 = vmatprep.subr.bf16.mxu0 %v2257
        %2378 = vmatpush1.bf16.msra.mxu0 %v2256
        %2379 = vmatprep.subr.bf16.mxu0 %v2260
        %2380 = vmatpush1.bf16.msra.mxu0 %v2259
        %2381 = vmatprep.subr.bf16.mxu0 %v2263
        %2382 = vmatpush1.bf16.msra.mxu0 %v2262
        %2383 = vmatprep.subr.bf16.mxu0 %v2266
        %2384 = vmatpush1.bf16.msra.mxu0 %v2265
        %2385 = vmatprep.subr.bf16.mxu0 %v2269
        %2386 = vmatpush1.bf16.msra.mxu0 %v2268
        %2387 = vmatprep.subr.bf16.mxu0 %v2272
        %2388 = vmatpush1.bf16.msra.mxu0 %v2271
        %2389 = vmatprep.subr.bf16.mxu0 %v2275
        %2390 = vmatpush1.bf16.msra.mxu0 %v2274
        %2391 = vmatprep.subr.bf16.mxu0 0
        %2392 = vmatpush1.bf16.msra.mxu0 0
        %2393 = vmatprep.subr.bf16.mxu0 0
        %2394 = vmatpush1.bf16.msra.mxu0 0
        %2395 = vmatprep.subr.bf16.mxu0 0
        %2396 = vmatpush1.bf16.msra.mxu0 0
        %2397 = vmatprep.mubr.bf16.mxu0 %v2318
        %2398 = vmatmul.mubr.bf16.gmra.mrb[0].mxu0 %v1793
        %v2399 = vpop.f32.mrb[0].mxu0
        %v2400 = vadd.f32 0.0, %v2399
        %v2401 = vpop.f32.mrb[0].mxu0
        %v2402 = vadd.f32 0.0, %v2401
        %v2403 = vpop.f32.mrb[0].mxu0
        %v2404 = vadd.f32 0.0, %v2403
        %v2405 = vpop.f32.mrb[0].mxu0
        %v2406 = vadd.f32 0.0, %v2405
        %2407 = vmatprep.mubr.bf16.mxu0 %v2321
        %2408 = vmatmul.mubr.bf16.gmra.mrb[0].mxu0 %v1813
        %v2409 = vpop.f32.mrb[0].mxu0
        %v2410 = vadd.f32 0.0, %v2409
        %v2411 = vpop.f32.mrb[0].mxu0
        %v2412 = vadd.f32 0.0, %v2411
        %v2413 = vpop.f32.mrb[0].mxu0
        %v2414 = vadd.f32 0.0, %v2413
        %v2415 = vpop.f32.mrb[0].mxu0
        %v2416 = vadd.f32 0.0, %v2415
        %2417 = vmatprep.mubr.bf16.mxu0 %v2324
        %2418 = vmatmul.mubr.bf16.gmra.mrb[0].mxu0 %v1829
        %v2419 = vpop.f32.mrb[0].mxu0
        %v2420 = vadd.f32 0.0, %v2419
        %v2421 = vpop.f32.mrb[0].mxu0
        %v2422 = vadd.f32 0.0, %v2421
        %v2423 = vpop.f32.mrb[0].mxu0
        %v2424 = vadd.f32 0.0, %v2423
        %v2425 = vpop.f32.mrb[0].mxu0
        %v2426 = vadd.f32 0.0, %v2425
        %2427 = vmatprep.mubr.bf16.mxu0 %v2327
        %2428 = vmatmul.mubr.bf16.gmra.mrb[0].mxu0 %v1845
        %v2429 = vpop.f32.mrb[0].mxu0
        %v2430 = vadd.f32 0.0, %v2429
        %v2431 = vpop.f32.mrb[0].mxu0
        %v2432 = vadd.f32 0.0, %v2431
        %v2433 = vpop.f32.mrb[0].mxu0
        %v2434 = vadd.f32 0.0, %v2433
        %v2435 = vpop.f32.mrb[0].mxu0
        %v2436 = vadd.f32 0.0, %v2435
        %2437 = vmatprep.mubr.bf16.mxu0 %v2330
        %2438 = vmatmul.mubr.bf16.gmra.mrb[0].mxu0 %v1861
        %v2439 = vpop.f32.mrb[0].mxu0
        %v2440 = vadd.f32 0.0, %v2439
        %v2441 = vpop.f32.mrb[0].mxu0
        %v2442 = vadd.f32 0.0, %v2441
        %v2443 = vpop.f32.mrb[0].mxu0
        %v2444 = vadd.f32 0.0, %v2443
        %v2445 = vpop.f32.mrb[0].mxu0
        %v2446 = vadd.f32 0.0, %v2445
        %2447 = vmatprep.mubr.bf16.mxu0 %v2333
        %2448 = vmatmul.mubr.bf16.gmra.mrb[0].mxu0 %v1877
        %v2449 = vpop.f32.mrb[0].mxu0
        %v2450 = vadd.f32 0.0, %v2449
        %v2451 = vpop.f32.mrb[0].mxu0
        %v2452 = vadd.f32 0.0, %v2451
        %v2453 = vpop.f32.mrb[0].mxu0
        %v2454 = vadd.f32 0.0, %v2453
        %v2455 = vpop.f32.mrb[0].mxu0
        %v2456 = vadd.f32 0.0, %v2455
        %2457 = vmatprep.mubr.bf16.mxu0 %v2336
        %2458 = vmatmul.mubr.bf16.gmra.mrb[0].mxu0 %v1893
        %v2459 = vpop.f32.mrb[0].mxu0
        %v2460 = vadd.f32 0.0, %v2459
        %v2461 = vpop.f32.mrb[0].mxu0
        %v2462 = vadd.f32 0.0, %v2461
        %v2463 = vpop.f32.mrb[0].mxu0
        %v2464 = vadd.f32 0.0, %v2463
        %v2465 = vpop.f32.mrb[0].mxu0
        %v2466 = vadd.f32 0.0, %v2465
        %2467 = vmatprep.mubr.bf16.mxu0 %v2339
        %2468 = vmatmul.mubr.bf16.gmra.mrb[0].mxu0 %v1909
        %v2469 = vpop.f32.mrb[0].mxu0
        %v2470 = vadd.f32 0.0, %v2469
        %v2471 = vpop.f32.mrb[0].mxu0
        %v2472 = vadd.f32 0.0, %v2471
        %v2473 = vpop.f32.mrb[0].mxu0
        %v2474 = vadd.f32 0.0, %v2473
        %v2475 = vpop.f32.mrb[0].mxu0
        %v2476 = vadd.f32 0.0, %v2475
        %2477 = vmatprep.mubr.bf16.mxu0 %v2342
        %2478 = vmatmul.mubr.bf16.gmra.mrb[0].mxu0 %v1925
        %v2479 = vpop.f32.mrb[0].mxu0
        %v2480 = vadd.f32 0.0, %v2479
        %v2481 = vpop.f32.mrb[0].mxu0
        %v2482 = vadd.f32 0.0, %v2481
        %v2483 = vpop.f32.mrb[0].mxu0
        %v2484 = vadd.f32 0.0, %v2483
        %v2485 = vpop.f32.mrb[0].mxu0
        %v2486 = vadd.f32 0.0, %v2485
        %2487 = vmatprep.mubr.bf16.mxu0 %v2345
        %2488 = vmatmul.mubr.bf16.gmra.mrb[0].mxu0 %v1941
        %v2489 = vpop.f32.mrb[0].mxu0
        %v2490 = vadd.f32 0.0, %v2489
        %v2491 = vpop.f32.mrb[0].mxu0
        %v2492 = vadd.f32 0.0, %v2491
        %v2493 = vpop.f32.mrb[0].mxu0
        %v2494 = vadd.f32 0.0, %v2493
        %v2495 = vpop.f32.mrb[0].mxu0
        %v2496 = vadd.f32 0.0, %v2495
        %2497 = vmatprep.mubr.bf16.mxu0 %v2348
        %2498 = vmatmul.mubr.bf16.gmra.mrb[0].mxu0 %v1957
        %v2499 = vpop.f32.mrb[0].mxu0
        %v2500 = vadd.f32 0.0, %v2499
        %v2501 = vpop.f32.mrb[0].mxu0
        %v2502 = vadd.f32 0.0, %v2501
        %v2503 = vpop.f32.mrb[0].mxu0
        %v2504 = vadd.f32 0.0, %v2503
        %v2505 = vpop.f32.mrb[0].mxu0
        %v2506 = vadd.f32 0.0, %v2505
        %2507 = vmatprep.mubr.bf16.mxu0 %v2351
        %2508 = vmatmul.mubr.bf16.gmra.mrb[0].mxu0 %v1973
        %v2509 = vpop.f32.mrb[0].mxu0
        %v2510 = vadd.f32 0.0, %v2509
        %v2511 = vpop.f32.mrb[0].mxu0
        %v2512 = vadd.f32 0.0, %v2511
        %v2513 = vpop.f32.mrb[0].mxu0
        %v2514 = vadd.f32 0.0, %v2513
        %v2515 = vpop.f32.mrb[0].mxu0
        %v2516 = vadd.f32 0.0, %v2515
        %2517 = vmatprep.mubr.bf16.mxu0 %v2354
        %2518 = vmatmul.mubr.bf16.gmra.mrb[0].mxu0 %v1989
        %v2519 = vpop.f32.mrb[0].mxu0
        %v2520 = vadd.f32 0.0, %v2519
        %v2521 = vpop.f32.mrb[0].mxu0
        %v2522 = vadd.f32 0.0, %v2521
        %v2523 = vpop.f32.mrb[0].mxu0
        %v2524 = vadd.f32 0.0, %v2523
        %v2525 = vpop.f32.mrb[0].mxu0
        %v2526 = vadd.f32 0.0, %v2525
        %2527 = vmatprep.mubr.bf16.mxu0 %v2357
        %2528 = vmatmul.mubr.bf16.gmra.mrb[0].mxu0 %v2005
        %v2529 = vpop.f32.mrb[0].mxu0
        %v2530 = vadd.f32 0.0, %v2529
        %v2531 = vpop.f32.mrb[0].mxu0
        %v2532 = vadd.f32 0.0, %v2531
        %v2533 = vpop.f32.mrb[0].mxu0
        %v2534 = vadd.f32 0.0, %v2533
        %v2535 = vpop.f32.mrb[0].mxu0
        %v2536 = vadd.f32 0.0, %v2535
        %2537 = vmatprep.mubr.bf16.mxu0 %v2360
        %2538 = vmatmul.mubr.bf16.gmra.mrb[0].mxu0 %v2021
        %v2539 = vpop.f32.mrb[0].mxu0
        %v2540 = vadd.f32 0.0, %v2539
        %v2541 = vpop.f32.mrb[0].mxu0
        %v2542 = vadd.f32 0.0, %v2541
        %v2543 = vpop.f32.mrb[0].mxu0
        %v2544 = vadd.f32 0.0, %v2543
        %v2545 = vpop.f32.mrb[0].mxu0
        %v2546 = vadd.f32 0.0, %v2545
        %2547 = vmatprep.mubr.bf16.mxu0 %v2363
        %2548 = vmatmul.mubr.bf16.gmra.mrb[0].mxu0 %v2053
        %v2549 = vpop.f32.mrb[0].mxu0
        %v2550 = vadd.f32 0.0, %v2549
        %v2551 = vpop.f32.mrb[0].mxu0
        %v2552 = vadd.f32 0.0, %v2551
        %v2553 = vpop.f32.mrb[0].mxu0
        %v2554 = vadd.f32 0.0, %v2553
        %v2555 = vpop.f32.mrb[0].mxu0
        %v2556 = vadd.f32 0.0, %v2555
        %2557 = vdwg.mxu0
        %2558 = vmatprep.subr.bf16.mxu0 0
        %2559 = vmatpush1.bf16.msra.mxu0 %v2240
        %2560 = vmatprep.subr.bf16.mxu0 0
        %2561 = vmatpush1.bf16.msra.mxu0 %v2243
        %2562 = vmatprep.subr.bf16.mxu0 0
        %2563 = vmatpush1.bf16.msra.mxu0 %v2246
        %2564 = vmatprep.subr.bf16.mxu0 0
        %2565 = vmatpush1.bf16.msra.mxu0 %v2249
        %2566 = vmatprep.subr.bf16.mxu0 0
        %2567 = vmatpush1.bf16.msra.mxu0 %v2252
        %2568 = vmatprep.subr.bf16.mxu0 0
        %2569 = vmatpush1.bf16.msra.mxu0 %v2255
        %2570 = vmatprep.subr.bf16.mxu0 0
        %2571 = vmatpush1.bf16.msra.mxu0 %v2258
        %2572 = vmatprep.subr.bf16.mxu0 0
        %2573 = vmatpush1.bf16.msra.mxu0 %v2261
        %2574 = vmatprep.subr.bf16.mxu0 0
        %2575 = vmatpush1.bf16.msra.mxu0 %v2264
        %2576 = vmatprep.subr.bf16.mxu0 0
        %2577 = vmatpush1.bf16.msra.mxu0 %v2267
        %2578 = vmatprep.subr.bf16.mxu0 0
        %2579 = vmatpush1.bf16.msra.mxu0 %v2270
        %2580 = vmatprep.subr.bf16.mxu0 0
        %2581 = vmatpush1.bf16.msra.mxu0 %v2273
        %2582 = vmatprep.subr.bf16.mxu0 0
        %2583 = vmatpush1.bf16.msra.mxu0 %v2276
        %2584 = vmatprep.subr.bf16.mxu0 0
        %2585 = vmatpush1.bf16.msra.mxu0 0
        %2586 = vmatprep.subr.bf16.mxu0 0
        %2587 = vmatpush1.bf16.msra.mxu0 0
        %2588 = vmatprep.subr.bf16.mxu0 0
        %2589 = vmatpush1.bf16.msra.mxu0 0
        %2590 = vmatprep.mubr.bf16.mxu0 %v2318
        %2591 = vmatmul.mubr.bf16.gmra.mrb[0].mxu0 %v1793
        %v2592 = vpop.f32.mrb[0].mxu0
        %v2593 = vadd.f32 0.0, %v2592
        %v2594 = vpop.f32.mrb[0].mxu0
        %v2595 = vpop.f32.mrb[0].mxu0
        %v2596 = vadd.f32 0.0, %v2595
        %v2597 = vpop.f32.mrb[0].mxu0
        %2598 = vmatprep.mubr.bf16.mxu0 %v2321
        %2599 = vmatmul.mubr.bf16.gmra.mrb[0].mxu0 %v1813
        %v2600 = vpop.f32.mrb[0].mxu0
        %v2601 = vadd.f32 0.0, %v2600
        %v2602 = vpop.f32.mrb[0].mxu0
        %v2603 = vpop.f32.mrb[0].mxu0
        %v2604 = vadd.f32 0.0, %v2603
        %v2605 = vpop.f32.mrb[0].mxu0
        %2606 = vmatprep.mubr.bf16.mxu0 %v2324
        %2607 = vmatmul.mubr.bf16.gmra.mrb[0].mxu0 %v1829
        %v2608 = vpop.f32.mrb[0].mxu0
        %v2609 = vadd.f32 0.0, %v2608
        %v2610 = vpop.f32.mrb[0].mxu0
        %v2611 = vpop.f32.mrb[0].mxu0
        %v2612 = vadd.f32 0.0, %v2611
        %v2613 = vpop.f32.mrb[0].mxu0
        %2614 = vmatprep.mubr.bf16.mxu0 %v2327
        %2615 = vmatmul.mubr.bf16.gmra.mrb[0].mxu0 %v1845
        %v2616 = vpop.f32.mrb[0].mxu0
        %v2617 = vadd.f32 0.0, %v2616
        %v2618 = vpop.f32.mrb[0].mxu0
        %v2619 = vpop.f32.mrb[0].mxu0
        %v2620 = vadd.f32 0.0, %v2619
        %v2621 = vpop.f32.mrb[0].mxu0
        %2622 = vmatprep.mubr.bf16.mxu0 %v2330
        %2623 = vmatmul.mubr.bf16.gmra.mrb[0].mxu0 %v1861
        %v2624 = vpop.f32.mrb[0].mxu0
        %v2625 = vadd.f32 0.0, %v2624
        %v2626 = vpop.f32.mrb[0].mxu0
        %v2627 = vpop.f32.mrb[0].mxu0
        %v2628 = vadd.f32 0.0, %v2627
        %v2629 = vpop.f32.mrb[0].mxu0
        %2630 = vmatprep.mubr.bf16.mxu0 %v2333
        %2631 = vmatmul.mubr.bf16.gmra.mrb[0].mxu0 %v1877
        %v2632 = vpop.f32.mrb[0].mxu0
        %v2633 = vadd.f32 0.0, %v2632
        %v2634 = vpop.f32.mrb[0].mxu0
        %v2635 = vpop.f32.mrb[0].mxu0
        %v2636 = vadd.f32 0.0, %v2635
        %v2637 = vpop.f32.mrb[0].mxu0
        %2638 = vmatprep.mubr.bf16.mxu0 %v2336
        %2639 = vmatmul.mubr.bf16.gmra.mrb[0].mxu0 %v1893
        %v2640 = vpop.f32.mrb[0].mxu0
        %v2641 = vadd.f32 0.0, %v2640
        %v2642 = vpop.f32.mrb[0].mxu0
        %v2643 = vpop.f32.mrb[0].mxu0
        %v2644 = vadd.f32 0.0, %v2643
        %v2645 = vpop.f32.mrb[0].mxu0
        %2646 = vmatprep.mubr.bf16.mxu0 %v2339
        %2647 = vmatmul.mubr.bf16.gmra.mrb[0].mxu0 %v1909
        %v2648 = vpop.f32.mrb[0].mxu0
        %v2649 = vadd.f32 0.0, %v2648
        %v2650 = vpop.f32.mrb[0].mxu0
        %v2651 = vpop.f32.mrb[0].mxu0
        %v2652 = vadd.f32 0.0, %v2651
        %v2653 = vpop.f32.mrb[0].mxu0
        %2654 = vmatprep.mubr.bf16.mxu0 %v2342
        %2655 = vmatmul.mubr.bf16.gmra.mrb[0].mxu0 %v1925
        %v2656 = vpop.f32.mrb[0].mxu0
        %v2657 = vadd.f32 0.0, %v2656
        %v2658 = vpop.f32.mrb[0].mxu0
        %v2659 = vpop.f32.mrb[0].mxu0
        %v2660 = vadd.f32 0.0, %v2659
        %v2661 = vpop.f32.mrb[0].mxu0
        %2662 = vmatprep.mubr.bf16.mxu0 %v2345
        %2663 = vmatmul.mubr.bf16.gmra.mrb[0].mxu0 %v1941
        %v2664 = vpop.f32.mrb[0].mxu0
        %v2665 = vadd.f32 0.0, %v2664
        %v2666 = vpop.f32.mrb[0].mxu0
        %v2667 = vpop.f32.mrb[0].mxu0
        %v2668 = vadd.f32 0.0, %v2667
        %v2669 = vpop.f32.mrb[0].mxu0
        %2670 = vmatprep.mubr.bf16.mxu0 %v2348
        %2671 = vmatmul.mubr.bf16.gmra.mrb[0].mxu0 %v1957
        %v2672 = vpop.f32.mrb[0].mxu0
        %v2673 = vadd.f32 0.0, %v2672
        %v2674 = vpop.f32.mrb[0].mxu0
        %v2675 = vpop.f32.mrb[0].mxu0
        %v2676 = vadd.f32 0.0, %v2675
        %v2677 = vpop.f32.mrb[0].mxu0
        %2678 = vmatprep.mubr.bf16.mxu0 %v2351
        %2679 = vmatmul.mubr.bf16.gmra.mrb[0].mxu0 %v1973
        %v2680 = vpop.f32.mrb[0].mxu0
        %v2681 = vadd.f32 0.0, %v2680
        %v2682 = vpop.f32.mrb[0].mxu0
        %v2683 = vpop.f32.mrb[0].mxu0
        %v2684 = vadd.f32 0.0, %v2683
        %v2685 = vpop.f32.mrb[0].mxu0
        %2686 = vmatprep.mubr.bf16.mxu0 %v2354
        %2687 = vmatmul.mubr.bf16.gmra.mrb[0].mxu0 %v1989
        %v2688 = vpop.f32.mrb[0].mxu0
        %v2689 = vadd.f32 0.0, %v2688
        %v2690 = vpop.f32.mrb[0].mxu0
        %v2691 = vpop.f32.mrb[0].mxu0
        %v2692 = vadd.f32 0.0, %v2691
        %v2693 = vpop.f32.mrb[0].mxu0
        %2694 = vmatprep.mubr.bf16.mxu0 %v2357
        %2695 = vmatmul.mubr.bf16.gmra.mrb[0].mxu0 %v2005
        %v2696 = vpop.f32.mrb[0].mxu0
        %v2697 = vadd.f32 0.0, %v2696
        %v2698 = vpop.f32.mrb[0].mxu0
        %v2699 = vpop.f32.mrb[0].mxu0
        %v2700 = vadd.f32 0.0, %v2699
        %v2701 = vpop.f32.mrb[0].mxu0
        %2702 = vmatprep.mubr.bf16.mxu0 %v2360
        %2703 = vmatmul.mubr.bf16.gmra.mrb[0].mxu0 %v2021
        %v2704 = vpop.f32.mrb[0].mxu0
        %v2705 = vadd.f32 0.0, %v2704
        %v2706 = vpop.f32.mrb[0].mxu0
        %v2707 = vpop.f32.mrb[0].mxu0
        %v2708 = vadd.f32 0.0, %v2707
        %v2709 = vpop.f32.mrb[0].mxu0
        %2710 = vmatprep.mubr.bf16.mxu0 %v2363
        %2711 = vmatmul.mubr.bf16.gmra.mrb[0].mxu0 %v2053
        %v2712 = vpop.f32.mrb[0].mxu0
        %v2713 = vadd.f32 0.0, %v2712
        %v2714 = vpop.f32.mrb[0].mxu0
        %v2715 = vpop.f32.mrb[0].mxu0
        %v2716 = vadd.f32 0.0, %v2715
        %v2717 = vpop.f32.mrb[0].mxu0
        %2718 = vdwg.mxu0
        %v2771 = vunpack.c.l.b16 %v1730
        %v2772 = vunpack.c.h.b16 %v1730
        %v2773 = vunpack.c.l.b16 %v1731
        %v2774 = vunpack.c.l.b16 %v1732
        %v2775 = vunpack.c.h.b16 %v1732
        %v2776 = vunpack.c.l.b16 %v1733
        %v2777 = vunpack.c.l.b16 %v1734
        %v2778 = vunpack.c.h.b16 %v1734
        %v2779 = vunpack.c.l.b16 %v1735
        %v2780 = vunpack.c.l.b16 %v1736
        %v2781 = vunpack.c.h.b16 %v1736
        %v2782 = vunpack.c.l.b16 %v1737
        %v2783 = vunpack.c.l.b16 %v1738
        %v2784 = vunpack.c.h.b16 %v1738
        %v2785 = vunpack.c.l.b16 %v1739
        %v2786 = vunpack.c.l.b16 %v1740
        %v2787 = vunpack.c.h.b16 %v1740
        %v2788 = vunpack.c.l.b16 %v1741
        %v2789 = vunpack.c.l.b16 %v1742
        %v2790 = vunpack.c.h.b16 %v1742
        %v2791 = vunpack.c.l.b16 %v1743
        %v2792 = vunpack.c.l.b16 %v1744
        %v2793 = vunpack.c.h.b16 %v1744
        %v2794 = vunpack.c.l.b16 %v1745
        %v2795 = vunpack.c.l.b16 %v1746
        %v2796 = vunpack.c.h.b16 %v1746
        %v2797 = vunpack.c.l.b16 %v1747
        %v2798 = vunpack.c.l.b16 %v1748
        %v2799 = vunpack.c.h.b16 %v1748
        %v2800 = vunpack.c.l.b16 %v1749
        %v2801 = vunpack.c.l.b16 %v1750
        %v2802 = vunpack.c.h.b16 %v1750
        %v2803 = vunpack.c.l.b16 %v1751
        %v2804 = vunpack.c.l.b16 %v1752
        %v2805 = vunpack.c.h.b16 %v1752
        %v2806 = vunpack.c.l.b16 %v1753
        %v2807 = vunpack.c.l.b16 %v1754
        %v2808 = vunpack.c.h.b16 %v1754
        %v2809 = vunpack.c.l.b16 %v1755
        %v2810 = vunpack.c.l.b16 %v1756
        %v2811 = vunpack.c.h.b16 %v1756
        %v2812 = vunpack.c.l.b16 %v1757
        %v2813 = vunpack.c.l.b16 %v1758
        %v2814 = vunpack.c.h.b16 %v1758
        %v2815 = vunpack.c.l.b16 %v1759
        %v2816 = vunpack.c.l.b16 %v1760
        %v2817 = vunpack.c.h.b16 %v1760
        %v2818 = vunpack.c.l.b16 %v1761
        %v2819 = vunpack.c.l.b16 %v1762
        %v2820 = vunpack.c.h.b16 %v1762
        %v2821 = vunpack.c.l.b16 %v1763
        %v2822 = vunpack.c.l.b16 %v1764
        %v2823 = vunpack.c.h.b16 %v1764
        %v2824 = vunpack.c.l.b16 %v1765
        %v2825 = vunpack.c.l.b16 %v1766
        %v2826 = vunpack.c.h.b16 %v1766
        %v2827 = vunpack.c.l.b16 %v1767
        %v2828 = vunpack.c.l.b16 %v1768
        %v2829 = vunpack.c.h.b16 %v1768
        %v2830 = vunpack.c.l.b16 %v1769
        %v2831 = vunpack.c.l.b16 %v1770
        %v2832 = vunpack.c.h.b16 %v1770
        %v2833 = vunpack.c.l.b16 %v1771
        %v2834 = vunpack.c.l.b16 %v1772
        %v2835 = vunpack.c.h.b16 %v1772
        %v2836 = vunpack.c.l.b16 %v1773
        %v2837 = vunpack.c.l.b16 %v1774
        %v2838 = vunpack.c.h.b16 %v1774
        %v2839 = vunpack.c.l.b16 %v1775
        %v2840 = vunpack.c.l.b16 %v1776
        %v2841 = vunpack.c.h.b16 %v1776
        %v2842 = vunpack.c.l.b16 %v1777
        %v2843 = vunpack.c.l.b16 %v1778
        %v2844 = vunpack.c.h.b16 %v1778
        %v2845 = vunpack.c.l.b16 %v1779
        %v2846 = vunpack.c.l.b16 %v1780
        %v2847 = vunpack.c.h.b16 %v1780
        %v2848 = vunpack.c.l.b16 %v1781
        %v2849 = vpack.c.b16 %v2774, %v2771
        %v2850 = vpack.c.b16 %v2775, %v2772
        %v2851 = vpack.c.b16 %v2776, %v2773
        %v2852 = vpack.c.b16 %v2780, %v2777
        %v2853 = vpack.c.b16 %v2781, %v2778
        %v2854 = vpack.c.b16 %v2782, %v2779
        %v2855 = vpack.c.b16 %v2786, %v2783
        %v2856 = vpack.c.b16 %v2787, %v2784
        %v2857 = vpack.c.b16 %v2788, %v2785
        %v2858 = vpack.c.b16 %v2792, %v2789
        %v2859 = vpack.c.b16 %v2793, %v2790
        %v2860 = vpack.c.b16 %v2794, %v2791
        %v2861 = vpack.c.b16 %v2798, %v2795
        %v2862 = vpack.c.b16 %v2799, %v2796
        %v2863 = vpack.c.b16 %v2800, %v2797
        %v2864 = vpack.c.b16 %v2804, %v2801
        %v2865 = vpack.c.b16 %v2805, %v2802
        %v2866 = vpack.c.b16 %v2806, %v2803
        %v2867 = vpack.c.b16 %v2810, %v2807
        %v2868 = vpack.c.b16 %v2811, %v2808
        %v2869 = vpack.c.b16 %v2812, %v2809
        %v2870 = vpack.c.b16 %v2816, %v2813
        %v2871 = vpack.c.b16 %v2817, %v2814
        %v2872 = vpack.c.b16 %v2818, %v2815
        %v2873 = vpack.c.b16 %v2822, %v2819
        %v2874 = vpack.c.b16 %v2823, %v2820
        %v2875 = vpack.c.b16 %v2824, %v2821
        %v2876 = vpack.c.b16 %v2828, %v2825
        %v2877 = vpack.c.b16 %v2829, %v2826
        %v2878 = vpack.c.b16 %v2830, %v2827
        %v2879 = vpack.c.b16 %v2834, %v2831
        %v2880 = vpack.c.b16 %v2835, %v2832
        %v2881 = vpack.c.b16 %v2836, %v2833
        %v2882 = vpack.c.b16 %v2840, %v2837
        %v2883 = vpack.c.b16 %v2841, %v2838
        %v2884 = vpack.c.b16 %v2842, %v2839
        %v2885 = vpack.c.b16 %v2846, %v2843
        %v2886 = vpack.c.b16 %v2847, %v2844
        %v2887 = vpack.c.b16 %v2848, %v2845
        %v2927 = vsel %vm2316, %v1699, 0
        %v2929 = vsel %vm2316, %v1701, 0
        %v2931 = vsel %vm2316, %v1703, 0
        %v2933 = vsel %vm2316, %v1705, 0
        %v2935 = vsel %vm2316, %v1707, 0
        %v2937 = vsel %vm2316, %v1709, 0
        %v2939 = vsel %vm2316, %v1711, 0
        %v2941 = vsel %vm2316, %v1713, 0
        %v2943 = vsel %vm2316, %v1715, 0
        %v2945 = vsel %vm2316, %v1717, 0
        %v2947 = vsel %vm2316, %v1719, 0
        %v2949 = vsel %vm2316, %v1721, 0
        %v2951 = vsel %vm2316, %v1723, 0
        %v2953 = vsel %vm2316, %v1725, 0
        %v2955 = vsel %vm2316, %v1727, 0
        %v2957 = vsel %vm2316, %v1729, 0
        %2959 = vmatprep.subr.bf16.mxu0 %v2850
        %2960 = vmatpush1.bf16.msra.mxu0 %v2849
        %2961 = vmatprep.subr.bf16.mxu0 %v2853
        %2962 = vmatpush1.bf16.msra.mxu0 %v2852
        %2963 = vmatprep.subr.bf16.mxu0 %v2856
        %2964 = vmatpush1.bf16.msra.mxu0 %v2855
        %2965 = vmatprep.subr.bf16.mxu0 %v2859
        %2966 = vmatpush1.bf16.msra.mxu0 %v2858
        %2967 = vmatprep.subr.bf16.mxu0 %v2862
        %2968 = vmatpush1.bf16.msra.mxu0 %v2861
        %2969 = vmatprep.subr.bf16.mxu0 %v2865
        %2970 = vmatpush1.bf16.msra.mxu0 %v2864
        %2971 = vmatprep.subr.bf16.mxu0 %v2868
        %2972 = vmatpush1.bf16.msra.mxu0 %v2867
        %2973 = vmatprep.subr.bf16.mxu0 %v2871
        %2974 = vmatpush1.bf16.msra.mxu0 %v2870
        %2975 = vmatprep.subr.bf16.mxu0 %v2874
        %2976 = vmatpush1.bf16.msra.mxu0 %v2873
        %2977 = vmatprep.subr.bf16.mxu0 %v2877
        %2978 = vmatpush1.bf16.msra.mxu0 %v2876
        %2979 = vmatprep.subr.bf16.mxu0 %v2880
        %2980 = vmatpush1.bf16.msra.mxu0 %v2879
        %2981 = vmatprep.subr.bf16.mxu0 %v2883
        %2982 = vmatpush1.bf16.msra.mxu0 %v2882
        %2983 = vmatprep.subr.bf16.mxu0 %v2886
        %2984 = vmatpush1.bf16.msra.mxu0 %v2885
        %2985 = vmatprep.subr.bf16.mxu0 0
        %2986 = vmatpush1.bf16.msra.mxu0 0
        %2987 = vmatprep.subr.bf16.mxu0 0
        %2988 = vmatpush1.bf16.msra.mxu0 0
        %2989 = vmatprep.subr.bf16.mxu0 0
        %2990 = vmatpush1.bf16.msra.mxu0 0
        %2991 = vmatprep.mubr.bf16.mxu0 %v2927
        %2992 = vmatmul.mubr.bf16.gmra.mrb[0].mxu0 %v1698
        %v2993 = vpop.f32.mrb[0].mxu0
        %v2994 = vadd.f32 %v2400, %v2993
        %v2995 = vpop.f32.mrb[0].mxu0
        %v2996 = vadd.f32 %v2402, %v2995
        %v2997 = vpop.f32.mrb[0].mxu0
        %v2998 = vadd.f32 %v2404, %v2997
        %v2999 = vpop.f32.mrb[0].mxu0
        %v3000 = vadd.f32 %v2406, %v2999
        %3001 = vmatprep.mubr.bf16.mxu0 %v2929
        %3002 = vmatmul.mubr.bf16.gmra.mrb[0].mxu0 %v1700
        %v3003 = vpop.f32.mrb[0].mxu0
        %v3004 = vadd.f32 %v2410, %v3003
        %v3005 = vpop.f32.mrb[0].mxu0
        %v3006 = vadd.f32 %v2412, %v3005
        %v3007 = vpop.f32.mrb[0].mxu0
        %v3008 = vadd.f32 %v2414, %v3007
        %v3009 = vpop.f32.mrb[0].mxu0
        %v3010 = vadd.f32 %v2416, %v3009
        %3011 = vmatprep.mubr.bf16.mxu0 %v2931
        %3012 = vmatmul.mubr.bf16.gmra.mrb[0].mxu0 %v1702
        %v3013 = vpop.f32.mrb[0].mxu0
        %v3014 = vadd.f32 %v2420, %v3013
        %v3015 = vpop.f32.mrb[0].mxu0
        %v3016 = vadd.f32 %v2422, %v3015
        %v3017 = vpop.f32.mrb[0].mxu0
        %v3018 = vadd.f32 %v2424, %v3017
        %v3019 = vpop.f32.mrb[0].mxu0
        %v3020 = vadd.f32 %v2426, %v3019
        %3021 = vmatprep.mubr.bf16.mxu0 %v2933
        %3022 = vmatmul.mubr.bf16.gmra.mrb[0].mxu0 %v1704
        %v3023 = vpop.f32.mrb[0].mxu0
        %v3024 = vadd.f32 %v2430, %v3023
        %v3025 = vpop.f32.mrb[0].mxu0
        %v3026 = vadd.f32 %v2432, %v3025
        %v3027 = vpop.f32.mrb[0].mxu0
        %v3028 = vadd.f32 %v2434, %v3027
        %v3029 = vpop.f32.mrb[0].mxu0
        %v3030 = vadd.f32 %v2436, %v3029
        %3031 = vmatprep.mubr.bf16.mxu0 %v2935
        %3032 = vmatmul.mubr.bf16.gmra.mrb[0].mxu0 %v1706
        %v3033 = vpop.f32.mrb[0].mxu0
        %v3034 = vadd.f32 %v2440, %v3033
        %v3035 = vpop.f32.mrb[0].mxu0
        %v3036 = vadd.f32 %v2442, %v3035
        %v3037 = vpop.f32.mrb[0].mxu0
        %v3038 = vadd.f32 %v2444, %v3037
        %v3039 = vpop.f32.mrb[0].mxu0
        %v3040 = vadd.f32 %v2446, %v3039
        %3041 = vmatprep.mubr.bf16.mxu0 %v2937
        %3042 = vmatmul.mubr.bf16.gmra.mrb[0].mxu0 %v1708
        %v3043 = vpop.f32.mrb[0].mxu0
        %v3044 = vadd.f32 %v2450, %v3043
        %v3045 = vpop.f32.mrb[0].mxu0
        %v3046 = vadd.f32 %v2452, %v3045
        %v3047 = vpop.f32.mrb[0].mxu0
        %v3048 = vadd.f32 %v2454, %v3047
        %v3049 = vpop.f32.mrb[0].mxu0
        %v3050 = vadd.f32 %v2456, %v3049
        %3051 = vmatprep.mubr.bf16.mxu0 %v2939
        %3052 = vmatmul.mubr.bf16.gmra.mrb[0].mxu0 %v1710
        %v3053 = vpop.f32.mrb[0].mxu0
        %v3054 = vadd.f32 %v2460, %v3053
        %v3055 = vpop.f32.mrb[0].mxu0
        %v3056 = vadd.f32 %v2462, %v3055
        %v3057 = vpop.f32.mrb[0].mxu0
        %v3058 = vadd.f32 %v2464, %v3057
        %v3059 = vpop.f32.mrb[0].mxu0
        %v3060 = vadd.f32 %v2466, %v3059
        %3061 = vmatprep.mubr.bf16.mxu0 %v2941
        %3062 = vmatmul.mubr.bf16.gmra.mrb[0].mxu0 %v1712
        %v3063 = vpop.f32.mrb[0].mxu0
        %v3064 = vadd.f32 %v2470, %v3063
        %v3065 = vpop.f32.mrb[0].mxu0
        %v3066 = vadd.f32 %v2472, %v3065
        %v3067 = vpop.f32.mrb[0].mxu0
        %v3068 = vadd.f32 %v2474, %v3067
        %v3069 = vpop.f32.mrb[0].mxu0
        %v3070 = vadd.f32 %v2476, %v3069
        %3071 = vmatprep.mubr.bf16.mxu0 %v2943
        %3072 = vmatmul.mubr.bf16.gmra.mrb[0].mxu0 %v1714
        %v3073 = vpop.f32.mrb[0].mxu0
        %v3074 = vadd.f32 %v2480, %v3073
        %v3075 = vpop.f32.mrb[0].mxu0
        %v3076 = vadd.f32 %v2482, %v3075
        %v3077 = vpop.f32.mrb[0].mxu0
        %v3078 = vadd.f32 %v2484, %v3077
        %v3079 = vpop.f32.mrb[0].mxu0
        %v3080 = vadd.f32 %v2486, %v3079
        %3081 = vmatprep.mubr.bf16.mxu0 %v2945
        %3082 = vmatmul.mubr.bf16.gmra.mrb[0].mxu0 %v1716
        %v3083 = vpop.f32.mrb[0].mxu0
        %v3084 = vadd.f32 %v2490, %v3083
        %v3085 = vpop.f32.mrb[0].mxu0
        %v3086 = vadd.f32 %v2492, %v3085
        %v3087 = vpop.f32.mrb[0].mxu0
        %v3088 = vadd.f32 %v2494, %v3087
        %v3089 = vpop.f32.mrb[0].mxu0
        %v3090 = vadd.f32 %v2496, %v3089
        %3091 = vmatprep.mubr.bf16.mxu0 %v2947
        %3092 = vmatmul.mubr.bf16.gmra.mrb[0].mxu0 %v1718
        %v3093 = vpop.f32.mrb[0].mxu0
        %v3094 = vadd.f32 %v2500, %v3093
        %v3095 = vpop.f32.mrb[0].mxu0
        %v3096 = vadd.f32 %v2502, %v3095
        %v3097 = vpop.f32.mrb[0].mxu0
        %v3098 = vadd.f32 %v2504, %v3097
        %v3099 = vpop.f32.mrb[0].mxu0
        %v3100 = vadd.f32 %v2506, %v3099
        %3101 = vmatprep.mubr.bf16.mxu0 %v2949
        %3102 = vmatmul.mubr.bf16.gmra.mrb[0].mxu0 %v1720
        %v3103 = vpop.f32.mrb[0].mxu0
        %v3104 = vadd.f32 %v2510, %v3103
        %v3105 = vpop.f32.mrb[0].mxu0
        %v3106 = vadd.f32 %v2512, %v3105
        %v3107 = vpop.f32.mrb[0].mxu0
        %v3108 = vadd.f32 %v2514, %v3107
        %v3109 = vpop.f32.mrb[0].mxu0
        %v3110 = vadd.f32 %v2516, %v3109
        %3111 = vmatprep.mubr.bf16.mxu0 %v2951
        %3112 = vmatmul.mubr.bf16.gmra.mrb[0].mxu0 %v1722
        %v3113 = vpop.f32.mrb[0].mxu0
        %v3114 = vadd.f32 %v2520, %v3113
        %v3115 = vpop.f32.mrb[0].mxu0
        %v3116 = vadd.f32 %v2522, %v3115
        %v3117 = vpop.f32.mrb[0].mxu0
        %v3118 = vadd.f32 %v2524, %v3117
        %v3119 = vpop.f32.mrb[0].mxu0
        %v3120 = vadd.f32 %v2526, %v3119
        %3121 = vmatprep.mubr.bf16.mxu0 %v2953
        %3122 = vmatmul.mubr.bf16.gmra.mrb[0].mxu0 %v1724
        %v3123 = vpop.f32.mrb[0].mxu0
        %v3124 = vadd.f32 %v2530, %v3123
        %v3125 = vpop.f32.mrb[0].mxu0
        %v3126 = vadd.f32 %v2532, %v3125
        %v3127 = vpop.f32.mrb[0].mxu0
        %v3128 = vadd.f32 %v2534, %v3127
        %v3129 = vpop.f32.mrb[0].mxu0
        %v3130 = vadd.f32 %v2536, %v3129
        %3131 = vmatprep.mubr.bf16.mxu0 %v2955
        %3132 = vmatmul.mubr.bf16.gmra.mrb[0].mxu0 %v1726
        %v3133 = vpop.f32.mrb[0].mxu0
        %v3134 = vadd.f32 %v2540, %v3133
        %v3135 = vpop.f32.mrb[0].mxu0
        %v3136 = vadd.f32 %v2542, %v3135
        %v3137 = vpop.f32.mrb[0].mxu0
        %v3138 = vadd.f32 %v2544, %v3137
        %v3139 = vpop.f32.mrb[0].mxu0
        %v3140 = vadd.f32 %v2546, %v3139
        %3141 = vmatprep.mubr.bf16.mxu0 %v2957
        %3142 = vmatmul.mubr.bf16.gmra.mrb[0].mxu0 %v1728
        %v3143 = vpop.f32.mrb[0].mxu0
        %v3144 = vadd.f32 %v2550, %v3143
        %v3145 = vpop.f32.mrb[0].mxu0
        %v3146 = vadd.f32 %v2552, %v3145
        %v3147 = vpop.f32.mrb[0].mxu0
        %v3148 = vadd.f32 %v2554, %v3147
        %v3149 = vpop.f32.mrb[0].mxu0
        %v3150 = vadd.f32 %v2556, %v3149
        %3151 = vdwg.mxu0
        %3152 = vmatprep.subr.bf16.mxu0 0
        %3153 = vmatpush1.bf16.msra.mxu0 %v2851
        %3154 = vmatprep.subr.bf16.mxu0 0
        %3155 = vmatpush1.bf16.msra.mxu0 %v2854
        %3156 = vmatprep.subr.bf16.mxu0 0
        %3157 = vmatpush1.bf16.msra.mxu0 %v2857
        %3158 = vmatprep.subr.bf16.mxu0 0
        %3159 = vmatpush1.bf16.msra.mxu0 %v2860
        %3160 = vmatprep.subr.bf16.mxu0 0
        %3161 = vmatpush1.bf16.msra.mxu0 %v2863
        %3162 = vmatprep.subr.bf16.mxu0 0
        %3163 = vmatpush1.bf16.msra.mxu0 %v2866
        %3164 = vmatprep.subr.bf16.mxu0 0
        %3165 = vmatpush1.bf16.msra.mxu0 %v2869
        %3166 = vmatprep.subr.bf16.mxu0 0
        %3167 = vmatpush1.bf16.msra.mxu0 %v2872
        %3168 = vmatprep.subr.bf16.mxu0 0
        %3169 = vmatpush1.bf16.msra.mxu0 %v2875
        %3170 = vmatprep.subr.bf16.mxu0 0
        %3171 = vmatpush1.bf16.msra.mxu0 %v2878
        %3172 = vmatprep.subr.bf16.mxu0 0
        %3173 = vmatpush1.bf16.msra.mxu0 %v2881
        %3174 = vmatprep.subr.bf16.mxu0 0
        %3175 = vmatpush1.bf16.msra.mxu0 %v2884
        %3176 = vmatprep.subr.bf16.mxu0 0
        %3177 = vmatpush1.bf16.msra.mxu0 %v2887
        %3178 = vmatprep.subr.bf16.mxu0 0
        %3179 = vmatpush1.bf16.msra.mxu0 0
        %3180 = vmatprep.subr.bf16.mxu0 0
        %3181 = vmatpush1.bf16.msra.mxu0 0
        %3182 = vmatprep.subr.bf16.mxu0 0
        %3183 = vmatpush1.bf16.msra.mxu0 0
        %3184 = vmatprep.mubr.bf16.mxu0 %v2927
        %3185 = vmatmul.mubr.bf16.gmra.mrb[0].mxu0 %v1698
        %v3186 = vpop.f32.mrb[0].mxu0
        %v3187 = vadd.f32 %v2593, %v3186
        %v3188 = vpop.f32.mrb[0].mxu0
        %v3189 = vpop.f32.mrb[0].mxu0
        %v3190 = vadd.f32 %v2596, %v3189
        %v3191 = vpop.f32.mrb[0].mxu0
        %3192 = vmatprep.mubr.bf16.mxu0 %v2929
        %3193 = vmatmul.mubr.bf16.gmra.mrb[0].mxu0 %v1700
        %v3194 = vpop.f32.mrb[0].mxu0
        %v3195 = vadd.f32 %v2601, %v3194
        %v3196 = vpop.f32.mrb[0].mxu0
        %v3197 = vpop.f32.mrb[0].mxu0
        %v3198 = vadd.f32 %v2604, %v3197
        %v3199 = vpop.f32.mrb[0].mxu0
        %3200 = vmatprep.mubr.bf16.mxu0 %v2931
        %3201 = vmatmul.mubr.bf16.gmra.mrb[0].mxu0 %v1702
        %v3202 = vpop.f32.mrb[0].mxu0
        %v3203 = vadd.f32 %v2609, %v3202
        %v3204 = vpop.f32.mrb[0].mxu0
        %v3205 = vpop.f32.mrb[0].mxu0
        %v3206 = vadd.f32 %v2612, %v3205
        %v3207 = vpop.f32.mrb[0].mxu0
        %3208 = vmatprep.mubr.bf16.mxu0 %v2933
        %3209 = vmatmul.mubr.bf16.gmra.mrb[0].mxu0 %v1704
        %v3210 = vpop.f32.mrb[0].mxu0
        %v3211 = vadd.f32 %v2617, %v3210
        %v3212 = vpop.f32.mrb[0].mxu0
        %v3213 = vpop.f32.mrb[0].mxu0
        %v3214 = vadd.f32 %v2620, %v3213
        %v3215 = vpop.f32.mrb[0].mxu0
        %3216 = vmatprep.mubr.bf16.mxu0 %v2935
        %3217 = vmatmul.mubr.bf16.gmra.mrb[0].mxu0 %v1706
        %v3218 = vpop.f32.mrb[0].mxu0
        %v3219 = vadd.f32 %v2625, %v3218
        %v3220 = vpop.f32.mrb[0].mxu0
        %v3221 = vpop.f32.mrb[0].mxu0
        %v3222 = vadd.f32 %v2628, %v3221
        %v3223 = vpop.f32.mrb[0].mxu0
        %3224 = vmatprep.mubr.bf16.mxu0 %v2937
        %3225 = vmatmul.mubr.bf16.gmra.mrb[0].mxu0 %v1708
        %v3226 = vpop.f32.mrb[0].mxu0
        %v3227 = vadd.f32 %v2633, %v3226
        %v3228 = vpop.f32.mrb[0].mxu0
        %v3229 = vpop.f32.mrb[0].mxu0
        %v3230 = vadd.f32 %v2636, %v3229
        %v3231 = vpop.f32.mrb[0].mxu0
        %3232 = vmatprep.mubr.bf16.mxu0 %v2939
        %3233 = vmatmul.mubr.bf16.gmra.mrb[0].mxu0 %v1710
        %v3234 = vpop.f32.mrb[0].mxu0
        %v3235 = vadd.f32 %v2641, %v3234
        %v3236 = vpop.f32.mrb[0].mxu0
        %v3237 = vpop.f32.mrb[0].mxu0
        %v3238 = vadd.f32 %v2644, %v3237
        %v3239 = vpop.f32.mrb[0].mxu0
        %3240 = vmatprep.mubr.bf16.mxu0 %v2941
        %3241 = vmatmul.mubr.bf16.gmra.mrb[0].mxu0 %v1712
        %v3242 = vpop.f32.mrb[0].mxu0
        %v3243 = vadd.f32 %v2649, %v3242
        %v3244 = vpop.f32.mrb[0].mxu0
        %v3245 = vpop.f32.mrb[0].mxu0
        %v3246 = vadd.f32 %v2652, %v3245
        %v3247 = vpop.f32.mrb[0].mxu0
        %3248 = vmatprep.mubr.bf16.mxu0 %v2943
        %3249 = vmatmul.mubr.bf16.gmra.mrb[0].mxu0 %v1714
        %v3250 = vpop.f32.mrb[0].mxu0
        %v3251 = vadd.f32 %v2657, %v3250
        %v3252 = vpop.f32.mrb[0].mxu0
        %v3253 = vpop.f32.mrb[0].mxu0
        %v3254 = vadd.f32 %v2660, %v3253
        %v3255 = vpop.f32.mrb[0].mxu0
        %3256 = vmatprep.mubr.bf16.mxu0 %v2945
        %3257 = vmatmul.mubr.bf16.gmra.mrb[0].mxu0 %v1716
        %v3258 = vpop.f32.mrb[0].mxu0
        %v3259 = vadd.f32 %v2665, %v3258
        %v3260 = vpop.f32.mrb[0].mxu0
        %v3261 = vpop.f32.mrb[0].mxu0
        %v3262 = vadd.f32 %v2668, %v3261
        %v3263 = vpop.f32.mrb[0].mxu0
        %3264 = vmatprep.mubr.bf16.mxu0 %v2947
        %3265 = vmatmul.mubr.bf16.gmra.mrb[0].mxu0 %v1718
        %v3266 = vpop.f32.mrb[0].mxu0
        %v3267 = vadd.f32 %v2673, %v3266
        %v3268 = vpop.f32.mrb[0].mxu0
        %v3269 = vpop.f32.mrb[0].mxu0
        %v3270 = vadd.f32 %v2676, %v3269
        %v3271 = vpop.f32.mrb[0].mxu0
        %3272 = vmatprep.mubr.bf16.mxu0 %v2949
        %3273 = vmatmul.mubr.bf16.gmra.mrb[0].mxu0 %v1720
        %v3274 = vpop.f32.mrb[0].mxu0
        %v3275 = vadd.f32 %v2681, %v3274
        %v3276 = vpop.f32.mrb[0].mxu0
        %v3277 = vpop.f32.mrb[0].mxu0
        %v3278 = vadd.f32 %v2684, %v3277
        %v3279 = vpop.f32.mrb[0].mxu0
        %3280 = vmatprep.mubr.bf16.mxu0 %v2951
        %3281 = vmatmul.mubr.bf16.gmra.mrb[0].mxu0 %v1722
        %v3282 = vpop.f32.mrb[0].mxu0
        %v3283 = vadd.f32 %v2689, %v3282
        %v3284 = vpop.f32.mrb[0].mxu0
        %v3285 = vpop.f32.mrb[0].mxu0
        %v3286 = vadd.f32 %v2692, %v3285
        %v3287 = vpop.f32.mrb[0].mxu0
        %3288 = vmatprep.mubr.bf16.mxu0 %v2953
        %3289 = vmatmul.mubr.bf16.gmra.mrb[0].mxu0 %v1724
        %v3290 = vpop.f32.mrb[0].mxu0
        %v3291 = vadd.f32 %v2697, %v3290
        %v3292 = vpop.f32.mrb[0].mxu0
        %v3293 = vpop.f32.mrb[0].mxu0
        %v3294 = vadd.f32 %v2700, %v3293
        %v3295 = vpop.f32.mrb[0].mxu0
        %3296 = vmatprep.mubr.bf16.mxu0 %v2955
        %3297 = vmatmul.mubr.bf16.gmra.mrb[0].mxu0 %v1726
        %v3298 = vpop.f32.mrb[0].mxu0
        %v3299 = vadd.f32 %v2705, %v3298
        %v3300 = vpop.f32.mrb[0].mxu0
        %v3301 = vpop.f32.mrb[0].mxu0
        %v3302 = vadd.f32 %v2708, %v3301
        %v3303 = vpop.f32.mrb[0].mxu0
        %3304 = vmatprep.mubr.bf16.mxu0 %v2957
        %3305 = vmatmul.mubr.bf16.gmra.mrb[0].mxu0 %v1728
        %v3306 = vpop.f32.mrb[0].mxu0
        %v3307 = vadd.f32 %v2713, %v3306
        %v3308 = vpop.f32.mrb[0].mxu0
        %v3309 = vpop.f32.mrb[0].mxu0
        %v3310 = vadd.f32 %v2716, %v3309
        %v3311 = vpop.f32.mrb[0].mxu0
        %3312 = vdwg.mxu0
        %v3345 = vrot.slane %v1698, 1
        %v3346 = vrot.slane %v1700, 1
        %v3347 = vsel %vm1189, %v3345, %v3346
        %v3348 = vrot.slane %v1699, 1
        %v3349 = vrot.slane %v1701, 1
        %v3350 = vsel %vm1189, %v3348, %v3349
        %v3351 = vrot.slane %v1702, 1
        %v3352 = vsel %vm1189, %v3346, %v3351
        %v3353 = vrot.slane %v1703, 1
        %v3354 = vsel %vm1189, %v3349, %v3353
        %v3355 = vrot.slane %v1704, 1
        %v3356 = vsel %vm1189, %v3351, %v3355
        %v3357 = vrot.slane %v1705, 1
        %v3358 = vsel %vm1189, %v3353, %v3357
        %v3359 = vrot.slane %v1706, 1
        %v3360 = vsel %vm1189, %v3355, %v3359
        %v3361 = vrot.slane %v1707, 1
        %v3362 = vsel %vm1189, %v3357, %v3361
        %v3363 = vrot.slane %v1708, 1
        %v3364 = vsel %vm1189, %v3359, %v3363
        %v3365 = vrot.slane %v1709, 1
        %v3366 = vsel %vm1189, %v3361, %v3365
        %v3367 = vrot.slane %v1710, 1
        %v3368 = vsel %vm1189, %v3363, %v3367
        %v3369 = vrot.slane %v1711, 1
        %v3370 = vsel %vm1189, %v3365, %v3369
        %v3371 = vrot.slane %v1712, 1
        %v3372 = vsel %vm1189, %v3367, %v3371
        %v3373 = vrot.slane %v1713, 1
        %v3374 = vsel %vm1189, %v3369, %v3373
        %v3375 = vrot.slane %v1714, 1
        %v3376 = vsel %vm1189, %v3371, %v3375
        %v3377 = vrot.slane %v1715, 1
        %v3378 = vsel %vm1189, %v3373, %v3377
        %v3379 = vrot.slane %v1716, 1
        %v3380 = vsel %vm1189, %v3375, %v3379
        %v3381 = vrot.slane %v1717, 1
        %v3382 = vsel %vm1189, %v3377, %v3381
        %v3383 = vrot.slane %v1718, 1
        %v3384 = vsel %vm1189, %v3379, %v3383
        %v3385 = vrot.slane %v1719, 1
        %v3386 = vsel %vm1189, %v3381, %v3385
        %v3387 = vrot.slane %v1720, 1
        %v3388 = vsel %vm1189, %v3383, %v3387
        %v3389 = vrot.slane %v1721, 1
        %v3390 = vsel %vm1189, %v3385, %v3389
        %v3391 = vrot.slane %v1722, 1
        %v3392 = vsel %vm1189, %v3387, %v3391
        %v3393 = vrot.slane %v1723, 1
        %v3394 = vsel %vm1189, %v3389, %v3393
        %v3395 = vrot.slane %v1724, 1
        %v3396 = vsel %vm1189, %v3391, %v3395
        %v3397 = vrot.slane %v1725, 1
        %v3398 = vsel %vm1189, %v3393, %v3397
        %v3399 = vrot.slane %v1726, 1
        %v3400 = vsel %vm1189, %v3395, %v3399
        %v3401 = vrot.slane %v1727, 1
        %v3402 = vsel %vm1189, %v3397, %v3401
        %v3403 = vrot.slane %v1728, 1
        %v3404 = vsel %vm1189, %v3399, %v3403
        %v3405 = vrot.slane %v1729, 1
        %v3406 = vsel %vm1189, %v3401, %v3405
        %v3423 = vsel %vm1221, %v3403, 0
        %v3426 = vsel %vm1221, %v3405, 0
        %s3427 = scalar_lea.vmem [#allocation6], 624
        %v3428 = vld [vmem:[%s3427] sm:$0xff]
        %v3429 = vld [vmem:[%s3427 + $0x8] sm:$0xf]
        %v3430 = vld [vmem:[%s3427 + $0xc] sm:$0xff]
        %v3431 = vld [vmem:[%s3427 + $0x14] sm:$0xf]
        %v3432 = vld [vmem:[%s3427 + $0x18] sm:$0xff]
        %v3433 = vld [vmem:[%s3427 + $0x20] sm:$0xf]
        %v3434 = vld [vmem:[%s3427 + $0x24] sm:$0xff]
        %v3435 = vld [vmem:[%s3427 + $0x2c] sm:$0xf]
        %v3436 = vld [vmem:[%s3427 + $0x30] sm:$0xff]
        %v3437 = vld [vmem:[%s3427 + $0x38] sm:$0xf]
        %v3438 = vld [vmem:[%s3427 + $0x3c] sm:$0xff]
        %v3439 = vld [vmem:[%s3427 + $0x44] sm:$0xf]
        %v3440 = vld [vmem:[%s3427 + $0x48] sm:$0xff]
        %v3441 = vld [vmem:[%s3427 + $0x50] sm:$0xf]
        %v3442 = vld [vmem:[%s3427 + $0x54] sm:$0xff]
        %v3443 = vld [vmem:[%s3427 + $0x5c] sm:$0xf]
        %v3444 = vld [vmem:[%s3427 + $0x60] sm:$0xff]
        %v3445 = vld [vmem:[%s3427 + $0x68] sm:$0xf]
        %v3446 = vld [vmem:[%s3427 + $0x6c] sm:$0xff]
        %v3447 = vld [vmem:[%s3427 + $0x74] sm:$0xf]
        %v3448 = vld [vmem:[%s3427 + $0x78] sm:$0xff]
        %v3449 = vld [vmem:[%s3427 + $0x80] sm:$0xf]
        %v3450 = vld [vmem:[%s3427 + $0x84] sm:$0xff]
        %v3451 = vld [vmem:[%s3427 + $0x8c] sm:$0xf]
        %v3452 = vld [vmem:[%s3427 + $0x90] sm:$0xff]
        %v3453 = vld [vmem:[%s3427 + $0x98] sm:$0xf]
        %v3454 = vld [vmem:[%s3427 + $0x9c] sm:$0xff]
        %v3455 = vld [vmem:[%s3427 + $0xa4] sm:$0xf]
        %v3456 = vld [vmem:[%s3427 + $0xa8] sm:$0xff]
        %v3457 = vld [vmem:[%s3427 + $0xb0] sm:$0xf]
        %v3458 = vld [vmem:[%s3427 + $0xb4] sm:$0xff]
        %v3459 = vld [vmem:[%s3427 + $0xbc] sm:$0xf]
        %v3460 = vld [vmem:[%s3427 + $0xc0] sm:$0xff]
        %v3461 = vld [vmem:[%s3427 + $0xc8] sm:$0xf]
        %v3462 = vld [vmem:[%s3427 + $0xcc] sm:$0xff]
        %v3463 = vld [vmem:[%s3427 + $0xd4] sm:$0xf]
        %v3464 = vld [vmem:[%s3427 + $0xd8] sm:$0xff]
        %v3465 = vld [vmem:[%s3427 + $0xe0] sm:$0xf]
        %v3466 = vld [vmem:[%s3427 + $0xe4] sm:$0xff]
        %v3467 = vld [vmem:[%s3427 + $0xec] sm:$0xf]
        %v3468 = vld [vmem:[%s3427 + $0xf0] sm:$0xff]
        %v3469 = vld [vmem:[%s3427 + $0xf8] sm:$0xf]
        %v3470 = vld [vmem:[%s3427 + $0xfc] sm:$0xff]
        %v3471 = vld [vmem:[%s3427 + $0x104] sm:$0xf]
        %v3472 = vld [vmem:[%s3427 + $0x108] sm:$0xff]
        %v3473 = vld [vmem:[%s3427 + $0x110] sm:$0xf]
        %v3474 = vld [vmem:[%s3427 + $0x114] sm:$0xff]
        %v3475 = vld [vmem:[%s3427 + $0x11c] sm:$0xf]
        %v3476 = vld [vmem:[%s3427 + $0x120] sm:$0xff]
        %v3477 = vld [vmem:[%s3427 + $0x128] sm:$0xf]
        %v3478 = vld [vmem:[%s3427 + $0x12c] sm:$0xff]
        %v3479 = vld [vmem:[%s3427 + $0x134] sm:$0xf]
        %v3532 = vunpack.c.l.b16 %v3428
        %v3533 = vunpack.c.h.b16 %v3428
        %v3534 = vunpack.c.l.b16 %v3429
        %v3535 = vunpack.c.l.b16 %v3430
        %v3536 = vunpack.c.h.b16 %v3430
        %v3537 = vunpack.c.l.b16 %v3431
        %v3538 = vunpack.c.l.b16 %v3432
        %v3539 = vunpack.c.h.b16 %v3432
        %v3540 = vunpack.c.l.b16 %v3433
        %v3541 = vunpack.c.l.b16 %v3434
        %v3542 = vunpack.c.h.b16 %v3434
        %v3543 = vunpack.c.l.b16 %v3435
        %v3544 = vunpack.c.l.b16 %v3436
        %v3545 = vunpack.c.h.b16 %v3436
        %v3546 = vunpack.c.l.b16 %v3437
        %v3547 = vunpack.c.l.b16 %v3438
        %v3548 = vunpack.c.h.b16 %v3438
        %v3549 = vunpack.c.l.b16 %v3439
        %v3550 = vunpack.c.l.b16 %v3440
        %v3551 = vunpack.c.h.b16 %v3440
        %v3552 = vunpack.c.l.b16 %v3441
        %v3553 = vunpack.c.l.b16 %v3442
        %v3554 = vunpack.c.h.b16 %v3442
        %v3555 = vunpack.c.l.b16 %v3443
        %v3556 = vunpack.c.l.b16 %v3444
        %v3557 = vunpack.c.h.b16 %v3444
        %v3558 = vunpack.c.l.b16 %v3445
        %v3559 = vunpack.c.l.b16 %v3446
        %v3560 = vunpack.c.h.b16 %v3446
        %v3561 = vunpack.c.l.b16 %v3447
        %v3562 = vunpack.c.l.b16 %v3448
        %v3563 = vunpack.c.h.b16 %v3448
        %v3564 = vunpack.c.l.b16 %v3449
        %v3565 = vunpack.c.l.b16 %v3450
        %v3566 = vunpack.c.h.b16 %v3450
        %v3567 = vunpack.c.l.b16 %v3451
        %v3568 = vunpack.c.l.b16 %v3452
        %v3569 = vunpack.c.h.b16 %v3452
        %v3570 = vunpack.c.l.b16 %v3453
        %v3571 = vunpack.c.l.b16 %v3454
        %v3572 = vunpack.c.h.b16 %v3454
        %v3573 = vunpack.c.l.b16 %v3455
        %v3574 = vunpack.c.l.b16 %v3456
        %v3575 = vunpack.c.h.b16 %v3456
        %v3576 = vunpack.c.l.b16 %v3457
        %v3577 = vunpack.c.l.b16 %v3458
        %v3578 = vunpack.c.h.b16 %v3458
        %v3579 = vunpack.c.l.b16 %v3459
        %v3580 = vunpack.c.l.b16 %v3460
        %v3581 = vunpack.c.h.b16 %v3460
        %v3582 = vunpack.c.l.b16 %v3461
        %v3583 = vunpack.c.l.b16 %v3462
        %v3584 = vunpack.c.h.b16 %v3462
        %v3585 = vunpack.c.l.b16 %v3463
        %v3586 = vunpack.c.l.b16 %v3464
        %v3587 = vunpack.c.h.b16 %v3464
        %v3588 = vunpack.c.l.b16 %v3465
        %v3589 = vunpack.c.l.b16 %v3466
        %v3590 = vunpack.c.h.b16 %v3466
        %v3591 = vunpack.c.l.b16 %v3467
        %v3592 = vunpack.c.l.b16 %v3468
        %v3593 = vunpack.c.h.b16 %v3468
        %v3594 = vunpack.c.l.b16 %v3469
        %v3595 = vunpack.c.l.b16 %v3470
        %v3596 = vunpack.c.h.b16 %v3470
        %v3597 = vunpack.c.l.b16 %v3471
        %v3598 = vunpack.c.l.b16 %v3472
        %v3599 = vunpack.c.h.b16 %v3472
        %v3600 = vunpack.c.l.b16 %v3473
        %v3601 = vunpack.c.l.b16 %v3474
        %v3602 = vunpack.c.h.b16 %v3474
        %v3603 = vunpack.c.l.b16 %v3475
        %v3604 = vunpack.c.l.b16 %v3476
        %v3605 = vunpack.c.h.b16 %v3476
        %v3606 = vunpack.c.l.b16 %v3477
        %v3607 = vunpack.c.l.b16 %v3478
        %v3608 = vunpack.c.h.b16 %v3478
        %v3609 = vunpack.c.l.b16 %v3479
        %v3610 = vpack.c.b16 %v3535, %v3532
        %v3611 = vpack.c.b16 %v3536, %v3533
        %v3612 = vpack.c.b16 %v3537, %v3534
        %v3613 = vpack.c.b16 %v3541, %v3538
        %v3614 = vpack.c.b16 %v3542, %v3539
        %v3615 = vpack.c.b16 %v3543, %v3540
        %v3616 = vpack.c.b16 %v3547, %v3544
        %v3617 = vpack.c.b16 %v3548, %v3545
        %v3618 = vpack.c.b16 %v3549, %v3546
        %v3619 = vpack.c.b16 %v3553, %v3550
        %v3620 = vpack.c.b16 %v3554, %v3551
        %v3621 = vpack.c.b16 %v3555, %v3552
        %v3622 = vpack.c.b16 %v3559, %v3556
        %v3623 = vpack.c.b16 %v3560, %v3557
        %v3624 = vpack.c.b16 %v3561, %v3558
        %v3625 = vpack.c.b16 %v3565, %v3562
        %v3626 = vpack.c.b16 %v3566, %v3563
        %v3627 = vpack.c.b16 %v3567, %v3564
        %v3628 = vpack.c.b16 %v3571, %v3568
        %v3629 = vpack.c.b16 %v3572, %v3569
        %v3630 = vpack.c.b16 %v3573, %v3570
        %v3631 = vpack.c.b16 %v3577, %v3574
        %v3632 = vpack.c.b16 %v3578, %v3575
        %v3633 = vpack.c.b16 %v3579, %v3576
        %v3634 = vpack.c.b16 %v3583, %v3580
        %v3635 = vpack.c.b16 %v3584, %v3581
        %v3636 = vpack.c.b16 %v3585, %v3582
        %v3637 = vpack.c.b16 %v3589, %v3586
        %v3638 = vpack.c.b16 %v3590, %v3587
        %v3639 = vpack.c.b16 %v3591, %v3588
        %v3640 = vpack.c.b16 %v3595, %v3592
        %v3641 = vpack.c.b16 %v3596, %v3593
        %v3642 = vpack.c.b16 %v3597, %v3594
        %v3643 = vpack.c.b16 %v3601, %v3598
        %v3644 = vpack.c.b16 %v3602, %v3599
        %v3645 = vpack.c.b16 %v3603, %v3600
        %v3646 = vpack.c.b16 %v3607, %v3604
        %v3647 = vpack.c.b16 %v3608, %v3605
        %v3648 = vpack.c.b16 %v3609, %v3606
        %v3689 = vsel %vm2316, %v3350, 0
        %v3692 = vsel %vm2316, %v3354, 0
        %v3695 = vsel %vm2316, %v3358, 0
        %v3698 = vsel %vm2316, %v3362, 0
        %v3701 = vsel %vm2316, %v3366, 0
        %v3704 = vsel %vm2316, %v3370, 0
        %v3707 = vsel %vm2316, %v3374, 0
        %v3710 = vsel %vm2316, %v3378, 0
        %v3713 = vsel %vm2316, %v3382, 0
        %v3716 = vsel %vm2316, %v3386, 0
        %v3719 = vsel %vm2316, %v3390, 0
        %v3722 = vsel %vm2316, %v3394, 0
        %v3725 = vsel %vm2316, %v3398, 0
        %v3728 = vsel %vm2316, %v3402, 0
        %v3731 = vsel %vm2316, %v3406, 0
        %v3733 = vsel %vm2316, %v3426, 0
        %3735 = vmatprep.subr.bf16.mxu0 %v3611
        %3736 = vmatpush1.bf16.msra.mxu0 %v3610
        %3737 = vmatprep.subr.bf16.mxu0 %v3614
        %3738 = vmatpush1.bf16.msra.mxu0 %v3613
        %3739 = vmatprep.subr.bf16.mxu0 %v3617
        %3740 = vmatpush1.bf16.msra.mxu0 %v3616
        %3741 = vmatprep.subr.bf16.mxu0 %v3620
        %3742 = vmatpush1.bf16.msra.mxu0 %v3619
        %3743 = vmatprep.subr.bf16.mxu0 %v3623
        %3744 = vmatpush1.bf16.msra.mxu0 %v3622
        %3745 = vmatprep.subr.bf16.mxu0 %v3626
        %3746 = vmatpush1.bf16.msra.mxu0 %v3625
        %3747 = vmatprep.subr.bf16.mxu0 %v3629
        %3748 = vmatpush1.bf16.msra.mxu0 %v3628
        %3749 = vmatprep.subr.bf16.mxu0 %v3632
        %3750 = vmatpush1.bf16.msra.mxu0 %v3631
        %3751 = vmatprep.subr.bf16.mxu0 %v3635
        %3752 = vmatpush1.bf16.msra.mxu0 %v3634
        %3753 = vmatprep.subr.bf16.mxu0 %v3638
        %3754 = vmatpush1.bf16.msra.mxu0 %v3637
        %3755 = vmatprep.subr.bf16.mxu0 %v3641
        %3756 = vmatpush1.bf16.msra.mxu0 %v3640
        %3757 = vmatprep.subr.bf16.mxu0 %v3644
        %3758 = vmatpush1.bf16.msra.mxu0 %v3643
        %3759 = vmatprep.subr.bf16.mxu0 %v3647
        %3760 = vmatpush1.bf16.msra.mxu0 %v3646
        %3761 = vmatprep.subr.bf16.mxu0 0
        %3762 = vmatpush1.bf16.msra.mxu0 0
        %3763 = vmatprep.subr.bf16.mxu0 0
        %3764 = vmatpush1.bf16.msra.mxu0 0
        %3765 = vmatprep.subr.bf16.mxu0 0
        %3766 = vmatpush1.bf16.msra.mxu0 0
        %3767 = vmatprep.mubr.bf16.mxu0 %v3689
        %3768 = vmatmul.mubr.bf16.gmra.mrb[0].mxu0 %v3347
        %v3769 = vpop.f32.mrb[0].mxu0
        %v3770 = vadd.f32 0.0, %v3769
        %v3771 = vpop.f32.mrb[0].mxu0
        %v3772 = vadd.f32 0.0, %v3771
        %v3773 = vpop.f32.mrb[0].mxu0
        %v3774 = vadd.f32 0.0, %v3773
        %v3775 = vpop.f32.mrb[0].mxu0
        %v3776 = vadd.f32 0.0, %v3775
        %3777 = vmatprep.mubr.bf16.mxu0 %v3692
        %3778 = vmatmul.mubr.bf16.gmra.mrb[0].mxu0 %v3352
        %v3779 = vpop.f32.mrb[0].mxu0
        %v3780 = vadd.f32 0.0, %v3779
        %v3781 = vpop.f32.mrb[0].mxu0
        %v3782 = vadd.f32 0.0, %v3781
        %v3783 = vpop.f32.mrb[0].mxu0
        %v3784 = vadd.f32 0.0, %v3783
        %v3785 = vpop.f32.mrb[0].mxu0
        %v3786 = vadd.f32 0.0, %v3785
        %3787 = vmatprep.mubr.bf16.mxu0 %v3695
        %3788 = vmatmul.mubr.bf16.gmra.mrb[0].mxu0 %v3356
        %v3789 = vpop.f32.mrb[0].mxu0
        %v3790 = vadd.f32 0.0, %v3789
        %v3791 = vpop.f32.mrb[0].mxu0
        %v3792 = vadd.f32 0.0, %v3791
        %v3793 = vpop.f32.mrb[0].mxu0
        %v3794 = vadd.f32 0.0, %v3793
        %v3795 = vpop.f32.mrb[0].mxu0
        %v3796 = vadd.f32 0.0, %v3795
        %3797 = vmatprep.mubr.bf16.mxu0 %v3698
        %3798 = vmatmul.mubr.bf16.gmra.mrb[0].mxu0 %v3360
        %v3799 = vpop.f32.mrb[0].mxu0
        %v3800 = vadd.f32 0.0, %v3799
        %v3801 = vpop.f32.mrb[0].mxu0
        %v3802 = vadd.f32 0.0, %v3801
        %v3803 = vpop.f32.mrb[0].mxu0
        %v3804 = vadd.f32 0.0, %v3803
        %v3805 = vpop.f32.mrb[0].mxu0
        %v3806 = vadd.f32 0.0, %v3805
        %3807 = vmatprep.mubr.bf16.mxu0 %v3701
        %3808 = vmatmul.mubr.bf16.gmra.mrb[0].mxu0 %v3364
        %v3809 = vpop.f32.mrb[0].mxu0
        %v3810 = vadd.f32 0.0, %v3809
        %v3811 = vpop.f32.mrb[0].mxu0
        %v3812 = vadd.f32 0.0, %v3811
        %v3813 = vpop.f32.mrb[0].mxu0
        %v3814 = vadd.f32 0.0, %v3813
        %v3815 = vpop.f32.mrb[0].mxu0
        %v3816 = vadd.f32 0.0, %v3815
        %3817 = vmatprep.mubr.bf16.mxu0 %v3704
        %3818 = vmatmul.mubr.bf16.gmra.mrb[0].mxu0 %v3368
        %v3819 = vpop.f32.mrb[0].mxu0
        %v3820 = vadd.f32 0.0, %v3819
        %v3821 = vpop.f32.mrb[0].mxu0
        %v3822 = vadd.f32 0.0, %v3821
        %v3823 = vpop.f32.mrb[0].mxu0
        %v3824 = vadd.f32 0.0, %v3823
        %v3825 = vpop.f32.mrb[0].mxu0
        %v3826 = vadd.f32 0.0, %v3825
        %3827 = vmatprep.mubr.bf16.mxu0 %v3707
        %3828 = vmatmul.mubr.bf16.gmra.mrb[0].mxu0 %v3372
        %v3829 = vpop.f32.mrb[0].mxu0
        %v3830 = vadd.f32 0.0, %v3829
        %v3831 = vpop.f32.mrb[0].mxu0
        %v3832 = vadd.f32 0.0, %v3831
        %v3833 = vpop.f32.mrb[0].mxu0
        %v3834 = vadd.f32 0.0, %v3833
        %v3835 = vpop.f32.mrb[0].mxu0
        %v3836 = vadd.f32 0.0, %v3835
        %3837 = vmatprep.mubr.bf16.mxu0 %v3710
        %3838 = vmatmul.mubr.bf16.gmra.mrb[0].mxu0 %v3376
        %v3839 = vpop.f32.mrb[0].mxu0
        %v3840 = vadd.f32 0.0, %v3839
        %v3841 = vpop.f32.mrb[0].mxu0
        %v3842 = vadd.f32 0.0, %v3841
        %v3843 = vpop.f32.mrb[0].mxu0
        %v3844 = vadd.f32 0.0, %v3843
        %v3845 = vpop.f32.mrb[0].mxu0
        %v3846 = vadd.f32 0.0, %v3845
        %3847 = vmatprep.mubr.bf16.mxu0 %v3713
        %3848 = vmatmul.mubr.bf16.gmra.mrb[0].mxu0 %v3380
        %v3849 = vpop.f32.mrb[0].mxu0
        %v3850 = vadd.f32 0.0, %v3849
        %v3851 = vpop.f32.mrb[0].mxu0
        %v3852 = vadd.f32 0.0, %v3851
        %v3853 = vpop.f32.mrb[0].mxu0
        %v3854 = vadd.f32 0.0, %v3853
        %v3855 = vpop.f32.mrb[0].mxu0
        %v3856 = vadd.f32 0.0, %v3855
        %3857 = vmatprep.mubr.bf16.mxu0 %v3716
        %3858 = vmatmul.mubr.bf16.gmra.mrb[0].mxu0 %v3384
        %v3859 = vpop.f32.mrb[0].mxu0
        %v3860 = vadd.f32 0.0, %v3859
        %v3861 = vpop.f32.mrb[0].mxu0
        %v3862 = vadd.f32 0.0, %v3861
        %v3863 = vpop.f32.mrb[0].mxu0
        %v3864 = vadd.f32 0.0, %v3863
        %v3865 = vpop.f32.mrb[0].mxu0
        %v3866 = vadd.f32 0.0, %v3865
        %3867 = vmatprep.mubr.bf16.mxu0 %v3719
        %3868 = vmatmul.mubr.bf16.gmra.mrb[0].mxu0 %v3388
        %v3869 = vpop.f32.mrb[0].mxu0
        %v3870 = vadd.f32 0.0, %v3869
        %v3871 = vpop.f32.mrb[0].mxu0
        %v3872 = vadd.f32 0.0, %v3871
        %v3873 = vpop.f32.mrb[0].mxu0
        %v3874 = vadd.f32 0.0, %v3873
        %v3875 = vpop.f32.mrb[0].mxu0
        %v3876 = vadd.f32 0.0, %v3875
        %3877 = vmatprep.mubr.bf16.mxu0 %v3722
        %3878 = vmatmul.mubr.bf16.gmra.mrb[0].mxu0 %v3392
        %v3879 = vpop.f32.mrb[0].mxu0
        %v3880 = vadd.f32 0.0, %v3879
        %v3881 = vpop.f32.mrb[0].mxu0
        %v3882 = vadd.f32 0.0, %v3881
        %v3883 = vpop.f32.mrb[0].mxu0
        %v3884 = vadd.f32 0.0, %v3883
        %v3885 = vpop.f32.mrb[0].mxu0
        %v3886 = vadd.f32 0.0, %v3885
        %3887 = vmatprep.mubr.bf16.mxu0 %v3725
        %3888 = vmatmul.mubr.bf16.gmra.mrb[0].mxu0 %v3396
        %v3889 = vpop.f32.mrb[0].mxu0
        %v3890 = vadd.f32 0.0, %v3889
        %v3891 = vpop.f32.mrb[0].mxu0
        %v3892 = vadd.f32 0.0, %v3891
        %v3893 = vpop.f32.mrb[0].mxu0
        %v3894 = vadd.f32 0.0, %v3893
        %v3895 = vpop.f32.mrb[0].mxu0
        %v3896 = vadd.f32 0.0, %v3895
        %3897 = vmatprep.mubr.bf16.mxu0 %v3728
        %3898 = vmatmul.mubr.bf16.gmra.mrb[0].mxu0 %v3400
        %v3899 = vpop.f32.mrb[0].mxu0
        %v3900 = vadd.f32 0.0, %v3899
        %v3901 = vpop.f32.mrb[0].mxu0
        %v3902 = vadd.f32 0.0, %v3901
        %v3903 = vpop.f32.mrb[0].mxu0
        %v3904 = vadd.f32 0.0, %v3903
        %v3905 = vpop.f32.mrb[0].mxu0
        %v3906 = vadd.f32 0.0, %v3905
        %3907 = vmatprep.mubr.bf16.mxu0 %v3731
        %3908 = vmatmul.mubr.bf16.gmra.mrb[0].mxu0 %v3404
        %v3909 = vpop.f32.mrb[0].mxu0
        %v3910 = vadd.f32 0.0, %v3909
        %v3911 = vpop.f32.mrb[0].mxu0
        %v3912 = vadd.f32 0.0, %v3911
        %v3913 = vpop.f32.mrb[0].mxu0
        %v3914 = vadd.f32 0.0, %v3913
        %v3915 = vpop.f32.mrb[0].mxu0
        %v3916 = vadd.f32 0.0, %v3915
        %3917 = vmatprep.mubr.bf16.mxu0 %v3733
        %3918 = vmatmul.mubr.bf16.gmra.mrb[0].mxu0 %v3423
        %v3919 = vpop.f32.mrb[0].mxu0
        %v3920 = vadd.f32 0.0, %v3919
        %v3921 = vpop.f32.mrb[0].mxu0
        %v3922 = vadd.f32 0.0, %v3921
        %v3923 = vpop.f32.mrb[0].mxu0
        %v3924 = vadd.f32 0.0, %v3923
        %v3925 = vpop.f32.mrb[0].mxu0
        %v3926 = vadd.f32 0.0, %v3925
        %3927 = vdwg.mxu0
        %3928 = vmatprep.subr.bf16.mxu0 0
        %3929 = vmatpush1.bf16.msra.mxu0 %v3612
        %3930 = vmatprep.subr.bf16.mxu0 0
        %3931 = vmatpush1.bf16.msra.mxu0 %v3615
        %3932 = vmatprep.subr.bf16.mxu0 0
        %3933 = vmatpush1.bf16.msra.mxu0 %v3618
        %3934 = vmatprep.subr.bf16.mxu0 0
        %3935 = vmatpush1.bf16.msra.mxu0 %v3621
        %3936 = vmatprep.subr.bf16.mxu0 0
        %3937 = vmatpush1.bf16.msra.mxu0 %v3624
        %3938 = vmatprep.subr.bf16.mxu0 0
        %3939 = vmatpush1.bf16.msra.mxu0 %v3627
        %3940 = vmatprep.subr.bf16.mxu0 0
        %3941 = vmatpush1.bf16.msra.mxu0 %v3630
        %3942 = vmatprep.subr.bf16.mxu0 0
        %3943 = vmatpush1.bf16.msra.mxu0 %v3633
        %3944 = vmatprep.subr.bf16.mxu0 0
        %3945 = vmatpush1.bf16.msra.mxu0 %v3636
        %3946 = vmatprep.subr.bf16.mxu0 0
        %3947 = vmatpush1.bf16.msra.mxu0 %v3639
        %3948 = vmatprep.subr.bf16.mxu0 0
        %3949 = vmatpush1.bf16.msra.mxu0 %v3642
        %3950 = vmatprep.subr.bf16.mxu0 0
        %3951 = vmatpush1.bf16.msra.mxu0 %v3645
        %3952 = vmatprep.subr.bf16.mxu0 0
        %3953 = vmatpush1.bf16.msra.mxu0 %v3648
        %3954 = vmatprep.subr.bf16.mxu0 0
        %3955 = vmatpush1.bf16.msra.mxu0 0
        %3956 = vmatprep.subr.bf16.mxu0 0
        %3957 = vmatpush1.bf16.msra.mxu0 0
        %3958 = vmatprep.subr.bf16.mxu0 0
        %3959 = vmatpush1.bf16.msra.mxu0 0
        %3960 = vmatprep.mubr.bf16.mxu0 %v3689
        %3961 = vmatmul.mubr.bf16.gmra.mrb[0].mxu0 %v3347
        %v3962 = vpop.f32.mrb[0].mxu0
        %v3963 = vadd.f32 0.0, %v3962
        %v3964 = vpop.f32.mrb[0].mxu0
        %v3965 = vpop.f32.mrb[0].mxu0
        %v3966 = vadd.f32 0.0, %v3965
        %v3967 = vpop.f32.mrb[0].mxu0
        %3968 = vmatprep.mubr.bf16.mxu0 %v3692
        %3969 = vmatmul.mubr.bf16.gmra.mrb[0].mxu0 %v3352
        %v3970 = vpop.f32.mrb[0].mxu0
        %v3971 = vadd.f32 0.0, %v3970
        %v3972 = vpop.f32.mrb[0].mxu0
        %v3973 = vpop.f32.mrb[0].mxu0
        %v3974 = vadd.f32 0.0, %v3973
        %v3975 = vpop.f32.mrb[0].mxu0
        %3976 = vmatprep.mubr.bf16.mxu0 %v3695
        %3977 = vmatmul.mubr.bf16.gmra.mrb[0].mxu0 %v3356
        %v3978 = vpop.f32.mrb[0].mxu0
        %v3979 = vadd.f32 0.0, %v3978
        %v3980 = vpop.f32.mrb[0].mxu0
        %v3981 = vpop.f32.mrb[0].mxu0
        %v3982 = vadd.f32 0.0, %v3981
        %v3983 = vpop.f32.mrb[0].mxu0
        %3984 = vmatprep.mubr.bf16.mxu0 %v3698
        %3985 = vmatmul.mubr.bf16.gmra.mrb[0].mxu0 %v3360
        %v3986 = vpop.f32.mrb[0].mxu0
        %v3987 = vadd.f32 0.0, %v3986
        %v3988 = vpop.f32.mrb[0].mxu0
        %v3989 = vpop.f32.mrb[0].mxu0
        %v3990 = vadd.f32 0.0, %v3989
        %v3991 = vpop.f32.mrb[0].mxu0
        %3992 = vmatprep.mubr.bf16.mxu0 %v3701
        %3993 = vmatmul.mubr.bf16.gmra.mrb[0].mxu0 %v3364
        %v3994 = vpop.f32.mrb[0].mxu0
        %v3995 = vadd.f32 0.0, %v3994
        %v3996 = vpop.f32.mrb[0].mxu0
        %v3997 = vpop.f32.mrb[0].mxu0
        %v3998 = vadd.f32 0.0, %v3997
        %v3999 = vpop.f32.mrb[0].mxu0
        %4000 = vmatprep.mubr.bf16.mxu0 %v3704
        %4001 = vmatmul.mubr.bf16.gmra.mrb[0].mxu0 %v3368
        %v4002 = vpop.f32.mrb[0].mxu0
        %v4003 = vadd.f32 0.0, %v4002
        %v4004 = vpop.f32.mrb[0].mxu0
        %v4005 = vpop.f32.mrb[0].mxu0
        %v4006 = vadd.f32 0.0, %v4005
        %v4007 = vpop.f32.mrb[0].mxu0
        %4008 = vmatprep.mubr.bf16.mxu0 %v3707
        %4009 = vmatmul.mubr.bf16.gmra.mrb[0].mxu0 %v3372
        %v4010 = vpop.f32.mrb[0].mxu0
        %v4011 = vadd.f32 0.0, %v4010
        %v4012 = vpop.f32.mrb[0].mxu0
        %v4013 = vpop.f32.mrb[0].mxu0
        %v4014 = vadd.f32 0.0, %v4013
        %v4015 = vpop.f32.mrb[0].mxu0
        %4016 = vmatprep.mubr.bf16.mxu0 %v3710
        %4017 = vmatmul.mubr.bf16.gmra.mrb[0].mxu0 %v3376
        %v4018 = vpop.f32.mrb[0].mxu0
        %v4019 = vadd.f32 0.0, %v4018
        %v4020 = vpop.f32.mrb[0].mxu0
        %v4021 = vpop.f32.mrb[0].mxu0
        %v4022 = vadd.f32 0.0, %v4021
        %v4023 = vpop.f32.mrb[0].mxu0
        %4024 = vmatprep.mubr.bf16.mxu0 %v3713
        %4025 = vmatmul.mubr.bf16.gmra.mrb[0].mxu0 %v3380
        %v4026 = vpop.f32.mrb[0].mxu0
        %v4027 = vadd.f32 0.0, %v4026
        %v4028 = vpop.f32.mrb[0].mxu0
        %v4029 = vpop.f32.mrb[0].mxu0
        %v4030 = vadd.f32 0.0, %v4029
        %v4031 = vpop.f32.mrb[0].mxu0
        %4032 = vmatprep.mubr.bf16.mxu0 %v3716
        %4033 = vmatmul.mubr.bf16.gmra.mrb[0].mxu0 %v3384
        %v4034 = vpop.f32.mrb[0].mxu0
        %v4035 = vadd.f32 0.0, %v4034
        %v4036 = vpop.f32.mrb[0].mxu0
        %v4037 = vpop.f32.mrb[0].mxu0
        %v4038 = vadd.f32 0.0, %v4037
        %v4039 = vpop.f32.mrb[0].mxu0
        %4040 = vmatprep.mubr.bf16.mxu0 %v3719
        %4041 = vmatmul.mubr.bf16.gmra.mrb[0].mxu0 %v3388
        %v4042 = vpop.f32.mrb[0].mxu0
        %v4043 = vadd.f32 0.0, %v4042
        %v4044 = vpop.f32.mrb[0].mxu0
        %v4045 = vpop.f32.mrb[0].mxu0
        %v4046 = vadd.f32 0.0, %v4045
        %v4047 = vpop.f32.mrb[0].mxu0
        %4048 = vmatprep.mubr.bf16.mxu0 %v3722
        %4049 = vmatmul.mubr.bf16.gmra.mrb[0].mxu0 %v3392
        %v4050 = vpop.f32.mrb[0].mxu0
        %v4051 = vadd.f32 0.0, %v4050
        %v4052 = vpop.f32.mrb[0].mxu0
        %v4053 = vpop.f32.mrb[0].mxu0
        %v4054 = vadd.f32 0.0, %v4053
        %v4055 = vpop.f32.mrb[0].mxu0
        %4056 = vmatprep.mubr.bf16.mxu0 %v3725
        %4057 = vmatmul.mubr.bf16.gmra.mrb[0].mxu0 %v3396
        %v4058 = vpop.f32.mrb[0].mxu0
        %v4059 = vadd.f32 0.0, %v4058
        %v4060 = vpop.f32.mrb[0].mxu0
        %v4061 = vpop.f32.mrb[0].mxu0
        %v4062 = vadd.f32 0.0, %v4061
        %v4063 = vpop.f32.mrb[0].mxu0
        %4064 = vmatprep.mubr.bf16.mxu0 %v3728
        %4065 = vmatmul.mubr.bf16.gmra.mrb[0].mxu0 %v3400
        %v4066 = vpop.f32.mrb[0].mxu0
        %v4067 = vadd.f32 0.0, %v4066
        %v4068 = vpop.f32.mrb[0].mxu0
        %v4069 = vpop.f32.mrb[0].mxu0
        %v4070 = vadd.f32 0.0, %v4069
        %v4071 = vpop.f32.mrb[0].mxu0
        %4072 = vmatprep.mubr.bf16.mxu0 %v3731
        %4073 = vmatmul.mubr.bf16.gmra.mrb[0].mxu0 %v3404
        %v4074 = vpop.f32.mrb[0].mxu0
        %v4075 = vadd.f32 0.0, %v4074
        %v4076 = vpop.f32.mrb[0].mxu0
        %v4077 = vpop.f32.mrb[0].mxu0
        %v4078 = vadd.f32 0.0, %v4077
        %v4079 = vpop.f32.mrb[0].mxu0
        %4080 = vmatprep.mubr.bf16.mxu0 %v3733
        %4081 = vmatmul.mubr.bf16.gmra.mrb[0].mxu0 %v3423
        %v4082 = vpop.f32.mrb[0].mxu0
        %v4083 = vadd.f32 0.0, %v4082
        %v4084 = vpop.f32.mrb[0].mxu0
        %v4085 = vpop.f32.mrb[0].mxu0
        %v4086 = vadd.f32 0.0, %v4085
        %v4087 = vpop.f32.mrb[0].mxu0
        %4088 = vdwg.mxu0
        %v4089 = vadd.f32 %v2994, %v3770
        %v4090 = vadd.f32 %v2996, %v3772
        %v4091 = vadd.f32 %v3187, %v3963
        %v4092 = vadd.f32 %v2998, %v3774
        %v4093 = vadd.f32 %v3000, %v3776
        %v4094 = vadd.f32 %v3190, %v3966
        %v4095 = vadd.f32 %v3004, %v3780
        %v4096 = vadd.f32 %v3006, %v3782
        %v4097 = vadd.f32 %v3195, %v3971
        %v4098 = vadd.f32 %v3008, %v3784
        %v4099 = vadd.f32 %v3010, %v3786
        %v4100 = vadd.f32 %v3198, %v3974
        %v4101 = vadd.f32 %v3014, %v3790
        %v4102 = vadd.f32 %v3016, %v3792
        %v4103 = vadd.f32 %v3203, %v3979
        %v4104 = vadd.f32 %v3018, %v3794
        %v4105 = vadd.f32 %v3020, %v3796
        %v4106 = vadd.f32 %v3206, %v3982
        %v4107 = vadd.f32 %v3024, %v3800
        %v4108 = vadd.f32 %v3026, %v3802
        %v4109 = vadd.f32 %v3211, %v3987
        %v4110 = vadd.f32 %v3028, %v3804
        %v4111 = vadd.f32 %v3030, %v3806
        %v4112 = vadd.f32 %v3214, %v3990
        %v4113 = vadd.f32 %v3034, %v3810
        %v4114 = vadd.f32 %v3036, %v3812
        %v4115 = vadd.f32 %v3219, %v3995
        %v4116 = vadd.f32 %v3038, %v3814
        %v4117 = vadd.f32 %v3040, %v3816
        %v4118 = vadd.f32 %v3222, %v3998
        %v4119 = vadd.f32 %v3044, %v3820
        %v4120 = vadd.f32 %v3046, %v3822
        %v4121 = vadd.f32 %v3227, %v4003
        %v4122 = vadd.f32 %v3048, %v3824
        %v4123 = vadd.f32 %v3050, %v3826
        %v4124 = vadd.f32 %v3230, %v4006
        %v4125 = vadd.f32 %v3054, %v3830
        %v4126 = vadd.f32 %v3056, %v3832
        %v4127 = vadd.f32 %v3235, %v4011
        %v4128 = vadd.f32 %v3058, %v3834
        %v4129 = vadd.f32 %v3060, %v3836
        %v4130 = vadd.f32 %v3238, %v4014
        %v4131 = vadd.f32 %v3064, %v3840
        %v4132 = vadd.f32 %v3066, %v3842
        %v4133 = vadd.f32 %v3243, %v4019
        %v4134 = vadd.f32 %v3068, %v3844
        %v4135 = vadd.f32 %v3070, %v3846
        %v4136 = vadd.f32 %v3246, %v4022
        %v4137 = vadd.f32 %v3074, %v3850
        %v4138 = vadd.f32 %v3076, %v3852
        %v4139 = vadd.f32 %v3251, %v4027
        %v4140 = vadd.f32 %v3078, %v3854
        %v4141 = vadd.f32 %v3080, %v3856
        %v4142 = vadd.f32 %v3254, %v4030
        %v4143 = vadd.f32 %v3084, %v3860
        %v4144 = vadd.f32 %v3086, %v3862
        %v4145 = vadd.f32 %v3259, %v4035
        %v4146 = vadd.f32 %v3088, %v3864
        %v4147 = vadd.f32 %v3090, %v3866
        %v4148 = vadd.f32 %v3262, %v4038
        %v4149 = vadd.f32 %v3094, %v3870
        %v4150 = vadd.f32 %v3096, %v3872
        %v4151 = vadd.f32 %v3267, %v4043
        %v4152 = vadd.f32 %v3098, %v3874
        %v4153 = vadd.f32 %v3100, %v3876
        %v4154 = vadd.f32 %v3270, %v4046
        %v4155 = vadd.f32 %v3104, %v3880
        %v4156 = vadd.f32 %v3106, %v3882
        %v4157 = vadd.f32 %v3275, %v4051
        %v4158 = vadd.f32 %v3108, %v3884
        %v4159 = vadd.f32 %v3110, %v3886
        %v4160 = vadd.f32 %v3278, %v4054
        %v4161 = vadd.f32 %v3114, %v3890
        %v4162 = vadd.f32 %v3116, %v3892
        %v4163 = vadd.f32 %v3283, %v4059
        %v4164 = vadd.f32 %v3118, %v3894
        %v4165 = vadd.f32 %v3120, %v3896
        %v4166 = vadd.f32 %v3286, %v4062
        %v4167 = vadd.f32 %v3124, %v3900
        %v4168 = vadd.f32 %v3126, %v3902
        %v4169 = vadd.f32 %v3291, %v4067
        %v4170 = vadd.f32 %v3128, %v3904
        %v4171 = vadd.f32 %v3130, %v3906
        %v4172 = vadd.f32 %v3294, %v4070
        %v4173 = vadd.f32 %v3134, %v3910
        %v4174 = vadd.f32 %v3136, %v3912
        %v4175 = vadd.f32 %v3299, %v4075
        %v4176 = vadd.f32 %v3138, %v3914
        %v4177 = vadd.f32 %v3140, %v3916
        %v4178 = vadd.f32 %v3302, %v4078
        %v4179 = vadd.f32 %v3144, %v3920
        %v4180 = vadd.f32 %v3146, %v3922
        %v4181 = vadd.f32 %v3307, %v4083
        %v4182 = vadd.f32 %v3148, %v3924
        %v4183 = vadd.f32 %v3150, %v3926
        %v4184 = vadd.f32 %v3310, %v4086
        %v4185 = vld [vmem:[%s4] sm:$0x7]
        %v4187 = vlaneseq
        %v4188 = vshrl.u32 %v4187, 7
        %v4189 = vsub.s32 0, %v4188
        %v4190 = vrot.slane %v4185, %v4189
        %v4191 = vlaneseq
        %v4192 = vshrl.u32 %v4191, 7
        %v4193 = vsub.s32 1, %v4192
        %v4194 = vrot.slane %v4185, %v4193
        %v4195 = vlaneseq
        %v4196 = vshrl.u32 %v4195, 7
        %v4197 = vsub.s32 2, %v4196
        %v4198 = vrot.slane %v4185, %v4197
        %v4202 = vadd.f32 %v4089, %v4190
        %v4203 = vadd.f32 %v4090, %v4194
        %v4204 = vadd.f32 %v4091, %v4198
        %v4205 = vadd.f32 %v4092, %v4190
        %v4206 = vadd.f32 %v4093, %v4194
        %v4207 = vadd.f32 %v4094, %v4198
        %v4208 = vadd.f32 %v4095, %v4190
        %v4209 = vadd.f32 %v4096, %v4194
        %v4210 = vadd.f32 %v4097, %v4198
        %v4211 = vadd.f32 %v4098, %v4190
        %v4212 = vadd.f32 %v4099, %v4194
        %v4213 = vadd.f32 %v4100, %v4198
        %v4214 = vadd.f32 %v4101, %v4190
        %v4215 = vadd.f32 %v4102, %v4194
        %v4216 = vadd.f32 %v4103, %v4198
        %v4217 = vadd.f32 %v4104, %v4190
        %v4218 = vadd.f32 %v4105, %v4194
        %v4219 = vadd.f32 %v4106, %v4198
        %v4220 = vadd.f32 %v4107, %v4190
        %v4221 = vadd.f32 %v4108, %v4194
        %v4222 = vadd.f32 %v4109, %v4198
        %v4223 = vadd.f32 %v4110, %v4190
        %v4224 = vadd.f32 %v4111, %v4194
        %v4225 = vadd.f32 %v4112, %v4198
        %v4226 = vadd.f32 %v4113, %v4190
        %v4227 = vadd.f32 %v4114, %v4194
        %v4228 = vadd.f32 %v4115, %v4198
        %v4229 = vadd.f32 %v4116, %v4190
        %v4230 = vadd.f32 %v4117, %v4194
        %v4231 = vadd.f32 %v4118, %v4198
        %v4232 = vadd.f32 %v4119, %v4190
        %v4233 = vadd.f32 %v4120, %v4194
        %v4234 = vadd.f32 %v4121, %v4198
        %v4235 = vadd.f32 %v4122, %v4190
        %v4236 = vadd.f32 %v4123, %v4194
        %v4237 = vadd.f32 %v4124, %v4198
        %v4238 = vadd.f32 %v4125, %v4190
        %v4239 = vadd.f32 %v4126, %v4194
        %v4240 = vadd.f32 %v4127, %v4198
        %v4241 = vadd.f32 %v4128, %v4190
        %v4242 = vadd.f32 %v4129, %v4194
        %v4243 = vadd.f32 %v4130, %v4198
        %v4244 = vadd.f32 %v4131, %v4190
        %v4245 = vadd.f32 %v4132, %v4194
        %v4246 = vadd.f32 %v4133, %v4198
        %v4247 = vadd.f32 %v4134, %v4190
        %v4248 = vadd.f32 %v4135, %v4194
        %v4249 = vadd.f32 %v4136, %v4198
        %v4250 = vadd.f32 %v4137, %v4190
        %v4251 = vadd.f32 %v4138, %v4194
        %v4252 = vadd.f32 %v4139, %v4198
        %v4253 = vadd.f32 %v4140, %v4190
        %v4254 = vadd.f32 %v4141, %v4194
        %v4255 = vadd.f32 %v4142, %v4198
        %v4256 = vadd.f32 %v4143, %v4190
        %v4257 = vadd.f32 %v4144, %v4194
        %v4258 = vadd.f32 %v4145, %v4198
        %v4259 = vadd.f32 %v4146, %v4190
        %v4260 = vadd.f32 %v4147, %v4194
        %v4261 = vadd.f32 %v4148, %v4198
        %v4262 = vadd.f32 %v4149, %v4190
        %v4263 = vadd.f32 %v4150, %v4194
        %v4264 = vadd.f32 %v4151, %v4198
        %v4265 = vadd.f32 %v4152, %v4190
        %v4266 = vadd.f32 %v4153, %v4194
        %v4267 = vadd.f32 %v4154, %v4198
        %v4268 = vadd.f32 %v4155, %v4190
        %v4269 = vadd.f32 %v4156, %v4194
        %v4270 = vadd.f32 %v4157, %v4198
        %v4271 = vadd.f32 %v4158, %v4190
        %v4272 = vadd.f32 %v4159, %v4194
        %v4273 = vadd.f32 %v4160, %v4198
        %v4274 = vadd.f32 %v4161, %v4190
        %v4275 = vadd.f32 %v4162, %v4194
        %v4276 = vadd.f32 %v4163, %v4198
        %v4277 = vadd.f32 %v4164, %v4190
        %v4278 = vadd.f32 %v4165, %v4194
        %v4279 = vadd.f32 %v4166, %v4198
        %v4280 = vadd.f32 %v4167, %v4190
        %v4281 = vadd.f32 %v4168, %v4194
        %v4282 = vadd.f32 %v4169, %v4198
        %v4283 = vadd.f32 %v4170, %v4190
        %v4284 = vadd.f32 %v4171, %v4194
        %v4285 = vadd.f32 %v4172, %v4198
        %v4286 = vadd.f32 %v4173, %v4190
        %v4287 = vadd.f32 %v4174, %v4194
        %v4288 = vadd.f32 %v4175, %v4198
        %v4289 = vadd.f32 %v4176, %v4190
        %v4290 = vadd.f32 %v4177, %v4194
        %v4291 = vadd.f32 %v4178, %v4198
        %v4292 = vadd.f32 %v4179, %v4190
        %v4293 = vadd.f32 %v4180, %v4194
        %v4294 = vadd.f32 %v4181, %v4198
        %v4295 = vadd.f32 %v4182, %v4190
        %v4296 = vadd.f32 %v4183, %v4194
        %v4297 = vadd.f32 %v4184, %v4198
        %v4298 = vmax.f32 %v4202, 0.0
        %v4299 = vmax.f32 %v4203, 0.0
        %v4300 = vmax.f32 %v4204, 0.0
        %v4301 = vmax.f32 %v4205, 0.0
        %v4302 = vmax.f32 %v4206, 0.0
        %v4303 = vmax.f32 %v4207, 0.0
        %v4304 = vmax.f32 %v4208, 0.0
        %v4305 = vmax.f32 %v4209, 0.0
        %v4306 = vmax.f32 %v4210, 0.0
        %v4307 = vmax.f32 %v4211, 0.0
        %v4308 = vmax.f32 %v4212, 0.0
        %v4309 = vmax.f32 %v4213, 0.0
        %v4310 = vmax.f32 %v4214, 0.0
        %v4311 = vmax.f32 %v4215, 0.0
        %v4312 = vmax.f32 %v4216, 0.0
        %v4313 = vmax.f32 %v4217, 0.0
        %v4314 = vmax.f32 %v4218, 0.0
        %v4315 = vmax.f32 %v4219, 0.0
        %v4316 = vmax.f32 %v4220, 0.0
        %v4317 = vmax.f32 %v4221, 0.0
        %v4318 = vmax.f32 %v4222, 0.0
        %v4319 = vmax.f32 %v4223, 0.0
        %v4320 = vmax.f32 %v4224, 0.0
        %v4321 = vmax.f32 %v4225, 0.0
        %v4322 = vmax.f32 %v4226, 0.0
        %v4323 = vmax.f32 %v4227, 0.0
        %v4324 = vmax.f32 %v4228, 0.0
        %v4325 = vmax.f32 %v4229, 0.0
        %v4326 = vmax.f32 %v4230, 0.0
        %v4327 = vmax.f32 %v4231, 0.0
        %v4328 = vmax.f32 %v4232, 0.0
        %v4329 = vmax.f32 %v4233, 0.0
        %v4330 = vmax.f32 %v4234, 0.0
        %v4331 = vmax.f32 %v4235, 0.0
        %v4332 = vmax.f32 %v4236, 0.0
        %v4333 = vmax.f32 %v4237, 0.0
        %v4334 = vmax.f32 %v4238, 0.0
        %v4335 = vmax.f32 %v4239, 0.0
        %v4336 = vmax.f32 %v4240, 0.0
        %v4337 = vmax.f32 %v4241, 0.0
        %v4338 = vmax.f32 %v4242, 0.0
        %v4339 = vmax.f32 %v4243, 0.0
        %v4340 = vmax.f32 %v4244, 0.0
        %v4341 = vmax.f32 %v4245, 0.0
        %v4342 = vmax.f32 %v4246, 0.0
        %v4343 = vmax.f32 %v4247, 0.0
        %v4344 = vmax.f32 %v4248, 0.0
        %v4345 = vmax.f32 %v4249, 0.0
        %v4346 = vmax.f32 %v4250, 0.0
        %v4347 = vmax.f32 %v4251, 0.0
        %v4348 = vmax.f32 %v4252, 0.0
        %v4349 = vmax.f32 %v4253, 0.0
        %v4350 = vmax.f32 %v4254, 0.0
        %v4351 = vmax.f32 %v4255, 0.0
        %v4352 = vmax.f32 %v4256, 0.0
        %v4353 = vmax.f32 %v4257, 0.0
        %v4354 = vmax.f32 %v4258, 0.0
        %v4355 = vmax.f32 %v4259, 0.0
        %v4356 = vmax.f32 %v4260, 0.0
        %v4357 = vmax.f32 %v4261, 0.0
        %v4358 = vmax.f32 %v4262, 0.0
        %v4359 = vmax.f32 %v4263, 0.0
        %v4360 = vmax.f32 %v4264, 0.0
        %v4361 = vmax.f32 %v4265, 0.0
        %v4362 = vmax.f32 %v4266, 0.0
        %v4363 = vmax.f32 %v4267, 0.0
        %v4364 = vmax.f32 %v4268, 0.0
        %v4365 = vmax.f32 %v4269, 0.0
        %v4366 = vmax.f32 %v4270, 0.0
        %v4367 = vmax.f32 %v4271, 0.0
        %v4368 = vmax.f32 %v4272, 0.0
        %v4369 = vmax.f32 %v4273, 0.0
        %v4370 = vmax.f32 %v4274, 0.0
        %v4371 = vmax.f32 %v4275, 0.0
        %v4372 = vmax.f32 %v4276, 0.0
        %v4373 = vmax.f32 %v4277, 0.0
        %v4374 = vmax.f32 %v4278, 0.0
        %v4375 = vmax.f32 %v4279, 0.0
        %v4376 = vmax.f32 %v4280, 0.0
        %v4377 = vmax.f32 %v4281, 0.0
        %v4378 = vmax.f32 %v4282, 0.0
        %v4379 = vmax.f32 %v4283, 0.0
        %v4380 = vmax.f32 %v4284, 0.0
        %v4381 = vmax.f32 %v4285, 0.0
        %v4382 = vmax.f32 %v4286, 0.0
        %v4383 = vmax.f32 %v4287, 0.0
        %v4384 = vmax.f32 %v4288, 0.0
        %v4385 = vmax.f32 %v4289, 0.0
        %v4386 = vmax.f32 %v4290, 0.0
        %v4387 = vmax.f32 %v4291, 0.0
        %v4388 = vmax.f32 %v4292, 0.0
        %v4389 = vmax.f32 %v4293, 0.0
        %v4390 = vmax.f32 %v4294, 0.0
        %v4391 = vmax.f32 %v4295, 0.0
        %v4392 = vmax.f32 %v4296, 0.0
        %v4393 = vmax.f32 %v4297, 0.0
        %v4394 = vpack.c.bf16 %v4301, %v4298
        %v4395 = vpack.c.bf16 %v4302, %v4299
        %v4396 = vpack.c.bf16 %v4303, %v4300
        %v4397 = vpack.c.bf16 %v4307, %v4304
        %v4398 = vpack.c.bf16 %v4308, %v4305
        %v4399 = vpack.c.bf16 %v4309, %v4306
        %v4400 = vpack.c.bf16 %v4313, %v4310
        %v4401 = vpack.c.bf16 %v4314, %v4311
        %v4402 = vpack.c.bf16 %v4315, %v4312
        %v4403 = vpack.c.bf16 %v4319, %v4316
        %v4404 = vpack.c.bf16 %v4320, %v4317
        %v4405 = vpack.c.bf16 %v4321, %v4318
        %v4406 = vpack.c.bf16 %v4325, %v4322
        %v4407 = vpack.c.bf16 %v4326, %v4323
        %v4408 = vpack.c.bf16 %v4327, %v4324
        %v4409 = vpack.c.bf16 %v4331, %v4328
        %v4410 = vpack.c.bf16 %v4332, %v4329
        %v4411 = vpack.c.bf16 %v4333, %v4330
        %v4412 = vpack.c.bf16 %v4337, %v4334
        %v4413 = vpack.c.bf16 %v4338, %v4335
        %v4414 = vpack.c.bf16 %v4339, %v4336
        %v4415 = vpack.c.bf16 %v4343, %v4340
        %v4416 = vpack.c.bf16 %v4344, %v4341
        %v4417 = vpack.c.bf16 %v4345, %v4342
        %v4418 = vpack.c.bf16 %v4349, %v4346
        %v4419 = vpack.c.bf16 %v4350, %v4347
        %v4420 = vpack.c.bf16 %v4351, %v4348
        %v4421 = vpack.c.bf16 %v4355, %v4352
        %v4422 = vpack.c.bf16 %v4356, %v4353
        %v4423 = vpack.c.bf16 %v4357, %v4354
        %v4424 = vpack.c.bf16 %v4361, %v4358
        %v4425 = vpack.c.bf16 %v4362, %v4359
        %v4426 = vpack.c.bf16 %v4363, %v4360
        %v4427 = vpack.c.bf16 %v4367, %v4364
        %v4428 = vpack.c.bf16 %v4368, %v4365
        %v4429 = vpack.c.bf16 %v4369, %v4366
        %v4430 = vpack.c.bf16 %v4373, %v4370
        %v4431 = vpack.c.bf16 %v4374, %v4371
        %v4432 = vpack.c.bf16 %v4375, %v4372
        %v4433 = vpack.c.bf16 %v4379, %v4376
        %v4434 = vpack.c.bf16 %v4380, %v4377
        %v4435 = vpack.c.bf16 %v4381, %v4378
        %v4436 = vpack.c.bf16 %v4385, %v4382
        %v4437 = vpack.c.bf16 %v4386, %v4383
        %v4438 = vpack.c.bf16 %v4387, %v4384
        %v4439 = vpack.c.bf16 %v4391, %v4388
        %v4440 = vpack.c.bf16 %v4392, %v4389
        %v4441 = vpack.c.bf16 %v4393, %v4390
        %v4442 = vld [vmem:[#allocation8] sm:$0xf]
        %v4443 = vld [vmem:[#allocation8 + $0x4] sm:$0xf]
        %v4444 = vld [vmem:[#allocation8 + $0x8] sm:$0xf]
        %v4445 = vld [vmem:[#allocation8 + $0xc] sm:$0xf]
        %v4446 = vld [vmem:[#allocation8 + $0x10] sm:$0xf]
        %v4447 = vld [vmem:[#allocation8 + $0x14] sm:$0xf]
        %v4448 = vld [vmem:[#allocation8 + $0x18] sm:$0xf]
        %v4449 = vld [vmem:[#allocation8 + $0x1c] sm:$0xf]
        %v4450 = vld [vmem:[#allocation8 + $0x20] sm:$0xf]
        %v4451 = vld [vmem:[#allocation8 + $0x24] sm:$0xf]
        %v4452 = vld [vmem:[#allocation8 + $0x28] sm:$0xf]
        %v4453 = vld [vmem:[#allocation8 + $0x2c] sm:$0xf]
        %v4454 = vld [vmem:[#allocation8 + $0x30] sm:$0xf]
        %v4455 = vld [vmem:[#allocation8 + $0x34] sm:$0xf]
        %v4456 = vld [vmem:[#allocation8 + $0x38] sm:$0xf]
        %v4457 = vld [vmem:[#allocation8 + $0x3c] sm:$0xf]
        %v4458 = vld [vmem:[#allocation8 + $0x40] sm:$0xf]
        %v4459 = vld [vmem:[#allocation8 + $0x44] sm:$0xf]
        %v4460 = vld [vmem:[#allocation8 + $0x48] sm:$0xf]
        %v4461 = vld [vmem:[#allocation8 + $0x4c] sm:$0xf]
        %v4462 = vld [vmem:[#allocation8 + $0x50] sm:$0xf]
        %v4463 = vld [vmem:[#allocation8 + $0x54] sm:$0xf]
        %v4464 = vld [vmem:[#allocation8 + $0x58] sm:$0xf]
        %v4465 = vld [vmem:[#allocation8 + $0x5c] sm:$0xf]
        %v4466 = vld [vmem:[#allocation8 + $0x60] sm:$0xf]
        %v4467 = vld [vmem:[#allocation8 + $0x64] sm:$0xf]
        %v4468 = vld [vmem:[#allocation8 + $0x68] sm:$0xf]
        %v4469 = vld [vmem:[#allocation8 + $0x6c] sm:$0xf]
        %v4470 = vld [vmem:[#allocation8 + $0x70] sm:$0xf]
        %v4471 = vld [vmem:[#allocation8 + $0x74] sm:$0xf]
        %v4472 = vld [vmem:[#allocation8 + $0x78] sm:$0xf]
        %v4473 = vld [vmem:[#allocation8 + $0x7c] sm:$0xf]
        %v4474 = vld [vmem:[#allocation8 + $0x80] sm:$0xf]
        %v4475 = vld [vmem:[#allocation8 + $0x84] sm:$0xf]
        %v4476 = vld [vmem:[#allocation8 + $0x88] sm:$0xf]
        %v4477 = vld [vmem:[#allocation8 + $0x8c] sm:$0xf]
        %v4478 = vld [vmem:[#allocation8 + $0x90] sm:$0xf]
        %v4479 = vld [vmem:[#allocation8 + $0x94] sm:$0xf]
        %v4480 = vld [vmem:[#allocation8 + $0x98] sm:$0xf]
        %v4481 = vld [vmem:[#allocation8 + $0x9c] sm:$0xf]
        %v4482 = vld [vmem:[#allocation8 + $0xa0] sm:$0xf]
        %v4483 = vld [vmem:[#allocation8 + $0xa4] sm:$0xf]
        %v4484 = vld [vmem:[#allocation8 + $0xa8] sm:$0xf]
        %v4485 = vld [vmem:[#allocation8 + $0xac] sm:$0xf]
        %v4486 = vld [vmem:[#allocation8 + $0xb0] sm:$0xf]
        %v4487 = vld [vmem:[#allocation8 + $0xb4] sm:$0xf]
        %v4488 = vld [vmem:[#allocation8 + $0xb8] sm:$0xf]
        %v4489 = vld [vmem:[#allocation8 + $0xbc] sm:$0xf]
        %v4538 = vunpack.c.l.b16 %v4442
        %v4539 = vunpack.c.l.b16 %v4443
        %v4540 = vunpack.c.l.b16 %v4444
        %v4541 = vunpack.c.l.b16 %v4445
        %v4542 = vunpack.c.l.b16 %v4446
        %v4543 = vunpack.c.l.b16 %v4447
        %v4544 = vunpack.c.l.b16 %v4448
        %v4545 = vunpack.c.l.b16 %v4449
        %v4546 = vunpack.c.l.b16 %v4450
        %v4547 = vunpack.c.l.b16 %v4451
        %v4548 = vunpack.c.l.b16 %v4452
        %v4549 = vunpack.c.l.b16 %v4453
        %v4550 = vunpack.c.l.b16 %v4454
        %v4551 = vunpack.c.l.b16 %v4455
        %v4552 = vunpack.c.l.b16 %v4456
        %v4553 = vunpack.c.l.b16 %v4457
        %v4554 = vunpack.c.l.b16 %v4458
        %v4555 = vunpack.c.l.b16 %v4459
        %v4556 = vunpack.c.l.b16 %v4460
        %v4557 = vunpack.c.l.b16 %v4461
        %v4558 = vunpack.c.l.b16 %v4462
        %v4559 = vunpack.c.l.b16 %v4463
        %v4560 = vunpack.c.l.b16 %v4464
        %v4561 = vunpack.c.l.b16 %v4465
        %v4562 = vunpack.c.l.b16 %v4466
        %v4563 = vunpack.c.l.b16 %v4467
        %v4564 = vunpack.c.l.b16 %v4468
        %v4565 = vunpack.c.l.b16 %v4469
        %v4566 = vunpack.c.l.b16 %v4470
        %v4567 = vunpack.c.l.b16 %v4471
        %v4568 = vunpack.c.l.b16 %v4472
        %v4569 = vunpack.c.l.b16 %v4473
        %v4570 = vunpack.c.l.b16 %v4474
        %v4571 = vunpack.c.l.b16 %v4475
        %v4572 = vunpack.c.l.b16 %v4476
        %v4573 = vunpack.c.l.b16 %v4477
        %v4574 = vunpack.c.l.b16 %v4478
        %v4575 = vunpack.c.l.b16 %v4479
        %v4576 = vunpack.c.l.b16 %v4480
        %v4577 = vunpack.c.l.b16 %v4481
        %v4578 = vunpack.c.l.b16 %v4482
        %v4579 = vunpack.c.l.b16 %v4483
        %v4580 = vunpack.c.l.b16 %v4484
        %v4581 = vunpack.c.l.b16 %v4485
        %v4582 = vunpack.c.l.b16 %v4486
        %v4583 = vunpack.c.l.b16 %v4487
        %v4584 = vunpack.c.l.b16 %v4488
        %v4585 = vunpack.c.l.b16 %v4489
        %v4586 = vpack.c.b16 %v4539, %v4538
        %v4587 = vpack.c.b16 %v4541, %v4540
        %v4588 = vpack.c.b16 %v4543, %v4542
        %v4589 = vpack.c.b16 %v4545, %v4544
        %v4590 = vpack.c.b16 %v4547, %v4546
        %v4591 = vpack.c.b16 %v4549, %v4548
        %v4592 = vpack.c.b16 %v4551, %v4550
        %v4593 = vpack.c.b16 %v4553, %v4552
        %v4594 = vpack.c.b16 %v4555, %v4554
        %v4595 = vpack.c.b16 %v4557, %v4556
        %v4596 = vpack.c.b16 %v4559, %v4558
        %v4597 = vpack.c.b16 %v4561, %v4560
        %v4598 = vpack.c.b16 %v4563, %v4562
        %v4599 = vpack.c.b16 %v4565, %v4564
        %v4600 = vpack.c.b16 %v4567, %v4566
        %v4601 = vpack.c.b16 %v4569, %v4568
        %v4602 = vpack.c.b16 %v4571, %v4570
        %v4603 = vpack.c.b16 %v4573, %v4572
        %v4604 = vpack.c.b16 %v4575, %v4574
        %v4605 = vpack.c.b16 %v4577, %v4576
        %v4606 = vpack.c.b16 %v4579, %v4578
        %v4607 = vpack.c.b16 %v4581, %v4580
        %v4608 = vpack.c.b16 %v4583, %v4582
        %v4609 = vpack.c.b16 %v4585, %v4584
        %4634 = vmatprep.subr.bf16.mxu0 0
        %4635 = vmatpush1.bf16.msra.mxu0 %v4586
        %4636 = vmatprep.subr.bf16.mxu0 0
        %4637 = vmatpush1.bf16.msra.mxu0 %v4587
        %4638 = vmatprep.subr.bf16.mxu0 0
        %4639 = vmatpush1.bf16.msra.mxu0 %v4588
        %4640 = vmatprep.subr.bf16.mxu0 0
        %4641 = vmatpush1.bf16.msra.mxu0 %v4589
        %4642 = vmatprep.subr.bf16.mxu0 0
        %4643 = vmatpush1.bf16.msra.mxu0 %v4590
        %4644 = vmatprep.subr.bf16.mxu0 0
        %4645 = vmatpush1.bf16.msra.mxu0 %v4591
        %4646 = vmatprep.subr.bf16.mxu0 0
        %4647 = vmatpush1.bf16.msra.mxu0 %v4592
        %4648 = vmatprep.subr.bf16.mxu0 0
        %4649 = vmatpush1.bf16.msra.mxu0 %v4593
        %4650 = vmatprep.subr.bf16.mxu0 0
        %4651 = vmatpush1.bf16.msra.mxu0 %v4594
        %4652 = vmatprep.subr.bf16.mxu0 0
        %4653 = vmatpush1.bf16.msra.mxu0 %v4595
        %4654 = vmatprep.subr.bf16.mxu0 0
        %4655 = vmatpush1.bf16.msra.mxu0 %v4596
        %4656 = vmatprep.subr.bf16.mxu0 0
        %4657 = vmatpush1.bf16.msra.mxu0 %v4597
        %4658 = vmatprep.subr.bf16.mxu0 0
        %4659 = vmatpush1.bf16.msra.mxu0 %v4598
        %4660 = vmatprep.subr.bf16.mxu0 0
        %4661 = vmatpush1.bf16.msra.mxu0 %v4599
        %4662 = vmatprep.subr.bf16.mxu0 0
        %4663 = vmatpush1.bf16.msra.mxu0 %v4600
        %4664 = vmatprep.subr.bf16.mxu0 0
        %4665 = vmatpush1.bf16.msra.mxu0 %v4601
        %4666 = vmatprep.mubr.bf16.mxu0 %v4395
        %4667 = vmatmul.mubr.bf16.gmra.mrb[0].mxu0 %v4394
        %v4668 = vpop.f32.mrb[0].mxu0
        %v4669 = vadd.f32 0.0, %v4668
        %v4670 = vpop.f32.mrb[0].mxu0
        %v4671 = vpop.f32.mrb[0].mxu0
        %v4672 = vadd.f32 0.0, %v4671
        %v4673 = vpop.f32.mrb[0].mxu0
        %4674 = vmatprep.mubr.bf16.mxu0 %v4398
        %4675 = vmatmul.mubr.bf16.gmra.mrb[0].mxu0 %v4397
        %v4676 = vpop.f32.mrb[0].mxu0
        %v4677 = vadd.f32 0.0, %v4676
        %v4678 = vpop.f32.mrb[0].mxu0
        %v4679 = vpop.f32.mrb[0].mxu0
        %v4680 = vadd.f32 0.0, %v4679
        %v4681 = vpop.f32.mrb[0].mxu0
        %4682 = vmatprep.mubr.bf16.mxu0 %v4401
        %4683 = vmatmul.mubr.bf16.gmra.mrb[0].mxu0 %v4400
        %v4684 = vpop.f32.mrb[0].mxu0
        %v4685 = vadd.f32 0.0, %v4684
        %v4686 = vpop.f32.mrb[0].mxu0
        %v4687 = vpop.f32.mrb[0].mxu0
        %v4688 = vadd.f32 0.0, %v4687
        %v4689 = vpop.f32.mrb[0].mxu0
        %4690 = vmatprep.mubr.bf16.mxu0 %v4404
        %4691 = vmatmul.mubr.bf16.gmra.mrb[0].mxu0 %v4403
        %v4692 = vpop.f32.mrb[0].mxu0
        %v4693 = vadd.f32 0.0, %v4692
        %v4694 = vpop.f32.mrb[0].mxu0
        %v4695 = vpop.f32.mrb[0].mxu0
        %v4696 = vadd.f32 0.0, %v4695
        %v4697 = vpop.f32.mrb[0].mxu0
        %4698 = vmatprep.mubr.bf16.mxu0 %v4407
        %4699 = vmatmul.mubr.bf16.gmra.mrb[0].mxu0 %v4406
        %v4700 = vpop.f32.mrb[0].mxu0
        %v4701 = vadd.f32 0.0, %v4700
        %v4702 = vpop.f32.mrb[0].mxu0
        %v4703 = vpop.f32.mrb[0].mxu0
        %v4704 = vadd.f32 0.0, %v4703
        %v4705 = vpop.f32.mrb[0].mxu0
        %4706 = vmatprep.mubr.bf16.mxu0 %v4410
        %4707 = vmatmul.mubr.bf16.gmra.mrb[0].mxu0 %v4409
        %v4708 = vpop.f32.mrb[0].mxu0
        %v4709 = vadd.f32 0.0, %v4708
        %v4710 = vpop.f32.mrb[0].mxu0
        %v4711 = vpop.f32.mrb[0].mxu0
        %v4712 = vadd.f32 0.0, %v4711
        %v4713 = vpop.f32.mrb[0].mxu0
        %4714 = vmatprep.mubr.bf16.mxu0 %v4413
        %4715 = vmatmul.mubr.bf16.gmra.mrb[0].mxu0 %v4412
        %v4716 = vpop.f32.mrb[0].mxu0
        %v4717 = vadd.f32 0.0, %v4716
        %v4718 = vpop.f32.mrb[0].mxu0
        %v4719 = vpop.f32.mrb[0].mxu0
        %v4720 = vadd.f32 0.0, %v4719
        %v4721 = vpop.f32.mrb[0].mxu0
        %4722 = vmatprep.mubr.bf16.mxu0 %v4416
        %4723 = vmatmul.mubr.bf16.gmra.mrb[0].mxu0 %v4415
        %v4724 = vpop.f32.mrb[0].mxu0
        %v4725 = vadd.f32 0.0, %v4724
        %v4726 = vpop.f32.mrb[0].mxu0
        %v4727 = vpop.f32.mrb[0].mxu0
        %v4728 = vadd.f32 0.0, %v4727
        %v4729 = vpop.f32.mrb[0].mxu0
        %4730 = vmatprep.mubr.bf16.mxu0 %v4419
        %4731 = vmatmul.mubr.bf16.gmra.mrb[0].mxu0 %v4418
        %v4732 = vpop.f32.mrb[0].mxu0
        %v4733 = vadd.f32 0.0, %v4732
        %v4734 = vpop.f32.mrb[0].mxu0
        %v4735 = vpop.f32.mrb[0].mxu0
        %v4736 = vadd.f32 0.0, %v4735
        %v4737 = vpop.f32.mrb[0].mxu0
        %4738 = vmatprep.mubr.bf16.mxu0 %v4422
        %4739 = vmatmul.mubr.bf16.gmra.mrb[0].mxu0 %v4421
        %v4740 = vpop.f32.mrb[0].mxu0
        %v4741 = vadd.f32 0.0, %v4740
        %v4742 = vpop.f32.mrb[0].mxu0
        %v4743 = vpop.f32.mrb[0].mxu0
        %v4744 = vadd.f32 0.0, %v4743
        %v4745 = vpop.f32.mrb[0].mxu0
        %4746 = vmatprep.mubr.bf16.mxu0 %v4425
        %4747 = vmatmul.mubr.bf16.gmra.mrb[0].mxu0 %v4424
        %v4748 = vpop.f32.mrb[0].mxu0
        %v4749 = vadd.f32 0.0, %v4748
        %v4750 = vpop.f32.mrb[0].mxu0
        %v4751 = vpop.f32.mrb[0].mxu0
        %v4752 = vadd.f32 0.0, %v4751
        %v4753 = vpop.f32.mrb[0].mxu0
        %4754 = vmatprep.mubr.bf16.mxu0 %v4428
        %4755 = vmatmul.mubr.bf16.gmra.mrb[0].mxu0 %v4427
        %v4756 = vpop.f32.mrb[0].mxu0
        %v4757 = vadd.f32 0.0, %v4756
        %v4758 = vpop.f32.mrb[0].mxu0
        %v4759 = vpop.f32.mrb[0].mxu0
        %v4760 = vadd.f32 0.0, %v4759
        %v4761 = vpop.f32.mrb[0].mxu0
        %4762 = vmatprep.mubr.bf16.mxu0 %v4431
        %4763 = vmatmul.mubr.bf16.gmra.mrb[0].mxu0 %v4430
        %v4764 = vpop.f32.mrb[0].mxu0
        %v4765 = vadd.f32 0.0, %v4764
        %v4766 = vpop.f32.mrb[0].mxu0
        %v4767 = vpop.f32.mrb[0].mxu0
        %v4768 = vadd.f32 0.0, %v4767
        %v4769 = vpop.f32.mrb[0].mxu0
        %4770 = vmatprep.mubr.bf16.mxu0 %v4434
        %4771 = vmatmul.mubr.bf16.gmra.mrb[0].mxu0 %v4433
        %v4772 = vpop.f32.mrb[0].mxu0
        %v4773 = vadd.f32 0.0, %v4772
        %v4774 = vpop.f32.mrb[0].mxu0
        %v4775 = vpop.f32.mrb[0].mxu0
        %v4776 = vadd.f32 0.0, %v4775
        %v4777 = vpop.f32.mrb[0].mxu0
        %4778 = vmatprep.mubr.bf16.mxu0 %v4437
        %4779 = vmatmul.mubr.bf16.gmra.mrb[0].mxu0 %v4436
        %v4780 = vpop.f32.mrb[0].mxu0
        %v4781 = vadd.f32 0.0, %v4780
        %v4782 = vpop.f32.mrb[0].mxu0
        %v4783 = vpop.f32.mrb[0].mxu0
        %v4784 = vadd.f32 0.0, %v4783
        %v4785 = vpop.f32.mrb[0].mxu0
        %4786 = vmatprep.mubr.bf16.mxu0 %v4440
        %4787 = vmatmul.mubr.bf16.gmra.mrb[0].mxu0 %v4439
        %v4788 = vpop.f32.mrb[0].mxu0
        %v4789 = vadd.f32 0.0, %v4788
        %v4790 = vpop.f32.mrb[0].mxu0
        %v4791 = vpop.f32.mrb[0].mxu0
        %v4792 = vadd.f32 0.0, %v4791
        %v4793 = vpop.f32.mrb[0].mxu0
        %4794 = vdwg.mxu0
        %4795 = vmatprep.subr.bf16.mxu0 0
        %4796 = vmatpush1.bf16.msra.mxu0 %v4602
        %4797 = vmatprep.subr.bf16.mxu0 0
        %4798 = vmatpush1.bf16.msra.mxu0 %v4603
        %4799 = vmatprep.subr.bf16.mxu0 0
        %4800 = vmatpush1.bf16.msra.mxu0 %v4604
        %4801 = vmatprep.subr.bf16.mxu0 0
        %4802 = vmatpush1.bf16.msra.mxu0 %v4605
        %4803 = vmatprep.subr.bf16.mxu0 0
        %4804 = vmatpush1.bf16.msra.mxu0 %v4606
        %4805 = vmatprep.subr.bf16.mxu0 0
        %4806 = vmatpush1.bf16.msra.mxu0 %v4607
        %4807 = vmatprep.subr.bf16.mxu0 0
        %4808 = vmatpush1.bf16.msra.mxu0 %v4608
        %4809 = vmatprep.subr.bf16.mxu0 0
        %4810 = vmatpush1.bf16.msra.mxu0 %v4609
        %4811 = vmatprep.subr.bf16.mxu0 0
        %4812 = vmatpush1.bf16.msra.mxu0 0
        %4813 = vmatprep.subr.bf16.mxu0 0
        %4814 = vmatpush1.bf16.msra.mxu0 0
        %4815 = vmatprep.subr.bf16.mxu0 0
        %4816 = vmatpush1.bf16.msra.mxu0 0
        %4817 = vmatprep.subr.bf16.mxu0 0
        %4818 = vmatpush1.bf16.msra.mxu0 0
        %4819 = vmatprep.subr.bf16.mxu0 0
        %4820 = vmatpush1.bf16.msra.mxu0 0
        %4821 = vmatprep.subr.bf16.mxu0 0
        %4822 = vmatpush1.bf16.msra.mxu0 0
        %4823 = vmatprep.subr.bf16.mxu0 0
        %4824 = vmatpush1.bf16.msra.mxu0 0
        %4825 = vmatprep.subr.bf16.mxu0 0
        %4826 = vmatpush1.bf16.msra.mxu0 0
        %4827 = vmatprep.mubr.bf16.mxu0 0
        %4828 = vmatmul.mubr.bf16.gmra.mrb[0].mxu0 %v4396
        %v4829 = vpop.f32.mrb[0].mxu0
        %v4830 = vadd.f32 %v4669, %v4829
        %v4831 = vpop.f32.mrb[0].mxu0
        %v4832 = vpop.f32.mrb[0].mxu0
        %v4833 = vadd.f32 %v4672, %v4832
        %v4834 = vpop.f32.mrb[0].mxu0
        %4835 = vmatprep.mubr.bf16.mxu0 0
        %4836 = vmatmul.mubr.bf16.gmra.mrb[0].mxu0 %v4399
        %v4837 = vpop.f32.mrb[0].mxu0
        %v4838 = vadd.f32 %v4677, %v4837
        %v4839 = vpop.f32.mrb[0].mxu0
        %v4840 = vpop.f32.mrb[0].mxu0
        %v4841 = vadd.f32 %v4680, %v4840
        %v4842 = vpop.f32.mrb[0].mxu0
        %4843 = vmatprep.mubr.bf16.mxu0 0
        %4844 = vmatmul.mubr.bf16.gmra.mrb[0].mxu0 %v4402
        %v4845 = vpop.f32.mrb[0].mxu0
        %v4846 = vadd.f32 %v4685, %v4845
        %v4847 = vpop.f32.mrb[0].mxu0
        %v4848 = vpop.f32.mrb[0].mxu0
        %v4849 = vadd.f32 %v4688, %v4848
        %v4850 = vpop.f32.mrb[0].mxu0
        %4851 = vmatprep.mubr.bf16.mxu0 0
        %4852 = vmatmul.mubr.bf16.gmra.mrb[0].mxu0 %v4405
        %v4853 = vpop.f32.mrb[0].mxu0
        %v4854 = vadd.f32 %v4693, %v4853
        %v4855 = vpop.f32.mrb[0].mxu0
        %v4856 = vpop.f32.mrb[0].mxu0
        %v4857 = vadd.f32 %v4696, %v4856
        %v4858 = vpop.f32.mrb[0].mxu0
        %4859 = vmatprep.mubr.bf16.mxu0 0
        %4860 = vmatmul.mubr.bf16.gmra.mrb[0].mxu0 %v4408
        %v4861 = vpop.f32.mrb[0].mxu0
        %v4862 = vadd.f32 %v4701, %v4861
        %v4863 = vpop.f32.mrb[0].mxu0
        %v4864 = vpop.f32.mrb[0].mxu0
        %v4865 = vadd.f32 %v4704, %v4864
        %v4866 = vpop.f32.mrb[0].mxu0
        %4867 = vmatprep.mubr.bf16.mxu0 0
        %4868 = vmatmul.mubr.bf16.gmra.mrb[0].mxu0 %v4411
        %v4869 = vpop.f32.mrb[0].mxu0
        %v4870 = vadd.f32 %v4709, %v4869
        %v4871 = vpop.f32.mrb[0].mxu0
        %v4872 = vpop.f32.mrb[0].mxu0
        %v4873 = vadd.f32 %v4712, %v4872
        %v4874 = vpop.f32.mrb[0].mxu0
        %4875 = vmatprep.mubr.bf16.mxu0 0
        %4876 = vmatmul.mubr.bf16.gmra.mrb[0].mxu0 %v4414
        %v4877 = vpop.f32.mrb[0].mxu0
        %v4878 = vadd.f32 %v4717, %v4877
        %v4879 = vpop.f32.mrb[0].mxu0
        %v4880 = vpop.f32.mrb[0].mxu0
        %v4881 = vadd.f32 %v4720, %v4880
        %v4882 = vpop.f32.mrb[0].mxu0
        %4883 = vmatprep.mubr.bf16.mxu0 0
        %4884 = vmatmul.mubr.bf16.gmra.mrb[0].mxu0 %v4417
        %v4885 = vpop.f32.mrb[0].mxu0
        %v4886 = vadd.f32 %v4725, %v4885
        %v4887 = vpop.f32.mrb[0].mxu0
        %v4888 = vpop.f32.mrb[0].mxu0
        %v4889 = vadd.f32 %v4728, %v4888
        %v4890 = vpop.f32.mrb[0].mxu0
        %4891 = vmatprep.mubr.bf16.mxu0 0
        %4892 = vmatmul.mubr.bf16.gmra.mrb[0].mxu0 %v4420
        %v4893 = vpop.f32.mrb[0].mxu0
        %v4894 = vadd.f32 %v4733, %v4893
        %v4895 = vpop.f32.mrb[0].mxu0
        %v4896 = vpop.f32.mrb[0].mxu0
        %v4897 = vadd.f32 %v4736, %v4896
        %v4898 = vpop.f32.mrb[0].mxu0
        %4899 = vmatprep.mubr.bf16.mxu0 0
        %4900 = vmatmul.mubr.bf16.gmra.mrb[0].mxu0 %v4423
        %v4901 = vpop.f32.mrb[0].mxu0
        %v4902 = vadd.f32 %v4741, %v4901
        %v4903 = vpop.f32.mrb[0].mxu0
        %v4904 = vpop.f32.mrb[0].mxu0
        %v4905 = vadd.f32 %v4744, %v4904
        %v4906 = vpop.f32.mrb[0].mxu0
        %4907 = vmatprep.mubr.bf16.mxu0 0
        %4908 = vmatmul.mubr.bf16.gmra.mrb[0].mxu0 %v4426
        %v4909 = vpop.f32.mrb[0].mxu0
        %v4910 = vadd.f32 %v4749, %v4909
        %v4911 = vpop.f32.mrb[0].mxu0
        %v4912 = vpop.f32.mrb[0].mxu0
        %v4913 = vadd.f32 %v4752, %v4912
        %v4914 = vpop.f32.mrb[0].mxu0
        %4915 = vmatprep.mubr.bf16.mxu0 0
        %4916 = vmatmul.mubr.bf16.gmra.mrb[0].mxu0 %v4429
        %v4917 = vpop.f32.mrb[0].mxu0
        %v4918 = vadd.f32 %v4757, %v4917
        %v4919 = vpop.f32.mrb[0].mxu0
        %v4920 = vpop.f32.mrb[0].mxu0
        %v4921 = vadd.f32 %v4760, %v4920
        %v4922 = vpop.f32.mrb[0].mxu0
        %4923 = vmatprep.mubr.bf16.mxu0 0
        %4924 = vmatmul.mubr.bf16.gmra.mrb[0].mxu0 %v4432
        %v4925 = vpop.f32.mrb[0].mxu0
        %v4926 = vadd.f32 %v4765, %v4925
        %v4927 = vpop.f32.mrb[0].mxu0
        %v4928 = vpop.f32.mrb[0].mxu0
        %v4929 = vadd.f32 %v4768, %v4928
        %v4930 = vpop.f32.mrb[0].mxu0
        %4931 = vmatprep.mubr.bf16.mxu0 0
        %4932 = vmatmul.mubr.bf16.gmra.mrb[0].mxu0 %v4435
        %v4933 = vpop.f32.mrb[0].mxu0
        %v4934 = vadd.f32 %v4773, %v4933
        %v4935 = vpop.f32.mrb[0].mxu0
        %v4936 = vpop.f32.mrb[0].mxu0
        %v4937 = vadd.f32 %v4776, %v4936
        %v4938 = vpop.f32.mrb[0].mxu0
        %4939 = vmatprep.mubr.bf16.mxu0 0
        %4940 = vmatmul.mubr.bf16.gmra.mrb[0].mxu0 %v4438
        %v4941 = vpop.f32.mrb[0].mxu0
        %v4942 = vadd.f32 %v4781, %v4941
        %v4943 = vpop.f32.mrb[0].mxu0
        %v4944 = vpop.f32.mrb[0].mxu0
        %v4945 = vadd.f32 %v4784, %v4944
        %v4946 = vpop.f32.mrb[0].mxu0
        %4947 = vmatprep.mubr.bf16.mxu0 0
        %4948 = vmatmul.mubr.bf16.gmra.mrb[0].mxu0 %v4441
        %v4949 = vpop.f32.mrb[0].mxu0
        %v4950 = vadd.f32 %v4789, %v4949
        %v4951 = vpop.f32.mrb[0].mxu0
        %v4952 = vpop.f32.mrb[0].mxu0
        %v4953 = vadd.f32 %v4792, %v4952
        %v4954 = vpop.f32.mrb[0].mxu0
        %4955 = vdwg.mxu0
        %v4988 = vrot.slane %v4830, 1
        %v4989 = vrot.slane %v4833, 1
        %v4990 = vsel %vm1221, %v4988, %v4989
        %v4991 = vrot.slane %v4838, 1
        %v4992 = vsel %vm1221, %v4989, %v4991
        %v4993 = vrot.slane %v4841, 1
        %v4994 = vsel %vm1221, %v4991, %v4993
        %v4995 = vrot.slane %v4846, 1
        %v4996 = vsel %vm1221, %v4993, %v4995
        %v4997 = vrot.slane %v4849, 1
        %v4998 = vsel %vm1221, %v4995, %v4997
        %v4999 = vrot.slane %v4854, 1
        %v5000 = vsel %vm1221, %v4997, %v4999
        %v5001 = vrot.slane %v4857, 1
        %v5002 = vsel %vm1221, %v4999, %v5001
        %v5003 = vrot.slane %v4862, 1
        %v5004 = vsel %vm1221, %v5001, %v5003
        %v5005 = vrot.slane %v4865, 1
        %v5006 = vsel %vm1221, %v5003, %v5005
        %v5007 = vrot.slane %v4870, 1
        %v5008 = vsel %vm1221, %v5005, %v5007
        %v5009 = vrot.slane %v4873, 1
        %v5010 = vsel %vm1221, %v5007, %v5009
        %v5011 = vrot.slane %v4878, 1
        %v5012 = vsel %vm1221, %v5009, %v5011
        %v5013 = vrot.slane %v4881, 1
        %v5014 = vsel %vm1221, %v5011, %v5013
        %v5015 = vrot.slane %v4886, 1
        %v5016 = vsel %vm1221, %v5013, %v5015
        %v5017 = vrot.slane %v4889, 1
        %v5018 = vsel %vm1221, %v5015, %v5017
        %v5019 = vrot.slane %v4894, 1
        %v5020 = vsel %vm1221, %v5017, %v5019
        %v5021 = vrot.slane %v4897, 1
        %v5022 = vsel %vm1221, %v5019, %v5021
        %v5023 = vrot.slane %v4902, 1
        %v5024 = vsel %vm1221, %v5021, %v5023
        %v5025 = vrot.slane %v4905, 1
        %v5026 = vsel %vm1221, %v5023, %v5025
        %v5027 = vrot.slane %v4910, 1
        %v5028 = vsel %vm1221, %v5025, %v5027
        %v5029 = vrot.slane %v4913, 1
        %v5030 = vsel %vm1221, %v5027, %v5029
        %v5031 = vrot.slane %v4918, 1
        %v5032 = vsel %vm1221, %v5029, %v5031
        %v5033 = vrot.slane %v4921, 1
        %v5034 = vsel %vm1221, %v5031, %v5033
        %v5035 = vrot.slane %v4926, 1
        %v5036 = vsel %vm1221, %v5033, %v5035
        %v5037 = vrot.slane %v4929, 1
        %v5038 = vsel %vm1221, %v5035, %v5037
        %v5039 = vrot.slane %v4934, 1
        %v5040 = vsel %vm1221, %v5037, %v5039
        %v5041 = vrot.slane %v4937, 1
        %v5042 = vsel %vm1221, %v5039, %v5041
        %v5043 = vrot.slane %v4942, 1
        %v5044 = vsel %vm1221, %v5041, %v5043
        %v5045 = vrot.slane %v4945, 1
        %v5046 = vsel %vm1221, %v5043, %v5045
        %v5047 = vrot.slane %v4950, 1
        %v5048 = vsel %vm1221, %v5045, %v5047
        %v5049 = vrot.slane %v4953, 1
        %v5050 = vsel %vm1221, %v5047, %v5049
        %v5083 = vsel %vm1221, %v5049, 0.0
        %v5084 = vadd.f32 %v4830, %v4990
        %v5085 = vadd.f32 %v4833, %v4992
        %v5086 = vadd.f32 %v4838, %v4994
        %v5087 = vadd.f32 %v4841, %v4996
        %v5088 = vadd.f32 %v4846, %v4998
        %v5089 = vadd.f32 %v4849, %v5000
        %v5090 = vadd.f32 %v4854, %v5002
        %v5091 = vadd.f32 %v4857, %v5004
        %v5092 = vadd.f32 %v4862, %v5006
        %v5093 = vadd.f32 %v4865, %v5008
        %v5094 = vadd.f32 %v4870, %v5010
        %v5095 = vadd.f32 %v4873, %v5012
        %v5096 = vadd.f32 %v4878, %v5014
        %v5097 = vadd.f32 %v4881, %v5016
        %v5098 = vadd.f32 %v4886, %v5018
        %v5099 = vadd.f32 %v4889, %v5020
        %v5100 = vadd.f32 %v4894, %v5022
        %v5101 = vadd.f32 %v4897, %v5024
        %v5102 = vadd.f32 %v4902, %v5026
        %v5103 = vadd.f32 %v4905, %v5028
        %v5104 = vadd.f32 %v4910, %v5030
        %v5105 = vadd.f32 %v4913, %v5032
        %v5106 = vadd.f32 %v4918, %v5034
        %v5107 = vadd.f32 %v4921, %v5036
        %v5108 = vadd.f32 %v4926, %v5038
        %v5109 = vadd.f32 %v4929, %v5040
        %v5110 = vadd.f32 %v4934, %v5042
        %v5111 = vadd.f32 %v4937, %v5044
        %v5112 = vadd.f32 %v4942, %v5046
        %v5113 = vadd.f32 %v4945, %v5048
        %v5114 = vadd.f32 %v4950, %v5050
        %v5115 = vadd.f32 %v4953, %v5083
        %v5116 = vrot.slane %v4830, 2
        %v5117 = vrot.slane %v4833, 2
        %v5118 = vsel %vm740, %v5116, %v5117
        %v5119 = vrot.slane %v4838, 2
        %v5120 = vsel %vm740, %v5117, %v5119
        %v5121 = vrot.slane %v4841, 2
        %v5122 = vsel %vm740, %v5119, %v5121
        %v5123 = vrot.slane %v4846, 2
        %v5124 = vsel %vm740, %v5121, %v5123
        %v5125 = vrot.slane %v4849, 2
        %v5126 = vsel %vm740, %v5123, %v5125
        %v5127 = vrot.slane %v4854, 2
        %v5128 = vsel %vm740, %v5125, %v5127
        %v5129 = vrot.slane %v4857, 2
        %v5130 = vsel %vm740, %v5127, %v5129
        %v5131 = vrot.slane %v4862, 2
        %v5132 = vsel %vm740, %v5129, %v5131
        %v5133 = vrot.slane %v4865, 2
        %v5134 = vsel %vm740, %v5131, %v5133
        %v5135 = vrot.slane %v4870, 2
        %v5136 = vsel %vm740, %v5133, %v5135
        %v5137 = vrot.slane %v4873, 2
        %v5138 = vsel %vm740, %v5135, %v5137
        %v5139 = vrot.slane %v4878, 2
        %v5140 = vsel %vm740, %v5137, %v5139
        %v5141 = vrot.slane %v4881, 2
        %v5142 = vsel %vm740, %v5139, %v5141
        %v5143 = vrot.slane %v4886, 2
        %v5144 = vsel %vm740, %v5141, %v5143
        %v5145 = vrot.slane %v4889, 2
        %v5146 = vsel %vm740, %v5143, %v5145
        %v5147 = vrot.slane %v4894, 2
        %v5148 = vsel %vm740, %v5145, %v5147
        %v5149 = vrot.slane %v4897, 2
        %v5150 = vsel %vm740, %v5147, %v5149
        %v5151 = vrot.slane %v4902, 2
        %v5152 = vsel %vm740, %v5149, %v5151
        %v5153 = vrot.slane %v4905, 2
        %v5154 = vsel %vm740, %v5151, %v5153
        %v5155 = vrot.slane %v4910, 2
        %v5156 = vsel %vm740, %v5153, %v5155
        %v5157 = vrot.slane %v4913, 2
        %v5158 = vsel %vm740, %v5155, %v5157
        %v5159 = vrot.slane %v4918, 2
        %v5160 = vsel %vm740, %v5157, %v5159
        %v5161 = vrot.slane %v4921, 2
        %v5162 = vsel %vm740, %v5159, %v5161
        %v5163 = vrot.slane %v4926, 2
        %v5164 = vsel %vm740, %v5161, %v5163
        %v5165 = vrot.slane %v4929, 2
        %v5166 = vsel %vm740, %v5163, %v5165
        %v5167 = vrot.slane %v4934, 2
        %v5168 = vsel %vm740, %v5165, %v5167
        %v5169 = vrot.slane %v4937, 2
        %v5170 = vsel %vm740, %v5167, %v5169
        %v5171 = vrot.slane %v4942, 2
        %v5172 = vsel %vm740, %v5169, %v5171
        %v5173 = vrot.slane %v4945, 2
        %v5174 = vsel %vm740, %v5171, %v5173
        %v5175 = vrot.slane %v4950, 2
        %v5176 = vsel %vm740, %v5173, %v5175
        %v5177 = vrot.slane %v4953, 2
        %v5178 = vsel %vm740, %v5175, %v5177
        %v5211 = vsel %vm740, %v5177, 0.0
        %v5212 = vadd.f32 %v5084, %v5118
        %v5213 = vadd.f32 %v5085, %v5120
        %v5214 = vadd.f32 %v5086, %v5122
        %v5215 = vadd.f32 %v5087, %v5124
        %v5216 = vadd.f32 %v5088, %v5126
        %v5217 = vadd.f32 %v5089, %v5128
        %v5218 = vadd.f32 %v5090, %v5130
        %v5219 = vadd.f32 %v5091, %v5132
        %v5220 = vadd.f32 %v5092, %v5134
        %v5221 = vadd.f32 %v5093, %v5136
        %v5222 = vadd.f32 %v5094, %v5138
        %v5223 = vadd.f32 %v5095, %v5140
        %v5224 = vadd.f32 %v5096, %v5142
        %v5225 = vadd.f32 %v5097, %v5144
        %v5226 = vadd.f32 %v5098, %v5146
        %v5227 = vadd.f32 %v5099, %v5148
        %v5228 = vadd.f32 %v5100, %v5150
        %v5229 = vadd.f32 %v5101, %v5152
        %v5230 = vadd.f32 %v5102, %v5154
        %v5231 = vadd.f32 %v5103, %v5156
        %v5232 = vadd.f32 %v5104, %v5158
        %v5233 = vadd.f32 %v5105, %v5160
        %v5234 = vadd.f32 %v5106, %v5162
        %v5235 = vadd.f32 %v5107, %v5164
        %v5236 = vadd.f32 %v5108, %v5166
        %v5237 = vadd.f32 %v5109, %v5168
        %v5238 = vadd.f32 %v5110, %v5170
        %v5239 = vadd.f32 %v5111, %v5172
        %v5240 = vadd.f32 %v5112, %v5174
        %v5241 = vadd.f32 %v5113, %v5176
        %v5242 = vadd.f32 %v5114, %v5178
        %v5243 = vadd.f32 %v5115, %v5211
        %5244 = vst [vmem:[#allocation2] sm:$0xff] %v5212
        %5245 = vst [vmem:[#allocation2 + $0x8] sm:$0xff] %v5213
        %5246 = vst [vmem:[#allocation2 + $0x10] sm:$0xff] %v5214
        %5247 = vst [vmem:[#allocation2 + $0x18] sm:$0xff] %v5215
        %5248 = vst [vmem:[#allocation2 + $0x20] sm:$0xff] %v5216
        %5249 = vst [vmem:[#allocation2 + $0x28] sm:$0xff] %v5217
        %5250 = vst [vmem:[#allocation2 + $0x30] sm:$0xff] %v5218
        %5251 = vst [vmem:[#allocation2 + $0x38] sm:$0xff] %v5219
        %5252 = vst [vmem:[#allocation2 + $0x40] sm:$0xff] %v5220
        %5253 = vst [vmem:[#allocation2 + $0x48] sm:$0xff] %v5221
        %5254 = vst [vmem:[#allocation2 + $0x50] sm:$0xff] %v5222
        %5255 = vst [vmem:[#allocation2 + $0x58] sm:$0xff] %v5223
        %5256 = vst [vmem:[#allocation2 + $0x60] sm:$0xff] %v5224
        %5257 = vst [vmem:[#allocation2 + $0x68] sm:$0xff] %v5225
        %5258 = vst [vmem:[#allocation2 + $0x70] sm:$0xff] %v5226
        %5259 = vst [vmem:[#allocation2 + $0x78] sm:$0xff] %v5227
        %5260 = vst [vmem:[#allocation2 + $0x80] sm:$0xff] %v5228
        %5261 = vst [vmem:[#allocation2 + $0x88] sm:$0xff] %v5229
        %5262 = vst [vmem:[#allocation2 + $0x90] sm:$0xff] %v5230
        %5263 = vst [vmem:[#allocation2 + $0x98] sm:$0xff] %v5231
        %5264 = vst [vmem:[#allocation2 + $0xa0] sm:$0xff] %v5232
        %5265 = vst [vmem:[#allocation2 + $0xa8] sm:$0xff] %v5233
        %5266 = vst [vmem:[#allocation2 + $0xb0] sm:$0xff] %v5234
        %5267 = vst [vmem:[#allocation2 + $0xb8] sm:$0xff] %v5235
        %5268 = vst [vmem:[#allocation2 + $0xc0] sm:$0xff] %v5236
        %5269 = vst [vmem:[#allocation2 + $0xc8] sm:$0xff] %v5237
        %5270 = vst [vmem:[#allocation2 + $0xd0] sm:$0xff] %v5238
        %5271 = vst [vmem:[#allocation2 + $0xd8] sm:$0xff] %v5239
        %5272 = vst [vmem:[#allocation2 + $0xe0] sm:$0xff] %v5240
        %5273 = vst [vmem:[#allocation2 + $0xe8] sm:$0xff] %v5241
        %5274 = vst [vmem:[#allocation2 + $0xf0] sm:$0xff] %v5242
        %5275 = vst [vmem:[#allocation2 + $0xf8] sm:$0xff] %v5243
        %v5276 = vld [vmem:[#allocation2] ss:$32 sm:$0x1]
        %v5277 = vld [vmem:[#allocation2] ss:$32 sm:$0x2]
        %v5278 = vor.u32 %v5276, %v5277
        %v5279 = vld [vmem:[#allocation2] ss:$32 sm:$0x4]
        %v5280 = vor.u32 %v5278, %v5279
        %v5281 = vld [vmem:[#allocation2] ss:$32 sm:$0x8]
        %v5282 = vor.u32 %v5280, %v5281
        %v5283 = vld [vmem:[#allocation2] ss:$32 sm:$0x10]
        %v5284 = vor.u32 %v5282, %v5283
        %v5285 = vld [vmem:[#allocation2] ss:$32 sm:$0x20]
        %v5286 = vor.u32 %v5284, %v5285
        %v5287 = vld [vmem:[#allocation2] ss:$32 sm:$0x40]
        %v5288 = vor.u32 %v5286, %v5287
        %v5289 = vld [vmem:[#allocation2] ss:$32 sm:$0x80]
        %v5290 = vor.u32 %v5288, %v5289
        %v5291 = vmul.f32 %v5290, 0.11111111
        %v5292 = vpack.c.bf16 %v5291, %v5291
        %v5293 = vld [vmem:[#allocation9] sm:$0xff]
        %v5294 = vld [vmem:[#allocation9 + $0x8] sm:$0xff]
        %v5295 = vld [vmem:[#allocation9 + $0x10] sm:$0xff]
        %v5296 = vld [vmem:[#allocation9 + $0x18] sm:$0xff]
        %v5297 = vld [vmem:[#allocation9 + $0x20] sm:$0xff]
        %v5298 = vld [vmem:[#allocation9 + $0x28] sm:$0xff]
        %v5299 = vld [vmem:[#allocation9 + $0x30] sm:$0xff]
        %v5300 = vld [vmem:[#allocation9 + $0x38] sm:$0xff]
        %v5301 = vld [vmem:[#allocation9 + $0x40] sm:$0xff]
        %v5302 = vld [vmem:[#allocation9 + $0x48] sm:$0xff]
        %v5303 = vld [vmem:[#allocation9 + $0x50] sm:$0xff]
        %v5304 = vld [vmem:[#allocation9 + $0x58] sm:$0xff]
        %v5305 = vld [vmem:[#allocation9 + $0x60] sm:$0xff]
        %v5306 = vld [vmem:[#allocation9 + $0x68] sm:$0xff]
        %v5307 = vld [vmem:[#allocation9 + $0x70] sm:$0xff]
        %v5308 = vld [vmem:[#allocation9 + $0x78] sm:$0xff]
        %v5309 = vld [vmem:[#allocation9 + $0x80] sm:$0xff]
        %v5310 = vld [vmem:[#allocation9 + $0x88] sm:$0xff]
        %v5311 = vld [vmem:[#allocation9 + $0x90] sm:$0xff]
        %v5312 = vld [vmem:[#allocation9 + $0x98] sm:$0xff]
        %v5313 = vld [vmem:[#allocation9 + $0xa0] sm:$0xff]
        %v5314 = vld [vmem:[#allocation9 + $0xa8] sm:$0xff]
        %v5315 = vld [vmem:[#allocation9 + $0xb0] sm:$0xff]
        %v5316 = vld [vmem:[#allocation9 + $0xb8] sm:$0xff]
        %v5317 = vld [vmem:[#allocation9 + $0xc0] sm:$0xff]
        %v5318 = vld [vmem:[#allocation9 + $0xc8] sm:$0xff]
        %v5319 = vld [vmem:[#allocation9 + $0xd0] sm:$0xff]
        %v5320 = vld [vmem:[#allocation9 + $0xd8] sm:$0xff]
        %v5321 = vld [vmem:[#allocation9 + $0xe0] sm:$0xff]
        %v5322 = vld [vmem:[#allocation9 + $0xe8] sm:$0xff]
        %v5323 = vld [vmem:[#allocation9 + $0xf0] sm:$0xff]
        %v5324 = vld [vmem:[#allocation9 + $0xf8] sm:$0xff]
        %s5325 = scalar_lea.vmem [#allocation2], 3
        %v5326 = vld [vmem:[%s5325] ss:$32 sm:$0x1]
        %v5327 = vld [vmem:[%s5325] ss:$32 sm:$0x2]
        %v5328 = vor.u32 %v5326, %v5327
        %v5329 = vld [vmem:[%s5325] ss:$32 sm:$0x4]
        %v5330 = vor.u32 %v5328, %v5329
        %v5331 = vld [vmem:[%s5325] ss:$32 sm:$0x8]
        %v5332 = vor.u32 %v5330, %v5331
        %v5333 = vld [vmem:[%s5325] ss:$32 sm:$0x10]
        %v5334 = vor.u32 %v5332, %v5333
        %v5335 = vld [vmem:[%s5325] ss:$32 sm:$0x20]
        %v5336 = vor.u32 %v5334, %v5335
        %v5337 = vld [vmem:[%s5325] ss:$32 sm:$0x40]
        %v5338 = vor.u32 %v5336, %v5337
        %v5339 = vld [vmem:[%s5325] ss:$32 sm:$0x80]
        %v5340 = vor.u32 %v5338, %v5339
        %v5341 = vmul.f32 %v5340, 0.11111111
        %v5342 = vpack.c.bf16 %v5341, %v5341
        %s5343 = scalar_lea.vmem [#allocation9], 256
        %v5344 = vld [vmem:[%s5343] sm:$0xff]
        %v5345 = vld [vmem:[%s5343 + $0x8] sm:$0xff]
        %v5346 = vld [vmem:[%s5343 + $0x10] sm:$0xff]
        %v5347 = vld [vmem:[%s5343 + $0x18] sm:$0xff]
        %v5348 = vld [vmem:[%s5343 + $0x20] sm:$0xff]
        %v5349 = vld [vmem:[%s5343 + $0x28] sm:$0xff]
        %v5350 = vld [vmem:[%s5343 + $0x30] sm:$0xff]
        %v5351 = vld [vmem:[%s5343 + $0x38] sm:$0xff]
        %v5352 = vld [vmem:[%s5343 + $0x40] sm:$0xff]
        %v5353 = vld [vmem:[%s5343 + $0x48] sm:$0xff]
        %v5354 = vld [vmem:[%s5343 + $0x50] sm:$0xff]
        %v5355 = vld [vmem:[%s5343 + $0x58] sm:$0xff]
        %v5356 = vld [vmem:[%s5343 + $0x60] sm:$0xff]
        %v5357 = vld [vmem:[%s5343 + $0x68] sm:$0xff]
        %v5358 = vld [vmem:[%s5343 + $0x70] sm:$0xff]
        %v5359 = vld [vmem:[%s5343 + $0x78] sm:$0xff]
        %v5360 = vld [vmem:[%s5343 + $0x80] sm:$0xff]
        %v5361 = vld [vmem:[%s5343 + $0x88] sm:$0xff]
        %v5362 = vld [vmem:[%s5343 + $0x90] sm:$0xff]
        %v5363 = vld [vmem:[%s5343 + $0x98] sm:$0xff]
        %v5364 = vld [vmem:[%s5343 + $0xa0] sm:$0xff]
        %v5365 = vld [vmem:[%s5343 + $0xa8] sm:$0xff]
        %v5366 = vld [vmem:[%s5343 + $0xb0] sm:$0xff]
        %v5367 = vld [vmem:[%s5343 + $0xb8] sm:$0xff]
        %v5368 = vld [vmem:[%s5343 + $0xc0] sm:$0xff]
        %v5369 = vld [vmem:[%s5343 + $0xc8] sm:$0xff]
        %v5370 = vld [vmem:[%s5343 + $0xd0] sm:$0xff]
        %v5371 = vld [vmem:[%s5343 + $0xd8] sm:$0xff]
        %v5372 = vld [vmem:[%s5343 + $0xe0] sm:$0xff]
        %v5373 = vld [vmem:[%s5343 + $0xe8] sm:$0xff]
        %v5374 = vld [vmem:[%s5343 + $0xf0] sm:$0xff]
        %v5375 = vld [vmem:[%s5343 + $0xf8] sm:$0xff]
        %v5408 = vunpack.c.l.b16 %v5344
        %v5409 = vunpack.c.h.b16 %v5344
        %v5410 = vunpack.c.l.b16 %v5345
        %v5411 = vunpack.c.h.b16 %v5345
        %v5412 = vunpack.c.l.b16 %v5346
        %v5413 = vunpack.c.h.b16 %v5346
        %v5414 = vunpack.c.l.b16 %v5347
        %v5415 = vunpack.c.h.b16 %v5347
        %v5416 = vunpack.c.l.b16 %v5348
        %v5417 = vunpack.c.h.b16 %v5348
        %v5418 = vunpack.c.l.b16 %v5349
        %v5419 = vunpack.c.h.b16 %v5349
        %v5420 = vunpack.c.l.b16 %v5350
        %v5421 = vunpack.c.h.b16 %v5350
        %v5422 = vunpack.c.l.b16 %v5351
        %v5423 = vunpack.c.h.b16 %v5351
        %v5424 = vunpack.c.l.b16 %v5352
        %v5425 = vunpack.c.h.b16 %v5352
        %v5426 = vunpack.c.l.b16 %v5353
        %v5427 = vunpack.c.h.b16 %v5353
        %v5428 = vunpack.c.l.b16 %v5354
        %v5429 = vunpack.c.h.b16 %v5354
        %v5430 = vunpack.c.l.b16 %v5355
        %v5431 = vunpack.c.h.b16 %v5355
        %v5432 = vunpack.c.l.b16 %v5356
        %v5433 = vunpack.c.h.b16 %v5356
        %v5434 = vunpack.c.l.b16 %v5357
        %v5435 = vunpack.c.h.b16 %v5357
        %v5436 = vunpack.c.l.b16 %v5358
        %v5437 = vunpack.c.h.b16 %v5358
        %v5438 = vunpack.c.l.b16 %v5359
        %v5439 = vunpack.c.h.b16 %v5359
        %v5440 = vunpack.c.l.b16 %v5360
        %v5441 = vunpack.c.h.b16 %v5360
        %v5442 = vunpack.c.l.b16 %v5361
        %v5443 = vunpack.c.h.b16 %v5361
        %v5444 = vunpack.c.l.b16 %v5362
        %v5445 = vunpack.c.h.b16 %v5362
        %v5446 = vunpack.c.l.b16 %v5363
        %v5447 = vunpack.c.h.b16 %v5363
        %v5448 = vunpack.c.l.b16 %v5364
        %v5449 = vunpack.c.h.b16 %v5364
        %v5450 = vunpack.c.l.b16 %v5365
        %v5451 = vunpack.c.h.b16 %v5365
        %v5452 = vunpack.c.l.b16 %v5366
        %v5453 = vunpack.c.h.b16 %v5366
        %v5454 = vunpack.c.l.b16 %v5367
        %v5455 = vunpack.c.h.b16 %v5367
        %v5456 = vunpack.c.l.b16 %v5368
        %v5457 = vunpack.c.h.b16 %v5368
        %v5458 = vunpack.c.l.b16 %v5369
        %v5459 = vunpack.c.h.b16 %v5369
        %v5460 = vunpack.c.l.b16 %v5370
        %v5461 = vunpack.c.h.b16 %v5370
        %v5462 = vunpack.c.l.b16 %v5371
        %v5463 = vunpack.c.h.b16 %v5371
        %v5464 = vunpack.c.l.b16 %v5372
        %v5465 = vunpack.c.h.b16 %v5372
        %v5466 = vunpack.c.l.b16 %v5373
        %v5467 = vunpack.c.h.b16 %v5373
        %v5468 = vunpack.c.l.b16 %v5374
        %v5469 = vunpack.c.h.b16 %v5374
        %v5470 = vunpack.c.l.b16 %v5375
        %v5471 = vunpack.c.h.b16 %v5375
        %v5472 = vpack.c.b16 %v5412, %v5408
        %v5473 = vpack.c.b16 %v5413, %v5409
        %v5474 = vpack.c.b16 %v5414, %v5410
        %v5475 = vpack.c.b16 %v5415, %v5411
        %v5476 = vpack.c.b16 %v5420, %v5416
        %v5477 = vpack.c.b16 %v5421, %v5417
        %v5478 = vpack.c.b16 %v5422, %v5418
        %v5479 = vpack.c.b16 %v5423, %v5419
        %v5480 = vpack.c.b16 %v5428, %v5424
        %v5481 = vpack.c.b16 %v5429, %v5425
        %v5482 = vpack.c.b16 %v5430, %v5426
        %v5483 = vpack.c.b16 %v5431, %v5427
        %v5484 = vpack.c.b16 %v5436, %v5432
        %v5485 = vpack.c.b16 %v5437, %v5433
        %v5486 = vpack.c.b16 %v5438, %v5434
        %v5487 = vpack.c.b16 %v5439, %v5435
        %v5488 = vpack.c.b16 %v5444, %v5440
        %v5489 = vpack.c.b16 %v5445, %v5441
        %v5490 = vpack.c.b16 %v5446, %v5442
        %v5491 = vpack.c.b16 %v5447, %v5443
        %v5492 = vpack.c.b16 %v5452, %v5448
        %v5493 = vpack.c.b16 %v5453, %v5449
        %v5494 = vpack.c.b16 %v5454, %v5450
        %v5495 = vpack.c.b16 %v5455, %v5451
        %v5496 = vpack.c.b16 %v5460, %v5456
        %v5497 = vpack.c.b16 %v5461, %v5457
        %v5498 = vpack.c.b16 %v5462, %v5458
        %v5499 = vpack.c.b16 %v5463, %v5459
        %v5500 = vpack.c.b16 %v5468, %v5464
        %v5501 = vpack.c.b16 %v5469, %v5465
        %v5502 = vpack.c.b16 %v5470, %v5466
        %v5503 = vpack.c.b16 %v5471, %v5467
        %5536 = vmatprep.subr.bf16.mxu0 %v5473
        %5537 = vmatpush1.bf16.msra.mxu0 %v5472
        %5538 = vmatprep.subr.bf16.mxu0 %v5477
        %5539 = vmatpush1.bf16.msra.mxu0 %v5476
        %5540 = vmatprep.subr.bf16.mxu0 %v5481
        %5541 = vmatpush1.bf16.msra.mxu0 %v5480
        %5542 = vmatprep.subr.bf16.mxu0 %v5485
        %5543 = vmatpush1.bf16.msra.mxu0 %v5484
        %5544 = vmatprep.subr.bf16.mxu0 %v5489
        %5545 = vmatpush1.bf16.msra.mxu0 %v5488
        %5546 = vmatprep.subr.bf16.mxu0 %v5493
        %5547 = vmatpush1.bf16.msra.mxu0 %v5492
        %5548 = vmatprep.subr.bf16.mxu0 %v5497
        %5549 = vmatpush1.bf16.msra.mxu0 %v5496
        %5550 = vmatprep.subr.bf16.mxu0 %v5501
        %5551 = vmatpush1.bf16.msra.mxu0 %v5500
        %5552 = vmatprep.subr.bf16.mxu0 0
        %5553 = vmatpush1.bf16.msra.mxu0 0
        %5554 = vmatprep.subr.bf16.mxu0 0
        %5555 = vmatpush1.bf16.msra.mxu0 0
        %5556 = vmatprep.subr.bf16.mxu0 0
        %5557 = vmatpush1.bf16.msra.mxu0 0
        %5558 = vmatprep.subr.bf16.mxu0 0
        %5559 = vmatpush1.bf16.msra.mxu0 0
        %5560 = vmatprep.subr.bf16.mxu0 0
        %5561 = vmatpush1.bf16.msra.mxu0 0
        %5562 = vmatprep.subr.bf16.mxu0 0
        %5563 = vmatpush1.bf16.msra.mxu0 0
        %5564 = vmatprep.subr.bf16.mxu0 0
        %5565 = vmatpush1.bf16.msra.mxu0 0
        %5566 = vmatprep.subr.bf16.mxu0 0
        %5567 = vmatpush1.bf16.msra.mxu0 0
        %5568 = vmatprep.mubr.bf16.mxu0 0
        %5569 = vmatmul.mubr.bf16.gmra.mrb[0].mxu0 %v5342
        %v5570 = vpop.f32.mrb[0].mxu0
        %v5571 = vadd.f32 0.0, %v5570
        %v5572 = vpop.f32.mrb[0].mxu0
        %v5573 = vadd.f32 0.0, %v5572
        %v5574 = vpop.f32.mrb[0].mxu0
        %v5575 = vpop.f32.mrb[0].mxu0
        %5576 = vdwg.mxu0
        %5577 = vmatprep.subr.bf16.mxu0 %v5475
        %5578 = vmatpush1.bf16.msra.mxu0 %v5474
        %5579 = vmatprep.subr.bf16.mxu0 %v5479
        %5580 = vmatpush1.bf16.msra.mxu0 %v5478
        %5581 = vmatprep.subr.bf16.mxu0 %v5483
        %5582 = vmatpush1.bf16.msra.mxu0 %v5482
        %5583 = vmatprep.subr.bf16.mxu0 %v5487
        %5584 = vmatpush1.bf16.msra.mxu0 %v5486
        %5585 = vmatprep.subr.bf16.mxu0 %v5491
        %5586 = vmatpush1.bf16.msra.mxu0 %v5490
        %5587 = vmatprep.subr.bf16.mxu0 %v5495
        %5588 = vmatpush1.bf16.msra.mxu0 %v5494
        %5589 = vmatprep.subr.bf16.mxu0 %v5499
        %5590 = vmatpush1.bf16.msra.mxu0 %v5498
        %5591 = vmatprep.subr.bf16.mxu0 %v5503
        %5592 = vmatpush1.bf16.msra.mxu0 %v5502
        %5593 = vmatprep.subr.bf16.mxu0 0
        %5594 = vmatpush1.bf16.msra.mxu0 0
        %5595 = vmatprep.subr.bf16.mxu0 0
        %5596 = vmatpush1.bf16.msra.mxu0 0
        %5597 = vmatprep.subr.bf16.mxu0 0
        %5598 = vmatpush1.bf16.msra.mxu0 0
        %5599 = vmatprep.subr.bf16.mxu0 0
        %5600 = vmatpush1.bf16.msra.mxu0 0
        %5601 = vmatprep.subr.bf16.mxu0 0
        %5602 = vmatpush1.bf16.msra.mxu0 0
        %5603 = vmatprep.subr.bf16.mxu0 0
        %5604 = vmatpush1.bf16.msra.mxu0 0
        %5605 = vmatprep.subr.bf16.mxu0 0
        %5606 = vmatpush1.bf16.msra.mxu0 0
        %5607 = vmatprep.subr.bf16.mxu0 0
        %5608 = vmatpush1.bf16.msra.mxu0 0
        %5609 = vmatprep.mubr.bf16.mxu0 0
        %5610 = vmatmul.mubr.bf16.gmra.mrb[0].mxu0 %v5342
        %v5611 = vpop.f32.mrb[0].mxu0
        %v5612 = vadd.f32 0.0, %v5611
        %v5613 = vpop.f32.mrb[0].mxu0
        %v5614 = vadd.f32 0.0, %v5613
        %v5615 = vpop.f32.mrb[0].mxu0
        %v5616 = vpop.f32.mrb[0].mxu0
        %5617 = vdwg.mxu0
        %v5650 = vunpack.c.l.b16 %v5293
        %v5651 = vunpack.c.h.b16 %v5293
        %v5652 = vunpack.c.l.b16 %v5294
        %v5653 = vunpack.c.h.b16 %v5294
        %v5654 = vunpack.c.l.b16 %v5295
        %v5655 = vunpack.c.h.b16 %v5295
        %v5656 = vunpack.c.l.b16 %v5296
        %v5657 = vunpack.c.h.b16 %v5296
        %v5658 = vunpack.c.l.b16 %v5297
        %v5659 = vunpack.c.h.b16 %v5297
        %v5660 = vunpack.c.l.b16 %v5298
        %v5661 = vunpack.c.h.b16 %v5298
        %v5662 = vunpack.c.l.b16 %v5299
        %v5663 = vunpack.c.h.b16 %v5299
        %v5664 = vunpack.c.l.b16 %v5300
        %v5665 = vunpack.c.h.b16 %v5300
        %v5666 = vunpack.c.l.b16 %v5301
        %v5667 = vunpack.c.h.b16 %v5301
        %v5668 = vunpack.c.l.b16 %v5302
        %v5669 = vunpack.c.h.b16 %v5302
        %v5670 = vunpack.c.l.b16 %v5303
        %v5671 = vunpack.c.h.b16 %v5303
        %v5672 = vunpack.c.l.b16 %v5304
        %v5673 = vunpack.c.h.b16 %v5304
        %v5674 = vunpack.c.l.b16 %v5305
        %v5675 = vunpack.c.h.b16 %v5305
        %v5676 = vunpack.c.l.b16 %v5306
        %v5677 = vunpack.c.h.b16 %v5306
        %v5678 = vunpack.c.l.b16 %v5307
        %v5679 = vunpack.c.h.b16 %v5307
        %v5680 = vunpack.c.l.b16 %v5308
        %v5681 = vunpack.c.h.b16 %v5308
        %v5682 = vunpack.c.l.b16 %v5309
        %v5683 = vunpack.c.h.b16 %v5309
        %v5684 = vunpack.c.l.b16 %v5310
        %v5685 = vunpack.c.h.b16 %v5310
        %v5686 = vunpack.c.l.b16 %v5311
        %v5687 = vunpack.c.h.b16 %v5311
        %v5688 = vunpack.c.l.b16 %v5312
        %v5689 = vunpack.c.h.b16 %v5312
        %v5690 = vunpack.c.l.b16 %v5313
        %v5691 = vunpack.c.h.b16 %v5313
        %v5692 = vunpack.c.l.b16 %v5314
        %v5693 = vunpack.c.h.b16 %v5314
        %v5694 = vunpack.c.l.b16 %v5315
        %v5695 = vunpack.c.h.b16 %v5315
        %v5696 = vunpack.c.l.b16 %v5316
        %v5697 = vunpack.c.h.b16 %v5316
        %v5698 = vunpack.c.l.b16 %v5317
        %v5699 = vunpack.c.h.b16 %v5317
        %v5700 = vunpack.c.l.b16 %v5318
        %v5701 = vunpack.c.h.b16 %v5318
        %v5702 = vunpack.c.l.b16 %v5319
        %v5703 = vunpack.c.h.b16 %v5319
        %v5704 = vunpack.c.l.b16 %v5320
        %v5705 = vunpack.c.h.b16 %v5320
        %v5706 = vunpack.c.l.b16 %v5321
        %v5707 = vunpack.c.h.b16 %v5321
        %v5708 = vunpack.c.l.b16 %v5322
        %v5709 = vunpack.c.h.b16 %v5322
        %v5710 = vunpack.c.l.b16 %v5323
        %v5711 = vunpack.c.h.b16 %v5323
        %v5712 = vunpack.c.l.b16 %v5324
        %v5713 = vunpack.c.h.b16 %v5324
        %v5714 = vpack.c.b16 %v5654, %v5650
        %v5715 = vpack.c.b16 %v5655, %v5651
        %v5716 = vpack.c.b16 %v5656, %v5652
        %v5717 = vpack.c.b16 %v5657, %v5653
        %v5718 = vpack.c.b16 %v5662, %v5658
        %v5719 = vpack.c.b16 %v5663, %v5659
        %v5720 = vpack.c.b16 %v5664, %v5660
        %v5721 = vpack.c.b16 %v5665, %v5661
        %v5722 = vpack.c.b16 %v5670, %v5666
        %v5723 = vpack.c.b16 %v5671, %v5667
        %v5724 = vpack.c.b16 %v5672, %v5668
        %v5725 = vpack.c.b16 %v5673, %v5669
        %v5726 = vpack.c.b16 %v5678, %v5674
        %v5727 = vpack.c.b16 %v5679, %v5675
        %v5728 = vpack.c.b16 %v5680, %v5676
        %v5729 = vpack.c.b16 %v5681, %v5677
        %v5730 = vpack.c.b16 %v5686, %v5682
        %v5731 = vpack.c.b16 %v5687, %v5683
        %v5732 = vpack.c.b16 %v5688, %v5684
        %v5733 = vpack.c.b16 %v5689, %v5685
        %v5734 = vpack.c.b16 %v5694, %v5690
        %v5735 = vpack.c.b16 %v5695, %v5691
        %v5736 = vpack.c.b16 %v5696, %v5692
        %v5737 = vpack.c.b16 %v5697, %v5693
        %v5738 = vpack.c.b16 %v5702, %v5698
        %v5739 = vpack.c.b16 %v5703, %v5699
        %v5740 = vpack.c.b16 %v5704, %v5700
        %v5741 = vpack.c.b16 %v5705, %v5701
        %v5742 = vpack.c.b16 %v5710, %v5706
        %v5743 = vpack.c.b16 %v5711, %v5707
        %v5744 = vpack.c.b16 %v5712, %v5708
        %v5745 = vpack.c.b16 %v5713, %v5709
        %5778 = vmatprep.subr.bf16.mxu0 %v5715
        %5779 = vmatpush1.bf16.msra.mxu0 %v5714
        %5780 = vmatprep.subr.bf16.mxu0 %v5719
        %5781 = vmatpush1.bf16.msra.mxu0 %v5718
        %5782 = vmatprep.subr.bf16.mxu0 %v5723
        %5783 = vmatpush1.bf16.msra.mxu0 %v5722
        %5784 = vmatprep.subr.bf16.mxu0 %v5727
        %5785 = vmatpush1.bf16.msra.mxu0 %v5726
        %5786 = vmatprep.subr.bf16.mxu0 %v5731
        %5787 = vmatpush1.bf16.msra.mxu0 %v5730
        %5788 = vmatprep.subr.bf16.mxu0 %v5735
        %5789 = vmatpush1.bf16.msra.mxu0 %v5734
        %5790 = vmatprep.subr.bf16.mxu0 %v5739
        %5791 = vmatpush1.bf16.msra.mxu0 %v5738
        %5792 = vmatprep.subr.bf16.mxu0 %v5743
        %5793 = vmatpush1.bf16.msra.mxu0 %v5742
        %5794 = vmatprep.subr.bf16.mxu0 0
        %5795 = vmatpush1.bf16.msra.mxu0 0
        %5796 = vmatprep.subr.bf16.mxu0 0
        %5797 = vmatpush1.bf16.msra.mxu0 0
        %5798 = vmatprep.subr.bf16.mxu0 0
        %5799 = vmatpush1.bf16.msra.mxu0 0
        %5800 = vmatprep.subr.bf16.mxu0 0
        %5801 = vmatpush1.bf16.msra.mxu0 0
        %5802 = vmatprep.subr.bf16.mxu0 0
        %5803 = vmatpush1.bf16.msra.mxu0 0
        %5804 = vmatprep.subr.bf16.mxu0 0
        %5805 = vmatpush1.bf16.msra.mxu0 0
        %5806 = vmatprep.subr.bf16.mxu0 0
        %5807 = vmatpush1.bf16.msra.mxu0 0
        %5808 = vmatprep.subr.bf16.mxu0 0
        %5809 = vmatpush1.bf16.msra.mxu0 0
        %5810 = vmatprep.mubr.bf16.mxu0 0
        %5811 = vmatmul.mubr.bf16.gmra.mrb[0].mxu0 %v5292
        %v5812 = vpop.f32.mrb[0].mxu0
        %v5813 = vadd.f32 %v5571, %v5812
        %v5814 = vpop.f32.mrb[0].mxu0
        %v5815 = vadd.f32 %v5573, %v5814
        %v5816 = vpop.f32.mrb[0].mxu0
        %v5817 = vpop.f32.mrb[0].mxu0
        %5818 = vdwg.mxu0
        %5819 = vmatprep.subr.bf16.mxu0 %v5717
        %5820 = vmatpush1.bf16.msra.mxu0 %v5716
        %5821 = vmatprep.subr.bf16.mxu0 %v5721
        %5822 = vmatpush1.bf16.msra.mxu0 %v5720
        %5823 = vmatprep.subr.bf16.mxu0 %v5725
        %5824 = vmatpush1.bf16.msra.mxu0 %v5724
        %5825 = vmatprep.subr.bf16.mxu0 %v5729
        %5826 = vmatpush1.bf16.msra.mxu0 %v5728
        %5827 = vmatprep.subr.bf16.mxu0 %v5733
        %5828 = vmatpush1.bf16.msra.mxu0 %v5732
        %5829 = vmatprep.subr.bf16.mxu0 %v5737
        %5830 = vmatpush1.bf16.msra.mxu0 %v5736
        %5831 = vmatprep.subr.bf16.mxu0 %v5741
        %5832 = vmatpush1.bf16.msra.mxu0 %v5740
        %5833 = vmatprep.subr.bf16.mxu0 %v5745
        %5834 = vmatpush1.bf16.msra.mxu0 %v5744
        %5835 = vmatprep.subr.bf16.mxu0 0
        %5836 = vmatpush1.bf16.msra.mxu0 0
        %5837 = vmatprep.subr.bf16.mxu0 0
        %5838 = vmatpush1.bf16.msra.mxu0 0
        %5839 = vmatprep.subr.bf16.mxu0 0
        %5840 = vmatpush1.bf16.msra.mxu0 0
        %5841 = vmatprep.subr.bf16.mxu0 0
        %5842 = vmatpush1.bf16.msra.mxu0 0
        %5843 = vmatprep.subr.bf16.mxu0 0
        %5844 = vmatpush1.bf16.msra.mxu0 0
        %5845 = vmatprep.subr.bf16.mxu0 0
        %5846 = vmatpush1.bf16.msra.mxu0 0
        %5847 = vmatprep.subr.bf16.mxu0 0
        %5848 = vmatpush1.bf16.msra.mxu0 0
        %5849 = vmatprep.subr.bf16.mxu0 0
        %5850 = vmatpush1.bf16.msra.mxu0 0
        %5851 = vmatprep.mubr.bf16.mxu0 0
        %5852 = vmatmul.mubr.bf16.gmra.mrb[0].mxu0 %v5292
        %v5853 = vpop.f32.mrb[0].mxu0
        %v5854 = vadd.f32 %v5612, %v5853
        %v5855 = vpop.f32.mrb[0].mxu0
        %v5856 = vadd.f32 %v5614, %v5855
        %v5857 = vpop.f32.mrb[0].mxu0
        %v5858 = vpop.f32.mrb[0].mxu0
        %5859 = vdwg.mxu0
        %s5860 = scalar_lea.vmem [#allocation2], 6
        %v5861 = vld [vmem:[%s5860] ss:$32 sm:$0x1]
        %v5862 = vld [vmem:[%s5860] ss:$32 sm:$0x2]
        %v5863 = vor.u32 %v5861, %v5862
        %v5864 = vld [vmem:[%s5860] ss:$32 sm:$0x4]
        %v5865 = vor.u32 %v5863, %v5864
        %v5866 = vld [vmem:[%s5860] ss:$32 sm:$0x8]
        %v5867 = vor.u32 %v5865, %v5866
        %v5868 = vld [vmem:[%s5860] ss:$32 sm:$0x10]
        %v5869 = vor.u32 %v5867, %v5868
        %v5870 = vld [vmem:[%s5860] ss:$32 sm:$0x20]
        %v5871 = vor.u32 %v5869, %v5870
        %v5872 = vld [vmem:[%s5860] ss:$32 sm:$0x40]
        %v5873 = vor.u32 %v5871, %v5872
        %v5874 = vld [vmem:[%s5860] ss:$32 sm:$0x80]
        %v5875 = vor.u32 %v5873, %v5874
        %v5876 = vmul.f32 %v5875, 0.11111111
        %v5877 = vpack.c.bf16 %v5876, %v5876
        %s5878 = scalar_lea.vmem [#allocation9], 512
        %v5879 = vld [vmem:[%s5878] sm:$0xff]
        %v5880 = vld [vmem:[%s5878 + $0x8] sm:$0xff]
        %v5881 = vld [vmem:[%s5878 + $0x10] sm:$0xff]
        %v5882 = vld [vmem:[%s5878 + $0x18] sm:$0xff]
        %v5883 = vld [vmem:[%s5878 + $0x20] sm:$0xff]
        %v5884 = vld [vmem:[%s5878 + $0x28] sm:$0xff]
        %v5885 = vld [vmem:[%s5878 + $0x30] sm:$0xff]
        %v5886 = vld [vmem:[%s5878 + $0x38] sm:$0xff]
        %v5887 = vld [vmem:[%s5878 + $0x40] sm:$0xff]
        %v5888 = vld [vmem:[%s5878 + $0x48] sm:$0xff]
        %v5889 = vld [vmem:[%s5878 + $0x50] sm:$0xff]
        %v5890 = vld [vmem:[%s5878 + $0x58] sm:$0xff]
        %v5891 = vld [vmem:[%s5878 + $0x60] sm:$0xff]
        %v5892 = vld [vmem:[%s5878 + $0x68] sm:$0xff]
        %v5893 = vld [vmem:[%s5878 + $0x70] sm:$0xff]
        %v5894 = vld [vmem:[%s5878 + $0x78] sm:$0xff]
        %v5895 = vld [vmem:[%s5878 + $0x80] sm:$0xff]
        %v5896 = vld [vmem:[%s5878 + $0x88] sm:$0xff]
        %v5897 = vld [vmem:[%s5878 + $0x90] sm:$0xff]
        %v5898 = vld [vmem:[%s5878 + $0x98] sm:$0xff]
        %v5899 = vld [vmem:[%s5878 + $0xa0] sm:$0xff]
        %v5900 = vld [vmem:[%s5878 + $0xa8] sm:$0xff]
        %v5901 = vld [vmem:[%s5878 + $0xb0] sm:$0xff]
        %v5902 = vld [vmem:[%s5878 + $0xb8] sm:$0xff]
        %v5903 = vld [vmem:[%s5878 + $0xc0] sm:$0xff]
        %v5904 = vld [vmem:[%s5878 + $0xc8] sm:$0xff]
        %v5905 = vld [vmem:[%s5878 + $0xd0] sm:$0xff]
        %v5906 = vld [vmem:[%s5878 + $0xd8] sm:$0xff]
        %v5907 = vld [vmem:[%s5878 + $0xe0] sm:$0xff]
        %v5908 = vld [vmem:[%s5878 + $0xe8] sm:$0xff]
        %v5909 = vld [vmem:[%s5878 + $0xf0] sm:$0xff]
        %v5910 = vld [vmem:[%s5878 + $0xf8] sm:$0xff]
        %v5943 = vunpack.c.l.b16 %v5879
        %v5944 = vunpack.c.h.b16 %v5879
        %v5945 = vunpack.c.l.b16 %v5880
        %v5946 = vunpack.c.h.b16 %v5880
        %v5947 = vunpack.c.l.b16 %v5881
        %v5948 = vunpack.c.h.b16 %v5881
        %v5949 = vunpack.c.l.b16 %v5882
        %v5950 = vunpack.c.h.b16 %v5882
        %v5951 = vunpack.c.l.b16 %v5883
        %v5952 = vunpack.c.h.b16 %v5883
        %v5953 = vunpack.c.l.b16 %v5884
        %v5954 = vunpack.c.h.b16 %v5884
        %v5955 = vunpack.c.l.b16 %v5885
        %v5956 = vunpack.c.h.b16 %v5885
        %v5957 = vunpack.c.l.b16 %v5886
        %v5958 = vunpack.c.h.b16 %v5886
        %v5959 = vunpack.c.l.b16 %v5887
        %v5960 = vunpack.c.h.b16 %v5887
        %v5961 = vunpack.c.l.b16 %v5888
        %v5962 = vunpack.c.h.b16 %v5888
        %v5963 = vunpack.c.l.b16 %v5889
        %v5964 = vunpack.c.h.b16 %v5889
        %v5965 = vunpack.c.l.b16 %v5890
        %v5966 = vunpack.c.h.b16 %v5890
        %v5967 = vunpack.c.l.b16 %v5891
        %v5968 = vunpack.c.h.b16 %v5891
        %v5969 = vunpack.c.l.b16 %v5892
        %v5970 = vunpack.c.h.b16 %v5892
        %v5971 = vunpack.c.l.b16 %v5893
        %v5972 = vunpack.c.h.b16 %v5893
        %v5973 = vunpack.c.l.b16 %v5894
        %v5974 = vunpack.c.h.b16 %v5894
        %v5975 = vunpack.c.l.b16 %v5895
        %v5976 = vunpack.c.h.b16 %v5895
        %v5977 = vunpack.c.l.b16 %v5896
        %v5978 = vunpack.c.h.b16 %v5896
        %v5979 = vunpack.c.l.b16 %v5897
        %v5980 = vunpack.c.h.b16 %v5897
        %v5981 = vunpack.c.l.b16 %v5898
        %v5982 = vunpack.c.h.b16 %v5898
        %v5983 = vunpack.c.l.b16 %v5899
        %v5984 = vunpack.c.h.b16 %v5899
        %v5985 = vunpack.c.l.b16 %v5900
        %v5986 = vunpack.c.h.b16 %v5900
        %v5987 = vunpack.c.l.b16 %v5901
        %v5988 = vunpack.c.h.b16 %v5901
        %v5989 = vunpack.c.l.b16 %v5902
        %v5990 = vunpack.c.h.b16 %v5902
        %v5991 = vunpack.c.l.b16 %v5903
        %v5992 = vunpack.c.h.b16 %v5903
        %v5993 = vunpack.c.l.b16 %v5904
        %v5994 = vunpack.c.h.b16 %v5904
        %v5995 = vunpack.c.l.b16 %v5905
        %v5996 = vunpack.c.h.b16 %v5905
        %v5997 = vunpack.c.l.b16 %v5906
        %v5998 = vunpack.c.h.b16 %v5906
        %v5999 = vunpack.c.l.b16 %v5907
        %v6000 = vunpack.c.h.b16 %v5907
        %v6001 = vunpack.c.l.b16 %v5908
        %v6002 = vunpack.c.h.b16 %v5908
        %v6003 = vunpack.c.l.b16 %v5909
        %v6004 = vunpack.c.h.b16 %v5909
        %v6005 = vunpack.c.l.b16 %v5910
        %v6006 = vunpack.c.h.b16 %v5910
        %v6007 = vpack.c.b16 %v5947, %v5943
        %v6008 = vpack.c.b16 %v5948, %v5944
        %v6009 = vpack.c.b16 %v5949, %v5945
        %v6010 = vpack.c.b16 %v5950, %v5946
        %v6011 = vpack.c.b16 %v5955, %v5951
        %v6012 = vpack.c.b16 %v5956, %v5952
        %v6013 = vpack.c.b16 %v5957, %v5953
        %v6014 = vpack.c.b16 %v5958, %v5954
        %v6015 = vpack.c.b16 %v5963, %v5959
        %v6016 = vpack.c.b16 %v5964, %v5960
        %v6017 = vpack.c.b16 %v5965, %v5961
        %v6018 = vpack.c.b16 %v5966, %v5962
        %v6019 = vpack.c.b16 %v5971, %v5967
        %v6020 = vpack.c.b16 %v5972, %v5968
        %v6021 = vpack.c.b16 %v5973, %v5969
        %v6022 = vpack.c.b16 %v5974, %v5970
        %v6023 = vpack.c.b16 %v5979, %v5975
        %v6024 = vpack.c.b16 %v5980, %v5976
        %v6025 = vpack.c.b16 %v5981, %v5977
        %v6026 = vpack.c.b16 %v5982, %v5978
        %v6027 = vpack.c.b16 %v5987, %v5983
        %v6028 = vpack.c.b16 %v5988, %v5984
        %v6029 = vpack.c.b16 %v5989, %v5985
        %v6030 = vpack.c.b16 %v5990, %v5986
        %v6031 = vpack.c.b16 %v5995, %v5991
        %v6032 = vpack.c.b16 %v5996, %v5992
        %v6033 = vpack.c.b16 %v5997, %v5993
        %v6034 = vpack.c.b16 %v5998, %v5994
        %v6035 = vpack.c.b16 %v6003, %v5999
        %v6036 = vpack.c.b16 %v6004, %v6000
        %v6037 = vpack.c.b16 %v6005, %v6001
        %v6038 = vpack.c.b16 %v6006, %v6002
        %6071 = vmatprep.subr.bf16.mxu0 %v6008
        %6072 = vmatpush1.bf16.msra.mxu0 %v6007
        %6073 = vmatprep.subr.bf16.mxu0 %v6012
        %6074 = vmatpush1.bf16.msra.mxu0 %v6011
        %6075 = vmatprep.subr.bf16.mxu0 %v6016
        %6076 = vmatpush1.bf16.msra.mxu0 %v6015
        %6077 = vmatprep.subr.bf16.mxu0 %v6020
        %6078 = vmatpush1.bf16.msra.mxu0 %v6019
        %6079 = vmatprep.subr.bf16.mxu0 %v6024
        %6080 = vmatpush1.bf16.msra.mxu0 %v6023
        %6081 = vmatprep.subr.bf16.mxu0 %v6028
        %6082 = vmatpush1.bf16.msra.mxu0 %v6027
        %6083 = vmatprep.subr.bf16.mxu0 %v6032
        %6084 = vmatpush1.bf16.msra.mxu0 %v6031
        %6085 = vmatprep.subr.bf16.mxu0 %v6036
        %6086 = vmatpush1.bf16.msra.mxu0 %v6035
        %6087 = vmatprep.subr.bf16.mxu0 0
        %6088 = vmatpush1.bf16.msra.mxu0 0
        %6089 = vmatprep.subr.bf16.mxu0 0
        %6090 = vmatpush1.bf16.msra.mxu0 0
        %6091 = vmatprep.subr.bf16.mxu0 0
        %6092 = vmatpush1.bf16.msra.mxu0 0
        %6093 = vmatprep.subr.bf16.mxu0 0
        %6094 = vmatpush1.bf16.msra.mxu0 0
        %6095 = vmatprep.subr.bf16.mxu0 0
        %6096 = vmatpush1.bf16.msra.mxu0 0
        %6097 = vmatprep.subr.bf16.mxu0 0
        %6098 = vmatpush1.bf16.msra.mxu0 0
        %6099 = vmatprep.subr.bf16.mxu0 0
        %6100 = vmatpush1.bf16.msra.mxu0 0
        %6101 = vmatprep.subr.bf16.mxu0 0
        %6102 = vmatpush1.bf16.msra.mxu0 0
        %6103 = vmatprep.mubr.bf16.mxu0 0
        %6104 = vmatmul.mubr.bf16.gmra.mrb[0].mxu0 %v5877
        %v6105 = vpop.f32.mrb[0].mxu0
        %v6106 = vadd.f32 0.0, %v6105
        %v6107 = vpop.f32.mrb[0].mxu0
        %v6108 = vadd.f32 0.0, %v6107
        %v6109 = vpop.f32.mrb[0].mxu0
        %v6110 = vpop.f32.mrb[0].mxu0
        %6111 = vdwg.mxu0
        %6112 = vmatprep.subr.bf16.mxu0 %v6010
        %6113 = vmatpush1.bf16.msra.mxu0 %v6009
        %6114 = vmatprep.subr.bf16.mxu0 %v6014
        %6115 = vmatpush1.bf16.msra.mxu0 %v6013
        %6116 = vmatprep.subr.bf16.mxu0 %v6018
        %6117 = vmatpush1.bf16.msra.mxu0 %v6017
        %6118 = vmatprep.subr.bf16.mxu0 %v6022
        %6119 = vmatpush1.bf16.msra.mxu0 %v6021
        %6120 = vmatprep.subr.bf16.mxu0 %v6026
        %6121 = vmatpush1.bf16.msra.mxu0 %v6025
        %6122 = vmatprep.subr.bf16.mxu0 %v6030
        %6123 = vmatpush1.bf16.msra.mxu0 %v6029
        %6124 = vmatprep.subr.bf16.mxu0 %v6034
        %6125 = vmatpush1.bf16.msra.mxu0 %v6033
        %6126 = vmatprep.subr.bf16.mxu0 %v6038
        %6127 = vmatpush1.bf16.msra.mxu0 %v6037
        %6128 = vmatprep.subr.bf16.mxu0 0
        %6129 = vmatpush1.bf16.msra.mxu0 0
        %6130 = vmatprep.subr.bf16.mxu0 0
        %6131 = vmatpush1.bf16.msra.mxu0 0
        %6132 = vmatprep.subr.bf16.mxu0 0
        %6133 = vmatpush1.bf16.msra.mxu0 0
        %6134 = vmatprep.subr.bf16.mxu0 0
        %6135 = vmatpush1.bf16.msra.mxu0 0
        %6136 = vmatprep.subr.bf16.mxu0 0
        %6137 = vmatpush1.bf16.msra.mxu0 0
        %6138 = vmatprep.subr.bf16.mxu0 0
        %6139 = vmatpush1.bf16.msra.mxu0 0
        %6140 = vmatprep.subr.bf16.mxu0 0
        %6141 = vmatpush1.bf16.msra.mxu0 0
        %6142 = vmatprep.subr.bf16.mxu0 0
        %6143 = vmatpush1.bf16.msra.mxu0 0
        %6144 = vmatprep.mubr.bf16.mxu0 0
        %6145 = vmatmul.mubr.bf16.gmra.mrb[0].mxu0 %v5877
        %v6146 = vpop.f32.mrb[0].mxu0
        %v6147 = vadd.f32 0.0, %v6146
        %v6148 = vpop.f32.mrb[0].mxu0
        %v6149 = vadd.f32 0.0, %v6148
        %v6150 = vpop.f32.mrb[0].mxu0
        %v6151 = vpop.f32.mrb[0].mxu0
        %6152 = vdwg.mxu0
        %v6153 = vadd.f32 %v5813, %v6106
        %v6154 = vadd.f32 %v5815, %v6108
        %v6155 = vadd.f32 %v5854, %v6147
        %v6156 = vadd.f32 %v5856, %v6149
        %s6157 = scalar_lea.vmem [#allocation2], 9
        %v6158 = vld [vmem:[%s6157] ss:$32 sm:$0x1]
        %v6159 = vld [vmem:[%s6157] ss:$32 sm:$0x2]
        %v6160 = vor.u32 %v6158, %v6159
        %v6161 = vld [vmem:[%s6157] ss:$32 sm:$0x4]
        %v6162 = vor.u32 %v6160, %v6161
        %v6163 = vld [vmem:[%s6157] ss:$32 sm:$0x8]
        %v6164 = vor.u32 %v6162, %v6163
        %v6165 = vld [vmem:[%s6157] ss:$32 sm:$0x10]
        %v6166 = vor.u32 %v6164, %v6165
        %v6167 = vld [vmem:[%s6157] ss:$32 sm:$0x20]
        %v6168 = vor.u32 %v6166, %v6167
        %v6169 = vld [vmem:[%s6157] ss:$32 sm:$0x40]
        %v6170 = vor.u32 %v6168, %v6169
        %v6171 = vld [vmem:[%s6157] ss:$32 sm:$0x80]
        %v6172 = vor.u32 %v6170, %v6171
        %v6173 = vmul.f32 %v6172, 0.11111111
        %v6174 = vpack.c.bf16 %v6173, %v6173
        %s6175 = scalar_lea.vmem [#allocation9], 768
        %v6176 = vld [vmem:[%s6175] sm:$0xff]
        %v6177 = vld [vmem:[%s6175 + $0x8] sm:$0xff]
        %v6178 = vld [vmem:[%s6175 + $0x10] sm:$0xff]
        %v6179 = vld [vmem:[%s6175 + $0x18] sm:$0xff]
        %v6180 = vld [vmem:[%s6175 + $0x20] sm:$0xff]
        %v6181 = vld [vmem:[%s6175 + $0x28] sm:$0xff]
        %v6182 = vld [vmem:[%s6175 + $0x30] sm:$0xff]
        %v6183 = vld [vmem:[%s6175 + $0x38] sm:$0xff]
        %v6184 = vld [vmem:[%s6175 + $0x40] sm:$0xff]
        %v6185 = vld [vmem:[%s6175 + $0x48] sm:$0xff]
        %v6186 = vld [vmem:[%s6175 + $0x50] sm:$0xff]
        %v6187 = vld [vmem:[%s6175 + $0x58] sm:$0xff]
        %v6188 = vld [vmem:[%s6175 + $0x60] sm:$0xff]
        %v6189 = vld [vmem:[%s6175 + $0x68] sm:$0xff]
        %v6190 = vld [vmem:[%s6175 + $0x70] sm:$0xff]
        %v6191 = vld [vmem:[%s6175 + $0x78] sm:$0xff]
        %v6192 = vld [vmem:[%s6175 + $0x80] sm:$0xff]
        %v6193 = vld [vmem:[%s6175 + $0x88] sm:$0xff]
        %v6194 = vld [vmem:[%s6175 + $0x90] sm:$0xff]
        %v6195 = vld [vmem:[%s6175 + $0x98] sm:$0xff]
        %v6196 = vld [vmem:[%s6175 + $0xa0] sm:$0xff]
        %v6197 = vld [vmem:[%s6175 + $0xa8] sm:$0xff]
        %v6198 = vld [vmem:[%s6175 + $0xb0] sm:$0xff]
        %v6199 = vld [vmem:[%s6175 + $0xb8] sm:$0xff]
        %v6200 = vld [vmem:[%s6175 + $0xc0] sm:$0xff]
        %v6201 = vld [vmem:[%s6175 + $0xc8] sm:$0xff]
        %v6202 = vld [vmem:[%s6175 + $0xd0] sm:$0xff]
        %v6203 = vld [vmem:[%s6175 + $0xd8] sm:$0xff]
        %v6204 = vld [vmem:[%s6175 + $0xe0] sm:$0xff]
        %v6205 = vld [vmem:[%s6175 + $0xe8] sm:$0xff]
        %v6206 = vld [vmem:[%s6175 + $0xf0] sm:$0xff]
        %v6207 = vld [vmem:[%s6175 + $0xf8] sm:$0xff]
        %v6240 = vunpack.c.l.b16 %v6176
        %v6241 = vunpack.c.h.b16 %v6176
        %v6242 = vunpack.c.l.b16 %v6177
        %v6243 = vunpack.c.h.b16 %v6177
        %v6244 = vunpack.c.l.b16 %v6178
        %v6245 = vunpack.c.h.b16 %v6178
        %v6246 = vunpack.c.l.b16 %v6179
        %v6247 = vunpack.c.h.b16 %v6179
        %v6248 = vunpack.c.l.b16 %v6180
        %v6249 = vunpack.c.h.b16 %v6180
        %v6250 = vunpack.c.l.b16 %v6181
        %v6251 = vunpack.c.h.b16 %v6181
        %v6252 = vunpack.c.l.b16 %v6182
        %v6253 = vunpack.c.h.b16 %v6182
        %v6254 = vunpack.c.l.b16 %v6183
        %v6255 = vunpack.c.h.b16 %v6183
        %v6256 = vunpack.c.l.b16 %v6184
        %v6257 = vunpack.c.h.b16 %v6184
        %v6258 = vunpack.c.l.b16 %v6185
        %v6259 = vunpack.c.h.b16 %v6185
        %v6260 = vunpack.c.l.b16 %v6186
        %v6261 = vunpack.c.h.b16 %v6186
        %v6262 = vunpack.c.l.b16 %v6187
        %v6263 = vunpack.c.h.b16 %v6187
        %v6264 = vunpack.c.l.b16 %v6188
        %v6265 = vunpack.c.h.b16 %v6188
        %v6266 = vunpack.c.l.b16 %v6189
        %v6267 = vunpack.c.h.b16 %v6189
        %v6268 = vunpack.c.l.b16 %v6190
        %v6269 = vunpack.c.h.b16 %v6190
        %v6270 = vunpack.c.l.b16 %v6191
        %v6271 = vunpack.c.h.b16 %v6191
        %v6272 = vunpack.c.l.b16 %v6192
        %v6273 = vunpack.c.h.b16 %v6192
        %v6274 = vunpack.c.l.b16 %v6193
        %v6275 = vunpack.c.h.b16 %v6193
        %v6276 = vunpack.c.l.b16 %v6194
        %v6277 = vunpack.c.h.b16 %v6194
        %v6278 = vunpack.c.l.b16 %v6195
        %v6279 = vunpack.c.h.b16 %v6195
        %v6280 = vunpack.c.l.b16 %v6196
        %v6281 = vunpack.c.h.b16 %v6196
        %v6282 = vunpack.c.l.b16 %v6197
        %v6283 = vunpack.c.h.b16 %v6197
        %v6284 = vunpack.c.l.b16 %v6198
        %v6285 = vunpack.c.h.b16 %v6198
        %v6286 = vunpack.c.l.b16 %v6199
        %v6287 = vunpack.c.h.b16 %v6199
        %v6288 = vunpack.c.l.b16 %v6200
        %v6289 = vunpack.c.h.b16 %v6200
        %v6290 = vunpack.c.l.b16 %v6201
        %v6291 = vunpack.c.h.b16 %v6201
        %v6292 = vunpack.c.l.b16 %v6202
        %v6293 = vunpack.c.h.b16 %v6202
        %v6294 = vunpack.c.l.b16 %v6203
        %v6295 = vunpack.c.h.b16 %v6203
        %v6296 = vunpack.c.l.b16 %v6204
        %v6297 = vunpack.c.h.b16 %v6204
        %v6298 = vunpack.c.l.b16 %v6205
        %v6299 = vunpack.c.h.b16 %v6205
        %v6300 = vunpack.c.l.b16 %v6206
        %v6301 = vunpack.c.h.b16 %v6206
        %v6302 = vunpack.c.l.b16 %v6207
        %v6303 = vunpack.c.h.b16 %v6207
        %v6304 = vpack.c.b16 %v6244, %v6240
        %v6305 = vpack.c.b16 %v6245, %v6241
        %v6306 = vpack.c.b16 %v6246, %v6242
        %v6307 = vpack.c.b16 %v6247, %v6243
        %v6308 = vpack.c.b16 %v6252, %v6248
        %v6309 = vpack.c.b16 %v6253, %v6249
        %v6310 = vpack.c.b16 %v6254, %v6250
        %v6311 = vpack.c.b16 %v6255, %v6251
        %v6312 = vpack.c.b16 %v6260, %v6256
        %v6313 = vpack.c.b16 %v6261, %v6257
        %v6314 = vpack.c.b16 %v6262, %v6258
        %v6315 = vpack.c.b16 %v6263, %v6259
        %v6316 = vpack.c.b16 %v6268, %v6264
        %v6317 = vpack.c.b16 %v6269, %v6265
        %v6318 = vpack.c.b16 %v6270, %v6266
        %v6319 = vpack.c.b16 %v6271, %v6267
        %v6320 = vpack.c.b16 %v6276, %v6272
        %v6321 = vpack.c.b16 %v6277, %v6273
        %v6322 = vpack.c.b16 %v6278, %v6274
        %v6323 = vpack.c.b16 %v6279, %v6275
        %v6324 = vpack.c.b16 %v6284, %v6280
        %v6325 = vpack.c.b16 %v6285, %v6281
        %v6326 = vpack.c.b16 %v6286, %v6282
        %v6327 = vpack.c.b16 %v6287, %v6283
        %v6328 = vpack.c.b16 %v6292, %v6288
        %v6329 = vpack.c.b16 %v6293, %v6289
        %v6330 = vpack.c.b16 %v6294, %v6290
        %v6331 = vpack.c.b16 %v6295, %v6291
        %v6332 = vpack.c.b16 %v6300, %v6296
        %v6333 = vpack.c.b16 %v6301, %v6297
        %v6334 = vpack.c.b16 %v6302, %v6298
        %v6335 = vpack.c.b16 %v6303, %v6299
        %6368 = vmatprep.subr.bf16.mxu0 %v6305
        %6369 = vmatpush1.bf16.msra.mxu0 %v6304
        %6370 = vmatprep.subr.bf16.mxu0 %v6309
        %6371 = vmatpush1.bf16.msra.mxu0 %v6308
        %6372 = vmatprep.subr.bf16.mxu0 %v6313
        %6373 = vmatpush1.bf16.msra.mxu0 %v6312
        %6374 = vmatprep.subr.bf16.mxu0 %v6317
        %6375 = vmatpush1.bf16.msra.mxu0 %v6316
        %6376 = vmatprep.subr.bf16.mxu0 %v6321
        %6377 = vmatpush1.bf16.msra.mxu0 %v6320
        %6378 = vmatprep.subr.bf16.mxu0 %v6325
        %6379 = vmatpush1.bf16.msra.mxu0 %v6324
        %6380 = vmatprep.subr.bf16.mxu0 %v6329
        %6381 = vmatpush1.bf16.msra.mxu0 %v6328
        %6382 = vmatprep.subr.bf16.mxu0 %v6333
        %6383 = vmatpush1.bf16.msra.mxu0 %v6332
        %6384 = vmatprep.subr.bf16.mxu0 0
        %6385 = vmatpush1.bf16.msra.mxu0 0
        %6386 = vmatprep.subr.bf16.mxu0 0
        %6387 = vmatpush1.bf16.msra.mxu0 0
        %6388 = vmatprep.subr.bf16.mxu0 0
        %6389 = vmatpush1.bf16.msra.mxu0 0
        %6390 = vmatprep.subr.bf16.mxu0 0
        %6391 = vmatpush1.bf16.msra.mxu0 0
        %6392 = vmatprep.subr.bf16.mxu0 0
        %6393 = vmatpush1.bf16.msra.mxu0 0
        %6394 = vmatprep.subr.bf16.mxu0 0
        %6395 = vmatpush1.bf16.msra.mxu0 0
        %6396 = vmatprep.subr.bf16.mxu0 0
        %6397 = vmatpush1.bf16.msra.mxu0 0
        %6398 = vmatprep.subr.bf16.mxu0 0
        %6399 = vmatpush1.bf16.msra.mxu0 0
        %6400 = vmatprep.mubr.bf16.mxu0 0
        %6401 = vmatmul.mubr.bf16.gmra.mrb[0].mxu0 %v6174
        %v6402 = vpop.f32.mrb[0].mxu0
        %v6403 = vadd.f32 0.0, %v6402
        %v6404 = vpop.f32.mrb[0].mxu0
        %v6405 = vadd.f32 0.0, %v6404
        %v6406 = vpop.f32.mrb[0].mxu0
        %v6407 = vpop.f32.mrb[0].mxu0
        %6408 = vdwg.mxu0
        %6409 = vmatprep.subr.bf16.mxu0 %v6307
        %6410 = vmatpush1.bf16.msra.mxu0 %v6306
        %6411 = vmatprep.subr.bf16.mxu0 %v6311
        %6412 = vmatpush1.bf16.msra.mxu0 %v6310
        %6413 = vmatprep.subr.bf16.mxu0 %v6315
        %6414 = vmatpush1.bf16.msra.mxu0 %v6314
        %6415 = vmatprep.subr.bf16.mxu0 %v6319
        %6416 = vmatpush1.bf16.msra.mxu0 %v6318
        %6417 = vmatprep.subr.bf16.mxu0 %v6323
        %6418 = vmatpush1.bf16.msra.mxu0 %v6322
        %6419 = vmatprep.subr.bf16.mxu0 %v6327
        %6420 = vmatpush1.bf16.msra.mxu0 %v6326
        %6421 = vmatprep.subr.bf16.mxu0 %v6331
        %6422 = vmatpush1.bf16.msra.mxu0 %v6330
        %6423 = vmatprep.subr.bf16.mxu0 %v6335
        %6424 = vmatpush1.bf16.msra.mxu0 %v6334
        %6425 = vmatprep.subr.bf16.mxu0 0
        %6426 = vmatpush1.bf16.msra.mxu0 0
        %6427 = vmatprep.subr.bf16.mxu0 0
        %6428 = vmatpush1.bf16.msra.mxu0 0
        %6429 = vmatprep.subr.bf16.mxu0 0
        %6430 = vmatpush1.bf16.msra.mxu0 0
        %6431 = vmatprep.subr.bf16.mxu0 0
        %6432 = vmatpush1.bf16.msra.mxu0 0
        %6433 = vmatprep.subr.bf16.mxu0 0
        %6434 = vmatpush1.bf16.msra.mxu0 0
        %6435 = vmatprep.subr.bf16.mxu0 0
        %6436 = vmatpush1.bf16.msra.mxu0 0
        %6437 = vmatprep.subr.bf16.mxu0 0
        %6438 = vmatpush1.bf16.msra.mxu0 0
        %6439 = vmatprep.subr.bf16.mxu0 0
        %6440 = vmatpush1.bf16.msra.mxu0 0
        %6441 = vmatprep.mubr.bf16.mxu0 0
        %6442 = vmatmul.mubr.bf16.gmra.mrb[0].mxu0 %v6174
        %v6443 = vpop.f32.mrb[0].mxu0
        %v6444 = vadd.f32 0.0, %v6443
        %v6445 = vpop.f32.mrb[0].mxu0
        %v6446 = vadd.f32 0.0, %v6445
        %v6447 = vpop.f32.mrb[0].mxu0
        %v6448 = vpop.f32.mrb[0].mxu0
        %6449 = vdwg.mxu0
        %v6450 = vadd.f32 %v6153, %v6403
        %v6451 = vadd.f32 %v6154, %v6405
        %v6452 = vadd.f32 %v6155, %v6444
        %v6453 = vadd.f32 %v6156, %v6446
        %s6454 = scalar_lea.vmem [#allocation2], 12
        %v6455 = vld [vmem:[%s6454] ss:$32 sm:$0x1]
        %v6456 = vld [vmem:[%s6454] ss:$32 sm:$0x2]
        %v6457 = vor.u32 %v6455, %v6456
        %v6458 = vld [vmem:[%s6454] ss:$32 sm:$0x4]
        %v6459 = vor.u32 %v6457, %v6458
        %v6460 = vld [vmem:[%s6454] ss:$32 sm:$0x8]
        %v6461 = vor.u32 %v6459, %v6460
        %v6462 = vld [vmem:[%s6454] ss:$32 sm:$0x10]
        %v6463 = vor.u32 %v6461, %v6462
        %v6464 = vld [vmem:[%s6454] ss:$32 sm:$0x20]
        %v6465 = vor.u32 %v6463, %v6464
        %v6466 = vld [vmem:[%s6454] ss:$32 sm:$0x40]
        %v6467 = vor.u32 %v6465, %v6466
        %v6468 = vld [vmem:[%s6454] ss:$32 sm:$0x80]
        %v6469 = vor.u32 %v6467, %v6468
        %v6470 = vmul.f32 %v6469, 0.11111111
        %v6471 = vpack.c.bf16 %v6470, %v6470
        %s6472 = scalar_lea.vmem [#allocation9], 1024
        %v6473 = vld [vmem:[%s6472] sm:$0xff]
        %v6474 = vld [vmem:[%s6472 + $0x8] sm:$0xff]
        %v6475 = vld [vmem:[%s6472 + $0x10] sm:$0xff]
        %v6476 = vld [vmem:[%s6472 + $0x18] sm:$0xff]
        %v6477 = vld [vmem:[%s6472 + $0x20] sm:$0xff]
        %v6478 = vld [vmem:[%s6472 + $0x28] sm:$0xff]
        %v6479 = vld [vmem:[%s6472 + $0x30] sm:$0xff]
        %v6480 = vld [vmem:[%s6472 + $0x38] sm:$0xff]
        %v6481 = vld [vmem:[%s6472 + $0x40] sm:$0xff]
        %v6482 = vld [vmem:[%s6472 + $0x48] sm:$0xff]
        %v6483 = vld [vmem:[%s6472 + $0x50] sm:$0xff]
        %v6484 = vld [vmem:[%s6472 + $0x58] sm:$0xff]
        %v6485 = vld [vmem:[%s6472 + $0x60] sm:$0xff]
        %v6486 = vld [vmem:[%s6472 + $0x68] sm:$0xff]
        %v6487 = vld [vmem:[%s6472 + $0x70] sm:$0xff]
        %v6488 = vld [vmem:[%s6472 + $0x78] sm:$0xff]
        %v6489 = vld [vmem:[%s6472 + $0x80] sm:$0xff]
        %v6490 = vld [vmem:[%s6472 + $0x88] sm:$0xff]
        %v6491 = vld [vmem:[%s6472 + $0x90] sm:$0xff]
        %v6492 = vld [vmem:[%s6472 + $0x98] sm:$0xff]
        %v6493 = vld [vmem:[%s6472 + $0xa0] sm:$0xff]
        %v6494 = vld [vmem:[%s6472 + $0xa8] sm:$0xff]
        %v6495 = vld [vmem:[%s6472 + $0xb0] sm:$0xff]
        %v6496 = vld [vmem:[%s6472 + $0xb8] sm:$0xff]
        %v6497 = vld [vmem:[%s6472 + $0xc0] sm:$0xff]
        %v6498 = vld [vmem:[%s6472 + $0xc8] sm:$0xff]
        %v6499 = vld [vmem:[%s6472 + $0xd0] sm:$0xff]
        %v6500 = vld [vmem:[%s6472 + $0xd8] sm:$0xff]
        %v6501 = vld [vmem:[%s6472 + $0xe0] sm:$0xff]
        %v6502 = vld [vmem:[%s6472 + $0xe8] sm:$0xff]
        %v6503 = vld [vmem:[%s6472 + $0xf0] sm:$0xff]
        %v6504 = vld [vmem:[%s6472 + $0xf8] sm:$0xff]
        %v6537 = vunpack.c.l.b16 %v6473
        %v6538 = vunpack.c.h.b16 %v6473
        %v6539 = vunpack.c.l.b16 %v6474
        %v6540 = vunpack.c.h.b16 %v6474
        %v6541 = vunpack.c.l.b16 %v6475
        %v6542 = vunpack.c.h.b16 %v6475
        %v6543 = vunpack.c.l.b16 %v6476
        %v6544 = vunpack.c.h.b16 %v6476
        %v6545 = vunpack.c.l.b16 %v6477
        %v6546 = vunpack.c.h.b16 %v6477
        %v6547 = vunpack.c.l.b16 %v6478
        %v6548 = vunpack.c.h.b16 %v6478
        %v6549 = vunpack.c.l.b16 %v6479
        %v6550 = vunpack.c.h.b16 %v6479
        %v6551 = vunpack.c.l.b16 %v6480
        %v6552 = vunpack.c.h.b16 %v6480
        %v6553 = vunpack.c.l.b16 %v6481
        %v6554 = vunpack.c.h.b16 %v6481
        %v6555 = vunpack.c.l.b16 %v6482
        %v6556 = vunpack.c.h.b16 %v6482
        %v6557 = vunpack.c.l.b16 %v6483
        %v6558 = vunpack.c.h.b16 %v6483
        %v6559 = vunpack.c.l.b16 %v6484
        %v6560 = vunpack.c.h.b16 %v6484
        %v6561 = vunpack.c.l.b16 %v6485
        %v6562 = vunpack.c.h.b16 %v6485
        %v6563 = vunpack.c.l.b16 %v6486
        %v6564 = vunpack.c.h.b16 %v6486
        %v6565 = vunpack.c.l.b16 %v6487
        %v6566 = vunpack.c.h.b16 %v6487
        %v6567 = vunpack.c.l.b16 %v6488
        %v6568 = vunpack.c.h.b16 %v6488
        %v6569 = vunpack.c.l.b16 %v6489
        %v6570 = vunpack.c.h.b16 %v6489
        %v6571 = vunpack.c.l.b16 %v6490
        %v6572 = vunpack.c.h.b16 %v6490
        %v6573 = vunpack.c.l.b16 %v6491
        %v6574 = vunpack.c.h.b16 %v6491
        %v6575 = vunpack.c.l.b16 %v6492
        %v6576 = vunpack.c.h.b16 %v6492
        %v6577 = vunpack.c.l.b16 %v6493
        %v6578 = vunpack.c.h.b16 %v6493
        %v6579 = vunpack.c.l.b16 %v6494
        %v6580 = vunpack.c.h.b16 %v6494
        %v6581 = vunpack.c.l.b16 %v6495
        %v6582 = vunpack.c.h.b16 %v6495
        %v6583 = vunpack.c.l.b16 %v6496
        %v6584 = vunpack.c.h.b16 %v6496
        %v6585 = vunpack.c.l.b16 %v6497
        %v6586 = vunpack.c.h.b16 %v6497
        %v6587 = vunpack.c.l.b16 %v6498
        %v6588 = vunpack.c.h.b16 %v6498
        %v6589 = vunpack.c.l.b16 %v6499
        %v6590 = vunpack.c.h.b16 %v6499
        %v6591 = vunpack.c.l.b16 %v6500
        %v6592 = vunpack.c.h.b16 %v6500
        %v6593 = vunpack.c.l.b16 %v6501
        %v6594 = vunpack.c.h.b16 %v6501
        %v6595 = vunpack.c.l.b16 %v6502
        %v6596 = vunpack.c.h.b16 %v6502
        %v6597 = vunpack.c.l.b16 %v6503
        %v6598 = vunpack.c.h.b16 %v6503
        %v6599 = vunpack.c.l.b16 %v6504
        %v6600 = vunpack.c.h.b16 %v6504
        %v6601 = vpack.c.b16 %v6541, %v6537
        %v6602 = vpack.c.b16 %v6542, %v6538
        %v6603 = vpack.c.b16 %v6543, %v6539
        %v6604 = vpack.c.b16 %v6544, %v6540
        %v6605 = vpack.c.b16 %v6549, %v6545
        %v6606 = vpack.c.b16 %v6550, %v6546
        %v6607 = vpack.c.b16 %v6551, %v6547
        %v6608 = vpack.c.b16 %v6552, %v6548
        %v6609 = vpack.c.b16 %v6557, %v6553
        %v6610 = vpack.c.b16 %v6558, %v6554
        %v6611 = vpack.c.b16 %v6559, %v6555
        %v6612 = vpack.c.b16 %v6560, %v6556
        %v6613 = vpack.c.b16 %v6565, %v6561
        %v6614 = vpack.c.b16 %v6566, %v6562
        %v6615 = vpack.c.b16 %v6567, %v6563
        %v6616 = vpack.c.b16 %v6568, %v6564
        %v6617 = vpack.c.b16 %v6573, %v6569
        %v6618 = vpack.c.b16 %v6574, %v6570
        %v6619 = vpack.c.b16 %v6575, %v6571
        %v6620 = vpack.c.b16 %v6576, %v6572
        %v6621 = vpack.c.b16 %v6581, %v6577
        %v6622 = vpack.c.b16 %v6582, %v6578
        %v6623 = vpack.c.b16 %v6583, %v6579
        %v6624 = vpack.c.b16 %v6584, %v6580
        %v6625 = vpack.c.b16 %v6589, %v6585
        %v6626 = vpack.c.b16 %v6590, %v6586
        %v6627 = vpack.c.b16 %v6591, %v6587
        %v6628 = vpack.c.b16 %v6592, %v6588
        %v6629 = vpack.c.b16 %v6597, %v6593
        %v6630 = vpack.c.b16 %v6598, %v6594
        %v6631 = vpack.c.b16 %v6599, %v6595
        %v6632 = vpack.c.b16 %v6600, %v6596
        %6665 = vmatprep.subr.bf16.mxu0 %v6602
        %6666 = vmatpush1.bf16.msra.mxu0 %v6601
        %6667 = vmatprep.subr.bf16.mxu0 %v6606
        %6668 = vmatpush1.bf16.msra.mxu0 %v6605
        %6669 = vmatprep.subr.bf16.mxu0 %v6610
        %6670 = vmatpush1.bf16.msra.mxu0 %v6609
        %6671 = vmatprep.subr.bf16.mxu0 %v6614
        %6672 = vmatpush1.bf16.msra.mxu0 %v6613
        %6673 = vmatprep.subr.bf16.mxu0 %v6618
        %6674 = vmatpush1.bf16.msra.mxu0 %v6617
        %6675 = vmatprep.subr.bf16.mxu0 %v6622
        %6676 = vmatpush1.bf16.msra.mxu0 %v6621
        %6677 = vmatprep.subr.bf16.mxu0 %v6626
        %6678 = vmatpush1.bf16.msra.mxu0 %v6625
        %6679 = vmatprep.subr.bf16.mxu0 %v6630
        %6680 = vmatpush1.bf16.msra.mxu0 %v6629
        %6681 = vmatprep.subr.bf16.mxu0 0
        %6682 = vmatpush1.bf16.msra.mxu0 0
        %6683 = vmatprep.subr.bf16.mxu0 0
        %6684 = vmatpush1.bf16.msra.mxu0 0
        %6685 = vmatprep.subr.bf16.mxu0 0
        %6686 = vmatpush1.bf16.msra.mxu0 0
        %6687 = vmatprep.subr.bf16.mxu0 0
        %6688 = vmatpush1.bf16.msra.mxu0 0
        %6689 = vmatprep.subr.bf16.mxu0 0
        %6690 = vmatpush1.bf16.msra.mxu0 0
        %6691 = vmatprep.subr.bf16.mxu0 0
        %6692 = vmatpush1.bf16.msra.mxu0 0
        %6693 = vmatprep.subr.bf16.mxu0 0
        %6694 = vmatpush1.bf16.msra.mxu0 0
        %6695 = vmatprep.subr.bf16.mxu0 0
        %6696 = vmatpush1.bf16.msra.mxu0 0
        %6697 = vmatprep.mubr.bf16.mxu0 0
        %6698 = vmatmul.mubr.bf16.gmra.mrb[0].mxu0 %v6471
        %v6699 = vpop.f32.mrb[0].mxu0
        %v6700 = vadd.f32 0.0, %v6699
        %v6701 = vpop.f32.mrb[0].mxu0
        %v6702 = vadd.f32 0.0, %v6701
        %v6703 = vpop.f32.mrb[0].mxu0
        %v6704 = vpop.f32.mrb[0].mxu0
        %6705 = vdwg.mxu0
        %6706 = vmatprep.subr.bf16.mxu0 %v6604
        %6707 = vmatpush1.bf16.msra.mxu0 %v6603
        %6708 = vmatprep.subr.bf16.mxu0 %v6608
        %6709 = vmatpush1.bf16.msra.mxu0 %v6607
        %6710 = vmatprep.subr.bf16.mxu0 %v6612
        %6711 = vmatpush1.bf16.msra.mxu0 %v6611
        %6712 = vmatprep.subr.bf16.mxu0 %v6616
        %6713 = vmatpush1.bf16.msra.mxu0 %v6615
        %6714 = vmatprep.subr.bf16.mxu0 %v6620
        %6715 = vmatpush1.bf16.msra.mxu0 %v6619
        %6716 = vmatprep.subr.bf16.mxu0 %v6624
        %6717 = vmatpush1.bf16.msra.mxu0 %v6623
        %6718 = vmatprep.subr.bf16.mxu0 %v6628
        %6719 = vmatpush1.bf16.msra.mxu0 %v6627
        %6720 = vmatprep.subr.bf16.mxu0 %v6632
        %6721 = vmatpush1.bf16.msra.mxu0 %v6631
        %6722 = vmatprep.subr.bf16.mxu0 0
        %6723 = vmatpush1.bf16.msra.mxu0 0
        %6724 = vmatprep.subr.bf16.mxu0 0
        %6725 = vmatpush1.bf16.msra.mxu0 0
        %6726 = vmatprep.subr.bf16.mxu0 0
        %6727 = vmatpush1.bf16.msra.mxu0 0
        %6728 = vmatprep.subr.bf16.mxu0 0
        %6729 = vmatpush1.bf16.msra.mxu0 0
        %6730 = vmatprep.subr.bf16.mxu0 0
        %6731 = vmatpush1.bf16.msra.mxu0 0
        %6732 = vmatprep.subr.bf16.mxu0 0
        %6733 = vmatpush1.bf16.msra.mxu0 0
        %6734 = vmatprep.subr.bf16.mxu0 0
        %6735 = vmatpush1.bf16.msra.mxu0 0
        %6736 = vmatprep.subr.bf16.mxu0 0
        %6737 = vmatpush1.bf16.msra.mxu0 0
        %6738 = vmatprep.mubr.bf16.mxu0 0
        %6739 = vmatmul.mubr.bf16.gmra.mrb[0].mxu0 %v6471
        %v6740 = vpop.f32.mrb[0].mxu0
        %v6741 = vadd.f32 0.0, %v6740
        %v6742 = vpop.f32.mrb[0].mxu0
        %v6743 = vadd.f32 0.0, %v6742
        %v6744 = vpop.f32.mrb[0].mxu0
        %v6745 = vpop.f32.mrb[0].mxu0
        %6746 = vdwg.mxu0
        %v6747 = vadd.f32 %v6450, %v6700
        %v6748 = vadd.f32 %v6451, %v6702
        %v6749 = vadd.f32 %v6452, %v6741
        %v6750 = vadd.f32 %v6453, %v6743
        %s6751 = scalar_lea.vmem [#allocation2], 15
        %v6752 = vld [vmem:[%s6751] ss:$32 sm:$0x1]
        %v6753 = vld [vmem:[%s6751] ss:$32 sm:$0x2]
        %v6754 = vor.u32 %v6752, %v6753
        %v6755 = vld [vmem:[%s6751] ss:$32 sm:$0x4]
        %v6756 = vor.u32 %v6754, %v6755
        %v6757 = vld [vmem:[%s6751] ss:$32 sm:$0x8]
        %v6758 = vor.u32 %v6756, %v6757
        %v6759 = vld [vmem:[%s6751] ss:$32 sm:$0x10]
        %v6760 = vor.u32 %v6758, %v6759
        %v6761 = vld [vmem:[%s6751] ss:$32 sm:$0x20]
        %v6762 = vor.u32 %v6760, %v6761
        %v6763 = vld [vmem:[%s6751] ss:$32 sm:$0x40]
        %v6764 = vor.u32 %v6762, %v6763
        %v6765 = vld [vmem:[%s6751] ss:$32 sm:$0x80]
        %v6766 = vor.u32 %v6764, %v6765
        %v6767 = vmul.f32 %v6766, 0.11111111
        %v6768 = vpack.c.bf16 %v6767, %v6767
        %s6769 = scalar_lea.vmem [#allocation9], 1280
        %v6770 = vld [vmem:[%s6769] sm:$0xff]
        %v6771 = vld [vmem:[%s6769 + $0x8] sm:$0xff]
        %v6772 = vld [vmem:[%s6769 + $0x10] sm:$0xff]
        %v6773 = vld [vmem:[%s6769 + $0x18] sm:$0xff]
        %v6774 = vld [vmem:[%s6769 + $0x20] sm:$0xff]
        %v6775 = vld [vmem:[%s6769 + $0x28] sm:$0xff]
        %v6776 = vld [vmem:[%s6769 + $0x30] sm:$0xff]
        %v6777 = vld [vmem:[%s6769 + $0x38] sm:$0xff]
        %v6778 = vld [vmem:[%s6769 + $0x40] sm:$0xff]
        %v6779 = vld [vmem:[%s6769 + $0x48] sm:$0xff]
        %v6780 = vld [vmem:[%s6769 + $0x50] sm:$0xff]
        %v6781 = vld [vmem:[%s6769 + $0x58] sm:$0xff]
        %v6782 = vld [vmem:[%s6769 + $0x60] sm:$0xff]
        %v6783 = vld [vmem:[%s6769 + $0x68] sm:$0xff]
        %v6784 = vld [vmem:[%s6769 + $0x70] sm:$0xff]
        %v6785 = vld [vmem:[%s6769 + $0x78] sm:$0xff]
        %v6786 = vld [vmem:[%s6769 + $0x80] sm:$0xff]
        %v6787 = vld [vmem:[%s6769 + $0x88] sm:$0xff]
        %v6788 = vld [vmem:[%s6769 + $0x90] sm:$0xff]
        %v6789 = vld [vmem:[%s6769 + $0x98] sm:$0xff]
        %v6790 = vld [vmem:[%s6769 + $0xa0] sm:$0xff]
        %v6791 = vld [vmem:[%s6769 + $0xa8] sm:$0xff]
        %v6792 = vld [vmem:[%s6769 + $0xb0] sm:$0xff]
        %v6793 = vld [vmem:[%s6769 + $0xb8] sm:$0xff]
        %v6794 = vld [vmem:[%s6769 + $0xc0] sm:$0xff]
        %v6795 = vld [vmem:[%s6769 + $0xc8] sm:$0xff]
        %v6796 = vld [vmem:[%s6769 + $0xd0] sm:$0xff]
        %v6797 = vld [vmem:[%s6769 + $0xd8] sm:$0xff]
        %v6798 = vld [vmem:[%s6769 + $0xe0] sm:$0xff]
        %v6799 = vld [vmem:[%s6769 + $0xe8] sm:$0xff]
        %v6800 = vld [vmem:[%s6769 + $0xf0] sm:$0xff]
        %v6801 = vld [vmem:[%s6769 + $0xf8] sm:$0xff]
        %v6834 = vunpack.c.l.b16 %v6770
        %v6835 = vunpack.c.h.b16 %v6770
        %v6836 = vunpack.c.l.b16 %v6771
        %v6837 = vunpack.c.h.b16 %v6771
        %v6838 = vunpack.c.l.b16 %v6772
        %v6839 = vunpack.c.h.b16 %v6772
        %v6840 = vunpack.c.l.b16 %v6773
        %v6841 = vunpack.c.h.b16 %v6773
        %v6842 = vunpack.c.l.b16 %v6774
        %v6843 = vunpack.c.h.b16 %v6774
        %v6844 = vunpack.c.l.b16 %v6775
        %v6845 = vunpack.c.h.b16 %v6775
        %v6846 = vunpack.c.l.b16 %v6776
        %v6847 = vunpack.c.h.b16 %v6776
        %v6848 = vunpack.c.l.b16 %v6777
        %v6849 = vunpack.c.h.b16 %v6777
        %v6850 = vunpack.c.l.b16 %v6778
        %v6851 = vunpack.c.h.b16 %v6778
        %v6852 = vunpack.c.l.b16 %v6779
        %v6853 = vunpack.c.h.b16 %v6779
        %v6854 = vunpack.c.l.b16 %v6780
        %v6855 = vunpack.c.h.b16 %v6780
        %v6856 = vunpack.c.l.b16 %v6781
        %v6857 = vunpack.c.h.b16 %v6781
        %v6858 = vunpack.c.l.b16 %v6782
        %v6859 = vunpack.c.h.b16 %v6782
        %v6860 = vunpack.c.l.b16 %v6783
        %v6861 = vunpack.c.h.b16 %v6783
        %v6862 = vunpack.c.l.b16 %v6784
        %v6863 = vunpack.c.h.b16 %v6784
        %v6864 = vunpack.c.l.b16 %v6785
        %v6865 = vunpack.c.h.b16 %v6785
        %v6866 = vunpack.c.l.b16 %v6786
        %v6867 = vunpack.c.h.b16 %v6786
        %v6868 = vunpack.c.l.b16 %v6787
        %v6869 = vunpack.c.h.b16 %v6787
        %v6870 = vunpack.c.l.b16 %v6788
        %v6871 = vunpack.c.h.b16 %v6788
        %v6872 = vunpack.c.l.b16 %v6789
        %v6873 = vunpack.c.h.b16 %v6789
        %v6874 = vunpack.c.l.b16 %v6790
        %v6875 = vunpack.c.h.b16 %v6790
        %v6876 = vunpack.c.l.b16 %v6791
        %v6877 = vunpack.c.h.b16 %v6791
        %v6878 = vunpack.c.l.b16 %v6792
        %v6879 = vunpack.c.h.b16 %v6792
        %v6880 = vunpack.c.l.b16 %v6793
        %v6881 = vunpack.c.h.b16 %v6793
        %v6882 = vunpack.c.l.b16 %v6794
        %v6883 = vunpack.c.h.b16 %v6794
        %v6884 = vunpack.c.l.b16 %v6795
        %v6885 = vunpack.c.h.b16 %v6795
        %v6886 = vunpack.c.l.b16 %v6796
        %v6887 = vunpack.c.h.b16 %v6796
        %v6888 = vunpack.c.l.b16 %v6797
        %v6889 = vunpack.c.h.b16 %v6797
        %v6890 = vunpack.c.l.b16 %v6798
        %v6891 = vunpack.c.h.b16 %v6798
        %v6892 = vunpack.c.l.b16 %v6799
        %v6893 = vunpack.c.h.b16 %v6799
        %v6894 = vunpack.c.l.b16 %v6800
        %v6895 = vunpack.c.h.b16 %v6800
        %v6896 = vunpack.c.l.b16 %v6801
        %v6897 = vunpack.c.h.b16 %v6801
        %v6898 = vpack.c.b16 %v6838, %v6834
        %v6899 = vpack.c.b16 %v6839, %v6835
        %v6900 = vpack.c.b16 %v6840, %v6836
        %v6901 = vpack.c.b16 %v6841, %v6837
        %v6902 = vpack.c.b16 %v6846, %v6842
        %v6903 = vpack.c.b16 %v6847, %v6843
        %v6904 = vpack.c.b16 %v6848, %v6844
        %v6905 = vpack.c.b16 %v6849, %v6845
        %v6906 = vpack.c.b16 %v6854, %v6850
        %v6907 = vpack.c.b16 %v6855, %v6851
        %v6908 = vpack.c.b16 %v6856, %v6852
        %v6909 = vpack.c.b16 %v6857, %v6853
        %v6910 = vpack.c.b16 %v6862, %v6858
        %v6911 = vpack.c.b16 %v6863, %v6859
        %v6912 = vpack.c.b16 %v6864, %v6860
        %v6913 = vpack.c.b16 %v6865, %v6861
        %v6914 = vpack.c.b16 %v6870, %v6866
        %v6915 = vpack.c.b16 %v6871, %v6867
        %v6916 = vpack.c.b16 %v6872, %v6868
        %v6917 = vpack.c.b16 %v6873, %v6869
        %v6918 = vpack.c.b16 %v6878, %v6874
        %v6919 = vpack.c.b16 %v6879, %v6875
        %v6920 = vpack.c.b16 %v6880, %v6876
        %v6921 = vpack.c.b16 %v6881, %v6877
        %v6922 = vpack.c.b16 %v6886, %v6882
        %v6923 = vpack.c.b16 %v6887, %v6883
        %v6924 = vpack.c.b16 %v6888, %v6884
        %v6925 = vpack.c.b16 %v6889, %v6885
        %v6926 = vpack.c.b16 %v6894, %v6890
        %v6927 = vpack.c.b16 %v6895, %v6891
        %v6928 = vpack.c.b16 %v6896, %v6892
        %v6929 = vpack.c.b16 %v6897, %v6893
        %6962 = vmatprep.subr.bf16.mxu0 %v6899
        %6963 = vmatpush1.bf16.msra.mxu0 %v6898
        %6964 = vmatprep.subr.bf16.mxu0 %v6903
        %6965 = vmatpush1.bf16.msra.mxu0 %v6902
        %6966 = vmatprep.subr.bf16.mxu0 %v6907
        %6967 = vmatpush1.bf16.msra.mxu0 %v6906
        %6968 = vmatprep.subr.bf16.mxu0 %v6911
        %6969 = vmatpush1.bf16.msra.mxu0 %v6910
        %6970 = vmatprep.subr.bf16.mxu0 %v6915
        %6971 = vmatpush1.bf16.msra.mxu0 %v6914
        %6972 = vmatprep.subr.bf16.mxu0 %v6919
        %6973 = vmatpush1.bf16.msra.mxu0 %v6918
        %6974 = vmatprep.subr.bf16.mxu0 %v6923
        %6975 = vmatpush1.bf16.msra.mxu0 %v6922
        %6976 = vmatprep.subr.bf16.mxu0 %v6927
        %6977 = vmatpush1.bf16.msra.mxu0 %v6926
        %6978 = vmatprep.subr.bf16.mxu0 0
        %6979 = vmatpush1.bf16.msra.mxu0 0
        %6980 = vmatprep.subr.bf16.mxu0 0
        %6981 = vmatpush1.bf16.msra.mxu0 0
        %6982 = vmatprep.subr.bf16.mxu0 0
        %6983 = vmatpush1.bf16.msra.mxu0 0
        %6984 = vmatprep.subr.bf16.mxu0 0
        %6985 = vmatpush1.bf16.msra.mxu0 0
        %6986 = vmatprep.subr.bf16.mxu0 0
        %6987 = vmatpush1.bf16.msra.mxu0 0
        %6988 = vmatprep.subr.bf16.mxu0 0
        %6989 = vmatpush1.bf16.msra.mxu0 0
        %6990 = vmatprep.subr.bf16.mxu0 0
        %6991 = vmatpush1.bf16.msra.mxu0 0
        %6992 = vmatprep.subr.bf16.mxu0 0
        %6993 = vmatpush1.bf16.msra.mxu0 0
        %6994 = vmatprep.mubr.bf16.mxu0 0
        %6995 = vmatmul.mubr.bf16.gmra.mrb[0].mxu0 %v6768
        %v6996 = vpop.f32.mrb[0].mxu0
        %v6997 = vadd.f32 0.0, %v6996
        %v6998 = vpop.f32.mrb[0].mxu0
        %v6999 = vadd.f32 0.0, %v6998
        %v7000 = vpop.f32.mrb[0].mxu0
        %v7001 = vpop.f32.mrb[0].mxu0
        %7002 = vdwg.mxu0
        %7003 = vmatprep.subr.bf16.mxu0 %v6901
        %7004 = vmatpush1.bf16.msra.mxu0 %v6900
        %7005 = vmatprep.subr.bf16.mxu0 %v6905
        %7006 = vmatpush1.bf16.msra.mxu0 %v6904
        %7007 = vmatprep.subr.bf16.mxu0 %v6909
        %7008 = vmatpush1.bf16.msra.mxu0 %v6908
        %7009 = vmatprep.subr.bf16.mxu0 %v6913
        %7010 = vmatpush1.bf16.msra.mxu0 %v6912
        %7011 = vmatprep.subr.bf16.mxu0 %v6917
        %7012 = vmatpush1.bf16.msra.mxu0 %v6916
        %7013 = vmatprep.subr.bf16.mxu0 %v6921
        %7014 = vmatpush1.bf16.msra.mxu0 %v6920
        %7015 = vmatprep.subr.bf16.mxu0 %v6925
        %7016 = vmatpush1.bf16.msra.mxu0 %v6924
        %7017 = vmatprep.subr.bf16.mxu0 %v6929
        %7018 = vmatpush1.bf16.msra.mxu0 %v6928
        %7019 = vmatprep.subr.bf16.mxu0 0
        %7020 = vmatpush1.bf16.msra.mxu0 0
        %7021 = vmatprep.subr.bf16.mxu0 0
        %7022 = vmatpush1.bf16.msra.mxu0 0
        %7023 = vmatprep.subr.bf16.mxu0 0
        %7024 = vmatpush1.bf16.msra.mxu0 0
        %7025 = vmatprep.subr.bf16.mxu0 0
        %7026 = vmatpush1.bf16.msra.mxu0 0
        %7027 = vmatprep.subr.bf16.mxu0 0
        %7028 = vmatpush1.bf16.msra.mxu0 0
        %7029 = vmatprep.subr.bf16.mxu0 0
        %7030 = vmatpush1.bf16.msra.mxu0 0
        %7031 = vmatprep.subr.bf16.mxu0 0
        %7032 = vmatpush1.bf16.msra.mxu0 0
        %7033 = vmatprep.subr.bf16.mxu0 0
        %7034 = vmatpush1.bf16.msra.mxu0 0
        %7035 = vmatprep.mubr.bf16.mxu0 0
        %7036 = vmatmul.mubr.bf16.gmra.mrb[0].mxu0 %v6768
        %v7037 = vpop.f32.mrb[0].mxu0
        %v7038 = vadd.f32 0.0, %v7037
        %v7039 = vpop.f32.mrb[0].mxu0
        %v7040 = vadd.f32 0.0, %v7039
        %v7041 = vpop.f32.mrb[0].mxu0
        %v7042 = vpop.f32.mrb[0].mxu0
        %7043 = vdwg.mxu0
        %v7044 = vadd.f32 %v6747, %v6997
        %v7045 = vadd.f32 %v6748, %v6999
        %v7046 = vadd.f32 %v6749, %v7038
        %v7047 = vadd.f32 %v6750, %v7040
        %s7048 = scalar_lea.vmem [#allocation2], 18
        %v7049 = vld [vmem:[%s7048] ss:$32 sm:$0x1]
        %v7050 = vld [vmem:[%s7048] ss:$32 sm:$0x2]
        %v7051 = vor.u32 %v7049, %v7050
        %v7052 = vld [vmem:[%s7048] ss:$32 sm:$0x4]
        %v7053 = vor.u32 %v7051, %v7052
        %v7054 = vld [vmem:[%s7048] ss:$32 sm:$0x8]
        %v7055 = vor.u32 %v7053, %v7054
        %v7056 = vld [vmem:[%s7048] ss:$32 sm:$0x10]
        %v7057 = vor.u32 %v7055, %v7056
        %v7058 = vld [vmem:[%s7048] ss:$32 sm:$0x20]
        %v7059 = vor.u32 %v7057, %v7058
        %v7060 = vld [vmem:[%s7048] ss:$32 sm:$0x40]
        %v7061 = vor.u32 %v7059, %v7060
        %v7062 = vld [vmem:[%s7048] ss:$32 sm:$0x80]
        %v7063 = vor.u32 %v7061, %v7062
        %v7064 = vmul.f32 %v7063, 0.11111111
        %v7065 = vpack.c.bf16 %v7064, %v7064
        %s7066 = scalar_lea.vmem [#allocation9], 1536
        %v7067 = vld [vmem:[%s7066] sm:$0xff]
        %v7068 = vld [vmem:[%s7066 + $0x8] sm:$0xff]
        %v7069 = vld [vmem:[%s7066 + $0x10] sm:$0xff]
        %v7070 = vld [vmem:[%s7066 + $0x18] sm:$0xff]
        %v7071 = vld [vmem:[%s7066 + $0x20] sm:$0xff]
        %v7072 = vld [vmem:[%s7066 + $0x28] sm:$0xff]
        %v7073 = vld [vmem:[%s7066 + $0x30] sm:$0xff]
        %v7074 = vld [vmem:[%s7066 + $0x38] sm:$0xff]
        %v7075 = vld [vmem:[%s7066 + $0x40] sm:$0xff]
        %v7076 = vld [vmem:[%s7066 + $0x48] sm:$0xff]
        %v7077 = vld [vmem:[%s7066 + $0x50] sm:$0xff]
        %v7078 = vld [vmem:[%s7066 + $0x58] sm:$0xff]
        %v7079 = vld [vmem:[%s7066 + $0x60] sm:$0xff]
        %v7080 = vld [vmem:[%s7066 + $0x68] sm:$0xff]
        %v7081 = vld [vmem:[%s7066 + $0x70] sm:$0xff]
        %v7082 = vld [vmem:[%s7066 + $0x78] sm:$0xff]
        %v7083 = vld [vmem:[%s7066 + $0x80] sm:$0xff]
        %v7084 = vld [vmem:[%s7066 + $0x88] sm:$0xff]
        %v7085 = vld [vmem:[%s7066 + $0x90] sm:$0xff]
        %v7086 = vld [vmem:[%s7066 + $0x98] sm:$0xff]
        %v7087 = vld [vmem:[%s7066 + $0xa0] sm:$0xff]
        %v7088 = vld [vmem:[%s7066 + $0xa8] sm:$0xff]
        %v7089 = vld [vmem:[%s7066 + $0xb0] sm:$0xff]
        %v7090 = vld [vmem:[%s7066 + $0xb8] sm:$0xff]
        %v7091 = vld [vmem:[%s7066 + $0xc0] sm:$0xff]
        %v7092 = vld [vmem:[%s7066 + $0xc8] sm:$0xff]
        %v7093 = vld [vmem:[%s7066 + $0xd0] sm:$0xff]
        %v7094 = vld [vmem:[%s7066 + $0xd8] sm:$0xff]
        %v7095 = vld [vmem:[%s7066 + $0xe0] sm:$0xff]
        %v7096 = vld [vmem:[%s7066 + $0xe8] sm:$0xff]
        %v7097 = vld [vmem:[%s7066 + $0xf0] sm:$0xff]
        %v7098 = vld [vmem:[%s7066 + $0xf8] sm:$0xff]
        %v7131 = vunpack.c.l.b16 %v7067
        %v7132 = vunpack.c.h.b16 %v7067
        %v7133 = vunpack.c.l.b16 %v7068
        %v7134 = vunpack.c.h.b16 %v7068
        %v7135 = vunpack.c.l.b16 %v7069
        %v7136 = vunpack.c.h.b16 %v7069
        %v7137 = vunpack.c.l.b16 %v7070
        %v7138 = vunpack.c.h.b16 %v7070
        %v7139 = vunpack.c.l.b16 %v7071
        %v7140 = vunpack.c.h.b16 %v7071
        %v7141 = vunpack.c.l.b16 %v7072
        %v7142 = vunpack.c.h.b16 %v7072
        %v7143 = vunpack.c.l.b16 %v7073
        %v7144 = vunpack.c.h.b16 %v7073
        %v7145 = vunpack.c.l.b16 %v7074
        %v7146 = vunpack.c.h.b16 %v7074
        %v7147 = vunpack.c.l.b16 %v7075
        %v7148 = vunpack.c.h.b16 %v7075
        %v7149 = vunpack.c.l.b16 %v7076
        %v7150 = vunpack.c.h.b16 %v7076
        %v7151 = vunpack.c.l.b16 %v7077
        %v7152 = vunpack.c.h.b16 %v7077
        %v7153 = vunpack.c.l.b16 %v7078
        %v7154 = vunpack.c.h.b16 %v7078
        %v7155 = vunpack.c.l.b16 %v7079
        %v7156 = vunpack.c.h.b16 %v7079
        %v7157 = vunpack.c.l.b16 %v7080
        %v7158 = vunpack.c.h.b16 %v7080
        %v7159 = vunpack.c.l.b16 %v7081
        %v7160 = vunpack.c.h.b16 %v7081
        %v7161 = vunpack.c.l.b16 %v7082
        %v7162 = vunpack.c.h.b16 %v7082
        %v7163 = vunpack.c.l.b16 %v7083
        %v7164 = vunpack.c.h.b16 %v7083
        %v7165 = vunpack.c.l.b16 %v7084
        %v7166 = vunpack.c.h.b16 %v7084
        %v7167 = vunpack.c.l.b16 %v7085
        %v7168 = vunpack.c.h.b16 %v7085
        %v7169 = vunpack.c.l.b16 %v7086
        %v7170 = vunpack.c.h.b16 %v7086
        %v7171 = vunpack.c.l.b16 %v7087
        %v7172 = vunpack.c.h.b16 %v7087
        %v7173 = vunpack.c.l.b16 %v7088
        %v7174 = vunpack.c.h.b16 %v7088
        %v7175 = vunpack.c.l.b16 %v7089
        %v7176 = vunpack.c.h.b16 %v7089
        %v7177 = vunpack.c.l.b16 %v7090
        %v7178 = vunpack.c.h.b16 %v7090
        %v7179 = vunpack.c.l.b16 %v7091
        %v7180 = vunpack.c.h.b16 %v7091
        %v7181 = vunpack.c.l.b16 %v7092
        %v7182 = vunpack.c.h.b16 %v7092
        %v7183 = vunpack.c.l.b16 %v7093
        %v7184 = vunpack.c.h.b16 %v7093
        %v7185 = vunpack.c.l.b16 %v7094
        %v7186 = vunpack.c.h.b16 %v7094
        %v7187 = vunpack.c.l.b16 %v7095
        %v7188 = vunpack.c.h.b16 %v7095
        %v7189 = vunpack.c.l.b16 %v7096
        %v7190 = vunpack.c.h.b16 %v7096
        %v7191 = vunpack.c.l.b16 %v7097
        %v7192 = vunpack.c.h.b16 %v7097
        %v7193 = vunpack.c.l.b16 %v7098
        %v7194 = vunpack.c.h.b16 %v7098
        %v7195 = vpack.c.b16 %v7135, %v7131
        %v7196 = vpack.c.b16 %v7136, %v7132
        %v7197 = vpack.c.b16 %v7137, %v7133
        %v7198 = vpack.c.b16 %v7138, %v7134
        %v7199 = vpack.c.b16 %v7143, %v7139
        %v7200 = vpack.c.b16 %v7144, %v7140
        %v7201 = vpack.c.b16 %v7145, %v7141
        %v7202 = vpack.c.b16 %v7146, %v7142
        %v7203 = vpack.c.b16 %v7151, %v7147
        %v7204 = vpack.c.b16 %v7152, %v7148
        %v7205 = vpack.c.b16 %v7153, %v7149
        %v7206 = vpack.c.b16 %v7154, %v7150
        %v7207 = vpack.c.b16 %v7159, %v7155
        %v7208 = vpack.c.b16 %v7160, %v7156
        %v7209 = vpack.c.b16 %v7161, %v7157
        %v7210 = vpack.c.b16 %v7162, %v7158
        %v7211 = vpack.c.b16 %v7167, %v7163
        %v7212 = vpack.c.b16 %v7168, %v7164
        %v7213 = vpack.c.b16 %v7169, %v7165
        %v7214 = vpack.c.b16 %v7170, %v7166
        %v7215 = vpack.c.b16 %v7175, %v7171
        %v7216 = vpack.c.b16 %v7176, %v7172
        %v7217 = vpack.c.b16 %v7177, %v7173
        %v7218 = vpack.c.b16 %v7178, %v7174
        %v7219 = vpack.c.b16 %v7183, %v7179
        %v7220 = vpack.c.b16 %v7184, %v7180
        %v7221 = vpack.c.b16 %v7185, %v7181
        %v7222 = vpack.c.b16 %v7186, %v7182
        %v7223 = vpack.c.b16 %v7191, %v7187
        %v7224 = vpack.c.b16 %v7192, %v7188
        %v7225 = vpack.c.b16 %v7193, %v7189
        %v7226 = vpack.c.b16 %v7194, %v7190
        %7259 = vmatprep.subr.bf16.mxu0 %v7196
        %7260 = vmatpush1.bf16.msra.mxu0 %v7195
        %7261 = vmatprep.subr.bf16.mxu0 %v7200
        %7262 = vmatpush1.bf16.msra.mxu0 %v7199
        %7263 = vmatprep.subr.bf16.mxu0 %v7204
        %7264 = vmatpush1.bf16.msra.mxu0 %v7203
        %7265 = vmatprep.subr.bf16.mxu0 %v7208
        %7266 = vmatpush1.bf16.msra.mxu0 %v7207
        %7267 = vmatprep.subr.bf16.mxu0 %v7212
        %7268 = vmatpush1.bf16.msra.mxu0 %v7211
        %7269 = vmatprep.subr.bf16.mxu0 %v7216
        %7270 = vmatpush1.bf16.msra.mxu0 %v7215
        %7271 = vmatprep.subr.bf16.mxu0 %v7220
        %7272 = vmatpush1.bf16.msra.mxu0 %v7219
        %7273 = vmatprep.subr.bf16.mxu0 %v7224
        %7274 = vmatpush1.bf16.msra.mxu0 %v7223
        %7275 = vmatprep.subr.bf16.mxu0 0
        %7276 = vmatpush1.bf16.msra.mxu0 0
        %7277 = vmatprep.subr.bf16.mxu0 0
        %7278 = vmatpush1.bf16.msra.mxu0 0
        %7279 = vmatprep.subr.bf16.mxu0 0
        %7280 = vmatpush1.bf16.msra.mxu0 0
        %7281 = vmatprep.subr.bf16.mxu0 0
        %7282 = vmatpush1.bf16.msra.mxu0 0
        %7283 = vmatprep.subr.bf16.mxu0 0
        %7284 = vmatpush1.bf16.msra.mxu0 0
        %7285 = vmatprep.subr.bf16.mxu0 0
        %7286 = vmatpush1.bf16.msra.mxu0 0
        %7287 = vmatprep.subr.bf16.mxu0 0
        %7288 = vmatpush1.bf16.msra.mxu0 0
        %7289 = vmatprep.subr.bf16.mxu0 0
        %7290 = vmatpush1.bf16.msra.mxu0 0
        %7291 = vmatprep.mubr.bf16.mxu0 0
        %7292 = vmatmul.mubr.bf16.gmra.mrb[0].mxu0 %v7065
        %v7293 = vpop.f32.mrb[0].mxu0
        %v7294 = vadd.f32 0.0, %v7293
        %v7295 = vpop.f32.mrb[0].mxu0
        %v7296 = vadd.f32 0.0, %v7295
        %v7297 = vpop.f32.mrb[0].mxu0
        %v7298 = vpop.f32.mrb[0].mxu0
        %7299 = vdwg.mxu0
        %7300 = vmatprep.subr.bf16.mxu0 %v7198
        %7301 = vmatpush1.bf16.msra.mxu0 %v7197
        %7302 = vmatprep.subr.bf16.mxu0 %v7202
        %7303 = vmatpush1.bf16.msra.mxu0 %v7201
        %7304 = vmatprep.subr.bf16.mxu0 %v7206
        %7305 = vmatpush1.bf16.msra.mxu0 %v7205
        %7306 = vmatprep.subr.bf16.mxu0 %v7210
        %7307 = vmatpush1.bf16.msra.mxu0 %v7209
        %7308 = vmatprep.subr.bf16.mxu0 %v7214
        %7309 = vmatpush1.bf16.msra.mxu0 %v7213
        %7310 = vmatprep.subr.bf16.mxu0 %v7218
        %7311 = vmatpush1.bf16.msra.mxu0 %v7217
        %7312 = vmatprep.subr.bf16.mxu0 %v7222
        %7313 = vmatpush1.bf16.msra.mxu0 %v7221
        %7314 = vmatprep.subr.bf16.mxu0 %v7226
        %7315 = vmatpush1.bf16.msra.mxu0 %v7225
        %7316 = vmatprep.subr.bf16.mxu0 0
        %7317 = vmatpush1.bf16.msra.mxu0 0
        %7318 = vmatprep.subr.bf16.mxu0 0
        %7319 = vmatpush1.bf16.msra.mxu0 0
        %7320 = vmatprep.subr.bf16.mxu0 0
        %7321 = vmatpush1.bf16.msra.mxu0 0
        %7322 = vmatprep.subr.bf16.mxu0 0
        %7323 = vmatpush1.bf16.msra.mxu0 0
        %7324 = vmatprep.subr.bf16.mxu0 0
        %7325 = vmatpush1.bf16.msra.mxu0 0
        %7326 = vmatprep.subr.bf16.mxu0 0
        %7327 = vmatpush1.bf16.msra.mxu0 0
        %7328 = vmatprep.subr.bf16.mxu0 0
        %7329 = vmatpush1.bf16.msra.mxu0 0
        %7330 = vmatprep.subr.bf16.mxu0 0
        %7331 = vmatpush1.bf16.msra.mxu0 0
        %7332 = vmatprep.mubr.bf16.mxu0 0
        %7333 = vmatmul.mubr.bf16.gmra.mrb[0].mxu0 %v7065
        %v7334 = vpop.f32.mrb[0].mxu0
        %v7335 = vadd.f32 0.0, %v7334
        %v7336 = vpop.f32.mrb[0].mxu0
        %v7337 = vadd.f32 0.0, %v7336
        %v7338 = vpop.f32.mrb[0].mxu0
        %v7339 = vpop.f32.mrb[0].mxu0
        %7340 = vdwg.mxu0
        %v7341 = vadd.f32 %v7044, %v7294
        %v7342 = vadd.f32 %v7045, %v7296
        %v7343 = vadd.f32 %v7046, %v7335
        %v7344 = vadd.f32 %v7047, %v7337
        %s7345 = scalar_lea.vmem [#allocation2], 21
        %v7346 = vld [vmem:[%s7345] ss:$32 sm:$0x1]
        %v7347 = vld [vmem:[%s7345] ss:$32 sm:$0x2]
        %v7348 = vor.u32 %v7346, %v7347
        %v7349 = vld [vmem:[%s7345] ss:$32 sm:$0x4]
        %v7350 = vor.u32 %v7348, %v7349
        %v7351 = vld [vmem:[%s7345] ss:$32 sm:$0x8]
        %v7352 = vor.u32 %v7350, %v7351
        %v7353 = vld [vmem:[%s7345] ss:$32 sm:$0x10]
        %v7354 = vor.u32 %v7352, %v7353
        %v7355 = vld [vmem:[%s7345] ss:$32 sm:$0x20]
        %v7356 = vor.u32 %v7354, %v7355
        %v7357 = vld [vmem:[%s7345] ss:$32 sm:$0x40]
        %v7358 = vor.u32 %v7356, %v7357
        %v7359 = vld [vmem:[%s7345] ss:$32 sm:$0x80]
        %v7360 = vor.u32 %v7358, %v7359
        %v7361 = vmul.f32 %v7360, 0.11111111
        %v7362 = vpack.c.bf16 %v7361, %v7361
        %s7363 = scalar_lea.vmem [#allocation9], 1792
        %v7364 = vld [vmem:[%s7363] sm:$0xff]
        %v7365 = vld [vmem:[%s7363 + $0x8] sm:$0xff]
        %v7366 = vld [vmem:[%s7363 + $0x10] sm:$0xff]
        %v7367 = vld [vmem:[%s7363 + $0x18] sm:$0xff]
        %v7368 = vld [vmem:[%s7363 + $0x20] sm:$0xff]
        %v7369 = vld [vmem:[%s7363 + $0x28] sm:$0xff]
        %v7370 = vld [vmem:[%s7363 + $0x30] sm:$0xff]
        %v7371 = vld [vmem:[%s7363 + $0x38] sm:$0xff]
        %v7372 = vld [vmem:[%s7363 + $0x40] sm:$0xff]
        %v7373 = vld [vmem:[%s7363 + $0x48] sm:$0xff]
        %v7374 = vld [vmem:[%s7363 + $0x50] sm:$0xff]
        %v7375 = vld [vmem:[%s7363 + $0x58] sm:$0xff]
        %v7376 = vld [vmem:[%s7363 + $0x60] sm:$0xff]
        %v7377 = vld [vmem:[%s7363 + $0x68] sm:$0xff]
        %v7378 = vld [vmem:[%s7363 + $0x70] sm:$0xff]
        %v7379 = vld [vmem:[%s7363 + $0x78] sm:$0xff]
        %v7380 = vld [vmem:[%s7363 + $0x80] sm:$0xff]
        %v7381 = vld [vmem:[%s7363 + $0x88] sm:$0xff]
        %v7382 = vld [vmem:[%s7363 + $0x90] sm:$0xff]
        %v7383 = vld [vmem:[%s7363 + $0x98] sm:$0xff]
        %v7384 = vld [vmem:[%s7363 + $0xa0] sm:$0xff]
        %v7385 = vld [vmem:[%s7363 + $0xa8] sm:$0xff]
        %v7386 = vld [vmem:[%s7363 + $0xb0] sm:$0xff]
        %v7387 = vld [vmem:[%s7363 + $0xb8] sm:$0xff]
        %v7388 = vld [vmem:[%s7363 + $0xc0] sm:$0xff]
        %v7389 = vld [vmem:[%s7363 + $0xc8] sm:$0xff]
        %v7390 = vld [vmem:[%s7363 + $0xd0] sm:$0xff]
        %v7391 = vld [vmem:[%s7363 + $0xd8] sm:$0xff]
        %v7392 = vld [vmem:[%s7363 + $0xe0] sm:$0xff]
        %v7393 = vld [vmem:[%s7363 + $0xe8] sm:$0xff]
        %v7394 = vld [vmem:[%s7363 + $0xf0] sm:$0xff]
        %v7395 = vld [vmem:[%s7363 + $0xf8] sm:$0xff]
        %v7428 = vunpack.c.l.b16 %v7364
        %v7429 = vunpack.c.h.b16 %v7364
        %v7430 = vunpack.c.l.b16 %v7365
        %v7431 = vunpack.c.h.b16 %v7365
        %v7432 = vunpack.c.l.b16 %v7366
        %v7433 = vunpack.c.h.b16 %v7366
        %v7434 = vunpack.c.l.b16 %v7367
        %v7435 = vunpack.c.h.b16 %v7367
        %v7436 = vunpack.c.l.b16 %v7368
        %v7437 = vunpack.c.h.b16 %v7368
        %v7438 = vunpack.c.l.b16 %v7369
        %v7439 = vunpack.c.h.b16 %v7369
        %v7440 = vunpack.c.l.b16 %v7370
        %v7441 = vunpack.c.h.b16 %v7370
        %v7442 = vunpack.c.l.b16 %v7371
        %v7443 = vunpack.c.h.b16 %v7371
        %v7444 = vunpack.c.l.b16 %v7372
        %v7445 = vunpack.c.h.b16 %v7372
        %v7446 = vunpack.c.l.b16 %v7373
        %v7447 = vunpack.c.h.b16 %v7373
        %v7448 = vunpack.c.l.b16 %v7374
        %v7449 = vunpack.c.h.b16 %v7374
        %v7450 = vunpack.c.l.b16 %v7375
        %v7451 = vunpack.c.h.b16 %v7375
        %v7452 = vunpack.c.l.b16 %v7376
        %v7453 = vunpack.c.h.b16 %v7376
        %v7454 = vunpack.c.l.b16 %v7377
        %v7455 = vunpack.c.h.b16 %v7377
        %v7456 = vunpack.c.l.b16 %v7378
        %v7457 = vunpack.c.h.b16 %v7378
        %v7458 = vunpack.c.l.b16 %v7379
        %v7459 = vunpack.c.h.b16 %v7379
        %v7460 = vunpack.c.l.b16 %v7380
        %v7461 = vunpack.c.h.b16 %v7380
        %v7462 = vunpack.c.l.b16 %v7381
        %v7463 = vunpack.c.h.b16 %v7381
        %v7464 = vunpack.c.l.b16 %v7382
        %v7465 = vunpack.c.h.b16 %v7382
        %v7466 = vunpack.c.l.b16 %v7383
        %v7467 = vunpack.c.h.b16 %v7383
        %v7468 = vunpack.c.l.b16 %v7384
        %v7469 = vunpack.c.h.b16 %v7384
        %v7470 = vunpack.c.l.b16 %v7385
        %v7471 = vunpack.c.h.b16 %v7385
        %v7472 = vunpack.c.l.b16 %v7386
        %v7473 = vunpack.c.h.b16 %v7386
        %v7474 = vunpack.c.l.b16 %v7387
        %v7475 = vunpack.c.h.b16 %v7387
        %v7476 = vunpack.c.l.b16 %v7388
        %v7477 = vunpack.c.h.b16 %v7388
        %v7478 = vunpack.c.l.b16 %v7389
        %v7479 = vunpack.c.h.b16 %v7389
        %v7480 = vunpack.c.l.b16 %v7390
        %v7481 = vunpack.c.h.b16 %v7390
        %v7482 = vunpack.c.l.b16 %v7391
        %v7483 = vunpack.c.h.b16 %v7391
        %v7484 = vunpack.c.l.b16 %v7392
        %v7485 = vunpack.c.h.b16 %v7392
        %v7486 = vunpack.c.l.b16 %v7393
        %v7487 = vunpack.c.h.b16 %v7393
        %v7488 = vunpack.c.l.b16 %v7394
        %v7489 = vunpack.c.h.b16 %v7394
        %v7490 = vunpack.c.l.b16 %v7395
        %v7491 = vunpack.c.h.b16 %v7395
        %v7492 = vpack.c.b16 %v7432, %v7428
        %v7493 = vpack.c.b16 %v7433, %v7429
        %v7494 = vpack.c.b16 %v7434, %v7430
        %v7495 = vpack.c.b16 %v7435, %v7431
        %v7496 = vpack.c.b16 %v7440, %v7436
        %v7497 = vpack.c.b16 %v7441, %v7437
        %v7498 = vpack.c.b16 %v7442, %v7438
        %v7499 = vpack.c.b16 %v7443, %v7439
        %v7500 = vpack.c.b16 %v7448, %v7444
        %v7501 = vpack.c.b16 %v7449, %v7445
        %v7502 = vpack.c.b16 %v7450, %v7446
        %v7503 = vpack.c.b16 %v7451, %v7447
        %v7504 = vpack.c.b16 %v7456, %v7452
        %v7505 = vpack.c.b16 %v7457, %v7453
        %v7506 = vpack.c.b16 %v7458, %v7454
        %v7507 = vpack.c.b16 %v7459, %v7455
        %v7508 = vpack.c.b16 %v7464, %v7460
        %v7509 = vpack.c.b16 %v7465, %v7461
        %v7510 = vpack.c.b16 %v7466, %v7462
        %v7511 = vpack.c.b16 %v7467, %v7463
        %v7512 = vpack.c.b16 %v7472, %v7468
        %v7513 = vpack.c.b16 %v7473, %v7469
        %v7514 = vpack.c.b16 %v7474, %v7470
        %v7515 = vpack.c.b16 %v7475, %v7471
        %v7516 = vpack.c.b16 %v7480, %v7476
        %v7517 = vpack.c.b16 %v7481, %v7477
        %v7518 = vpack.c.b16 %v7482, %v7478
        %v7519 = vpack.c.b16 %v7483, %v7479
        %v7520 = vpack.c.b16 %v7488, %v7484
        %v7521 = vpack.c.b16 %v7489, %v7485
        %v7522 = vpack.c.b16 %v7490, %v7486
        %v7523 = vpack.c.b16 %v7491, %v7487
        %7556 = vmatprep.subr.bf16.mxu0 %v7493
        %7557 = vmatpush1.bf16.msra.mxu0 %v7492
        %7558 = vmatprep.subr.bf16.mxu0 %v7497
        %7559 = vmatpush1.bf16.msra.mxu0 %v7496
        %7560 = vmatprep.subr.bf16.mxu0 %v7501
        %7561 = vmatpush1.bf16.msra.mxu0 %v7500
        %7562 = vmatprep.subr.bf16.mxu0 %v7505
        %7563 = vmatpush1.bf16.msra.mxu0 %v7504
        %7564 = vmatprep.subr.bf16.mxu0 %v7509
        %7565 = vmatpush1.bf16.msra.mxu0 %v7508
        %7566 = vmatprep.subr.bf16.mxu0 %v7513
        %7567 = vmatpush1.bf16.msra.mxu0 %v7512
        %7568 = vmatprep.subr.bf16.mxu0 %v7517
        %7569 = vmatpush1.bf16.msra.mxu0 %v7516
        %7570 = vmatprep.subr.bf16.mxu0 %v7521
        %7571 = vmatpush1.bf16.msra.mxu0 %v7520
        %7572 = vmatprep.subr.bf16.mxu0 0
        %7573 = vmatpush1.bf16.msra.mxu0 0
        %7574 = vmatprep.subr.bf16.mxu0 0
        %7575 = vmatpush1.bf16.msra.mxu0 0
        %7576 = vmatprep.subr.bf16.mxu0 0
        %7577 = vmatpush1.bf16.msra.mxu0 0
        %7578 = vmatprep.subr.bf16.mxu0 0
        %7579 = vmatpush1.bf16.msra.mxu0 0
        %7580 = vmatprep.subr.bf16.mxu0 0
        %7581 = vmatpush1.bf16.msra.mxu0 0
        %7582 = vmatprep.subr.bf16.mxu0 0
        %7583 = vmatpush1.bf16.msra.mxu0 0
        %7584 = vmatprep.subr.bf16.mxu0 0
        %7585 = vmatpush1.bf16.msra.mxu0 0
        %7586 = vmatprep.subr.bf16.mxu0 0
        %7587 = vmatpush1.bf16.msra.mxu0 0
        %7588 = vmatprep.mubr.bf16.mxu0 0
        %7589 = vmatmul.mubr.bf16.gmra.mrb[0].mxu0 %v7362
        %v7590 = vpop.f32.mrb[0].mxu0
        %v7591 = vadd.f32 0.0, %v7590
        %v7592 = vpop.f32.mrb[0].mxu0
        %v7593 = vadd.f32 0.0, %v7592
        %v7594 = vpop.f32.mrb[0].mxu0
        %v7595 = vpop.f32.mrb[0].mxu0
        %7596 = vdwg.mxu0
        %7597 = vmatprep.subr.bf16.mxu0 %v7495
        %7598 = vmatpush1.bf16.msra.mxu0 %v7494
        %7599 = vmatprep.subr.bf16.mxu0 %v7499
        %7600 = vmatpush1.bf16.msra.mxu0 %v7498
        %7601 = vmatprep.subr.bf16.mxu0 %v7503
        %7602 = vmatpush1.bf16.msra.mxu0 %v7502
        %7603 = vmatprep.subr.bf16.mxu0 %v7507
        %7604 = vmatpush1.bf16.msra.mxu0 %v7506
        %7605 = vmatprep.subr.bf16.mxu0 %v7511
        %7606 = vmatpush1.bf16.msra.mxu0 %v7510
        %7607 = vmatprep.subr.bf16.mxu0 %v7515
        %7608 = vmatpush1.bf16.msra.mxu0 %v7514
        %7609 = vmatprep.subr.bf16.mxu0 %v7519
        %7610 = vmatpush1.bf16.msra.mxu0 %v7518
        %7611 = vmatprep.subr.bf16.mxu0 %v7523
        %7612 = vmatpush1.bf16.msra.mxu0 %v7522
        %7613 = vmatprep.subr.bf16.mxu0 0
        %7614 = vmatpush1.bf16.msra.mxu0 0
        %7615 = vmatprep.subr.bf16.mxu0 0
        %7616 = vmatpush1.bf16.msra.mxu0 0
        %7617 = vmatprep.subr.bf16.mxu0 0
        %7618 = vmatpush1.bf16.msra.mxu0 0
        %7619 = vmatprep.subr.bf16.mxu0 0
        %7620 = vmatpush1.bf16.msra.mxu0 0
        %7621 = vmatprep.subr.bf16.mxu0 0
        %7622 = vmatpush1.bf16.msra.mxu0 0
        %7623 = vmatprep.subr.bf16.mxu0 0
        %7624 = vmatpush1.bf16.msra.mxu0 0
        %7625 = vmatprep.subr.bf16.mxu0 0
        %7626 = vmatpush1.bf16.msra.mxu0 0
        %7627 = vmatprep.subr.bf16.mxu0 0
        %7628 = vmatpush1.bf16.msra.mxu0 0
        %7629 = vmatprep.mubr.bf16.mxu0 0
        %7630 = vmatmul.mubr.bf16.gmra.mrb[0].mxu0 %v7362
        %v7631 = vpop.f32.mrb[0].mxu0
        %v7632 = vadd.f32 0.0, %v7631
        %v7633 = vpop.f32.mrb[0].mxu0
        %v7634 = vadd.f32 0.0, %v7633
        %v7635 = vpop.f32.mrb[0].mxu0
        %v7636 = vpop.f32.mrb[0].mxu0
        %7637 = vdwg.mxu0
        %v7638 = vadd.f32 %v7341, %v7591
        %v7639 = vadd.f32 %v7342, %v7593
        %v7640 = vadd.f32 %v7343, %v7632
        %v7641 = vadd.f32 %v7344, %v7634
        %v7642 = vld [vmem:[%s7] sm:$0xf]
        %v7644 = vlaneseq
        %v7645 = vshrl.u32 %v7644, 7
        %v7646 = vsub.s32 0, %v7645
        %v7647 = vrot.slane %v7642, %v7646
        %v7648 = vlaneseq
        %v7649 = vshrl.u32 %v7648, 7
        %v7650 = vsub.s32 1, %v7649
        %v7651 = vrot.slane %v7642, %v7650
        %v7652 = vlaneseq
        %v7653 = vshrl.u32 %v7652, 7
        %v7654 = vsub.s32 2, %v7653
        %v7655 = vrot.slane %v7642, %v7654
        %v7656 = vlaneseq
        %v7657 = vshrl.u32 %v7656, 7
        %v7658 = vsub.s32 3, %v7657
        %v7659 = vrot.slane %v7642, %v7658
        %v7664 = vadd.f32 %v7638, %v7647
        %v7665 = vadd.f32 %v7639, %v7651
        %v7666 = vadd.f32 %v7640, %v7655
        %v7667 = vadd.f32 %v7641, %v7659
        %v7668 = vmax.f32 %v7664, 0.0
        %v7669 = vmax.f32 %v7665, 0.0
        %v7670 = vmax.f32 %v7666, 0.0
        %v7671 = vmax.f32 %v7667, 0.0
        %v7672 = vpack.c.bf16 %v7668, %v7668
        %v7673 = vpack.c.bf16 %v7669, %v7669
        %v7674 = vpack.c.bf16 %v7670, %v7670
        %v7675 = vpack.c.bf16 %v7671, %v7671
        %v7676 = vld [vmem:[%s8] sm:$0xf]
        %v7677 = vld [vmem:[%s8 + $0x4] sm:$0xf]
        %v7678 = vld [vmem:[%s8 + $0x8] sm:$0xf]
        %v7679 = vld [vmem:[%s8 + $0xc] sm:$0xf]
        %v7680 = vld [vmem:[%s8 + $0x10] sm:$0xf]
        %v7681 = vld [vmem:[%s8 + $0x14] sm:$0xf]
        %v7682 = vld [vmem:[%s8 + $0x18] sm:$0xf]
        %v7683 = vld [vmem:[%s8 + $0x1c] sm:$0xf]
        %v7684 = vld [vmem:[%s8 + $0x20] sm:$0xf]
        %v7685 = vld [vmem:[%s8 + $0x24] sm:$0xf]
        %v7686 = vld [vmem:[%s8 + $0x28] sm:$0xf]
        %v7687 = vld [vmem:[%s8 + $0x2c] sm:$0xf]
        %v7688 = vld [vmem:[%s8 + $0x30] sm:$0xf]
        %v7689 = vld [vmem:[%s8 + $0x34] sm:$0xf]
        %v7690 = vld [vmem:[%s8 + $0x38] sm:$0xf]
        %v7691 = vld [vmem:[%s8 + $0x3c] sm:$0xf]
        %v7692 = vld [vmem:[%s8 + $0x40] sm:$0xf]
        %v7693 = vld [vmem:[%s8 + $0x44] sm:$0xf]
        %v7694 = vld [vmem:[%s8 + $0x48] sm:$0xf]
        %v7695 = vld [vmem:[%s8 + $0x4c] sm:$0xf]
        %v7696 = vld [vmem:[%s8 + $0x50] sm:$0xf]
        %v7697 = vld [vmem:[%s8 + $0x54] sm:$0xf]
        %v7698 = vld [vmem:[%s8 + $0x58] sm:$0xf]
        %v7699 = vld [vmem:[%s8 + $0x5c] sm:$0xf]
        %v7700 = vld [vmem:[%s8 + $0x60] sm:$0xf]
        %v7701 = vld [vmem:[%s8 + $0x64] sm:$0xf]
        %v7702 = vld [vmem:[%s8 + $0x68] sm:$0xf]
        %v7703 = vld [vmem:[%s8 + $0x6c] sm:$0xf]
        %v7704 = vld [vmem:[%s8 + $0x70] sm:$0xf]
        %v7705 = vld [vmem:[%s8 + $0x74] sm:$0xf]
        %v7706 = vld [vmem:[%s8 + $0x78] sm:$0xf]
        %v7707 = vld [vmem:[%s8 + $0x7c] sm:$0xf]
        %v7708 = vld [vmem:[%s8 + $0x80] sm:$0xf]
        %v7709 = vld [vmem:[%s8 + $0x84] sm:$0xf]
        %v7710 = vld [vmem:[%s8 + $0x88] sm:$0xf]
        %v7711 = vld [vmem:[%s8 + $0x8c] sm:$0xf]
        %v7712 = vld [vmem:[%s8 + $0x90] sm:$0xf]
        %v7713 = vld [vmem:[%s8 + $0x94] sm:$0xf]
        %v7714 = vld [vmem:[%s8 + $0x98] sm:$0xf]
        %v7715 = vld [vmem:[%s8 + $0x9c] sm:$0xf]
        %v7716 = vld [vmem:[%s8 + $0xa0] sm:$0xf]
        %v7717 = vld [vmem:[%s8 + $0xa4] sm:$0xf]
        %v7718 = vld [vmem:[%s8 + $0xa8] sm:$0xf]
        %v7719 = vld [vmem:[%s8 + $0xac] sm:$0xf]
        %v7720 = vld [vmem:[%s8 + $0xb0] sm:$0xf]
        %v7721 = vld [vmem:[%s8 + $0xb4] sm:$0xf]
        %v7722 = vld [vmem:[%s8 + $0xb8] sm:$0xf]
        %v7723 = vld [vmem:[%s8 + $0xbc] sm:$0xf]
        %v7724 = vld [vmem:[%s8 + $0xc0] sm:$0xf]
        %v7725 = vld [vmem:[%s8 + $0xc4] sm:$0xf]
        %v7726 = vld [vmem:[%s8 + $0xc8] sm:$0xf]
        %v7727 = vld [vmem:[%s8 + $0xcc] sm:$0xf]
        %v7728 = vld [vmem:[%s8 + $0xd0] sm:$0xf]
        %v7729 = vld [vmem:[%s8 + $0xd4] sm:$0xf]
        %v7730 = vld [vmem:[%s8 + $0xd8] sm:$0xf]
        %v7731 = vld [vmem:[%s8 + $0xdc] sm:$0xf]
        %v7732 = vld [vmem:[%s8 + $0xe0] sm:$0xf]
        %v7733 = vld [vmem:[%s8 + $0xe4] sm:$0xf]
        %v7734 = vld [vmem:[%s8 + $0xe8] sm:$0xf]
        %v7735 = vld [vmem:[%s8 + $0xec] sm:$0xf]
        %v7736 = vld [vmem:[%s8 + $0xf0] sm:$0xf]
        %v7737 = vld [vmem:[%s8 + $0xf4] sm:$0xf]
        %v7738 = vld [vmem:[%s8 + $0xf8] sm:$0xf]
        %v7739 = vld [vmem:[%s8 + $0xfc] sm:$0xf]
        %v7740 = vld [vmem:[%s9] sm:$0x1]
        %v7742 = vlaneseq
        %v7743 = vshrl.u32 %v7742, 7
        %v7744 = vsub.s32 0, %v7743
        %v7745 = vrot.slane %v7740, %v7744
        %v7811 = vunpack.c.l.b16 %v7676
        %v7812 = vunpack.c.l.b16 %v7677
        %v7813 = vunpack.c.l.b16 %v7678
        %v7814 = vunpack.c.l.b16 %v7679
        %v7815 = vunpack.c.l.b16 %v7680
        %v7816 = vunpack.c.l.b16 %v7681
        %v7817 = vunpack.c.l.b16 %v7682
        %v7818 = vunpack.c.l.b16 %v7683
        %v7819 = vunpack.c.l.b16 %v7684
        %v7820 = vunpack.c.l.b16 %v7685
        %v7821 = vunpack.c.l.b16 %v7686
        %v7822 = vunpack.c.l.b16 %v7687
        %v7823 = vunpack.c.l.b16 %v7688
        %v7824 = vunpack.c.l.b16 %v7689
        %v7825 = vunpack.c.l.b16 %v7690
        %v7826 = vunpack.c.l.b16 %v7691
        %v7827 = vunpack.c.l.b16 %v7692
        %v7828 = vunpack.c.l.b16 %v7693
        %v7829 = vunpack.c.l.b16 %v7694
        %v7830 = vunpack.c.l.b16 %v7695
        %v7831 = vunpack.c.l.b16 %v7696
        %v7832 = vunpack.c.l.b16 %v7697
        %v7833 = vunpack.c.l.b16 %v7698
        %v7834 = vunpack.c.l.b16 %v7699
        %v7835 = vunpack.c.l.b16 %v7700
        %v7836 = vunpack.c.l.b16 %v7701
        %v7837 = vunpack.c.l.b16 %v7702
        %v7838 = vunpack.c.l.b16 %v7703
        %v7839 = vunpack.c.l.b16 %v7704
        %v7840 = vunpack.c.l.b16 %v7705
        %v7841 = vunpack.c.l.b16 %v7706
        %v7842 = vunpack.c.l.b16 %v7707
        %v7843 = vunpack.c.l.b16 %v7708
        %v7844 = vunpack.c.l.b16 %v7709
        %v7845 = vunpack.c.l.b16 %v7710
        %v7846 = vunpack.c.l.b16 %v7711
        %v7847 = vunpack.c.l.b16 %v7712
        %v7848 = vunpack.c.l.b16 %v7713
        %v7849 = vunpack.c.l.b16 %v7714
        %v7850 = vunpack.c.l.b16 %v7715
        %v7851 = vunpack.c.l.b16 %v7716
        %v7852 = vunpack.c.l.b16 %v7717
        %v7853 = vunpack.c.l.b16 %v7718
        %v7854 = vunpack.c.l.b16 %v7719
        %v7855 = vunpack.c.l.b16 %v7720
        %v7856 = vunpack.c.l.b16 %v7721
        %v7857 = vunpack.c.l.b16 %v7722
        %v7858 = vunpack.c.l.b16 %v7723
        %v7859 = vunpack.c.l.b16 %v7724
        %v7860 = vunpack.c.l.b16 %v7725
        %v7861 = vunpack.c.l.b16 %v7726
        %v7862 = vunpack.c.l.b16 %v7727
        %v7863 = vunpack.c.l.b16 %v7728
        %v7864 = vunpack.c.l.b16 %v7729
        %v7865 = vunpack.c.l.b16 %v7730
        %v7866 = vunpack.c.l.b16 %v7731
        %v7867 = vunpack.c.l.b16 %v7732
        %v7868 = vunpack.c.l.b16 %v7733
        %v7869 = vunpack.c.l.b16 %v7734
        %v7870 = vunpack.c.l.b16 %v7735
        %v7871 = vunpack.c.l.b16 %v7736
        %v7872 = vunpack.c.l.b16 %v7737
        %v7873 = vunpack.c.l.b16 %v7738
        %v7874 = vunpack.c.l.b16 %v7739
        %v7875 = vpack.c.b16 %v7812, %v7811
        %v7876 = vpack.c.b16 %v7814, %v7813
        %v7877 = vpack.c.b16 %v7816, %v7815
        %v7878 = vpack.c.b16 %v7818, %v7817
        %v7879 = vpack.c.b16 %v7820, %v7819
        %v7880 = vpack.c.b16 %v7822, %v7821
        %v7881 = vpack.c.b16 %v7824, %v7823
        %v7882 = vpack.c.b16 %v7826, %v7825
        %v7883 = vpack.c.b16 %v7828, %v7827
        %v7884 = vpack.c.b16 %v7830, %v7829
        %v7885 = vpack.c.b16 %v7832, %v7831
        %v7886 = vpack.c.b16 %v7834, %v7833
        %v7887 = vpack.c.b16 %v7836, %v7835
        %v7888 = vpack.c.b16 %v7838, %v7837
        %v7889 = vpack.c.b16 %v7840, %v7839
        %v7890 = vpack.c.b16 %v7842, %v7841
        %v7891 = vpack.c.b16 %v7844, %v7843
        %v7892 = vpack.c.b16 %v7846, %v7845
        %v7893 = vpack.c.b16 %v7848, %v7847
        %v7894 = vpack.c.b16 %v7850, %v7849
        %v7895 = vpack.c.b16 %v7852, %v7851
        %v7896 = vpack.c.b16 %v7854, %v7853
        %v7897 = vpack.c.b16 %v7856, %v7855
        %v7898 = vpack.c.b16 %v7858, %v7857
        %v7899 = vpack.c.b16 %v7860, %v7859
        %v7900 = vpack.c.b16 %v7862, %v7861
        %v7901 = vpack.c.b16 %v7864, %v7863
        %v7902 = vpack.c.b16 %v7866, %v7865
        %v7903 = vpack.c.b16 %v7868, %v7867
        %v7904 = vpack.c.b16 %v7870, %v7869
        %v7905 = vpack.c.b16 %v7872, %v7871
        %v7906 = vpack.c.b16 %v7874, %v7873
        %7939 = vmatprep.subr.bf16.mxu0 0
        %7940 = vmatpush1.bf16.msra.mxu0 %v7875
        %7941 = vmatprep.subr.bf16.mxu0 0
        %7942 = vmatpush1.bf16.msra.mxu0 %v7876
        %7943 = vmatprep.subr.bf16.mxu0 0
        %7944 = vmatpush1.bf16.msra.mxu0 %v7877
        %7945 = vmatprep.subr.bf16.mxu0 0
        %7946 = vmatpush1.bf16.msra.mxu0 %v7878
        %7947 = vmatprep.subr.bf16.mxu0 0
        %7948 = vmatpush1.bf16.msra.mxu0 %v7879
        %7949 = vmatprep.subr.bf16.mxu0 0
        %7950 = vmatpush1.bf16.msra.mxu0 %v7880
        %7951 = vmatprep.subr.bf16.mxu0 0
        %7952 = vmatpush1.bf16.msra.mxu0 %v7881
        %7953 = vmatprep.subr.bf16.mxu0 0
        %7954 = vmatpush1.bf16.msra.mxu0 %v7882
        %7955 = vmatprep.subr.bf16.mxu0 0
        %7956 = vmatpush1.bf16.msra.mxu0 %v7883
        %7957 = vmatprep.subr.bf16.mxu0 0
        %7958 = vmatpush1.bf16.msra.mxu0 %v7884
        %7959 = vmatprep.subr.bf16.mxu0 0
        %7960 = vmatpush1.bf16.msra.mxu0 %v7885
        %7961 = vmatprep.subr.bf16.mxu0 0
        %7962 = vmatpush1.bf16.msra.mxu0 %v7886
        %7963 = vmatprep.subr.bf16.mxu0 0
        %7964 = vmatpush1.bf16.msra.mxu0 %v7887
        %7965 = vmatprep.subr.bf16.mxu0 0
        %7966 = vmatpush1.bf16.msra.mxu0 %v7888
        %7967 = vmatprep.subr.bf16.mxu0 0
        %7968 = vmatpush1.bf16.msra.mxu0 %v7889
        %7969 = vmatprep.subr.bf16.mxu0 0
        %7970 = vmatpush1.bf16.msra.mxu0 %v7890
        %7971 = vmatprep.mubr.bf16.mxu0 %v7673
        %7972 = vmatmul.mubr.bf16.gmra.mrb[0].mxu0 %v7672
        %v7973 = vpop.f32.mrb[0].mxu0
        %v7974 = vadd.f32 %v7745, %v7973
        %v7975 = vpop.f32.mrb[0].mxu0
        %v7976 = vpop.f32.mrb[0].mxu0
        %v7977 = vpop.f32.mrb[0].mxu0
        %7978 = vdwg.mxu0
        %7979 = vmatprep.subr.bf16.mxu0 0
        %7980 = vmatpush1.bf16.msra.mxu0 %v7891
        %7981 = vmatprep.subr.bf16.mxu0 0
        %7982 = vmatpush1.bf16.msra.mxu0 %v7892
        %7983 = vmatprep.subr.bf16.mxu0 0
        %7984 = vmatpush1.bf16.msra.mxu0 %v7893
        %7985 = vmatprep.subr.bf16.mxu0 0
        %7986 = vmatpush1.bf16.msra.mxu0 %v7894
        %7987 = vmatprep.subr.bf16.mxu0 0
        %7988 = vmatpush1.bf16.msra.mxu0 %v7895
        %7989 = vmatprep.subr.bf16.mxu0 0
        %7990 = vmatpush1.bf16.msra.mxu0 %v7896
        %7991 = vmatprep.subr.bf16.mxu0 0
        %7992 = vmatpush1.bf16.msra.mxu0 %v7897
        %7993 = vmatprep.subr.bf16.mxu0 0
        %7994 = vmatpush1.bf16.msra.mxu0 %v7898
        %7995 = vmatprep.subr.bf16.mxu0 0
        %7996 = vmatpush1.bf16.msra.mxu0 %v7899
        %7997 = vmatprep.subr.bf16.mxu0 0
        %7998 = vmatpush1.bf16.msra.mxu0 %v7900
        %7999 = vmatprep.subr.bf16.mxu0 0
        %8000 = vmatpush1.bf16.msra.mxu0 %v7901
        %8001 = vmatprep.subr.bf16.mxu0 0
        %8002 = vmatpush1.bf16.msra.mxu0 %v7902
        %8003 = vmatprep.subr.bf16.mxu0 0
        %8004 = vmatpush1.bf16.msra.mxu0 %v7903
        %8005 = vmatprep.subr.bf16.mxu0 0
        %8006 = vmatpush1.bf16.msra.mxu0 %v7904
        %8007 = vmatprep.subr.bf16.mxu0 0
        %8008 = vmatpush1.bf16.msra.mxu0 %v7905
        %8009 = vmatprep.subr.bf16.mxu0 0
        %8010 = vmatpush1.bf16.msra.mxu0 %v7906
        %8011 = vmatprep.mubr.bf16.mxu0 %v7675
        %8012 = vmatmul.mubr.bf16.gmra.mrb[0].mxu0 %v7674
        %v8013 = vpop.f32.mrb[0].mxu0
        %v8014 = vadd.f32 %v7974, %v8013
        %v8015 = vpop.f32.mrb[0].mxu0
        %v8016 = vpop.f32.mrb[0].mxu0
        %v8017 = vpop.f32.mrb[0].mxu0
        %8018 = vdwg.mxu0
        %8019 = vst [vmem:[%s412] sm:$0xff] %v8014
        %s8020 = sand.u32 %s250, 1
        %s8021 = scalar_lea.sflag [#allocation5], %s8020
        %s8022 = sand.u32 %s250, 1
        %s8023 = smul.addr %s8022, 8
        %s8024 = scalar_lea.vmem [#allocation11], %s8023
        // Predicated region
        $region77: #{tpu_custom_call.1} parent=59 // pred_check
          %p8025 = pneg %p260
        $region78: #{tpu_custom_call.1} parent=59 // pred_check_branch
          %8027 = sbr.rel (%p8025) target = $region80
        $region79: #{tpu_custom_call.1} parent=59 // pred_region
          %s8029 = ssub.s32 128, 128
          %8030 = vsyncadd %s8021, %s8029
          %s8031 = smul.addr %s27, 128
          %s8032 = scalar_lea.hbm %s10, %s8031
          %s8034 = sshll.u32 %s8024, 4
          %s8035 = int_to_ptr.vmem [resolvable:$true] %s8034
          %8037 = dma.vmem_to_hbm [thread:$0]  %s8035, 128, %s8032, %s8021
        $region80: #{tpu_custom_call.1} parent=59 // pred_fallthru
          _
      $region60: #{tpu_custom_call.1} parent=5 // pred_fallthru
        _
      %p8038 = scmp.le.s32.totalorder 2, %s22
      // Predicated region
      $region81: #{tpu_custom_call.1} parent=5 // pred_check
        %p8039 = pneg %p8038
      $region82: #{tpu_custom_call.1} parent=5 // pred_check_branch
        %8041 = sbr.rel (%p8039) target = $region84
      $region83: #{tpu_custom_call.1} parent=5 // pred_region
        %s8042 = ssub.s32 %s22, 2
        // Predicated region
        $region85: #{tpu_custom_call.1} parent=83 // pred_check
          %p8043 = pneg %p266
        $region86: #{tpu_custom_call.1} parent=83 // pred_check_branch
          %8045 = sbr.rel (%p8043) target = $region88
        $region87: #{tpu_custom_call.1} parent=83 // pred_region
          %s8046 = sand.u32 %s251, 1
          %s8047 = scalar_lea.sflag [#allocation5], %s8046
          %s8048 = sand.u32 %s251, 1
          %s8049 = smul.addr %s8048, 8
          %s8050 = scalar_lea.vmem [#allocation11], %s8049
          %8051 = dma.done %s8047, 128
        $region88: #{tpu_custom_call.1} parent=83 // pred_fallthru
          _
      $region84: #{tpu_custom_call.1} parent=5 // pred_fallthru
        _
    $region6: #{tpu_custom_call.1} parent=1 // loop_footer
      %s26 = sadd.s32 1, %s22
    $region7: #{tpu_custom_call.1} parent=1 // loop_footer_branch
      %21 = sbr.rel target = $region3
    $region8: #{tpu_custom_call.1} parent=1 // loop_exit
      _
    %8052 = vsyncpa [#allocation4], 1
    %s8053 = scalar_lea.sflag [#allocation4], 1
    %8054 = vsyncpa %s8053, 1
    %8055 = vsyncpa [#allocation7], 1
    %8056 = vsyncpa [#allocation10], 1
    %8057 = vsyncpa [#allocation5], 1
    %s8058 = scalar_lea.sflag [#allocation5], 1
    %8059 = vsyncpa %s8058, 1

</llo_original>
